<compile_context>
chip_gen: v7x
topology: tpu7x:2x2x1
jax: 0.10.0
libtpu: 0.0.40
codegen_flags: <defaults>
</compile_context>

<pallas_src>
import functools

import jax
import jax.numpy as jnp
from jax.experimental import pallas as pl
from jax.experimental.pallas import tpu as pltpu


def _round_up(x, m):
    return ((x + m - 1) // m) * m


# Whether pipeline_mode=pl.Buffered(1) (single-buffered resident weights) is usable with the
# installed Pallas.  None = unknown (probe on first call), True/False afterwards.
_SINGLE_BUFFER_WEIGHTS = None


def _weight_spec(shape, index_map, single_buffer):
    """BlockSpec for a resident (constant index_map) weight; single-buffer when possible."""
    if single_buffer:
        try:
            return pl.BlockSpec(shape, index_map, pipeline_mode=pl.Buffered(1))
        except TypeError:
            return pl.BlockSpec(shape, index_map)
    return pl.BlockSpec(shape, index_map)


# ----------------------------- fused stacked-RNN kernels -----------------------------------


def _gru_stack_kernel(x_ref, wih0_ref, wihr_ref, whh_ref, bgi_ref, bhn_ref, fcw_ref, fcb_ref,
                      o_ref, act_ref, gi_ref, h_ref,
                      *, t_block, bp, hp, n_layers, res_start, mxu_dtype):
    """One time-chunk through the whole GRU stack + fused Linear epilogue.

    x_ref:    (t_block*bp, Dcom)  mxu dtype, rows ordered (t, b) with b padded to bp
    wih0_ref: (Dcom, 3*hp)        layer-0 input weights
    wihr_ref: (max(L-1,1), hp, 3*hp)  layers>0 input weights
    whh_ref:  (L, hp, 3*hp)       recurrent weights
    bgi_ref:  (L, 1, 3*hp) f32    b_ih + [b_hr, b_hz, 0]  (hoisted into gi)
    bhn_ref:  (L, 1, hp)   f32    b_hn (must stay inside r*(.))
    fcw_ref:  (hp, Op)  fcb_ref: (1, Op)
    o_ref:    (t_block*bp, Op)
    act_ref:  (t_block*bp, hp) mxu dtype  -- inter-layer activations for the chunk
    gi_ref:   (t_block*bp, 3*hp) f32      -- hoisted input projection
    h_ref:    (L, bp, hp) f32             -- persistent hidden state across chunks
    """
    @pl.when(pl.program_id(0) == 0)
    def _init():
        h_ref[...] = jnp.zeros_like(h_ref)

    for l in range(n_layers):
        whh = whh_ref[l]                       # (hp, 3*hp)
        bhn = bhn_ref[l]                       # (1, hp)
        residual = (l > 0) and (l >= res_start)

        # Hoisted dense input projection: one big MXU matmul for the whole chunk.
        if l == 0:
            gi_ref[...] = jnp.dot(x_ref[...], wih0_ref[...],
                                  preferred_element_type=jnp.float32) + bgi_ref[0]
        else:
            gi_ref[...] = jnp.dot(act_ref[...], wihr_ref[l - 1],
                                  preferred_element_type=jnp.float32) + bgi_ref[l]

        for t in range(t_block):               # static unroll (t_block is small)
            rows = pl.ds(t * bp, bp)           # sublane-aligned: bp is a multiple of 8
            h = h_ref[l]                       # (bp, hp) f32
            gi = gi_ref[rows, :]               # (bp, 3*hp)
            gh = jnp.dot(h.astype(mxu_dtype), whh, preferred_element_type=jnp.float32)
            r = jax.nn.sigmoid(gi[:, 0:hp] + gh[:, 0:hp])
            z = jax.nn.sigmoid(gi[:, hp:2 * hp] + gh[:, hp:2 * hp])
            n = jnp.tanh(gi[:, 2 * hp:3 * hp] + r * (gh[:, 2 * hp:3 * hp] + bhn))
            h_new = (1.0 - z) * n + z * h
            h_ref[l] = h_new
            if residual:
                h_new = h_new + act_ref[rows, :].astype(jnp.float32)
            act_ref[rows, :] = h_new.astype(mxu_dtype)

    # Fused Linear epilogue (lane-dense Op-wide output block).
    o_ref[...] = (jnp.dot(act_ref[...], fcw_ref[...], preferred_element_type=jnp.float32)
                  + fcb_ref[...]).astype(o_ref.dtype)


def _lstm_stack_kernel(x_ref, wih0_ref, wihr_ref, whh_ref, b_ref, fcw_ref, fcb_ref,
                       o_ref, act_ref, gi_ref, h_ref, c_ref,
                       *, t_block, bp, hp, n_layers, res_start, mxu_dtype):
    """Same structure as the GRU kernel; biases are pre-summed (b_ih + b_hh), gate order ifgo."""
    @pl.when(pl.program_id(0) == 0)
    def _init():
        h_ref[...] = jnp.zeros_like(h_ref)
        c_ref[...] = jnp.zeros_like(c_ref)

    for l in range(n_layers):
        whh = whh_ref[l]                       # (hp, 4*hp)
        residual = (l > 0) and (l >= res_start)

        if l == 0:
            gi_ref[...] = jnp.dot(x_ref[...], wih0_ref[...],
                                  preferred_element_type=jnp.float32) + b_ref[0]
        else:
            gi_ref[...] = jnp.dot(act_ref[...], wihr_ref[l - 1],
                                  preferred_element_type=jnp.float32) + b_ref[l]

        for t in range(t_block):
            rows = pl.ds(t * bp, bp)
            h = h_ref[l]
            c = c_ref[l]
            g = gi_ref[rows, :] + jnp.dot(h.astype(mxu_dtype), whh,
                                          preferred_element_type=jnp.float32)
            i = jax.nn.sigmoid(g[:, 0:hp])
            f = jax.nn.sigmoid(g[:, hp:2 * hp])
            gg = jnp.tanh(g[:, 2 * hp:3 * hp])
            o = jax.nn.sigmoid(g[:, 3 * hp:4 * hp])
            c_new = f * c + i * gg
            h_new = o * jnp.tanh(c_new)
            c_ref[l] = c_new
            h_ref[l] = h_new
            if residual:
                h_new = h_new + act_ref[rows, :].astype(jnp.float32)
            act_ref[rows, :] = h_new.astype(mxu_dtype)

    o_ref[...] = (jnp.dot(act_ref[...], fcw_ref[...], preferred_element_type=jnp.float32)
                  + fcb_ref[...]).astype(o_ref.dtype)


# ----------------------------- parameter prep helpers ---------------------------------------


def _pad_gate_cols(w_t, gates, h, hp):
    """(rows, gates*h) -> (rows, gates*hp): each gate block zero-padded to hp lanes."""
    parts = []
    for g in range(gates):
        blk = w_t[:, g * h:(g + 1) * h]
        parts.append(jnp.pad(blk, ((0, 0), (0, hp - h))))
    return jnp.concatenate(parts, axis=1)


# ----------------------------- model wrapper -------------------------------------------------


class SyntheticDataModelArchitecture:
    """JAX/Pallas port of the PyTorch SyntheticDataModelArchitecture forward pass."""

    def __init__(self, model_type, input_size, hidden_size, out_size, rnn_layers,
                 res_layers, bias=True, batch_first=True, dropout=0.0,
                 bidirectional=False, p=0.1, time_block=16,
                 mxu_dtype=jnp.bfloat16, key=None):
        assert model_type in ("GRU", "LSTM"), "Not valid architecture"
        assert batch_first and not bidirectional, "only batch_first unidirectional supported"
        self.model_type = model_type
        self.input_size = input_size
        self.hidden_size = hidden_size
        self.out_size = out_size
        self.rnn_layers = rnn_layers
        self.res_layers = res_layers
        self.p = p                      # dropout prob (identity at inference)
        # For throughput runs pick time_block so t_block*8 is a multiple of 256 (128 on v5e)
        # to saturate the MXU in the hoisted projection / FC epilogue.
        self.time_block = max(1, int(time_block))
        self.mxu_dtype = mxu_dtype

        gates = 3 if model_type == "GRU" else 4
        self.gates = gates
        self.hp = _round_up(hidden_size, 128)                 # lane-aligned hidden width
        self.dcom = _round_up(input_size, 128)                # lane-aligned layer-0 input width
        self.op = _round_up(out_size, 128)                    # lane-aligned FC output width

        # VMEM budget: ~75% of the chip's VMEM (≈48 MiB on v7x, ≈96 MiB on v5e/v6e).
        try:
            vmem_cap = int(pltpu.get_tpu_info().vmem_capacity_bytes)
        except Exception:
            vmem_cap = 64 * 1024 * 1024
        self.vmem_limit_bytes = min(int(vmem_cap * 3 // 4), 100 * 1024 * 1024)

        if key is None:
            key = jax.random.PRNGKey(0)
        bound = 1.0 / float(hidden_size) ** 0.5

        wih0 = None
        wihr_l, whh_l, bgi_l, bhn_l, b_l = [], [], [], [], []
        for l in range(rnn_layers):
            d_in = input_size if l == 0 else hidden_size
            key, k1, k2, k3, k4 = jax.random.split(key, 5)
            wih = jax.random.uniform(k1, (gates * hidden_size, d_in), jnp.float32, -bound, bound)
            whh = jax.random.uniform(k2, (gates * hidden_size, hidden_size), jnp.float32,
                                     -bound, bound)
            bih = jax.random.uniform(k3, (gates * hidden_size,), jnp.float32, -bound, bound)
            bhh = jax.random.uniform(k4, (gates * hidden_size,), jnp.float32, -bound, bound)
            if not bias:
                bih = jnp.zeros_like(bih)
                bhh = jnp.zeros_like(bhh)

            wih_t = _pad_gate_cols(wih.T, gates, hidden_size, self.hp)   # (d_in, gates*hp)
            whh_t = _pad_gate_cols(whh.T, gates, hidden_size, self.hp)   # (H, gates*hp)
            whh_t = jnp.pad(whh_t, ((0, self.hp - hidden_size), (0, 0)))  # (hp, gates*hp)
            bih_p = _pad_gate_cols(bih[None, :], gates, hidden_size, self.hp)  # (1, gates*hp)
            bhh_p = _pad_gate_cols(bhh[None, :], gates, hidden_size, self.hp)

            if l == 0:
                wih0 = jnp.pad(wih_t, ((0, self.dcom - d_in), (0, 0)))   # (Dcom, gates*hp)
            else:
                wihr_l.append(jnp.pad(wih_t, ((0, self.hp - d_in), (0, 0))))  # (hp, gates*hp)
            whh_l.append(whh_t)

            if model_type == "GRU":
                # Fold r/z hidden biases into the hoisted gi bias; keep b_hn separate
                # (it must sit inside r*(.)).
                bgi_l.append(bih_p + jnp.concatenate(
                    [bhh_p[:, :2 * self.hp], jnp.zeros((1, self.hp), jnp.float32)], axis=1))
                bhn_l.append(bhh_p[:, 2 * self.hp:3 * self.hp])
            else:
                b_l.append(bih_p + bhh_p)   # LSTM biases always appear summed

        self.wih0 = wih0.astype(mxu_dtype)                    # (Dcom, gates*hp)
        if rnn_layers > 1:
            self.wih_rest = jnp.stack(wihr_l).astype(mxu_dtype)   # (L-1, hp, gates*hp)
        else:
            self.wih_rest = jnp.zeros((1, self.hp, gates * self.hp), mxu_dtype)  # unused
        self.whh_all = jnp.stack(whh_l).astype(mxu_dtype)     # (L, hp, gates*hp)
        if model_type == "GRU":
            self.bgi_all = jnp.stack(bgi_l)                   # (L, 1, gates*hp) f32
            self.bhn_all = jnp.stack(bhn_l)                   # (L, 1, hp) f32
        else:
            self.b_all = jnp.stack(b_l)                       # (L, 1, gates*hp) f32

        key, kfw, kfb = jax.random.split(key, 3)
        fb = 1.0 / float(hidden_size) ** 0.5
        fc_w = jax.random.uniform(kfw, (out_size, hidden_size), jnp.float32, -fb, fb)
        fc_b = jax.random.uniform(kfb, (out_size,), jnp.float32, -fb, fb)
        self.fcw_t = jnp.pad(fc_w.T, ((0, self.hp - hidden_size),
                                      (0, self.op - out_size))).astype(mxu_dtype)  # (hp, Op)
        self.fcb = jnp.pad(fc_b, (0, self.op - out_size))[None, :]                 # (1, Op) f32

    # ------------------------------------------------------------------------------------

    def _forward(self, x2d, n_chunks, rows_blk, bp, t_block, single_buffer):
        L, G, Hp, Dcom, Op = self.rnn_layers, self.gates, self.hp, self.dcom, self.op
        Lr = max(L - 1, 1)
        res_start = max(0, L - self.res_layers)

        c3 = lambda t: (0, 0, 0)
        c2 = lambda t: (0, 0)
        wspec = functools.partial(_weight_spec, single_buffer=single_buffer)

        in_specs = [
            pl.BlockSpec((rows_blk, Dcom), lambda t: (t, 0)),   # x chunk (pipelined)
            wspec((Dcom, G * Hp), c2),                          # layer-0 W_ih (resident)
            wspec((Lr, Hp, G * Hp), c3),                        # layers>0 W_ih (resident)
            wspec((L, Hp, G * Hp), c3),                         # W_hh (resident)
        ]
        scratch = [
            pltpu.VMEM((rows_blk, Hp), self.mxu_dtype),         # inter-layer activations (bf16)
            pltpu.VMEM((rows_blk, G * Hp), jnp.float32),        # hoisted input projection
            pltpu.VMEM((L, bp, Hp), jnp.float32),               # h carry (all layers)
        ]

        if self.model_type == "GRU":
            kernel = functools.partial(
                _gru_stack_kernel, t_block=t_block, bp=bp, hp=Hp,
                n_layers=L, res_start=res_start, mxu_dtype=self.mxu_dtype)
            inputs = (x2d, self.wih0, self.wih_rest, self.whh_all,
                      self.bgi_all, self.bhn_all, self.fcw_t, self.fcb)
            in_specs += [wspec((L, 1, G * Hp), c3), wspec((L, 1, Hp), c3)]
        else:
            kernel = functools.partial(
                _lstm_stack_kernel, t_block=t_block, bp=bp, hp=Hp,
                n_layers=L, res_start=res_start, mxu_dtype=self.mxu_dtype)
            inputs = (x2d, self.wih0, self.wih_rest, self.whh_all, self.b_all,
                      self.fcw_t, self.fcb)
            in_specs += [wspec((L, 1, G * Hp), c3)]
            scratch = scratch + [pltpu.VMEM((L, bp, Hp), jnp.float32)]   # c carry
        in_specs += [wspec((Hp, Op), c2), wspec((1, Op), c2)]            # fc weight / bias

        return pl.pallas_call(
            kernel,
            out_shape=jax.ShapeDtypeStruct((n_chunks * rows_blk, Op), jnp.float32),
            grid=(n_chunks,),
            in_specs=in_specs,
            out_specs=pl.BlockSpec((rows_blk, Op), lambda t: (t, 0)),
            scratch_shapes=scratch,
            compiler_params=pltpu.CompilerParams(
                dimension_semantics=("arbitrary",),            # sequential time recurrence
                vmem_limit_bytes=self.vmem_limit_bytes),
        )(*inputs)

    def __call__(self, x):
        global _SINGLE_BUFFER_WEIGHTS
        # x: (B, T, input_size), batch_first like the PyTorch module.
        B, T, d_in = x.shape
        assert d_in == self.input_size

        Bp = _round_up(B, 8)                     # sublane-aligned batch (review item #1)
        t_block = max(1, int(self.time_block))
        Tp = _round_up(T, t_block)
        n_chunks = Tp // t_block
        rows_blk = t_block * Bp

        # Pad batch / time / features and flatten to 2D rows ordered (t, b) so the hoisted
        # input projection is one dense lane-and-sublane-aligned matmul per chunk.
        xp = jnp.pad(x.astype(jnp.float32),
                     ((0, Bp - B), (0, Tp - T), (0, self.dcom - d_in)))
        x2d = jnp.transpose(xp, (1, 0, 2)).reshape(Tp * Bp, self.dcom).astype(self.mxu_dtype)

        if _SINGLE_BUFFER_WEIGHTS is None:
            # Probe once whether single-buffered resident weights (pl.Buffered(1)) lower on
            # this Pallas version; fall back to default double-buffering otherwise.
            try:
                y2d = self._forward(x2d, n_chunks, rows_blk, Bp, t_block, single_buffer=True)
                jax.block_until_ready(y2d)
                _SINGLE_BUFFER_WEIGHTS = True
            except Exception:
                _SINGLE_BUFFER_WEIGHTS = False
                y2d = self._forward(x2d, n_chunks, rows_blk, Bp, t_block, single_buffer=False)
        else:
            y2d = self._forward(x2d, n_chunks, rows_blk, Bp, t_block,
                                single_buffer=_SINGLE_BUFFER_WEIGHTS)

        # dropout(p): identity at inference; strip batch/time/lane padding outside the kernel.
        y = y2d.reshape(Tp, Bp, self.op).transpose(1, 0, 2)[:B, :T, :self.out_size]
        return y


# ----------------------------- demo / smoke test ---------------------------------------------

if __name__ == "__main__":
    key = jax.random.PRNGKey(0)
    k_param, k_x = jax.random.split(key)

    B, T = 2, 8
    input_size, hidden_size, out_size = 16, 32, 8
    rnn_layers, res_layers = 2, 1

    x = jax.random.normal(k_x, (B, T, input_size), dtype=jnp.float32)

    # GRU path (time_block=4 -> 2 time chunks, exercising the VMEM-carried h state).
    gru = SyntheticDataModelArchitecture(
        "GRU", input_size, hidden_size, out_size,
        rnn_layers=rnn_layers, res_layers=res_layers, p=0.1,
        time_block=4, key=k_param)
    y_gru = gru(x)
    jax.block_until_ready(y_gru)
    assert y_gru.shape == (B, T, out_size)
    assert y_gru.dtype == jnp.float32
    assert bool(jnp.all(jnp.isfinite(y_gru)))

    # LSTM path.
    lstm = SyntheticDataModelArchitecture(
        "LSTM", input_size, hidden_size, out_size,
        rnn_layers=rnn_layers, res_layers=res_layers, p=0.1,
        time_block=4, key=k_param)
    y_lstm = lstm(x)
    jax.block_until_ready(y_lstm)
    assert y_lstm.shape == (B, T, out_size)
    assert y_lstm.dtype == jnp.float32
    assert bool(jnp.all(jnp.isfinite(y_lstm)))

    print("KERNEL_OK")
</pallas_src>

<mosaic_0001>
module attributes {stable_mosaic.version = 11 : i64} {
  func.func @_gru_stack_kernel(%arg0: i32, %arg1: memref<32x128xbf16, #tpu.memory_space<vmem>>, %arg2: memref<128x384xbf16, #tpu.memory_space<vmem>>, %arg3: memref<1x128x384xbf16, #tpu.memory_space<vmem>>, %arg4: memref<2x128x384xbf16, #tpu.memory_space<vmem>>, %arg5: memref<2x1x384xf32, #tpu.memory_space<vmem>>, %arg6: memref<2x1x128xf32, #tpu.memory_space<vmem>>, %arg7: memref<128x128xbf16, #tpu.memory_space<vmem>>, %arg8: memref<1x128xf32, #tpu.memory_space<vmem>>, %arg9: memref<32x128xf32, #tpu.memory_space<vmem>>, %arg10: memref<32x128xbf16, #tpu.memory_space<vmem>>, %arg11: memref<32x384xf32, #tpu.memory_space<vmem>>, %arg12: memref<2x8x128xf32, #tpu.memory_space<vmem>>) attributes {dimension_semantics = [#tpu.dimension_semantics<arbitrary>], iteration_bounds = array<i64: 2>, scalar_prefetch = 0 : i64, scratch_operands = 3 : i64, tpu.core_type = #tpu.core_type<tc>, window_params = [{transform_indices = @transform_0, window_bounds = array<i64: 32, 128>}, {pipeline_mode = #tpu.pipeline_mode<synchronous>, transform_indices = @transform_1, window_bounds = array<i64: 128, 384>}, {pipeline_mode = #tpu.pipeline_mode<synchronous>, transform_indices = @transform_2, window_bounds = array<i64: 1, 128, 384>}, {pipeline_mode = #tpu.pipeline_mode<synchronous>, transform_indices = @transform_3, window_bounds = array<i64: 2, 128, 384>}, {pipeline_mode = #tpu.pipeline_mode<synchronous>, transform_indices = @transform_4, window_bounds = array<i64: 2, 1, 384>}, {pipeline_mode = #tpu.pipeline_mode<synchronous>, transform_indices = @transform_5, window_bounds = array<i64: 2, 1, 128>}, {pipeline_mode = #tpu.pipeline_mode<synchronous>, transform_indices = @transform_6, window_bounds = array<i64: 128, 128>}, {pipeline_mode = #tpu.pipeline_mode<synchronous>, transform_indices = @transform_7, window_bounds = array<i64: 1, 128>}, {transform_indices = @transform_8, window_bounds = array<i64: 32, 128>}]} {
    %c0_i32 = arith.constant 0 : i32
    %0 = arith.cmpi eq, %arg0, %c0_i32 : i32
    %1 = arith.extui %0 : i1 to i32
    %c0_i32_0 = arith.constant 0 : i32
    %2 = arith.cmpi ne, %1, %c0_i32_0 : i32
    scf.if %2 {
      %cst_157 = arith.constant 0.000000e+00 : f32
      %351 = vector.broadcast %cst_157 : f32 to vector<2x8x128xf32>
      %c0_158 = arith.constant 0 : index
      %c0_159 = arith.constant 0 : index
      %c0_160 = arith.constant 0 : index
      %352 = vector.load %arg12[%c0_158, %c0_159, %c0_160] : memref<2x8x128xf32, #tpu.memory_space<vmem>>, vector<2x8x128xf32>
      tpu.vector_store %arg12[%c0_158, %c0_159, %c0_160], %351 {strides = array<i32>} : memref<2x8x128xf32, #tpu.memory_space<vmem>>, vector<2x8x128xf32>,
    } else {
    }
    %c0 = arith.constant 0 : index
    %c0_1 = arith.constant 0 : index
    %c0_2 = arith.constant 0 : index
    %3 = vector.load %arg4[%c0, %c0_1, %c0_2] : memref<2x128x384xbf16, #tpu.memory_space<vmem>>, vector<1x128x384xbf16>
    %4 = vector.shape_cast %3 : vector<1x128x384xbf16> to vector<128x384xbf16>
    %c0_3 = arith.constant 0 : index
    %c0_4 = arith.constant 0 : index
    %c0_5 = arith.constant 0 : index
    %5 = vector.load %arg6[%c0_3, %c0_4, %c0_5] : memref<2x1x128xf32, #tpu.memory_space<vmem>>, vector<1x1x128xf32>
    %6 = vector.shape_cast %5 : vector<1x1x128xf32> to vector<1x128xf32>
    %c0_6 = arith.constant 0 : index
    %c0_7 = arith.constant 0 : index
    %7 = vector.load %arg1[%c0_6, %c0_7] : memref<32x128xbf16, #tpu.memory_space<vmem>>, vector<32x128xbf16>
    %c0_8 = arith.constant 0 : index
    %c0_9 = arith.constant 0 : index
    %8 = vector.load %arg2[%c0_8, %c0_9] : memref<128x384xbf16, #tpu.memory_space<vmem>>, vector<128x384xbf16>
    %cst = arith.constant dense<0.000000e+00> : vector<32x384xf32>
    %9 = tpu.matmul %7, %8, %cst {dimension_numbers = #tpu.dot_dimension_numbers<[1], [0], [0], [1], [0, 0, 1, 1], [], []>} : vector<32x128xbf16>, vector<128x384xbf16>, vector<32x384xf32> -> vector<32x384xf32>
    %c0_10 = arith.constant 0 : index
    %c0_11 = arith.constant 0 : index
    %c0_12 = arith.constant 0 : index
    %10 = vector.load %arg5[%c0_10, %c0_11, %c0_12] : memref<2x1x384xf32, #tpu.memory_space<vmem>>, vector<1x1x384xf32>
    %11 = vector.shape_cast %10 : vector<1x1x384xf32> to vector<1x384xf32>
    %12 = vector.broadcast %11 : vector<1x384xf32> to vector<32x384xf32>
    %13 = arith.addf %9, %12 : vector<32x384xf32>
    %c0_13 = arith.constant 0 : index
    %c0_14 = arith.constant 0 : index
    %14 = vector.load %arg11[%c0_13, %c0_14] : memref<32x384xf32, #tpu.memory_space<vmem>>, vector<32x384xf32>
    tpu.vector_store %arg11[%c0_13, %c0_14], %13 {strides = array<i32>} : memref<32x384xf32, #tpu.memory_space<vmem>>, vector<32x384xf32>,
    %c0_15 = arith.constant 0 : index
    %c0_16 = arith.constant 0 : index
    %c0_17 = arith.constant 0 : index
    %15 = vector.load %arg12[%c0_15, %c0_16, %c0_17] : memref<2x8x128xf32, #tpu.memory_space<vmem>>, vector<1x8x128xf32>
    %16 = vector.shape_cast %15 : vector<1x8x128xf32> to vector<8x128xf32>
    %c0_18 = arith.constant 0 : index
    %c0_19 = arith.constant 0 : index
    %17 = vector.load %arg11[%c0_18, %c0_19] : memref<32x384xf32, #tpu.memory_space<vmem>>, vector<8x384xf32>
    %18 = arith.truncf %16 : vector<8x128xf32> to vector<8x128xbf16>
    %cst_20 = arith.constant dense<0.000000e+00> : vector<8x384xf32>
    %19 = tpu.matmul %18, %4, %cst_20 {dimension_numbers = #tpu.dot_dimension_numbers<[1], [0], [0], [1], [0, 0, 1, 1], [], []>} : vector<8x128xbf16>, vector<128x384xbf16>, vector<8x384xf32> -> vector<8x384xf32>
    %20 = vector.extract_strided_slice %17 {offsets = [0, 0], sizes = [8, 128], strides = [1, 1]} : vector<8x384xf32> to vector<8x128xf32>
    %21 = vector.extract_strided_slice %19 {offsets = [0, 0], sizes = [8, 128], strides = [1, 1]} : vector<8x384xf32> to vector<8x128xf32>
    %22 = arith.addf %20, %21 : vector<8x128xf32>
    %23 = arith.negf %22 : vector<8x128xf32>
    %24 = math.exp %23 : vector<8x128xf32>
    %cst_21 = arith.constant 1.000000e+00 : f32
    %25 = vector.broadcast %cst_21 : f32 to vector<8x128xf32>
    %26 = arith.addf %25, %24 : vector<8x128xf32>
    %27 = arith.divf %25, %26 : vector<8x128xf32>
    %28 = vector.extract_strided_slice %17 {offsets = [0, 128], sizes = [8, 128], strides = [1, 1]} : vector<8x384xf32> to vector<8x128xf32>
    %29 = vector.extract_strided_slice %19 {offsets = [0, 128], sizes = [8, 128], strides = [1, 1]} : vector<8x384xf32> to vector<8x128xf32>
    %30 = arith.addf %28, %29 : vector<8x128xf32>
    %31 = arith.negf %30 : vector<8x128xf32>
    %32 = math.exp %31 : vector<8x128xf32>
    %cst_22 = arith.constant 1.000000e+00 : f32
    %33 = vector.broadcast %cst_22 : f32 to vector<8x128xf32>
    %34 = arith.addf %33, %32 : vector<8x128xf32>
    %35 = arith.divf %33, %34 : vector<8x128xf32>
    %36 = vector.extract_strided_slice %17 {offsets = [0, 256], sizes = [8, 128], strides = [1, 1]} : vector<8x384xf32> to vector<8x128xf32>
    %37 = vector.extract_strided_slice %19 {offsets = [0, 256], sizes = [8, 128], strides = [1, 1]} : vector<8x384xf32> to vector<8x128xf32>
    %38 = vector.broadcast %6 : vector<1x128xf32> to vector<8x128xf32>
    %39 = arith.addf %37, %38 : vector<8x128xf32>
    %40 = arith.mulf %27, %39 : vector<8x128xf32>
    %41 = arith.addf %36, %40 : vector<8x128xf32>
    %42 = math.tanh %41 : vector<8x128xf32>
    %cst_23 = arith.constant 1.000000e+00 : f32
    %43 = vector.broadcast %cst_23 : f32 to vector<8x128xf32>
    %44 = arith.subf %43, %35 : vector<8x128xf32>
    %45 = arith.mulf %44, %42 : vector<8x128xf32>
    %46 = arith.mulf %35, %16 : vector<8x128xf32>
    %47 = arith.addf %45, %46 : vector<8x128xf32>
    %c0_24 = arith.constant 0 : index
    %c0_25 = arith.constant 0 : index
    %c0_26 = arith.constant 0 : index
    %48 = vector.load %arg12[%c0_24, %c0_25, %c0_26] : memref<2x8x128xf32, #tpu.memory_space<vmem>>, vector<1x8x128xf32>
    %49 = vector.shape_cast %48 : vector<1x8x128xf32> to vector<8x128xf32>
    %50 = vector.shape_cast %47 : vector<8x128xf32> to vector<1x8x128xf32>
    tpu.vector_store %arg12[%c0_24, %c0_25, %c0_26], %50 {strides = array<i32>} : memref<2x8x128xf32, #tpu.memory_space<vmem>>, vector<1x8x128xf32>,
    %51 = arith.truncf %47 : vector<8x128xf32> to vector<8x128xbf16>
    %c0_27 = arith.constant 0 : index
    %c0_28 = arith.constant 0 : index
    %52 = vector.load %arg10[%c0_27, %c0_28] : memref<32x128xbf16, #tpu.memory_space<vmem>>, vector<8x128xbf16>
    tpu.vector_store %arg10[%c0_27, %c0_28], %51 {strides = array<i32>} : memref<32x128xbf16, #tpu.memory_space<vmem>>, vector<8x128xbf16>,
    %c0_29 = arith.constant 0 : index
    %c0_30 = arith.constant 0 : index
    %c0_31 = arith.constant 0 : index
    %53 = vector.load %arg12[%c0_29, %c0_30, %c0_31] : memref<2x8x128xf32, #tpu.memory_space<vmem>>, vector<1x8x128xf32>
    %54 = vector.shape_cast %53 : vector<1x8x128xf32> to vector<8x128xf32>
    %c8 = arith.constant 8 : index
    %c0_32 = arith.constant 0 : index
    %55 = vector.load %arg11[%c8, %c0_32] : memref<32x384xf32, #tpu.memory_space<vmem>>, vector<8x384xf32>
    %56 = arith.truncf %54 : vector<8x128xf32> to vector<8x128xbf16>
    %cst_33 = arith.constant dense<0.000000e+00> : vector<8x384xf32>
    %57 = tpu.matmul %56, %4, %cst_33 {dimension_numbers = #tpu.dot_dimension_numbers<[1], [0], [0], [1], [0, 0, 1, 1], [], []>} : vector<8x128xbf16>, vector<128x384xbf16>, vector<8x384xf32> -> vector<8x384xf32>
    %58 = vector.extract_strided_slice %55 {offsets = [0, 0], sizes = [8, 128], strides = [1, 1]} : vector<8x384xf32> to vector<8x128xf32>
    %59 = vector.extract_strided_slice %57 {offsets = [0, 0], sizes = [8, 128], strides = [1, 1]} : vector<8x384xf32> to vector<8x128xf32>
    %60 = arith.addf %58, %59 : vector<8x128xf32>
    %61 = arith.negf %60 : vector<8x128xf32>
    %62 = math.exp %61 : vector<8x128xf32>
    %cst_34 = arith.constant 1.000000e+00 : f32
    %63 = vector.broadcast %cst_34 : f32 to vector<8x128xf32>
    %64 = arith.addf %63, %62 : vector<8x128xf32>
    %65 = arith.divf %63, %64 : vector<8x128xf32>
    %66 = vector.extract_strided_slice %55 {offsets = [0, 128], sizes = [8, 128], strides = [1, 1]} : vector<8x384xf32> to vector<8x128xf32>
    %67 = vector.extract_strided_slice %57 {offsets = [0, 128], sizes = [8, 128], strides = [1, 1]} : vector<8x384xf32> to vector<8x128xf32>
    %68 = arith.addf %66, %67 : vector<8x128xf32>
    %69 = arith.negf %68 : vector<8x128xf32>
    %70 = math.exp %69 : vector<8x128xf32>
    %cst_35 = arith.constant 1.000000e+00 : f32
    %71 = vector.broadcast %cst_35 : f32 to vector<8x128xf32>
    %72 = arith.addf %71, %70 : vector<8x128xf32>
    %73 = arith.divf %71, %72 : vector<8x128xf32>
    %74 = vector.extract_strided_slice %55 {offsets = [0, 256], sizes = [8, 128], strides = [1, 1]} : vector<8x384xf32> to vector<8x128xf32>
    %75 = vector.extract_strided_slice %57 {offsets = [0, 256], sizes = [8, 128], strides = [1, 1]} : vector<8x384xf32> to vector<8x128xf32>
    %76 = vector.broadcast %6 : vector<1x128xf32> to vector<8x128xf32>
    %77 = arith.addf %75, %76 : vector<8x128xf32>
    %78 = arith.mulf %65, %77 : vector<8x128xf32>
    %79 = arith.addf %74, %78 : vector<8x128xf32>
    %80 = math.tanh %79 : vector<8x128xf32>
    %cst_36 = arith.constant 1.000000e+00 : f32
    %81 = vector.broadcast %cst_36 : f32 to vector<8x128xf32>
    %82 = arith.subf %81, %73 : vector<8x128xf32>
    %83 = arith.mulf %82, %80 : vector<8x128xf32>
    %84 = arith.mulf %73, %54 : vector<8x128xf32>
    %85 = arith.addf %83, %84 : vector<8x128xf32>
    %c0_37 = arith.constant 0 : index
    %c0_38 = arith.constant 0 : index
    %c0_39 = arith.constant 0 : index
    %86 = vector.load %arg12[%c0_37, %c0_38, %c0_39] : memref<2x8x128xf32, #tpu.memory_space<vmem>>, vector<1x8x128xf32>
    %87 = vector.shape_cast %86 : vector<1x8x128xf32> to vector<8x128xf32>
    %88 = vector.shape_cast %85 : vector<8x128xf32> to vector<1x8x128xf32>
    tpu.vector_store %arg12[%c0_37, %c0_38, %c0_39], %88 {strides = array<i32>} : memref<2x8x128xf32, #tpu.memory_space<vmem>>, vector<1x8x128xf32>,
    %89 = arith.truncf %85 : vector<8x128xf32> to vector<8x128xbf16>
    %c8_40 = arith.constant 8 : index
    %c0_41 = arith.constant 0 : index
    %90 = vector.load %arg10[%c8_40, %c0_41] : memref<32x128xbf16, #tpu.memory_space<vmem>>, vector<8x128xbf16>
    tpu.vector_store %arg10[%c8_40, %c0_41], %89 {strides = array<i32>} : memref<32x128xbf16, #tpu.memory_space<vmem>>, vector<8x128xbf16>,
    %c0_42 = arith.constant 0 : index
    %c0_43 = arith.constant 0 : index
    %c0_44 = arith.constant 0 : index
    %91 = vector.load %arg12[%c0_42, %c0_43, %c0_44] : memref<2x8x128xf32, #tpu.memory_space<vmem>>, vector<1x8x128xf32>
    %92 = vector.shape_cast %91 : vector<1x8x128xf32> to vector<8x128xf32>
    %c16 = arith.constant 16 : index
    %c0_45 = arith.constant 0 : index
    %93 = vector.load %arg11[%c16, %c0_45] : memref<32x384xf32, #tpu.memory_space<vmem>>, vector<8x384xf32>
    %94 = arith.truncf %92 : vector<8x128xf32> to vector<8x128xbf16>
    %cst_46 = arith.constant dense<0.000000e+00> : vector<8x384xf32>
    %95 = tpu.matmul %94, %4, %cst_46 {dimension_numbers = #tpu.dot_dimension_numbers<[1], [0], [0], [1], [0, 0, 1, 1], [], []>} : vector<8x128xbf16>, vector<128x384xbf16>, vector<8x384xf32> -> vector<8x384xf32>
    %96 = vector.extract_strided_slice %93 {offsets = [0, 0], sizes = [8, 128], strides = [1, 1]} : vector<8x384xf32> to vector<8x128xf32>
    %97 = vector.extract_strided_slice %95 {offsets = [0, 0], sizes = [8, 128], strides = [1, 1]} : vector<8x384xf32> to vector<8x128xf32>
    %98 = arith.addf %96, %97 : vector<8x128xf32>
    %99 = arith.negf %98 : vector<8x128xf32>
    %100 = math.exp %99 : vector<8x128xf32>
    %cst_47 = arith.constant 1.000000e+00 : f32
    %101 = vector.broadcast %cst_47 : f32 to vector<8x128xf32>
    %102 = arith.addf %101, %100 : vector<8x128xf32>
    %103 = arith.divf %101, %102 : vector<8x128xf32>
    %104 = vector.extract_strided_slice %93 {offsets = [0, 128], sizes = [8, 128], strides = [1, 1]} : vector<8x384xf32> to vector<8x128xf32>
    %105 = vector.extract_strided_slice %95 {offsets = [0, 128], sizes = [8, 128], strides = [1, 1]} : vector<8x384xf32> to vector<8x128xf32>
    %106 = arith.addf %104, %105 : vector<8x128xf32>
    %107 = arith.negf %106 : vector<8x128xf32>
    %108 = math.exp %107 : vector<8x128xf32>
    %cst_48 = arith.constant 1.000000e+00 : f32
    %109 = vector.broadcast %cst_48 : f32 to vector<8x128xf32>
    %110 = arith.addf %109, %108 : vector<8x128xf32>
    %111 = arith.divf %109, %110 : vector<8x128xf32>
    %112 = vector.extract_strided_slice %93 {offsets = [0, 256], sizes = [8, 128], strides = [1, 1]} : vector<8x384xf32> to vector<8x128xf32>
    %113 = vector.extract_strided_slice %95 {offsets = [0, 256], sizes = [8, 128], strides = [1, 1]} : vector<8x384xf32> to vector<8x128xf32>
    %114 = vector.broadcast %6 : vector<1x128xf32> to vector<8x128xf32>
    %115 = arith.addf %113, %114 : vector<8x128xf32>
    %116 = arith.mulf %103, %115 : vector<8x128xf32>
    %117 = arith.addf %112, %116 : vector<8x128xf32>
    %118 = math.tanh %117 : vector<8x128xf32>
    %cst_49 = arith.constant 1.000000e+00 : f32
    %119 = vector.broadcast %cst_49 : f32 to vector<8x128xf32>
    %120 = arith.subf %119, %111 : vector<8x128xf32>
    %121 = arith.mulf %120, %118 : vector<8x128xf32>
    %122 = arith.mulf %111, %92 : vector<8x128xf32>
    %123 = arith.addf %121, %122 : vector<8x128xf32>
    %c0_50 = arith.constant 0 : index
    %c0_51 = arith.constant 0 : index
    %c0_52 = arith.constant 0 : index
    %124 = vector.load %arg12[%c0_50, %c0_51, %c0_52] : memref<2x8x128xf32, #tpu.memory_space<vmem>>, vector<1x8x128xf32>
    %125 = vector.shape_cast %124 : vector<1x8x128xf32> to vector<8x128xf32>
    %126 = vector.shape_cast %123 : vector<8x128xf32> to vector<1x8x128xf32>
    tpu.vector_store %arg12[%c0_50, %c0_51, %c0_52], %126 {strides = array<i32>} : memref<2x8x128xf32, #tpu.memory_space<vmem>>, vector<1x8x128xf32>,
    %127 = arith.truncf %123 : vector<8x128xf32> to vector<8x128xbf16>
    %c16_53 = arith.constant 16 : index
    %c0_54 = arith.constant 0 : index
    %128 = vector.load %arg10[%c16_53, %c0_54] : memref<32x128xbf16, #tpu.memory_space<vmem>>, vector<8x128xbf16>
    tpu.vector_store %arg10[%c16_53, %c0_54], %127 {strides = array<i32>} : memref<32x128xbf16, #tpu.memory_space<vmem>>, vector<8x128xbf16>,
    %c0_55 = arith.constant 0 : index
    %c0_56 = arith.constant 0 : index
    %c0_57 = arith.constant 0 : index
    %129 = vector.load %arg12[%c0_55, %c0_56, %c0_57] : memref<2x8x128xf32, #tpu.memory_space<vmem>>, vector<1x8x128xf32>
    %130 = vector.shape_cast %129 : vector<1x8x128xf32> to vector<8x128xf32>
    %c24 = arith.constant 24 : index
    %c0_58 = arith.constant 0 : index
    %131 = vector.load %arg11[%c24, %c0_58] : memref<32x384xf32, #tpu.memory_space<vmem>>, vector<8x384xf32>
    %132 = arith.truncf %130 : vector<8x128xf32> to vector<8x128xbf16>
    %cst_59 = arith.constant dense<0.000000e+00> : vector<8x384xf32>
    %133 = tpu.matmul %132, %4, %cst_59 {dimension_numbers = #tpu.dot_dimension_numbers<[1], [0], [0], [1], [0, 0, 1, 1], [], []>} : vector<8x128xbf16>, vector<128x384xbf16>, vector<8x384xf32> -> vector<8x384xf32>
    %134 = vector.extract_strided_slice %131 {offsets = [0, 0], sizes = [8, 128], strides = [1, 1]} : vector<8x384xf32> to vector<8x128xf32>
    %135 = vector.extract_strided_slice %133 {offsets = [0, 0], sizes = [8, 128], strides = [1, 1]} : vector<8x384xf32> to vector<8x128xf32>
    %136 = arith.addf %134, %135 : vector<8x128xf32>
    %137 = arith.negf %136 : vector<8x128xf32>
    %138 = math.exp %137 : vector<8x128xf32>
    %cst_60 = arith.constant 1.000000e+00 : f32
    %139 = vector.broadcast %cst_60 : f32 to vector<8x128xf32>
    %140 = arith.addf %139, %138 : vector<8x128xf32>
    %141 = arith.divf %139, %140 : vector<8x128xf32>
    %142 = vector.extract_strided_slice %131 {offsets = [0, 128], sizes = [8, 128], strides = [1, 1]} : vector<8x384xf32> to vector<8x128xf32>
    %143 = vector.extract_strided_slice %133 {offsets = [0, 128], sizes = [8, 128], strides = [1, 1]} : vector<8x384xf32> to vector<8x128xf32>
    %144 = arith.addf %142, %143 : vector<8x128xf32>
    %145 = arith.negf %144 : vector<8x128xf32>
    %146 = math.exp %145 : vector<8x128xf32>
    %cst_61 = arith.constant 1.000000e+00 : f32
    %147 = vector.broadcast %cst_61 : f32 to vector<8x128xf32>
    %148 = arith.addf %147, %146 : vector<8x128xf32>
    %149 = arith.divf %147, %148 : vector<8x128xf32>
    %150 = vector.extract_strided_slice %131 {offsets = [0, 256], sizes = [8, 128], strides = [1, 1]} : vector<8x384xf32> to vector<8x128xf32>
    %151 = vector.extract_strided_slice %133 {offsets = [0, 256], sizes = [8, 128], strides = [1, 1]} : vector<8x384xf32> to vector<8x128xf32>
    %152 = vector.broadcast %6 : vector<1x128xf32> to vector<8x128xf32>
    %153 = arith.addf %151, %152 : vector<8x128xf32>
    %154 = arith.mulf %141, %153 : vector<8x128xf32>
    %155 = arith.addf %150, %154 : vector<8x128xf32>
    %156 = math.tanh %155 : vector<8x128xf32>
    %cst_62 = arith.constant 1.000000e+00 : f32
    %157 = vector.broadcast %cst_62 : f32 to vector<8x128xf32>
    %158 = arith.subf %157, %149 : vector<8x128xf32>
    %159 = arith.mulf %158, %156 : vector<8x128xf32>
    %160 = arith.mulf %149, %130 : vector<8x128xf32>
    %161 = arith.addf %159, %160 : vector<8x128xf32>
    %c0_63 = arith.constant 0 : index
    %c0_64 = arith.constant 0 : index
    %c0_65 = arith.constant 0 : index
    %162 = vector.load %arg12[%c0_63, %c0_64, %c0_65] : memref<2x8x128xf32, #tpu.memory_space<vmem>>, vector<1x8x128xf32>
    %163 = vector.shape_cast %162 : vector<1x8x128xf32> to vector<8x128xf32>
    %164 = vector.shape_cast %161 : vector<8x128xf32> to vector<1x8x128xf32>
    tpu.vector_store %arg12[%c0_63, %c0_64, %c0_65], %164 {strides = array<i32>} : memref<2x8x128xf32, #tpu.memory_space<vmem>>, vector<1x8x128xf32>,
    %165 = arith.truncf %161 : vector<8x128xf32> to vector<8x128xbf16>
    %c24_66 = arith.constant 24 : index
    %c0_67 = arith.constant 0 : index
    %166 = vector.load %arg10[%c24_66, %c0_67] : memref<32x128xbf16, #tpu.memory_space<vmem>>, vector<8x128xbf16>
    tpu.vector_store %arg10[%c24_66, %c0_67], %165 {strides = array<i32>} : memref<32x128xbf16, #tpu.memory_space<vmem>>, vector<8x128xbf16>,
    %c1 = arith.constant 1 : index
    %c0_68 = arith.constant 0 : index
    %c0_69 = arith.constant 0 : index
    %167 = vector.load %arg4[%c1, %c0_68, %c0_69] : memref<2x128x384xbf16, #tpu.memory_space<vmem>>, vector<1x128x384xbf16>
    %168 = vector.shape_cast %167 : vector<1x128x384xbf16> to vector<128x384xbf16>
    %c1_70 = arith.constant 1 : index
    %c0_71 = arith.constant 0 : index
    %c0_72 = arith.constant 0 : index
    %169 = vector.load %arg6[%c1_70, %c0_71, %c0_72] : memref<2x1x128xf32, #tpu.memory_space<vmem>>, vector<1x1x128xf32>
    %170 = vector.shape_cast %169 : vector<1x1x128xf32> to vector<1x128xf32>
    %c0_73 = arith.constant 0 : index
    %c0_74 = arith.constant 0 : index
    %171 = vector.load %arg10[%c0_73, %c0_74] : memref<32x128xbf16, #tpu.memory_space<vmem>>, vector<32x128xbf16>
    %c0_75 = arith.constant 0 : index
    %c0_76 = arith.constant 0 : index
    %c0_77 = arith.constant 0 : index
    %172 = vector.load %arg3[%c0_75, %c0_76, %c0_77] : memref<1x128x384xbf16, #tpu.memory_space<vmem>>, vector<1x128x384xbf16>
    %173 = vector.shape_cast %172 : vector<1x128x384xbf16> to vector<128x384xbf16>
    %cst_78 = arith.constant dense<0.000000e+00> : vector<32x384xf32>
    %174 = tpu.matmul %171, %173, %cst_78 {dimension_numbers = #tpu.dot_dimension_numbers<[1], [0], [0], [1], [0, 0, 1, 1], [], []>} : vector<32x128xbf16>, vector<128x384xbf16>, vector<32x384xf32> -> vector<32x384xf32>
    %c1_79 = arith.constant 1 : index
    %c0_80 = arith.constant 0 : index
    %c0_81 = arith.constant 0 : index
    %175 = vector.load %arg5[%c1_79, %c0_80, %c0_81] : memref<2x1x384xf32, #tpu.memory_space<vmem>>, vector<1x1x384xf32>
    %176 = vector.shape_cast %175 : vector<1x1x384xf32> to vector<1x384xf32>
    %177 = vector.broadcast %176 : vector<1x384xf32> to vector<32x384xf32>
    %178 = arith.addf %174, %177 : vector<32x384xf32>
    %c0_82 = arith.constant 0 : index
    %c0_83 = arith.constant 0 : index
    %179 = vector.load %arg11[%c0_82, %c0_83] : memref<32x384xf32, #tpu.memory_space<vmem>>, vector<32x384xf32>
    tpu.vector_store %arg11[%c0_82, %c0_83], %178 {strides = array<i32>} : memref<32x384xf32, #tpu.memory_space<vmem>>, vector<32x384xf32>,
    %c1_84 = arith.constant 1 : index
    %c0_85 = arith.constant 0 : index
    %c0_86 = arith.constant 0 : index
    %180 = vector.load %arg12[%c1_84, %c0_85, %c0_86] : memref<2x8x128xf32, #tpu.memory_space<vmem>>, vector<1x8x128xf32>
    %181 = vector.shape_cast %180 : vector<1x8x128xf32> to vector<8x128xf32>
    %c0_87 = arith.constant 0 : index
    %c0_88 = arith.constant 0 : index
    %182 = vector.load %arg11[%c0_87, %c0_88] : memref<32x384xf32, #tpu.memory_space<vmem>>, vector<8x384xf32>
    %183 = arith.truncf %181 : vector<8x128xf32> to vector<8x128xbf16>
    %cst_89 = arith.constant dense<0.000000e+00> : vector<8x384xf32>
    %184 = tpu.matmul %183, %168, %cst_89 {dimension_numbers = #tpu.dot_dimension_numbers<[1], [0], [0], [1], [0, 0, 1, 1], [], []>} : vector<8x128xbf16>, vector<128x384xbf16>, vector<8x384xf32> -> vector<8x384xf32>
    %185 = vector.extract_strided_slice %182 {offsets = [0, 0], sizes = [8, 128], strides = [1, 1]} : vector<8x384xf32> to vector<8x128xf32>
    %186 = vector.extract_strided_slice %184 {offsets = [0, 0], sizes = [8, 128], strides = [1, 1]} : vector<8x384xf32> to vector<8x128xf32>
    %187 = arith.addf %185, %186 : vector<8x128xf32>
    %188 = arith.negf %187 : vector<8x128xf32>
    %189 = math.exp %188 : vector<8x128xf32>
    %cst_90 = arith.constant 1.000000e+00 : f32
    %190 = vector.broadcast %cst_90 : f32 to vector<8x128xf32>
    %191 = arith.addf %190, %189 : vector<8x128xf32>
    %192 = arith.divf %190, %191 : vector<8x128xf32>
    %193 = vector.extract_strided_slice %182 {offsets = [0, 128], sizes = [8, 128], strides = [1, 1]} : vector<8x384xf32> to vector<8x128xf32>
    %194 = vector.extract_strided_slice %184 {offsets = [0, 128], sizes = [8, 128], strides = [1, 1]} : vector<8x384xf32> to vector<8x128xf32>
    %195 = arith.addf %193, %194 : vector<8x128xf32>
    %196 = arith.negf %195 : vector<8x128xf32>
    %197 = math.exp %196 : vector<8x128xf32>
    %cst_91 = arith.constant 1.000000e+00 : f32
    %198 = vector.broadcast %cst_91 : f32 to vector<8x128xf32>
    %199 = arith.addf %198, %197 : vector<8x128xf32>
    %200 = arith.divf %198, %199 : vector<8x128xf32>
    %201 = vector.extract_strided_slice %182 {offsets = [0, 256], sizes = [8, 128], strides = [1, 1]} : vector<8x384xf32> to vector<8x128xf32>
    %202 = vector.extract_strided_slice %184 {offsets = [0, 256], sizes = [8, 128], strides = [1, 1]} : vector<8x384xf32> to vector<8x128xf32>
    %203 = vector.broadcast %170 : vector<1x128xf32> to vector<8x128xf32>
    %204 = arith.addf %202, %203 : vector<8x128xf32>
    %205 = arith.mulf %192, %204 : vector<8x128xf32>
    %206 = arith.addf %201, %205 : vector<8x128xf32>
    %207 = math.tanh %206 : vector<8x128xf32>
    %cst_92 = arith.constant 1.000000e+00 : f32
    %208 = vector.broadcast %cst_92 : f32 to vector<8x128xf32>
    %209 = arith.subf %208, %200 : vector<8x128xf32>
    %210 = arith.mulf %209, %207 : vector<8x128xf32>
    %211 = arith.mulf %200, %181 : vector<8x128xf32>
    %212 = arith.addf %210, %211 : vector<8x128xf32>
    %c1_93 = arith.constant 1 : index
    %c0_94 = arith.constant 0 : index
    %c0_95 = arith.constant 0 : index
    %213 = vector.load %arg12[%c1_93, %c0_94, %c0_95] : memref<2x8x128xf32, #tpu.memory_space<vmem>>, vector<1x8x128xf32>
    %214 = vector.shape_cast %213 : vector<1x8x128xf32> to vector<8x128xf32>
    %215 = vector.shape_cast %212 : vector<8x128xf32> to vector<1x8x128xf32>
    tpu.vector_store %arg12[%c1_93, %c0_94, %c0_95], %215 {strides = array<i32>} : memref<2x8x128xf32, #tpu.memory_space<vmem>>, vector<1x8x128xf32>,
    %c0_96 = arith.constant 0 : index
    %c0_97 = arith.constant 0 : index
    %216 = vector.load %arg10[%c0_96, %c0_97] : memref<32x128xbf16, #tpu.memory_space<vmem>>, vector<8x128xbf16>
    %217 = arith.extf %216 : vector<8x128xbf16> to vector<8x128xf32>
    %218 = arith.addf %212, %217 : vector<8x128xf32>
    %219 = arith.truncf %218 : vector<8x128xf32> to vector<8x128xbf16>
    %c0_98 = arith.constant 0 : index
    %c0_99 = arith.constant 0 : index
    %220 = vector.load %arg10[%c0_98, %c0_99] : memref<32x128xbf16, #tpu.memory_space<vmem>>, vector<8x128xbf16>
    tpu.vector_store %arg10[%c0_98, %c0_99], %219 {strides = array<i32>} : memref<32x128xbf16, #tpu.memory_space<vmem>>, vector<8x128xbf16>,
    %c1_100 = arith.constant 1 : index
    %c0_101 = arith.constant 0 : index
    %c0_102 = arith.constant 0 : index
    %221 = vector.load %arg12[%c1_100, %c0_101, %c0_102] : memref<2x8x128xf32, #tpu.memory_space<vmem>>, vector<1x8x128xf32>
    %222 = vector.shape_cast %221 : vector<1x8x128xf32> to vector<8x128xf32>
    %c8_103 = arith.constant 8 : index
    %c0_104 = arith.constant 0 : index
    %223 = vector.load %arg11[%c8_103, %c0_104] : memref<32x384xf32, #tpu.memory_space<vmem>>, vector<8x384xf32>
    %224 = arith.truncf %222 : vector<8x128xf32> to vector<8x128xbf16>
    %cst_105 = arith.constant dense<0.000000e+00> : vector<8x384xf32>
    %225 = tpu.matmul %224, %168, %cst_105 {dimension_numbers = #tpu.dot_dimension_numbers<[1], [0], [0], [1], [0, 0, 1, 1], [], []>} : vector<8x128xbf16>, vector<128x384xbf16>, vector<8x384xf32> -> vector<8x384xf32>
    %226 = vector.extract_strided_slice %223 {offsets = [0, 0], sizes = [8, 128], strides = [1, 1]} : vector<8x384xf32> to vector<8x128xf32>
    %227 = vector.extract_strided_slice %225 {offsets = [0, 0], sizes = [8, 128], strides = [1, 1]} : vector<8x384xf32> to vector<8x128xf32>
    %228 = arith.addf %226, %227 : vector<8x128xf32>
    %229 = arith.negf %228 : vector<8x128xf32>
    %230 = math.exp %229 : vector<8x128xf32>
    %cst_106 = arith.constant 1.000000e+00 : f32
    %231 = vector.broadcast %cst_106 : f32 to vector<8x128xf32>
    %232 = arith.addf %231, %230 : vector<8x128xf32>
    %233 = arith.divf %231, %232 : vector<8x128xf32>
    %234 = vector.extract_strided_slice %223 {offsets = [0, 128], sizes = [8, 128], strides = [1, 1]} : vector<8x384xf32> to vector<8x128xf32>
    %235 = vector.extract_strided_slice %225 {offsets = [0, 128], sizes = [8, 128], strides = [1, 1]} : vector<8x384xf32> to vector<8x128xf32>
    %236 = arith.addf %234, %235 : vector<8x128xf32>
    %237 = arith.negf %236 : vector<8x128xf32>
    %238 = math.exp %237 : vector<8x128xf32>
    %cst_107 = arith.constant 1.000000e+00 : f32
    %239 = vector.broadcast %cst_107 : f32 to vector<8x128xf32>
    %240 = arith.addf %239, %238 : vector<8x128xf32>
    %241 = arith.divf %239, %240 : vector<8x128xf32>
    %242 = vector.extract_strided_slice %223 {offsets = [0, 256], sizes = [8, 128], strides = [1, 1]} : vector<8x384xf32> to vector<8x128xf32>
    %243 = vector.extract_strided_slice %225 {offsets = [0, 256], sizes = [8, 128], strides = [1, 1]} : vector<8x384xf32> to vector<8x128xf32>
    %244 = vector.broadcast %170 : vector<1x128xf32> to vector<8x128xf32>
    %245 = arith.addf %243, %244 : vector<8x128xf32>
    %246 = arith.mulf %233, %245 : vector<8x128xf32>
    %247 = arith.addf %242, %246 : vector<8x128xf32>
    %248 = math.tanh %247 : vector<8x128xf32>
    %cst_108 = arith.constant 1.000000e+00 : f32
    %249 = vector.broadcast %cst_108 : f32 to vector<8x128xf32>
    %250 = arith.subf %249, %241 : vector<8x128xf32>
    %251 = arith.mulf %250, %248 : vector<8x128xf32>
    %252 = arith.mulf %241, %222 : vector<8x128xf32>
    %253 = arith.addf %251, %252 : vector<8x128xf32>
    %c1_109 = arith.constant 1 : index
    %c0_110 = arith.constant 0 : index
    %c0_111 = arith.constant 0 : index
    %254 = vector.load %arg12[%c1_109, %c0_110, %c0_111] : memref<2x8x128xf32, #tpu.memory_space<vmem>>, vector<1x8x128xf32>
    %255 = vector.shape_cast %254 : vector<1x8x128xf32> to vector<8x128xf32>
    %256 = vector.shape_cast %253 : vector<8x128xf32> to vector<1x8x128xf32>
    tpu.vector_store %arg12[%c1_109, %c0_110, %c0_111], %256 {strides = array<i32>} : memref<2x8x128xf32, #tpu.memory_space<vmem>>, vector<1x8x128xf32>,
    %c8_112 = arith.constant 8 : index
    %c0_113 = arith.constant 0 : index
    %257 = vector.load %arg10[%c8_112, %c0_113] : memref<32x128xbf16, #tpu.memory_space<vmem>>, vector<8x128xbf16>
    %258 = arith.extf %257 : vector<8x128xbf16> to vector<8x128xf32>
    %259 = arith.addf %253, %258 : vector<8x128xf32>
    %260 = arith.truncf %259 : vector<8x128xf32> to vector<8x128xbf16>
    %c8_114 = arith.constant 8 : index
    %c0_115 = arith.constant 0 : index
    %261 = vector.load %arg10[%c8_114, %c0_115] : memref<32x128xbf16, #tpu.memory_space<vmem>>, vector<8x128xbf16>
    tpu.vector_store %arg10[%c8_114, %c0_115], %260 {strides = array<i32>} : memref<32x128xbf16, #tpu.memory_space<vmem>>, vector<8x128xbf16>,
    %c1_116 = arith.constant 1 : index
    %c0_117 = arith.constant 0 : index
    %c0_118 = arith.constant 0 : index
    %262 = vector.load %arg12[%c1_116, %c0_117, %c0_118] : memref<2x8x128xf32, #tpu.memory_space<vmem>>, vector<1x8x128xf32>
    %263 = vector.shape_cast %262 : vector<1x8x128xf32> to vector<8x128xf32>
    %c16_119 = arith.constant 16 : index
    %c0_120 = arith.constant 0 : index
    %264 = vector.load %arg11[%c16_119, %c0_120] : memref<32x384xf32, #tpu.memory_space<vmem>>, vector<8x384xf32>
    %265 = arith.truncf %263 : vector<8x128xf32> to vector<8x128xbf16>
    %cst_121 = arith.constant dense<0.000000e+00> : vector<8x384xf32>
    %266 = tpu.matmul %265, %168, %cst_121 {dimension_numbers = #tpu.dot_dimension_numbers<[1], [0], [0], [1], [0, 0, 1, 1], [], []>} : vector<8x128xbf16>, vector<128x384xbf16>, vector<8x384xf32> -> vector<8x384xf32>
    %267 = vector.extract_strided_slice %264 {offsets = [0, 0], sizes = [8, 128], strides = [1, 1]} : vector<8x384xf32> to vector<8x128xf32>
    %268 = vector.extract_strided_slice %266 {offsets = [0, 0], sizes = [8, 128], strides = [1, 1]} : vector<8x384xf32> to vector<8x128xf32>
    %269 = arith.addf %267, %268 : vector<8x128xf32>
    %270 = arith.negf %269 : vector<8x128xf32>
    %271 = math.exp %270 : vector<8x128xf32>
    %cst_122 = arith.constant 1.000000e+00 : f32
    %272 = vector.broadcast %cst_122 : f32 to vector<8x128xf32>
    %273 = arith.addf %272, %271 : vector<8x128xf32>
    %274 = arith.divf %272, %273 : vector<8x128xf32>
    %275 = vector.extract_strided_slice %264 {offsets = [0, 128], sizes = [8, 128], strides = [1, 1]} : vector<8x384xf32> to vector<8x128xf32>
    %276 = vector.extract_strided_slice %266 {offsets = [0, 128], sizes = [8, 128], strides = [1, 1]} : vector<8x384xf32> to vector<8x128xf32>
    %277 = arith.addf %275, %276 : vector<8x128xf32>
    %278 = arith.negf %277 : vector<8x128xf32>
    %279 = math.exp %278 : vector<8x128xf32>
    %cst_123 = arith.constant 1.000000e+00 : f32
    %280 = vector.broadcast %cst_123 : f32 to vector<8x128xf32>
    %281 = arith.addf %280, %279 : vector<8x128xf32>
    %282 = arith.divf %280, %281 : vector<8x128xf32>
    %283 = vector.extract_strided_slice %264 {offsets = [0, 256], sizes = [8, 128], strides = [1, 1]} : vector<8x384xf32> to vector<8x128xf32>
    %284 = vector.extract_strided_slice %266 {offsets = [0, 256], sizes = [8, 128], strides = [1, 1]} : vector<8x384xf32> to vector<8x128xf32>
    %285 = vector.broadcast %170 : vector<1x128xf32> to vector<8x128xf32>
    %286 = arith.addf %284, %285 : vector<8x128xf32>
    %287 = arith.mulf %274, %286 : vector<8x128xf32>
    %288 = arith.addf %283, %287 : vector<8x128xf32>
    %289 = math.tanh %288 : vector<8x128xf32>
    %cst_124 = arith.constant 1.000000e+00 : f32
    %290 = vector.broadcast %cst_124 : f32 to vector<8x128xf32>
    %291 = arith.subf %290, %282 : vector<8x128xf32>
    %292 = arith.mulf %291, %289 : vector<8x128xf32>
    %293 = arith.mulf %282, %263 : vector<8x128xf32>
    %294 = arith.addf %292, %293 : vector<8x128xf32>
    %c1_125 = arith.constant 1 : index
    %c0_126 = arith.constant 0 : index
    %c0_127 = arith.constant 0 : index
    %295 = vector.load %arg12[%c1_125, %c0_126, %c0_127] : memref<2x8x128xf32, #tpu.memory_space<vmem>>, vector<1x8x128xf32>
    %296 = vector.shape_cast %295 : vector<1x8x128xf32> to vector<8x128xf32>
    %297 = vector.shape_cast %294 : vector<8x128xf32> to vector<1x8x128xf32>
    tpu.vector_store %arg12[%c1_125, %c0_126, %c0_127], %297 {strides = array<i32>} : memref<2x8x128xf32, #tpu.memory_space<vmem>>, vector<1x8x128xf32>,
    %c16_128 = arith.constant 16 : index
    %c0_129 = arith.constant 0 : index
    %298 = vector.load %arg10[%c16_128, %c0_129] : memref<32x128xbf16, #tpu.memory_space<vmem>>, vector<8x128xbf16>
    %299 = arith.extf %298 : vector<8x128xbf16> to vector<8x128xf32>
    %300 = arith.addf %294, %299 : vector<8x128xf32>
    %301 = arith.truncf %300 : vector<8x128xf32> to vector<8x128xbf16>
    %c16_130 = arith.constant 16 : index
    %c0_131 = arith.constant 0 : index
    %302 = vector.load %arg10[%c16_130, %c0_131] : memref<32x128xbf16, #tpu.memory_space<vmem>>, vector<8x128xbf16>
    tpu.vector_store %arg10[%c16_130, %c0_131], %301 {strides = array<i32>} : memref<32x128xbf16, #tpu.memory_space<vmem>>, vector<8x128xbf16>,
    %c1_132 = arith.constant 1 : index
    %c0_133 = arith.constant 0 : index
    %c0_134 = arith.constant 0 : index
    %303 = vector.load %arg12[%c1_132, %c0_133, %c0_134] : memref<2x8x128xf32, #tpu.memory_space<vmem>>, vector<1x8x128xf32>
    %304 = vector.shape_cast %303 : vector<1x8x128xf32> to vector<8x128xf32>
    %c24_135 = arith.constant 24 : index
    %c0_136 = arith.constant 0 : index
    %305 = vector.load %arg11[%c24_135, %c0_136] : memref<32x384xf32, #tpu.memory_space<vmem>>, vector<8x384xf32>
    %306 = arith.truncf %304 : vector<8x128xf32> to vector<8x128xbf16>
    %cst_137 = arith.constant dense<0.000000e+00> : vector<8x384xf32>
    %307 = tpu.matmul %306, %168, %cst_137 {dimension_numbers = #tpu.dot_dimension_numbers<[1], [0], [0], [1], [0, 0, 1, 1], [], []>} : vector<8x128xbf16>, vector<128x384xbf16>, vector<8x384xf32> -> vector<8x384xf32>
    %308 = vector.extract_strided_slice %305 {offsets = [0, 0], sizes = [8, 128], strides = [1, 1]} : vector<8x384xf32> to vector<8x128xf32>
    %309 = vector.extract_strided_slice %307 {offsets = [0, 0], sizes = [8, 128], strides = [1, 1]} : vector<8x384xf32> to vector<8x128xf32>
    %310 = arith.addf %308, %309 : vector<8x128xf32>
    %311 = arith.negf %310 : vector<8x128xf32>
    %312 = math.exp %311 : vector<8x128xf32>
    %cst_138 = arith.constant 1.000000e+00 : f32
    %313 = vector.broadcast %cst_138 : f32 to vector<8x128xf32>
    %314 = arith.addf %313, %312 : vector<8x128xf32>
    %315 = arith.divf %313, %314 : vector<8x128xf32>
    %316 = vector.extract_strided_slice %305 {offsets = [0, 128], sizes = [8, 128], strides = [1, 1]} : vector<8x384xf32> to vector<8x128xf32>
    %317 = vector.extract_strided_slice %307 {offsets = [0, 128], sizes = [8, 128], strides = [1, 1]} : vector<8x384xf32> to vector<8x128xf32>
    %318 = arith.addf %316, %317 : vector<8x128xf32>
    %319 = arith.negf %318 : vector<8x128xf32>
    %320 = math.exp %319 : vector<8x128xf32>
    %cst_139 = arith.constant 1.000000e+00 : f32
    %321 = vector.broadcast %cst_139 : f32 to vector<8x128xf32>
    %322 = arith.addf %321, %320 : vector<8x128xf32>
    %323 = arith.divf %321, %322 : vector<8x128xf32>
    %324 = vector.extract_strided_slice %305 {offsets = [0, 256], sizes = [8, 128], strides = [1, 1]} : vector<8x384xf32> to vector<8x128xf32>
    %325 = vector.extract_strided_slice %307 {offsets = [0, 256], sizes = [8, 128], strides = [1, 1]} : vector<8x384xf32> to vector<8x128xf32>
    %326 = vector.broadcast %170 : vector<1x128xf32> to vector<8x128xf32>
    %327 = arith.addf %325, %326 : vector<8x128xf32>
    %328 = arith.mulf %315, %327 : vector<8x128xf32>
    %329 = arith.addf %324, %328 : vector<8x128xf32>
    %330 = math.tanh %329 : vector<8x128xf32>
    %cst_140 = arith.constant 1.000000e+00 : f32
    %331 = vector.broadcast %cst_140 : f32 to vector<8x128xf32>
    %332 = arith.subf %331, %323 : vector<8x128xf32>
    %333 = arith.mulf %332, %330 : vector<8x128xf32>
    %334 = arith.mulf %323, %304 : vector<8x128xf32>
    %335 = arith.addf %333, %334 : vector<8x128xf32>
    %c1_141 = arith.constant 1 : index
    %c0_142 = arith.constant 0 : index
    %c0_143 = arith.constant 0 : index
    %336 = vector.load %arg12[%c1_141, %c0_142, %c0_143] : memref<2x8x128xf32, #tpu.memory_space<vmem>>, vector<1x8x128xf32>
    %337 = vector.shape_cast %336 : vector<1x8x128xf32> to vector<8x128xf32>
    %338 = vector.shape_cast %335 : vector<8x128xf32> to vector<1x8x128xf32>
    tpu.vector_store %arg12[%c1_141, %c0_142, %c0_143], %338 {strides = array<i32>} : memref<2x8x128xf32, #tpu.memory_space<vmem>>, vector<1x8x128xf32>,
    %c24_144 = arith.constant 24 : index
    %c0_145 = arith.constant 0 : index
    %339 = vector.load %arg10[%c24_144, %c0_145] : memref<32x128xbf16, #tpu.memory_space<vmem>>, vector<8x128xbf16>
    %340 = arith.extf %339 : vector<8x128xbf16> to vector<8x128xf32>
    %341 = arith.addf %335, %340 : vector<8x128xf32>
    %342 = arith.truncf %341 : vector<8x128xf32> to vector<8x128xbf16>
    %c24_146 = arith.constant 24 : index
    %c0_147 = arith.constant 0 : index
    %343 = vector.load %arg10[%c24_146, %c0_147] : memref<32x128xbf16, #tpu.memory_space<vmem>>, vector<8x128xbf16>
    tpu.vector_store %arg10[%c24_146, %c0_147], %342 {strides = array<i32>} : memref<32x128xbf16, #tpu.memory_space<vmem>>, vector<8x128xbf16>,
    %c0_148 = arith.constant 0 : index
    %c0_149 = arith.constant 0 : index
    %344 = vector.load %arg10[%c0_148, %c0_149] : memref<32x128xbf16, #tpu.memory_space<vmem>>, vector<32x128xbf16>
    %c0_150 = arith.constant 0 : index
    %c0_151 = arith.constant 0 : index
    %345 = vector.load %arg7[%c0_150, %c0_151] : memref<128x128xbf16, #tpu.memory_space<vmem>>, vector<128x128xbf16>
    %cst_152 = arith.constant dense<0.000000e+00> : vector<32x128xf32>
    %346 = tpu.matmul %344, %345, %cst_152 {dimension_numbers = #tpu.dot_dimension_numbers<[1], [0], [0], [1], [0, 0, 1, 1], [], []>} : vector<32x128xbf16>, vector<128x128xbf16>, vector<32x128xf32> -> vector<32x128xf32>
    %c0_153 = arith.constant 0 : index
    %c0_154 = arith.constant 0 : index
    %347 = vector.load %arg8[%c0_153, %c0_154] : memref<1x128xf32, #tpu.memory_space<vmem>>, vector<1x128xf32>
    %348 = vector.broadcast %347 : vector<1x128xf32> to vector<32x128xf32>
    %349 = arith.addf %346, %348 : vector<32x128xf32>
    %c0_155 = arith.constant 0 : index
    %c0_156 = arith.constant 0 : index
    %350 = vector.load %arg9[%c0_155, %c0_156] : memref<32x128xf32, #tpu.memory_space<vmem>>, vector<32x128xf32>
    tpu.vector_store %arg9[%c0_155, %c0_156], %349 {strides = array<i32>} : memref<32x128xf32, #tpu.memory_space<vmem>>, vector<32x128xf32>,
    return
  }
  func.func @transform_0(%arg0: i32) -> (i32, i32) {
    %c0_i32 = arith.constant 0 : i32
    %c0_i32_0 = arith.constant 0 : i32
    return %arg0, %c0_i32 : i32, i32
  }
  func.func @transform_1(%arg0: i32) -> (i32, i32) {
    %c0_i32 = arith.constant 0 : i32
    %c0_i32_0 = arith.constant 0 : i32
    %c0_i32_1 = arith.constant 0 : i32
    return %c0_i32, %c0_i32_0 : i32, i32
  }
  func.func @transform_2(%arg0: i32) -> (i32, i32, i32) {
    %c0_i32 = arith.constant 0 : i32
    %c0_i32_0 = arith.constant 0 : i32
    %c0_i32_1 = arith.constant 0 : i32
    %c0_i32_2 = arith.constant 0 : i32
    return %c0_i32, %c0_i32_0, %c0_i32_1 : i32, i32, i32
  }
  func.func @transform_3(%arg0: i32) -> (i32, i32, i32) {
    %c0_i32 = arith.constant 0 : i32
    %c0_i32_0 = arith.constant 0 : i32
    %c0_i32_1 = arith.constant 0 : i32
    %c0_i32_2 = arith.constant 0 : i32
    return %c0_i32, %c0_i32_0, %c0_i32_1 : i32, i32, i32
  }
  func.func @transform_4(%arg0: i32) -> (i32, i32, i32) {
    %c0_i32 = arith.constant 0 : i32
    %c0_i32_0 = arith.constant 0 : i32
    %c0_i32_1 = arith.constant 0 : i32
    %c0_i32_2 = arith.constant 0 : i32
    return %c0_i32, %c0_i32_0, %c0_i32_1 : i32, i32, i32
  }
  func.func @transform_5(%arg0: i32) -> (i32, i32, i32) {
    %c0_i32 = arith.constant 0 : i32
    %c0_i32_0 = arith.constant 0 : i32
    %c0_i32_1 = arith.constant 0 : i32
    %c0_i32_2 = arith.constant 0 : i32
    return %c0_i32, %c0_i32_0, %c0_i32_1 : i32, i32, i32
  }
  func.func @transform_6(%arg0: i32) -> (i32, i32) {
    %c0_i32 = arith.constant 0 : i32
    %c0_i32_0 = arith.constant 0 : i32
    %c0_i32_1 = arith.constant 0 : i32
    return %c0_i32, %c0_i32_0 : i32, i32
  }
  func.func @transform_7(%arg0: i32) -> (i32, i32) {
    %c0_i32 = arith.constant 0 : i32
    %c0_i32_0 = arith.constant 0 : i32
    %c0_i32_1 = arith.constant 0 : i32
    return %c0_i32, %c0_i32_0 : i32, i32
  }
  func.func @transform_8(%arg0: i32) -> (i32, i32) {
    %c0_i32 = arith.constant 0 : i32
    %c0_i32_0 = arith.constant 0 : i32
    return %arg0, %c0_i32 : i32, i32
  }
}

module attributes {stable_mosaic.version = 11 : i64} {
  func.func @_gru_stack_kernel(%arg0: i32, %arg1: memref<32x128xbf16, #tpu.memory_space<vmem>>, %arg2: memref<128x384xbf16, #tpu.memory_space<vmem>>, %arg3: memref<1x128x384xbf16, #tpu.memory_space<vmem>>, %arg4: memref<2x128x384xbf16, #tpu.memory_space<vmem>>, %arg5: memref<2x1x384xf32, #tpu.memory_space<vmem>>, %arg6: memref<2x1x128xf32, #tpu.memory_space<vmem>>, %arg7: memref<128x128xbf16, #tpu.memory_space<vmem>>, %arg8: memref<1x128xf32, #tpu.memory_space<vmem>>, %arg9: memref<32x128xf32, #tpu.memory_space<vmem>>, %arg10: memref<32x128xbf16, #tpu.memory_space<vmem>>, %arg11: memref<32x384xf32, #tpu.memory_space<vmem>>, %arg12: memref<2x8x128xf32, #tpu.memory_space<vmem>>) attributes {dimension_semantics = [#tpu.dimension_semantics<arbitrary>], iteration_bounds = array<i64: 2>, scalar_prefetch = 0 : i64, scratch_operands = 3 : i64, tpu.core_type = #tpu.core_type<tc>, window_params = [{transform_indices = @transform_0, window_bounds = array<i64: 32, 128>}, {pipeline_mode = #tpu.pipeline_mode<synchronous>, transform_indices = @transform_1, window_bounds = array<i64: 128, 384>}, {pipeline_mode = #tpu.pipeline_mode<synchronous>, transform_indices = @transform_2, window_bounds = array<i64: 1, 128, 384>}, {pipeline_mode = #tpu.pipeline_mode<synchronous>, transform_indices = @transform_3, window_bounds = array<i64: 2, 128, 384>}, {pipeline_mode = #tpu.pipeline_mode<synchronous>, transform_indices = @transform_4, window_bounds = array<i64: 2, 1, 384>}, {pipeline_mode = #tpu.pipeline_mode<synchronous>, transform_indices = @transform_5, window_bounds = array<i64: 2, 1, 128>}, {pipeline_mode = #tpu.pipeline_mode<synchronous>, transform_indices = @transform_6, window_bounds = array<i64: 128, 128>}, {pipeline_mode = #tpu.pipeline_mode<synchronous>, transform_indices = @transform_7, window_bounds = array<i64: 1, 128>}, {transform_indices = @transform_8, window_bounds = array<i64: 32, 128>}]} {
    %c0_i32 = arith.constant 0 : i32
    %0 = arith.cmpi eq, %arg0, %c0_i32 : i32
    %1 = arith.extui %0 : i1 to i32
    %c0_i32_0 = arith.constant 0 : i32
    %2 = arith.cmpi ne, %1, %c0_i32_0 : i32
    scf.if %2 {
      %cst_157 = arith.constant 0.000000e+00 : f32
      %351 = vector.broadcast %cst_157 : f32 to vector<2x8x128xf32>
      %c0_158 = arith.constant 0 : index
      %c0_159 = arith.constant 0 : index
      %c0_160 = arith.constant 0 : index
      %352 = vector.load %arg12[%c0_158, %c0_159, %c0_160] : memref<2x8x128xf32, #tpu.memory_space<vmem>>, vector<2x8x128xf32>
      tpu.vector_store %arg12[%c0_158, %c0_159, %c0_160], %351 {strides = array<i32>} : memref<2x8x128xf32, #tpu.memory_space<vmem>>, vector<2x8x128xf32>,
    } else {
    }
    %c0 = arith.constant 0 : index
    %c0_1 = arith.constant 0 : index
    %c0_2 = arith.constant 0 : index
    %3 = vector.load %arg4[%c0, %c0_1, %c0_2] : memref<2x128x384xbf16, #tpu.memory_space<vmem>>, vector<1x128x384xbf16>
    %4 = vector.shape_cast %3 : vector<1x128x384xbf16> to vector<128x384xbf16>
    %c0_3 = arith.constant 0 : index
    %c0_4 = arith.constant 0 : index
    %c0_5 = arith.constant 0 : index
    %5 = vector.load %arg6[%c0_3, %c0_4, %c0_5] : memref<2x1x128xf32, #tpu.memory_space<vmem>>, vector<1x1x128xf32>
    %6 = vector.shape_cast %5 : vector<1x1x128xf32> to vector<1x128xf32>
    %c0_6 = arith.constant 0 : index
    %c0_7 = arith.constant 0 : index
    %7 = vector.load %arg1[%c0_6, %c0_7] : memref<32x128xbf16, #tpu.memory_space<vmem>>, vector<32x128xbf16>
    %c0_8 = arith.constant 0 : index
    %c0_9 = arith.constant 0 : index
    %8 = vector.load %arg2[%c0_8, %c0_9] : memref<128x384xbf16, #tpu.memory_space<vmem>>, vector<128x384xbf16>
    %cst = arith.constant dense<0.000000e+00> : vector<32x384xf32>
    %9 = tpu.matmul %7, %8, %cst {dimension_numbers = #tpu.dot_dimension_numbers<[1], [0], [0], [1], [0, 0, 1, 1], [], []>} : vector<32x128xbf16>, vector<128x384xbf16>, vector<32x384xf32> -> vector<32x384xf32>
    %c0_10 = arith.constant 0 : index
    %c0_11 = arith.constant 0 : index
    %c0_12 = arith.constant 0 : index
    %10 = vector.load %arg5[%c0_10, %c0_11, %c0_12] : memref<2x1x384xf32, #tpu.memory_space<vmem>>, vector<1x1x384xf32>
    %11 = vector.shape_cast %10 : vector<1x1x384xf32> to vector<1x384xf32>
    %12 = vector.broadcast %11 : vector<1x384xf32> to vector<32x384xf32>
    %13 = arith.addf %9, %12 : vector<32x384xf32>
    %c0_13 = arith.constant 0 : index
    %c0_14 = arith.constant 0 : index
    %14 = vector.load %arg11[%c0_13, %c0_14] : memref<32x384xf32, #tpu.memory_space<vmem>>, vector<32x384xf32>
    tpu.vector_store %arg11[%c0_13, %c0_14], %13 {strides = array<i32>} : memref<32x384xf32, #tpu.memory_space<vmem>>, vector<32x384xf32>,
    %c0_15 = arith.constant 0 : index
    %c0_16 = arith.constant 0 : index
    %c0_17 = arith.constant 0 : index
    %15 = vector.load %arg12[%c0_15, %c0_16, %c0_17] : memref<2x8x128xf32, #tpu.memory_space<vmem>>, vector<1x8x128xf32>
    %16 = vector.shape_cast %15 : vector<1x8x128xf32> to vector<8x128xf32>
    %c0_18 = arith.constant 0 : index
    %c0_19 = arith.constant 0 : index
    %17 = vector.load %arg11[%c0_18, %c0_19] : memref<32x384xf32, #tpu.memory_space<vmem>>, vector<8x384xf32>
    %18 = arith.truncf %16 : vector<8x128xf32> to vector<8x128xbf16>
    %cst_20 = arith.constant dense<0.000000e+00> : vector<8x384xf32>
    %19 = tpu.matmul %18, %4, %cst_20 {dimension_numbers = #tpu.dot_dimension_numbers<[1], [0], [0], [1], [0, 0, 1, 1], [], []>} : vector<8x128xbf16>, vector<128x384xbf16>, vector<8x384xf32> -> vector<8x384xf32>
    %20 = vector.extract_strided_slice %17 {offsets = [0, 0], sizes = [8, 128], strides = [1, 1]} : vector<8x384xf32> to vector<8x128xf32>
    %21 = vector.extract_strided_slice %19 {offsets = [0, 0], sizes = [8, 128], strides = [1, 1]} : vector<8x384xf32> to vector<8x128xf32>
    %22 = arith.addf %20, %21 : vector<8x128xf32>
    %23 = arith.negf %22 : vector<8x128xf32>
    %24 = math.exp %23 : vector<8x128xf32>
    %cst_21 = arith.constant 1.000000e+00 : f32
    %25 = vector.broadcast %cst_21 : f32 to vector<8x128xf32>
    %26 = arith.addf %25, %24 : vector<8x128xf32>
    %27 = arith.divf %25, %26 : vector<8x128xf32>
    %28 = vector.extract_strided_slice %17 {offsets = [0, 128], sizes = [8, 128], strides = [1, 1]} : vector<8x384xf32> to vector<8x128xf32>
    %29 = vector.extract_strided_slice %19 {offsets = [0, 128], sizes = [8, 128], strides = [1, 1]} : vector<8x384xf32> to vector<8x128xf32>
    %30 = arith.addf %28, %29 : vector<8x128xf32>
    %31 = arith.negf %30 : vector<8x128xf32>
    %32 = math.exp %31 : vector<8x128xf32>
    %cst_22 = arith.constant 1.000000e+00 : f32
    %33 = vector.broadcast %cst_22 : f32 to vector<8x128xf32>
    %34 = arith.addf %33, %32 : vector<8x128xf32>
    %35 = arith.divf %33, %34 : vector<8x128xf32>
    %36 = vector.extract_strided_slice %17 {offsets = [0, 256], sizes = [8, 128], strides = [1, 1]} : vector<8x384xf32> to vector<8x128xf32>
    %37 = vector.extract_strided_slice %19 {offsets = [0, 256], sizes = [8, 128], strides = [1, 1]} : vector<8x384xf32> to vector<8x128xf32>
    %38 = vector.broadcast %6 : vector<1x128xf32> to vector<8x128xf32>
    %39 = arith.addf %37, %38 : vector<8x128xf32>
    %40 = arith.mulf %27, %39 : vector<8x128xf32>
    %41 = arith.addf %36, %40 : vector<8x128xf32>
    %42 = math.tanh %41 : vector<8x128xf32>
    %cst_23 = arith.constant 1.000000e+00 : f32
    %43 = vector.broadcast %cst_23 : f32 to vector<8x128xf32>
    %44 = arith.subf %43, %35 : vector<8x128xf32>
    %45 = arith.mulf %44, %42 : vector<8x128xf32>
    %46 = arith.mulf %35, %16 : vector<8x128xf32>
    %47 = arith.addf %45, %46 : vector<8x128xf32>
    %c0_24 = arith.constant 0 : index
    %c0_25 = arith.constant 0 : index
    %c0_26 = arith.constant 0 : index
    %48 = vector.load %arg12[%c0_24, %c0_25, %c0_26] : memref<2x8x128xf32, #tpu.memory_space<vmem>>, vector<1x8x128xf32>
    %49 = vector.shape_cast %48 : vector<1x8x128xf32> to vector<8x128xf32>
    %50 = vector.shape_cast %47 : vector<8x128xf32> to vector<1x8x128xf32>
    tpu.vector_store %arg12[%c0_24, %c0_25, %c0_26], %50 {strides = array<i32>} : memref<2x8x128xf32, #tpu.memory_space<vmem>>, vector<1x8x128xf32>,
    %51 = arith.truncf %47 : vector<8x128xf32> to vector<8x128xbf16>
    %c0_27 = arith.constant 0 : index
    %c0_28 = arith.constant 0 : index
    %52 = vector.load %arg10[%c0_27, %c0_28] : memref<32x128xbf16, #tpu.memory_space<vmem>>, vector<8x128xbf16>
    tpu.vector_store %arg10[%c0_27, %c0_28], %51 {strides = array<i32>} : memref<32x128xbf16, #tpu.memory_space<vmem>>, vector<8x128xbf16>,
    %c0_29 = arith.constant 0 : index
    %c0_30 = arith.constant 0 : index
    %c0_31 = arith.constant 0 : index
    %53 = vector.load %arg12[%c0_29, %c0_30, %c0_31] : memref<2x8x128xf32, #tpu.memory_space<vmem>>, vector<1x8x128xf32>
    %54 = vector.shape_cast %53 : vector<1x8x128xf32> to vector<8x128xf32>
    %c8 = arith.constant 8 : index
    %c0_32 = arith.constant 0 : index
    %55 = vector.load %arg11[%c8, %c0_32] : memref<32x384xf32, #tpu.memory_space<vmem>>, vector<8x384xf32>
    %56 = arith.truncf %54 : vector<8x128xf32> to vector<8x128xbf16>
    %cst_33 = arith.constant dense<0.000000e+00> : vector<8x384xf32>
    %57 = tpu.matmul %56, %4, %cst_33 {dimension_numbers = #tpu.dot_dimension_numbers<[1], [0], [0], [1], [0, 0, 1, 1], [], []>} : vector<8x128xbf16>, vector<128x384xbf16>, vector<8x384xf32> -> vector<8x384xf32>
    %58 = vector.extract_strided_slice %55 {offsets = [0, 0], sizes = [8, 128], strides = [1, 1]} : vector<8x384xf32> to vector<8x128xf32>
    %59 = vector.extract_strided_slice %57 {offsets = [0, 0], sizes = [8, 128], strides = [1, 1]} : vector<8x384xf32> to vector<8x128xf32>
    %60 = arith.addf %58, %59 : vector<8x128xf32>
    %61 = arith.negf %60 : vector<8x128xf32>
    %62 = math.exp %61 : vector<8x128xf32>
    %cst_34 = arith.constant 1.000000e+00 : f32
    %63 = vector.broadcast %cst_34 : f32 to vector<8x128xf32>
    %64 = arith.addf %63, %62 : vector<8x128xf32>
    %65 = arith.divf %63, %64 : vector<8x128xf32>
    %66 = vector.extract_strided_slice %55 {offsets = [0, 128], sizes = [8, 128], strides = [1, 1]} : vector<8x384xf32> to vector<8x128xf32>
    %67 = vector.extract_strided_slice %57 {offsets = [0, 128], sizes = [8, 128], strides = [1, 1]} : vector<8x384xf32> to vector<8x128xf32>
    %68 = arith.addf %66, %67 : vector<8x128xf32>
    %69 = arith.negf %68 : vector<8x128xf32>
    %70 = math.exp %69 : vector<8x128xf32>
    %cst_35 = arith.constant 1.000000e+00 : f32
    %71 = vector.broadcast %cst_35 : f32 to vector<8x128xf32>
    %72 = arith.addf %71, %70 : vector<8x128xf32>
    %73 = arith.divf %71, %72 : vector<8x128xf32>
    %74 = vector.extract_strided_slice %55 {offsets = [0, 256], sizes = [8, 128], strides = [1, 1]} : vector<8x384xf32> to vector<8x128xf32>
    %75 = vector.extract_strided_slice %57 {offsets = [0, 256], sizes = [8, 128], strides = [1, 1]} : vector<8x384xf32> to vector<8x128xf32>
    %76 = vector.broadcast %6 : vector<1x128xf32> to vector<8x128xf32>
    %77 = arith.addf %75, %76 : vector<8x128xf32>
    %78 = arith.mulf %65, %77 : vector<8x128xf32>
    %79 = arith.addf %74, %78 : vector<8x128xf32>
    %80 = math.tanh %79 : vector<8x128xf32>
    %cst_36 = arith.constant 1.000000e+00 : f32
    %81 = vector.broadcast %cst_36 : f32 to vector<8x128xf32>
    %82 = arith.subf %81, %73 : vector<8x128xf32>
    %83 = arith.mulf %82, %80 : vector<8x128xf32>
    %84 = arith.mulf %73, %54 : vector<8x128xf32>
    %85 = arith.addf %83, %84 : vector<8x128xf32>
    %c0_37 = arith.constant 0 : index
    %c0_38 = arith.constant 0 : index
    %c0_39 = arith.constant 0 : index
    %86 = vector.load %arg12[%c0_37, %c0_38, %c0_39] : memref<2x8x128xf32, #tpu.memory_space<vmem>>, vector<1x8x128xf32>
    %87 = vector.shape_cast %86 : vector<1x8x128xf32> to vector<8x128xf32>
    %88 = vector.shape_cast %85 : vector<8x128xf32> to vector<1x8x128xf32>
    tpu.vector_store %arg12[%c0_37, %c0_38, %c0_39], %88 {strides = array<i32>} : memref<2x8x128xf32, #tpu.memory_space<vmem>>, vector<1x8x128xf32>,
    %89 = arith.truncf %85 : vector<8x128xf32> to vector<8x128xbf16>
    %c8_40 = arith.constant 8 : index
    %c0_41 = arith.constant 0 : index
    %90 = vector.load %arg10[%c8_40, %c0_41] : memref<32x128xbf16, #tpu.memory_space<vmem>>, vector<8x128xbf16>
    tpu.vector_store %arg10[%c8_40, %c0_41], %89 {strides = array<i32>} : memref<32x128xbf16, #tpu.memory_space<vmem>>, vector<8x128xbf16>,
    %c0_42 = arith.constant 0 : index
    %c0_43 = arith.constant 0 : index
    %c0_44 = arith.constant 0 : index
    %91 = vector.load %arg12[%c0_42, %c0_43, %c0_44] : memref<2x8x128xf32, #tpu.memory_space<vmem>>, vector<1x8x128xf32>
    %92 = vector.shape_cast %91 : vector<1x8x128xf32> to vector<8x128xf32>
    %c16 = arith.constant 16 : index
    %c0_45 = arith.constant 0 : index
    %93 = vector.load %arg11[%c16, %c0_45] : memref<32x384xf32, #tpu.memory_space<vmem>>, vector<8x384xf32>
    %94 = arith.truncf %92 : vector<8x128xf32> to vector<8x128xbf16>
    %cst_46 = arith.constant dense<0.000000e+00> : vector<8x384xf32>
    %95 = tpu.matmul %94, %4, %cst_46 {dimension_numbers = #tpu.dot_dimension_numbers<[1], [0], [0], [1], [0, 0, 1, 1], [], []>} : vector<8x128xbf16>, vector<128x384xbf16>, vector<8x384xf32> -> vector<8x384xf32>
    %96 = vector.extract_strided_slice %93 {offsets = [0, 0], sizes = [8, 128], strides = [1, 1]} : vector<8x384xf32> to vector<8x128xf32>
    %97 = vector.extract_strided_slice %95 {offsets = [0, 0], sizes = [8, 128], strides = [1, 1]} : vector<8x384xf32> to vector<8x128xf32>
    %98 = arith.addf %96, %97 : vector<8x128xf32>
    %99 = arith.negf %98 : vector<8x128xf32>
    %100 = math.exp %99 : vector<8x128xf32>
    %cst_47 = arith.constant 1.000000e+00 : f32
    %101 = vector.broadcast %cst_47 : f32 to vector<8x128xf32>
    %102 = arith.addf %101, %100 : vector<8x128xf32>
    %103 = arith.divf %101, %102 : vector<8x128xf32>
    %104 = vector.extract_strided_slice %93 {offsets = [0, 128], sizes = [8, 128], strides = [1, 1]} : vector<8x384xf32> to vector<8x128xf32>
    %105 = vector.extract_strided_slice %95 {offsets = [0, 128], sizes = [8, 128], strides = [1, 1]} : vector<8x384xf32> to vector<8x128xf32>
    %106 = arith.addf %104, %105 : vector<8x128xf32>
    %107 = arith.negf %106 : vector<8x128xf32>
    %108 = math.exp %107 : vector<8x128xf32>
    %cst_48 = arith.constant 1.000000e+00 : f32
    %109 = vector.broadcast %cst_48 : f32 to vector<8x128xf32>
    %110 = arith.addf %109, %108 : vector<8x128xf32>
    %111 = arith.divf %109, %110 : vector<8x128xf32>
    %112 = vector.extract_strided_slice %93 {offsets = [0, 256], sizes = [8, 128], strides = [1, 1]} : vector<8x384xf32> to vector<8x128xf32>
    %113 = vector.extract_strided_slice %95 {offsets = [0, 256], sizes = [8, 128], strides = [1, 1]} : vector<8x384xf32> to vector<8x128xf32>
    %114 = vector.broadcast %6 : vector<1x128xf32> to vector<8x128xf32>
    %115 = arith.addf %113, %114 : vector<8x128xf32>
    %116 = arith.mulf %103, %115 : vector<8x128xf32>
    %117 = arith.addf %112, %116 : vector<8x128xf32>
    %118 = math.tanh %117 : vector<8x128xf32>
    %cst_49 = arith.constant 1.000000e+00 : f32
    %119 = vector.broadcast %cst_49 : f32 to vector<8x128xf32>
    %120 = arith.subf %119, %111 : vector<8x128xf32>
    %121 = arith.mulf %120, %118 : vector<8x128xf32>
    %122 = arith.mulf %111, %92 : vector<8x128xf32>
    %123 = arith.addf %121, %122 : vector<8x128xf32>
    %c0_50 = arith.constant 0 : index
    %c0_51 = arith.constant 0 : index
    %c0_52 = arith.constant 0 : index
    %124 = vector.load %arg12[%c0_50, %c0_51, %c0_52] : memref<2x8x128xf32, #tpu.memory_space<vmem>>, vector<1x8x128xf32>
    %125 = vector.shape_cast %124 : vector<1x8x128xf32> to vector<8x128xf32>
    %126 = vector.shape_cast %123 : vector<8x128xf32> to vector<1x8x128xf32>
    tpu.vector_store %arg12[%c0_50, %c0_51, %c0_52], %126 {strides = array<i32>} : memref<2x8x128xf32, #tpu.memory_space<vmem>>, vector<1x8x128xf32>,
    %127 = arith.truncf %123 : vector<8x128xf32> to vector<8x128xbf16>
    %c16_53 = arith.constant 16 : index
    %c0_54 = arith.constant 0 : index
    %128 = vector.load %arg10[%c16_53, %c0_54] : memref<32x128xbf16, #tpu.memory_space<vmem>>, vector<8x128xbf16>
    tpu.vector_store %arg10[%c16_53, %c0_54], %127 {strides = array<i32>} : memref<32x128xbf16, #tpu.memory_space<vmem>>, vector<8x128xbf16>,
    %c0_55 = arith.constant 0 : index
    %c0_56 = arith.constant 0 : index
    %c0_57 = arith.constant 0 : index
    %129 = vector.load %arg12[%c0_55, %c0_56, %c0_57] : memref<2x8x128xf32, #tpu.memory_space<vmem>>, vector<1x8x128xf32>
    %130 = vector.shape_cast %129 : vector<1x8x128xf32> to vector<8x128xf32>
    %c24 = arith.constant 24 : index
    %c0_58 = arith.constant 0 : index
    %131 = vector.load %arg11[%c24, %c0_58] : memref<32x384xf32, #tpu.memory_space<vmem>>, vector<8x384xf32>
    %132 = arith.truncf %130 : vector<8x128xf32> to vector<8x128xbf16>
    %cst_59 = arith.constant dense<0.000000e+00> : vector<8x384xf32>
    %133 = tpu.matmul %132, %4, %cst_59 {dimension_numbers = #tpu.dot_dimension_numbers<[1], [0], [0], [1], [0, 0, 1, 1], [], []>} : vector<8x128xbf16>, vector<128x384xbf16>, vector<8x384xf32> -> vector<8x384xf32>
    %134 = vector.extract_strided_slice %131 {offsets = [0, 0], sizes = [8, 128], strides = [1, 1]} : vector<8x384xf32> to vector<8x128xf32>
    %135 = vector.extract_strided_slice %133 {offsets = [0, 0], sizes = [8, 128], strides = [1, 1]} : vector<8x384xf32> to vector<8x128xf32>
    %136 = arith.addf %134, %135 : vector<8x128xf32>
    %137 = arith.negf %136 : vector<8x128xf32>
    %138 = math.exp %137 : vector<8x128xf32>
    %cst_60 = arith.constant 1.000000e+00 : f32
    %139 = vector.broadcast %cst_60 : f32 to vector<8x128xf32>
    %140 = arith.addf %139, %138 : vector<8x128xf32>
    %141 = arith.divf %139, %140 : vector<8x128xf32>
    %142 = vector.extract_strided_slice %131 {offsets = [0, 128], sizes = [8, 128], strides = [1, 1]} : vector<8x384xf32> to vector<8x128xf32>
    %143 = vector.extract_strided_slice %133 {offsets = [0, 128], sizes = [8, 128], strides = [1, 1]} : vector<8x384xf32> to vector<8x128xf32>
    %144 = arith.addf %142, %143 : vector<8x128xf32>
    %145 = arith.negf %144 : vector<8x128xf32>
    %146 = math.exp %145 : vector<8x128xf32>
    %cst_61 = arith.constant 1.000000e+00 : f32
    %147 = vector.broadcast %cst_61 : f32 to vector<8x128xf32>
    %148 = arith.addf %147, %146 : vector<8x128xf32>
    %149 = arith.divf %147, %148 : vector<8x128xf32>
    %150 = vector.extract_strided_slice %131 {offsets = [0, 256], sizes = [8, 128], strides = [1, 1]} : vector<8x384xf32> to vector<8x128xf32>
    %151 = vector.extract_strided_slice %133 {offsets = [0, 256], sizes = [8, 128], strides = [1, 1]} : vector<8x384xf32> to vector<8x128xf32>
    %152 = vector.broadcast %6 : vector<1x128xf32> to vector<8x128xf32>
    %153 = arith.addf %151, %152 : vector<8x128xf32>
    %154 = arith.mulf %141, %153 : vector<8x128xf32>
    %155 = arith.addf %150, %154 : vector<8x128xf32>
    %156 = math.tanh %155 : vector<8x128xf32>
    %cst_62 = arith.constant 1.000000e+00 : f32
    %157 = vector.broadcast %cst_62 : f32 to vector<8x128xf32>
    %158 = arith.subf %157, %149 : vector<8x128xf32>
    %159 = arith.mulf %158, %156 : vector<8x128xf32>
    %160 = arith.mulf %149, %130 : vector<8x128xf32>
    %161 = arith.addf %159, %160 : vector<8x128xf32>
    %c0_63 = arith.constant 0 : index
    %c0_64 = arith.constant 0 : index
    %c0_65 = arith.constant 0 : index
    %162 = vector.load %arg12[%c0_63, %c0_64, %c0_65] : memref<2x8x128xf32, #tpu.memory_space<vmem>>, vector<1x8x128xf32>
    %163 = vector.shape_cast %162 : vector<1x8x128xf32> to vector<8x128xf32>
    %164 = vector.shape_cast %161 : vector<8x128xf32> to vector<1x8x128xf32>
    tpu.vector_store %arg12[%c0_63, %c0_64, %c0_65], %164 {strides = array<i32>} : memref<2x8x128xf32, #tpu.memory_space<vmem>>, vector<1x8x128xf32>,
    %165 = arith.truncf %161 : vector<8x128xf32> to vector<8x128xbf16>
    %c24_66 = arith.constant 24 : index
    %c0_67 = arith.constant 0 : index
    %166 = vector.load %arg10[%c24_66, %c0_67] : memref<32x128xbf16, #tpu.memory_space<vmem>>, vector<8x128xbf16>
    tpu.vector_store %arg10[%c24_66, %c0_67], %165 {strides = array<i32>} : memref<32x128xbf16, #tpu.memory_space<vmem>>, vector<8x128xbf16>,
    %c1 = arith.constant 1 : index
    %c0_68 = arith.constant 0 : index
    %c0_69 = arith.constant 0 : index
    %167 = vector.load %arg4[%c1, %c0_68, %c0_69] : memref<2x128x384xbf16, #tpu.memory_space<vmem>>, vector<1x128x384xbf16>
    %168 = vector.shape_cast %167 : vector<1x128x384xbf16> to vector<128x384xbf16>
    %c1_70 = arith.constant 1 : index
    %c0_71 = arith.constant 0 : index
    %c0_72 = arith.constant 0 : index
    %169 = vector.load %arg6[%c1_70, %c0_71, %c0_72] : memref<2x1x128xf32, #tpu.memory_space<vmem>>, vector<1x1x128xf32>
    %170 = vector.shape_cast %169 : vector<1x1x128xf32> to vector<1x128xf32>
    %c0_73 = arith.constant 0 : index
    %c0_74 = arith.constant 0 : index
    %171 = vector.load %arg10[%c0_73, %c0_74] : memref<32x128xbf16, #tpu.memory_space<vmem>>, vector<32x128xbf16>
    %c0_75 = arith.constant 0 : index
    %c0_76 = arith.constant 0 : index
    %c0_77 = arith.constant 0 : index
    %172 = vector.load %arg3[%c0_75, %c0_76, %c0_77] : memref<1x128x384xbf16, #tpu.memory_space<vmem>>, vector<1x128x384xbf16>
    %173 = vector.shape_cast %172 : vector<1x128x384xbf16> to vector<128x384xbf16>
    %cst_78 = arith.constant dense<0.000000e+00> : vector<32x384xf32>
    %174 = tpu.matmul %171, %173, %cst_78 {dimension_numbers = #tpu.dot_dimension_numbers<[1], [0], [0], [1], [0, 0, 1, 1], [], []>} : vector<32x128xbf16>, vector<128x384xbf16>, vector<32x384xf32> -> vector<32x384xf32>
    %c1_79 = arith.constant 1 : index
    %c0_80 = arith.constant 0 : index
    %c0_81 = arith.constant 0 : index
    %175 = vector.load %arg5[%c1_79, %c0_80, %c0_81] : memref<2x1x384xf32, #tpu.memory_space<vmem>>, vector<1x1x384xf32>
    %176 = vector.shape_cast %175 : vector<1x1x384xf32> to vector<1x384xf32>
    %177 = vector.broadcast %176 : vector<1x384xf32> to vector<32x384xf32>
    %178 = arith.addf %174, %177 : vector<32x384xf32>
    %c0_82 = arith.constant 0 : index
    %c0_83 = arith.constant 0 : index
    %179 = vector.load %arg11[%c0_82, %c0_83] : memref<32x384xf32, #tpu.memory_space<vmem>>, vector<32x384xf32>
    tpu.vector_store %arg11[%c0_82, %c0_83], %178 {strides = array<i32>} : memref<32x384xf32, #tpu.memory_space<vmem>>, vector<32x384xf32>,
    %c1_84 = arith.constant 1 : index
    %c0_85 = arith.constant 0 : index
    %c0_86 = arith.constant 0 : index
    %180 = vector.load %arg12[%c1_84, %c0_85, %c0_86] : memref<2x8x128xf32, #tpu.memory_space<vmem>>, vector<1x8x128xf32>
    %181 = vector.shape_cast %180 : vector<1x8x128xf32> to vector<8x128xf32>
    %c0_87 = arith.constant 0 : index
    %c0_88 = arith.constant 0 : index
    %182 = vector.load %arg11[%c0_87, %c0_88] : memref<32x384xf32, #tpu.memory_space<vmem>>, vector<8x384xf32>
    %183 = arith.truncf %181 : vector<8x128xf32> to vector<8x128xbf16>
    %cst_89 = arith.constant dense<0.000000e+00> : vector<8x384xf32>
    %184 = tpu.matmul %183, %168, %cst_89 {dimension_numbers = #tpu.dot_dimension_numbers<[1], [0], [0], [1], [0, 0, 1, 1], [], []>} : vector<8x128xbf16>, vector<128x384xbf16>, vector<8x384xf32> -> vector<8x384xf32>
    %185 = vector.extract_strided_slice %182 {offsets = [0, 0], sizes = [8, 128], strides = [1, 1]} : vector<8x384xf32> to vector<8x128xf32>
    %186 = vector.extract_strided_slice %184 {offsets = [0, 0], sizes = [8, 128], strides = [1, 1]} : vector<8x384xf32> to vector<8x128xf32>
    %187 = arith.addf %185, %186 : vector<8x128xf32>
    %188 = arith.negf %187 : vector<8x128xf32>
    %189 = math.exp %188 : vector<8x128xf32>
    %cst_90 = arith.constant 1.000000e+00 : f32
    %190 = vector.broadcast %cst_90 : f32 to vector<8x128xf32>
    %191 = arith.addf %190, %189 : vector<8x128xf32>
    %192 = arith.divf %190, %191 : vector<8x128xf32>
    %193 = vector.extract_strided_slice %182 {offsets = [0, 128], sizes = [8, 128], strides = [1, 1]} : vector<8x384xf32> to vector<8x128xf32>
    %194 = vector.extract_strided_slice %184 {offsets = [0, 128], sizes = [8, 128], strides = [1, 1]} : vector<8x384xf32> to vector<8x128xf32>
    %195 = arith.addf %193, %194 : vector<8x128xf32>
    %196 = arith.negf %195 : vector<8x128xf32>
    %197 = math.exp %196 : vector<8x128xf32>
    %cst_91 = arith.constant 1.000000e+00 : f32
    %198 = vector.broadcast %cst_91 : f32 to vector<8x128xf32>
    %199 = arith.addf %198, %197 : vector<8x128xf32>
    %200 = arith.divf %198, %199 : vector<8x128xf32>
    %201 = vector.extract_strided_slice %182 {offsets = [0, 256], sizes = [8, 128], strides = [1, 1]} : vector<8x384xf32> to vector<8x128xf32>
    %202 = vector.extract_strided_slice %184 {offsets = [0, 256], sizes = [8, 128], strides = [1, 1]} : vector<8x384xf32> to vector<8x128xf32>
    %203 = vector.broadcast %170 : vector<1x128xf32> to vector<8x128xf32>
    %204 = arith.addf %202, %203 : vector<8x128xf32>
    %205 = arith.mulf %192, %204 : vector<8x128xf32>
    %206 = arith.addf %201, %205 : vector<8x128xf32>
    %207 = math.tanh %206 : vector<8x128xf32>
    %cst_92 = arith.constant 1.000000e+00 : f32
    %208 = vector.broadcast %cst_92 : f32 to vector<8x128xf32>
    %209 = arith.subf %208, %200 : vector<8x128xf32>
    %210 = arith.mulf %209, %207 : vector<8x128xf32>
    %211 = arith.mulf %200, %181 : vector<8x128xf32>
    %212 = arith.addf %210, %211 : vector<8x128xf32>
    %c1_93 = arith.constant 1 : index
    %c0_94 = arith.constant 0 : index
    %c0_95 = arith.constant 0 : index
    %213 = vector.load %arg12[%c1_93, %c0_94, %c0_95] : memref<2x8x128xf32, #tpu.memory_space<vmem>>, vector<1x8x128xf32>
    %214 = vector.shape_cast %213 : vector<1x8x128xf32> to vector<8x128xf32>
    %215 = vector.shape_cast %212 : vector<8x128xf32> to vector<1x8x128xf32>
    tpu.vector_store %arg12[%c1_93, %c0_94, %c0_95], %215 {strides = array<i32>} : memref<2x8x128xf32, #tpu.memory_space<vmem>>, vector<1x8x128xf32>,
    %c0_96 = arith.constant 0 : index
    %c0_97 = arith.constant 0 : index
    %216 = vector.load %arg10[%c0_96, %c0_97] : memref<32x128xbf16, #tpu.memory_space<vmem>>, vector<8x128xbf16>
    %217 = arith.extf %216 : vector<8x128xbf16> to vector<8x128xf32>
    %218 = arith.addf %212, %217 : vector<8x128xf32>
    %219 = arith.truncf %218 : vector<8x128xf32> to vector<8x128xbf16>
    %c0_98 = arith.constant 0 : index
    %c0_99 = arith.constant 0 : index
    %220 = vector.load %arg10[%c0_98, %c0_99] : memref<32x128xbf16, #tpu.memory_space<vmem>>, vector<8x128xbf16>
    tpu.vector_store %arg10[%c0_98, %c0_99], %219 {strides = array<i32>} : memref<32x128xbf16, #tpu.memory_space<vmem>>, vector<8x128xbf16>,
    %c1_100 = arith.constant 1 : index
    %c0_101 = arith.constant 0 : index
    %c0_102 = arith.constant 0 : index
    %221 = vector.load %arg12[%c1_100, %c0_101, %c0_102] : memref<2x8x128xf32, #tpu.memory_space<vmem>>, vector<1x8x128xf32>
    %222 = vector.shape_cast %221 : vector<1x8x128xf32> to vector<8x128xf32>
    %c8_103 = arith.constant 8 : index
    %c0_104 = arith.constant 0 : index
    %223 = vector.load %arg11[%c8_103, %c0_104] : memref<32x384xf32, #tpu.memory_space<vmem>>, vector<8x384xf32>
    %224 = arith.truncf %222 : vector<8x128xf32> to vector<8x128xbf16>
    %cst_105 = arith.constant dense<0.000000e+00> : vector<8x384xf32>
    %225 = tpu.matmul %224, %168, %cst_105 {dimension_numbers = #tpu.dot_dimension_numbers<[1], [0], [0], [1], [0, 0, 1, 1], [], []>} : vector<8x128xbf16>, vector<128x384xbf16>, vector<8x384xf32> -> vector<8x384xf32>
    %226 = vector.extract_strided_slice %223 {offsets = [0, 0], sizes = [8, 128], strides = [1, 1]} : vector<8x384xf32> to vector<8x128xf32>
    %227 = vector.extract_strided_slice %225 {offsets = [0, 0], sizes = [8, 128], strides = [1, 1]} : vector<8x384xf32> to vector<8x128xf32>
    %228 = arith.addf %226, %227 : vector<8x128xf32>
    %229 = arith.negf %228 : vector<8x128xf32>
    %230 = math.exp %229 : vector<8x128xf32>
    %cst_106 = arith.constant 1.000000e+00 : f32
    %231 = vector.broadcast %cst_106 : f32 to vector<8x128xf32>
    %232 = arith.addf %231, %230 : vector<8x128xf32>
    %233 = arith.divf %231, %232 : vector<8x128xf32>
    %234 = vector.extract_strided_slice %223 {offsets = [0, 128], sizes = [8, 128], strides = [1, 1]} : vector<8x384xf32> to vector<8x128xf32>
    %235 = vector.extract_strided_slice %225 {offsets = [0, 128], sizes = [8, 128], strides = [1, 1]} : vector<8x384xf32> to vector<8x128xf32>
    %236 = arith.addf %234, %235 : vector<8x128xf32>
    %237 = arith.negf %236 : vector<8x128xf32>
    %238 = math.exp %237 : vector<8x128xf32>
    %cst_107 = arith.constant 1.000000e+00 : f32
    %239 = vector.broadcast %cst_107 : f32 to vector<8x128xf32>
    %240 = arith.addf %239, %238 : vector<8x128xf32>
    %241 = arith.divf %239, %240 : vector<8x128xf32>
    %242 = vector.extract_strided_slice %223 {offsets = [0, 256], sizes = [8, 128], strides = [1, 1]} : vector<8x384xf32> to vector<8x128xf32>
    %243 = vector.extract_strided_slice %225 {offsets = [0, 256], sizes = [8, 128], strides = [1, 1]} : vector<8x384xf32> to vector<8x128xf32>
    %244 = vector.broadcast %170 : vector<1x128xf32> to vector<8x128xf32>
    %245 = arith.addf %243, %244 : vector<8x128xf32>
    %246 = arith.mulf %233, %245 : vector<8x128xf32>
    %247 = arith.addf %242, %246 : vector<8x128xf32>
    %248 = math.tanh %247 : vector<8x128xf32>
    %cst_108 = arith.constant 1.000000e+00 : f32
    %249 = vector.broadcast %cst_108 : f32 to vector<8x128xf32>
    %250 = arith.subf %249, %241 : vector<8x128xf32>
    %251 = arith.mulf %250, %248 : vector<8x128xf32>
    %252 = arith.mulf %241, %222 : vector<8x128xf32>
    %253 = arith.addf %251, %252 : vector<8x128xf32>
    %c1_109 = arith.constant 1 : index
    %c0_110 = arith.constant 0 : index
    %c0_111 = arith.constant 0 : index
    %254 = vector.load %arg12[%c1_109, %c0_110, %c0_111] : memref<2x8x128xf32, #tpu.memory_space<vmem>>, vector<1x8x128xf32>
    %255 = vector.shape_cast %254 : vector<1x8x128xf32> to vector<8x128xf32>
    %256 = vector.shape_cast %253 : vector<8x128xf32> to vector<1x8x128xf32>
    tpu.vector_store %arg12[%c1_109, %c0_110, %c0_111], %256 {strides = array<i32>} : memref<2x8x128xf32, #tpu.memory_space<vmem>>, vector<1x8x128xf32>,
    %c8_112 = arith.constant 8 : index
    %c0_113 = arith.constant 0 : index
    %257 = vector.load %arg10[%c8_112, %c0_113] : memref<32x128xbf16, #tpu.memory_space<vmem>>, vector<8x128xbf16>
    %258 = arith.extf %257 : vector<8x128xbf16> to vector<8x128xf32>
    %259 = arith.addf %253, %258 : vector<8x128xf32>
    %260 = arith.truncf %259 : vector<8x128xf32> to vector<8x128xbf16>
    %c8_114 = arith.constant 8 : index
    %c0_115 = arith.constant 0 : index
    %261 = vector.load %arg10[%c8_114, %c0_115] : memref<32x128xbf16, #tpu.memory_space<vmem>>, vector<8x128xbf16>
    tpu.vector_store %arg10[%c8_114, %c0_115], %260 {strides = array<i32>} : memref<32x128xbf16, #tpu.memory_space<vmem>>, vector<8x128xbf16>,
    %c1_116 = arith.constant 1 : index
    %c0_117 = arith.constant 0 : index
    %c0_118 = arith.constant 0 : index
    %262 = vector.load %arg12[%c1_116, %c0_117, %c0_118] : memref<2x8x128xf32, #tpu.memory_space<vmem>>, vector<1x8x128xf32>
    %263 = vector.shape_cast %262 : vector<1x8x128xf32> to vector<8x128xf32>
    %c16_119 = arith.constant 16 : index
    %c0_120 = arith.constant 0 : index
    %264 = vector.load %arg11[%c16_119, %c0_120] : memref<32x384xf32, #tpu.memory_space<vmem>>, vector<8x384xf32>
    %265 = arith.truncf %263 : vector<8x128xf32> to vector<8x128xbf16>
    %cst_121 = arith.constant dense<0.000000e+00> : vector<8x384xf32>
    %266 = tpu.matmul %265, %168, %cst_121 {dimension_numbers = #tpu.dot_dimension_numbers<[1], [0], [0], [1], [0, 0, 1, 1], [], []>} : vector<8x128xbf16>, vector<128x384xbf16>, vector<8x384xf32> -> vector<8x384xf32>
    %267 = vector.extract_strided_slice %264 {offsets = [0, 0], sizes = [8, 128], strides = [1, 1]} : vector<8x384xf32> to vector<8x128xf32>
    %268 = vector.extract_strided_slice %266 {offsets = [0, 0], sizes = [8, 128], strides = [1, 1]} : vector<8x384xf32> to vector<8x128xf32>
    %269 = arith.addf %267, %268 : vector<8x128xf32>
    %270 = arith.negf %269 : vector<8x128xf32>
    %271 = math.exp %270 : vector<8x128xf32>
    %cst_122 = arith.constant 1.000000e+00 : f32
    %272 = vector.broadcast %cst_122 : f32 to vector<8x128xf32>
    %273 = arith.addf %272, %271 : vector<8x128xf32>
    %274 = arith.divf %272, %273 : vector<8x128xf32>
    %275 = vector.extract_strided_slice %264 {offsets = [0, 128], sizes = [8, 128], strides = [1, 1]} : vector<8x384xf32> to vector<8x128xf32>
    %276 = vector.extract_strided_slice %266 {offsets = [0, 128], sizes = [8, 128], strides = [1, 1]} : vector<8x384xf32> to vector<8x128xf32>
    %277 = arith.addf %275, %276 : vector<8x128xf32>
    %278 = arith.negf %277 : vector<8x128xf32>
    %279 = math.exp %278 : vector<8x128xf32>
    %cst_123 = arith.constant 1.000000e+00 : f32
    %280 = vector.broadcast %cst_123 : f32 to vector<8x128xf32>
    %281 = arith.addf %280, %279 : vector<8x128xf32>
    %282 = arith.divf %280, %281 : vector<8x128xf32>
    %283 = vector.extract_strided_slice %264 {offsets = [0, 256], sizes = [8, 128], strides = [1, 1]} : vector<8x384xf32> to vector<8x128xf32>
    %284 = vector.extract_strided_slice %266 {offsets = [0, 256], sizes = [8, 128], strides = [1, 1]} : vector<8x384xf32> to vector<8x128xf32>
    %285 = vector.broadcast %170 : vector<1x128xf32> to vector<8x128xf32>
    %286 = arith.addf %284, %285 : vector<8x128xf32>
    %287 = arith.mulf %274, %286 : vector<8x128xf32>
    %288 = arith.addf %283, %287 : vector<8x128xf32>
    %289 = math.tanh %288 : vector<8x128xf32>
    %cst_124 = arith.constant 1.000000e+00 : f32
    %290 = vector.broadcast %cst_124 : f32 to vector<8x128xf32>
    %291 = arith.subf %290, %282 : vector<8x128xf32>
    %292 = arith.mulf %291, %289 : vector<8x128xf32>
    %293 = arith.mulf %282, %263 : vector<8x128xf32>
    %294 = arith.addf %292, %293 : vector<8x128xf32>
    %c1_125 = arith.constant 1 : index
    %c0_126 = arith.constant 0 : index
    %c0_127 = arith.constant 0 : index
    %295 = vector.load %arg12[%c1_125, %c0_126, %c0_127] : memref<2x8x128xf32, #tpu.memory_space<vmem>>, vector<1x8x128xf32>
    %296 = vector.shape_cast %295 : vector<1x8x128xf32> to vector<8x128xf32>
    %297 = vector.shape_cast %294 : vector<8x128xf32> to vector<1x8x128xf32>
    tpu.vector_store %arg12[%c1_125, %c0_126, %c0_127], %297 {strides = array<i32>} : memref<2x8x128xf32, #tpu.memory_space<vmem>>, vector<1x8x128xf32>,
    %c16_128 = arith.constant 16 : index
    %c0_129 = arith.constant 0 : index
    %298 = vector.load %arg10[%c16_128, %c0_129] : memref<32x128xbf16, #tpu.memory_space<vmem>>, vector<8x128xbf16>
    %299 = arith.extf %298 : vector<8x128xbf16> to vector<8x128xf32>
    %300 = arith.addf %294, %299 : vector<8x128xf32>
    %301 = arith.truncf %300 : vector<8x128xf32> to vector<8x128xbf16>
    %c16_130 = arith.constant 16 : index
    %c0_131 = arith.constant 0 : index
    %302 = vector.load %arg10[%c16_130, %c0_131] : memref<32x128xbf16, #tpu.memory_space<vmem>>, vector<8x128xbf16>
    tpu.vector_store %arg10[%c16_130, %c0_131], %301 {strides = array<i32>} : memref<32x128xbf16, #tpu.memory_space<vmem>>, vector<8x128xbf16>,
    %c1_132 = arith.constant 1 : index
    %c0_133 = arith.constant 0 : index
    %c0_134 = arith.constant 0 : index
    %303 = vector.load %arg12[%c1_132, %c0_133, %c0_134] : memref<2x8x128xf32, #tpu.memory_space<vmem>>, vector<1x8x128xf32>
    %304 = vector.shape_cast %303 : vector<1x8x128xf32> to vector<8x128xf32>
    %c24_135 = arith.constant 24 : index
    %c0_136 = arith.constant 0 : index
    %305 = vector.load %arg11[%c24_135, %c0_136] : memref<32x384xf32, #tpu.memory_space<vmem>>, vector<8x384xf32>
    %306 = arith.truncf %304 : vector<8x128xf32> to vector<8x128xbf16>
    %cst_137 = arith.constant dense<0.000000e+00> : vector<8x384xf32>
    %307 = tpu.matmul %306, %168, %cst_137 {dimension_numbers = #tpu.dot_dimension_numbers<[1], [0], [0], [1], [0, 0, 1, 1], [], []>} : vector<8x128xbf16>, vector<128x384xbf16>, vector<8x384xf32> -> vector<8x384xf32>
    %308 = vector.extract_strided_slice %305 {offsets = [0, 0], sizes = [8, 128], strides = [1, 1]} : vector<8x384xf32> to vector<8x128xf32>
    %309 = vector.extract_strided_slice %307 {offsets = [0, 0], sizes = [8, 128], strides = [1, 1]} : vector<8x384xf32> to vector<8x128xf32>
    %310 = arith.addf %308, %309 : vector<8x128xf32>
    %311 = arith.negf %310 : vector<8x128xf32>
    %312 = math.exp %311 : vector<8x128xf32>
    %cst_138 = arith.constant 1.000000e+00 : f32
    %313 = vector.broadcast %cst_138 : f32 to vector<8x128xf32>
    %314 = arith.addf %313, %312 : vector<8x128xf32>
    %315 = arith.divf %313, %314 : vector<8x128xf32>
    %316 = vector.extract_strided_slice %305 {offsets = [0, 128], sizes = [8, 128], strides = [1, 1]} : vector<8x384xf32> to vector<8x128xf32>
    %317 = vector.extract_strided_slice %307 {offsets = [0, 128], sizes = [8, 128], strides = [1, 1]} : vector<8x384xf32> to vector<8x128xf32>
    %318 = arith.addf %316, %317 : vector<8x128xf32>
    %319 = arith.negf %318 : vector<8x128xf32>
    %320 = math.exp %319 : vector<8x128xf32>
    %cst_139 = arith.constant 1.000000e+00 : f32
    %321 = vector.broadcast %cst_139 : f32 to vector<8x128xf32>
    %322 = arith.addf %321, %320 : vector<8x128xf32>
    %323 = arith.divf %321, %322 : vector<8x128xf32>
    %324 = vector.extract_strided_slice %305 {offsets = [0, 256], sizes = [8, 128], strides = [1, 1]} : vector<8x384xf32> to vector<8x128xf32>
    %325 = vector.extract_strided_slice %307 {offsets = [0, 256], sizes = [8, 128], strides = [1, 1]} : vector<8x384xf32> to vector<8x128xf32>
    %326 = vector.broadcast %170 : vector<1x128xf32> to vector<8x128xf32>
    %327 = arith.addf %325, %326 : vector<8x128xf32>
    %328 = arith.mulf %315, %327 : vector<8x128xf32>
    %329 = arith.addf %324, %328 : vector<8x128xf32>
    %330 = math.tanh %329 : vector<8x128xf32>
    %cst_140 = arith.constant 1.000000e+00 : f32
    %331 = vector.broadcast %cst_140 : f32 to vector<8x128xf32>
    %332 = arith.subf %331, %323 : vector<8x128xf32>
    %333 = arith.mulf %332, %330 : vector<8x128xf32>
    %334 = arith.mulf %323, %304 : vector<8x128xf32>
    %335 = arith.addf %333, %334 : vector<8x128xf32>
    %c1_141 = arith.constant 1 : index
    %c0_142 = arith.constant 0 : index
    %c0_143 = arith.constant 0 : index
    %336 = vector.load %arg12[%c1_141, %c0_142, %c0_143] : memref<2x8x128xf32, #tpu.memory_space<vmem>>, vector<1x8x128xf32>
    %337 = vector.shape_cast %336 : vector<1x8x128xf32> to vector<8x128xf32>
    %338 = vector.shape_cast %335 : vector<8x128xf32> to vector<1x8x128xf32>
    tpu.vector_store %arg12[%c1_141, %c0_142, %c0_143], %338 {strides = array<i32>} : memref<2x8x128xf32, #tpu.memory_space<vmem>>, vector<1x8x128xf32>,
    %c24_144 = arith.constant 24 : index
    %c0_145 = arith.constant 0 : index
    %339 = vector.load %arg10[%c24_144, %c0_145] : memref<32x128xbf16, #tpu.memory_space<vmem>>, vector<8x128xbf16>
    %340 = arith.extf %339 : vector<8x128xbf16> to vector<8x128xf32>
    %341 = arith.addf %335, %340 : vector<8x128xf32>
    %342 = arith.truncf %341 : vector<8x128xf32> to vector<8x128xbf16>
    %c24_146 = arith.constant 24 : index
    %c0_147 = arith.constant 0 : index
    %343 = vector.load %arg10[%c24_146, %c0_147] : memref<32x128xbf16, #tpu.memory_space<vmem>>, vector<8x128xbf16>
    tpu.vector_store %arg10[%c24_146, %c0_147], %342 {strides = array<i32>} : memref<32x128xbf16, #tpu.memory_space<vmem>>, vector<8x128xbf16>,
    %c0_148 = arith.constant 0 : index
    %c0_149 = arith.constant 0 : index
    %344 = vector.load %arg10[%c0_148, %c0_149] : memref<32x128xbf16, #tpu.memory_space<vmem>>, vector<32x128xbf16>
    %c0_150 = arith.constant 0 : index
    %c0_151 = arith.constant 0 : index
    %345 = vector.load %arg7[%c0_150, %c0_151] : memref<128x128xbf16, #tpu.memory_space<vmem>>, vector<128x128xbf16>
    %cst_152 = arith.constant dense<0.000000e+00> : vector<32x128xf32>
    %346 = tpu.matmul %344, %345, %cst_152 {dimension_numbers = #tpu.dot_dimension_numbers<[1], [0], [0], [1], [0, 0, 1, 1], [], []>} : vector<32x128xbf16>, vector<128x128xbf16>, vector<32x128xf32> -> vector<32x128xf32>
    %c0_153 = arith.constant 0 : index
    %c0_154 = arith.constant 0 : index
    %347 = vector.load %arg8[%c0_153, %c0_154] : memref<1x128xf32, #tpu.memory_space<vmem>>, vector<1x128xf32>
    %348 = vector.broadcast %347 : vector<1x128xf32> to vector<32x128xf32>
    %349 = arith.addf %346, %348 : vector<32x128xf32>
    %c0_155 = arith.constant 0 : index
    %c0_156 = arith.constant 0 : index
    %350 = vector.load %arg9[%c0_155, %c0_156] : memref<32x128xf32, #tpu.memory_space<vmem>>, vector<32x128xf32>
    tpu.vector_store %arg9[%c0_155, %c0_156], %349 {strides = array<i32>} : memref<32x128xf32, #tpu.memory_space<vmem>>, vector<32x128xf32>,
    return
  }
  func.func @transform_0(%arg0: i32) -> (i32, i32) {
    %c0_i32 = arith.constant 0 : i32
    %c0_i32_0 = arith.constant 0 : i32
    return %arg0, %c0_i32 : i32, i32
  }
  func.func @transform_1(%arg0: i32) -> (i32, i32) {
    %c0_i32 = arith.constant 0 : i32
    %c0_i32_0 = arith.constant 0 : i32
    %c0_i32_1 = arith.constant 0 : i32
    return %c0_i32, %c0_i32_0 : i32, i32
  }
  func.func @transform_2(%arg0: i32) -> (i32, i32, i32) {
    %c0_i32 = arith.constant 0 : i32
    %c0_i32_0 = arith.constant 0 : i32
    %c0_i32_1 = arith.constant 0 : i32
    %c0_i32_2 = arith.constant 0 : i32
    return %c0_i32, %c0_i32_0, %c0_i32_1 : i32, i32, i32
  }
  func.func @transform_3(%arg0: i32) -> (i32, i32, i32) {
    %c0_i32 = arith.constant 0 : i32
    %c0_i32_0 = arith.constant 0 : i32
    %c0_i32_1 = arith.constant 0 : i32
    %c0_i32_2 = arith.constant 0 : i32
    return %c0_i32, %c0_i32_0, %c0_i32_1 : i32, i32, i32
  }
  func.func @transform_4(%arg0: i32) -> (i32, i32, i32) {
    %c0_i32 = arith.constant 0 : i32
    %c0_i32_0 = arith.constant 0 : i32
    %c0_i32_1 = arith.constant 0 : i32
    %c0_i32_2 = arith.constant 0 : i32
    return %c0_i32, %c0_i32_0, %c0_i32_1 : i32, i32, i32
  }
  func.func @transform_5(%arg0: i32) -> (i32, i32, i32) {
    %c0_i32 = arith.constant 0 : i32
    %c0_i32_0 = arith.constant 0 : i32
    %c0_i32_1 = arith.constant 0 : i32
    %c0_i32_2 = arith.constant 0 : i32
    return %c0_i32, %c0_i32_0, %c0_i32_1 : i32, i32, i32
  }
  func.func @transform_6(%arg0: i32) -> (i32, i32) {
    %c0_i32 = arith.constant 0 : i32
    %c0_i32_0 = arith.constant 0 : i32
    %c0_i32_1 = arith.constant 0 : i32
    return %c0_i32, %c0_i32_0 : i32, i32
  }
  func.func @transform_7(%arg0: i32) -> (i32, i32) {
    %c0_i32 = arith.constant 0 : i32
    %c0_i32_0 = arith.constant 0 : i32
    %c0_i32_1 = arith.constant 0 : i32
    return %c0_i32, %c0_i32_0 : i32, i32
  }
  func.func @transform_8(%arg0: i32) -> (i32, i32) {
    %c0_i32 = arith.constant 0 : i32
    %c0_i32_0 = arith.constant 0 : i32
    return %arg0, %c0_i32 : i32, i32
  }
}

</mosaic_0001>

<llo_original>
// kernel: tpu_custom_call.1
$region0: #{tpu_custom_call.1}
  #allocation0 [shape = 'u32[]', space=smem, size = 0x4, offset = 0x4, fixed_abs, tag = 'smem constant byte address 0x4 - core index']
  #allocation1 [shape = 'u32[144,128]{1,0:T(1,128)}', space=vmem, size = 0x12000, scoped, tag = 'internal scratch']
  #allocation2 [shape = 'bf16[32,128]{1,0:T(16,128)(2,1)}', space=vmem, size = 0x2000, scoped, tag = 'scratch operand']
  #allocation3 [shape = 'f32[32,384]{1,0:T(8,128)}', space=vmem, size = 0xc000, scoped, tag = 'scratch operand']
  #allocation4 [shape = 'f32[2,8,128]{2,1,0:T(8,128)}', space=vmem, size = 0x2000, scoped, tag = 'scratch operand']
  %s0 = inlined_call_operand.hbm [shape: bf16[64,128], index: 0, kind: input, shape index: {}]
  %s1 = inlined_call_operand.hbm [shape: bf16[128,384], index: 1, kind: input, shape index: {}]
  %s2 = inlined_call_operand.hbm [shape: bf16[1,128,384], index: 2, kind: input, shape index: {}]
  %s3 = inlined_call_operand.hbm [shape: bf16[2,128,384], index: 3, kind: input, shape index: {}]
  %s4 = inlined_call_operand.vmem [shape: f32[2,1,384], index: 4, kind: input, shape index: {}]
  %s5 = inlined_call_operand.vmem [shape: f32[2,1,128], index: 5, kind: input, shape index: {}]
  %s6 = inlined_call_operand.hbm [shape: bf16[128,128], index: 6, kind: input, shape index: {}]
  %s7 = inlined_call_operand.vmem [shape: f32[1,128], index: 7, kind: input, shape index: {}]
  %s8 = inlined_call_operand.hbm [shape: f32[64,128], index: 8, kind: output, shape index: {}]
  %s9 = sld [smem:[#allocation0]]
  $region89: #{tpu_custom_call.1} parent=0
    _
  %s11 = ssub.s32 1, %s9
  %s12 = scalar_select 0, %s11, %s9
  $region1: #{tpu_custom_call.1} parent=0
    #allocation5 [shape = 'u8[16384]{0}', space=vmem, size = 0x4000, scoped, tag = 'input window, operand 0']
    #allocation6 [shape = 's32[2]{0}', space=sflag, size = 0x8, scoped, tag = 'scoped memory for tpu_custom_call.1']
    #allocation7 [shape = 's32[2]{0}', space=sflag, size = 0x8, scoped, tag = 'scoped memory for tpu_custom_call.1']
    #allocation8 [shape = 'u8[98304]{0}', space=vmem, size = 0x18000, scoped, tag = 'input window, operand 1, single buffered']
    #allocation9 [shape = 's32[1]{0}', space=sflag, size = 0x4, scoped, tag = 'scoped memory for tpu_custom_call.1']
    #allocation10 [shape = 'u8[98304]{0}', space=vmem, size = 0x18000, scoped, tag = 'input window, operand 2, single buffered']
    #allocation11 [shape = 'u8[196608]{0}', space=vmem, size = 0x30000, scoped, tag = 'input window, operand 3, single buffered']
    #allocation12 [shape = 's32[1]{0}', space=sflag, size = 0x4, scoped, tag = 'scoped memory for tpu_custom_call.1']
    #allocation13 [shape = 'u8[32768]{0}', space=vmem, size = 0x8000, scoped, tag = 'input window, operand 6, single buffered']
    #allocation14 [shape = 'u8[32768]{0}', space=vmem, size = 0x8000, scoped, tag = 'output window, operand 0']
    %13 = vsyncpa [#allocation6], 0
    %s14 = scalar_lea.sflag [#allocation6], 1
    %15 = vsyncpa %s14, 0
    %16 = vsyncpa [#allocation9], 0
    %17 = vsyncpa [#allocation12], 0
    %18 = vsyncpa [#allocation7], 0
    %s19 = scalar_lea.sflag [#allocation7], 1
    %20 = vsyncpa %s19, 0
    loop: start=0, step=1, limit=4
    $region2: #{tpu_custom_call.1} parent=1 // loop_pre_header
      _
    $region3: #{tpu_custom_call.1} parent=1 // loop_header
      %s22 = sphi 0, %s26
      %p23 = scmp.ge.s32.totalorder %s22, 4
      %s32 = sphi 0, %s34
      %s35 = sphi 0, %s32
      %s36 = sphi 0, %s35
      %s52 = sphi 0, %s36
      %s56 = sphi 0, %s56
      %s58 = sphi 0, %s56
      %s59 = sphi 0, %s58
      %s73 = sphi 0, %s59
      %s77 = sphi 0, %s77
      %s79 = sphi 0, %s77
      %s80 = sphi 0, %s79
      %s94 = sphi 0, %s80
      %s98 = sphi 0, %s98
      %s100 = sphi 0, %s98
      %s101 = sphi 0, %s100
      %s115 = sphi 0, %s101
      %s119 = sphi 0, %s119
      %s121 = sphi 0, %s119
      %s122 = sphi 0, %s121
      %s136 = sphi 0, %s122
      %s140 = sphi 0, %s140
      %s142 = sphi 0, %s140
      %s143 = sphi 0, %s142
      %s157 = sphi 0, %s143
      %s161 = sphi 0, %s161
      %s163 = sphi 0, %s161
      %s164 = sphi 0, %s163
      %s178 = sphi 0, %s164
      %s182 = sphi 0, %s182
      %s184 = sphi 0, %s182
      %s185 = sphi 0, %s184
      %s199 = sphi 0, %s185
      %s205 = sphi 0, %s207
      %s208 = sphi 0, %s205
      %s209 = sphi 0, %s208
      %s225 = sphi 0, %s209
    $region4: #{tpu_custom_call.1} parent=1 // loop_header_branch
      %25 = sbr.rel (%p23) target = $region8
    $region5: #{tpu_custom_call.1} parent=1 // loop_body
      %s27 = ssub.s32 %s22, 1
      %s28 = ssub.s32 %s22, 2
      %s29 = sadd.s32 %s22, 1
      %s30 = ssub.s32 %s22, %s29
      %p31 = scmp.eq.s32.totalorder %s30, 0
      %s33 = sadd.s32 %s32, 1
      %s34 = scalar_select %p31, %s32, %s33
      %p37 = pneg %p31
      %p38 = scmp.eq.s32.totalorder %s22, 1
      %p39 = por %p37, %p38
      %p40 = scmp.ne.s32.totalorder %s32, %s35
      %p41 = scmp.eq.s32.totalorder %s22, 0
      %p42 = por %p40, %p41
      %p43 = scmp.ne.s32.totalorder %s32, %s35
      %p44 = scmp.eq.s32.totalorder %s27, 1
      %p45 = por %p43, %p44
      %p46 = scmp.ne.s32.totalorder %s35, %s36
      %p47 = scmp.eq.s32.totalorder %s27, 0
      %p48 = por %p46, %p47
      %p49 = scmp.ne.s32.totalorder %s35, %s36
      %p50 = scmp.eq.s32.totalorder %s28, 1
      %p51 = por %p49, %p50
      %p53 = scmp.ne.s32.totalorder %s36, %s52
      %p54 = scmp.eq.s32.totalorder %s28, 0
      %p55 = por %p53, %p54
      %s57 = sadd.s32 %s56, 1
      %p60 = scmp.eq.s32.totalorder %s22, 1
      %p61 = scmp.ne.s32.totalorder %s56, %s58
      %p62 = scmp.eq.s32.totalorder %s22, 0
      %p63 = por %p61, %p62
      %p64 = scmp.ne.s32.totalorder %s56, %s58
      %p65 = scmp.eq.s32.totalorder %s27, 1
      %p66 = por %p64, %p65
      %p67 = scmp.ne.s32.totalorder %s58, %s59
      %p68 = scmp.eq.s32.totalorder %s27, 0
      %p69 = por %p67, %p68
      %p70 = scmp.ne.s32.totalorder %s58, %s59
      %p71 = scmp.eq.s32.totalorder %s28, 1
      %p72 = por %p70, %p71
      %p74 = scmp.ne.s32.totalorder %s59, %s73
      %p75 = scmp.eq.s32.totalorder %s28, 0
      %p76 = por %p74, %p75
      %s78 = sadd.s32 %s77, 1
      %p81 = scmp.eq.s32.totalorder %s22, 1
      %p82 = scmp.ne.s32.totalorder %s77, %s79
      %p83 = scmp.eq.s32.totalorder %s22, 0
      %p84 = por %p82, %p83
      %p85 = scmp.ne.s32.totalorder %s77, %s79
      %p86 = scmp.eq.s32.totalorder %s27, 1
      %p87 = por %p85, %p86
      %p88 = scmp.ne.s32.totalorder %s79, %s80
      %p89 = scmp.eq.s32.totalorder %s27, 0
      %p90 = por %p88, %p89
      %p91 = scmp.ne.s32.totalorder %s79, %s80
      %p92 = scmp.eq.s32.totalorder %s28, 1
      %p93 = por %p91, %p92
      %p95 = scmp.ne.s32.totalorder %s80, %s94
      %p96 = scmp.eq.s32.totalorder %s28, 0
      %p97 = por %p95, %p96
      %s99 = sadd.s32 %s98, 1
      %p102 = scmp.eq.s32.totalorder %s22, 1
      %p103 = scmp.ne.s32.totalorder %s98, %s100
      %p104 = scmp.eq.s32.totalorder %s22, 0
      %p105 = por %p103, %p104
      %p106 = scmp.ne.s32.totalorder %s98, %s100
      %p107 = scmp.eq.s32.totalorder %s27, 1
      %p108 = por %p106, %p107
      %p109 = scmp.ne.s32.totalorder %s100, %s101
      %p110 = scmp.eq.s32.totalorder %s27, 0
      %p111 = por %p109, %p110
      %p112 = scmp.ne.s32.totalorder %s100, %s101
      %p113 = scmp.eq.s32.totalorder %s28, 1
      %p114 = por %p112, %p113
      %p116 = scmp.ne.s32.totalorder %s101, %s115
      %p117 = scmp.eq.s32.totalorder %s28, 0
      %p118 = por %p116, %p117
      %s120 = sadd.s32 %s119, 1
      %p123 = scmp.eq.s32.totalorder %s22, 1
      %p124 = scmp.ne.s32.totalorder %s119, %s121
      %p125 = scmp.eq.s32.totalorder %s22, 0
      %p126 = por %p124, %p125
      %p127 = scmp.ne.s32.totalorder %s119, %s121
      %p128 = scmp.eq.s32.totalorder %s27, 1
      %p129 = por %p127, %p128
      %p130 = scmp.ne.s32.totalorder %s121, %s122
      %p131 = scmp.eq.s32.totalorder %s27, 0
      %p132 = por %p130, %p131
      %p133 = scmp.ne.s32.totalorder %s121, %s122
      %p134 = scmp.eq.s32.totalorder %s28, 1
      %p135 = por %p133, %p134
      %p137 = scmp.ne.s32.totalorder %s122, %s136
      %p138 = scmp.eq.s32.totalorder %s28, 0
      %p139 = por %p137, %p138
      %s141 = sadd.s32 %s140, 1
      %p144 = scmp.eq.s32.totalorder %s22, 1
      %p145 = scmp.ne.s32.totalorder %s140, %s142
      %p146 = scmp.eq.s32.totalorder %s22, 0
      %p147 = por %p145, %p146
      %p148 = scmp.ne.s32.totalorder %s140, %s142
      %p149 = scmp.eq.s32.totalorder %s27, 1
      %p150 = por %p148, %p149
      %p151 = scmp.ne.s32.totalorder %s142, %s143
      %p152 = scmp.eq.s32.totalorder %s27, 0
      %p153 = por %p151, %p152
      %p154 = scmp.ne.s32.totalorder %s142, %s143
      %p155 = scmp.eq.s32.totalorder %s28, 1
      %p156 = por %p154, %p155
      %p158 = scmp.ne.s32.totalorder %s143, %s157
      %p159 = scmp.eq.s32.totalorder %s28, 0
      %p160 = por %p158, %p159
      %s162 = sadd.s32 %s161, 1
      %p165 = scmp.eq.s32.totalorder %s22, 1
      %p166 = scmp.ne.s32.totalorder %s161, %s163
      %p167 = scmp.eq.s32.totalorder %s22, 0
      %p168 = por %p166, %p167
      %p169 = scmp.ne.s32.totalorder %s161, %s163
      %p170 = scmp.eq.s32.totalorder %s27, 1
      %p171 = por %p169, %p170
      %p172 = scmp.ne.s32.totalorder %s163, %s164
      %p173 = scmp.eq.s32.totalorder %s27, 0
      %p174 = por %p172, %p173
      %p175 = scmp.ne.s32.totalorder %s163, %s164
      %p176 = scmp.eq.s32.totalorder %s28, 1
      %p177 = por %p175, %p176
      %p179 = scmp.ne.s32.totalorder %s164, %s178
      %p180 = scmp.eq.s32.totalorder %s28, 0
      %p181 = por %p179, %p180
      %s183 = sadd.s32 %s182, 1
      %p186 = scmp.eq.s32.totalorder %s22, 1
      %p187 = scmp.ne.s32.totalorder %s182, %s184
      %p188 = scmp.eq.s32.totalorder %s22, 0
      %p189 = por %p187, %p188
      %p190 = scmp.ne.s32.totalorder %s182, %s184
      %p191 = scmp.eq.s32.totalorder %s27, 1
      %p192 = por %p190, %p191
      %p193 = scmp.ne.s32.totalorder %s184, %s185
      %p194 = scmp.eq.s32.totalorder %s27, 0
      %p195 = por %p193, %p194
      %p196 = scmp.ne.s32.totalorder %s184, %s185
      %p197 = scmp.eq.s32.totalorder %s28, 1
      %p198 = por %p196, %p197
      %p200 = scmp.ne.s32.totalorder %s185, %s199
      %p201 = scmp.eq.s32.totalorder %s28, 0
      %p202 = por %p200, %p201
      %s203 = ssub.s32 %s22, %s29
      %p204 = scmp.eq.s32.totalorder %s203, 0
      %s206 = sadd.s32 %s205, 1
      %s207 = scalar_select %p204, %s205, %s206
      %p210 = pneg %p204
      %p211 = scmp.eq.s32.totalorder %s22, 1
      %p212 = por %p210, %p211
      %p213 = scmp.ne.s32.totalorder %s205, %s208
      %p214 = scmp.eq.s32.totalorder %s22, 0
      %p215 = por %p213, %p214
      %p216 = scmp.ne.s32.totalorder %s205, %s208
      %p217 = scmp.eq.s32.totalorder %s27, 1
      %p218 = por %p216, %p217
      %p219 = scmp.ne.s32.totalorder %s208, %s209
      %p220 = scmp.eq.s32.totalorder %s27, 0
      %p221 = por %p219, %p220
      %p222 = scmp.ne.s32.totalorder %s208, %s209
      %p223 = scmp.eq.s32.totalorder %s28, 1
      %p224 = por %p222, %p223
      %p226 = scmp.ne.s32.totalorder %s209, %s225
      %p227 = scmp.eq.s32.totalorder %s28, 0
      %p228 = por %p226, %p227
      %p229 = scmp.le.s32.totalorder 1, %s22
      %p230 = scmp.lt.s32.totalorder %s22, 3
      %p231 = pnand %p229, %p230
      %p232 = pneg %p231
      // Predicated region
      $region9: #{tpu_custom_call.1} parent=5 // pred_check
        _
      $region10: #{tpu_custom_call.1} parent=5 // pred_check_branch
        %234 = sbr.rel (%p231) target = $region12
      $region11: #{tpu_custom_call.1} parent=5 // pred_region
        %s235 = ssub.s32 %s22, 1
        // Predicated region
        $region13: #{tpu_custom_call.1} parent=11 // pred_check
          %p236 = pneg %p69
        $region14: #{tpu_custom_call.1} parent=11 // pred_check_branch
          %238 = sbr.rel (%p236) target = $region16
        $region15: #{tpu_custom_call.1} parent=11 // pred_region
          %s240 = ssub.s32 3072, 3072
          %241 = vsyncadd [#allocation9], %s240
          %s242 = sshll.u32 [#allocation8], 4
          %s243 = int_to_ptr.vmem [resolvable:$true] %s242
          %248 = dma.hbm_to_vmem [thread:$0]  %s1, 3072, %s243, [#allocation9], 192, 192, 12
        $region16: #{tpu_custom_call.1} parent=11 // pred_fallthru
          _
        // Predicated region
        $region17: #{tpu_custom_call.1} parent=11 // pred_check
          %p249 = pneg %p90
        $region18: #{tpu_custom_call.1} parent=11 // pred_check_branch
          %251 = sbr.rel (%p249) target = $region20
        $region19: #{tpu_custom_call.1} parent=11 // pred_region
          %s253 = ssub.s32 3072, 3072
          %254 = vsyncadd [#allocation9], %s253
          %s255 = sshll.u32 [#allocation10], 4
          %s256 = int_to_ptr.vmem [resolvable:$true] %s255
          %261 = dma.hbm_to_vmem [thread:$0]  %s2, 3072, %s256, [#allocation9], 192, 192, 12
        $region20: #{tpu_custom_call.1} parent=11 // pred_fallthru
          _
        // Predicated region
        $region21: #{tpu_custom_call.1} parent=11 // pred_check
          %p262 = pneg %p111
        $region22: #{tpu_custom_call.1} parent=11 // pred_check_branch
          %264 = sbr.rel (%p262) target = $region24
        $region23: #{tpu_custom_call.1} parent=11 // pred_region
          %s266 = ssub.s32 6144, 6144
          %267 = vsyncadd [#allocation12], %s266
          %s268 = sshll.u32 [#allocation11], 4
          %s269 = int_to_ptr.vmem [resolvable:$true] %s268
          %274 = dma.hbm_to_vmem [thread:$0]  %s3, 6144, %s269, [#allocation12], 192, 192, 12
        $region24: #{tpu_custom_call.1} parent=11 // pred_fallthru
          _
        // Predicated region
        $region25: #{tpu_custom_call.1} parent=11 // pred_check
          %p275 = pneg %p132
        $region26: #{tpu_custom_call.1} parent=11 // pred_check_branch
          %277 = sbr.rel (%p275) target = $region28
        $region27: #{tpu_custom_call.1} parent=11 // pred_region
          _
        $region28: #{tpu_custom_call.1} parent=11 // pred_fallthru
          _
        // Predicated region
        $region29: #{tpu_custom_call.1} parent=11 // pred_check
          %p278 = pneg %p153
        $region30: #{tpu_custom_call.1} parent=11 // pred_check_branch
          %280 = sbr.rel (%p278) target = $region32
        $region31: #{tpu_custom_call.1} parent=11 // pred_region
          _
        $region32: #{tpu_custom_call.1} parent=11 // pred_fallthru
          _
        // Predicated region
        $region33: #{tpu_custom_call.1} parent=11 // pred_check
          %p281 = pneg %p174
        $region34: #{tpu_custom_call.1} parent=11 // pred_check_branch
          %283 = sbr.rel (%p281) target = $region36
        $region35: #{tpu_custom_call.1} parent=11 // pred_region
          %s285 = ssub.s32 1024, 1024
          %286 = vsyncadd [#allocation12], %s285
          %s287 = sshll.u32 [#allocation13], 4
          %s288 = int_to_ptr.vmem [resolvable:$true] %s287
          %293 = dma.hbm_to_vmem [thread:$0]  %s6, 1024, %s288, [#allocation12], 64, 64, 4
        $region36: #{tpu_custom_call.1} parent=11 // pred_fallthru
          _
        // Predicated region
        $region37: #{tpu_custom_call.1} parent=11 // pred_check
          %p294 = pneg %p195
        $region38: #{tpu_custom_call.1} parent=11 // pred_check_branch
          %296 = sbr.rel (%p294) target = $region40
        $region39: #{tpu_custom_call.1} parent=11 // pred_region
          _
        $region40: #{tpu_custom_call.1} parent=11 // pred_fallthru
          _
      $region12: #{tpu_custom_call.1} parent=5 // pred_fallthru
        _
      %p297 = scmp.lt.s32.totalorder %s22, 2
      // Predicated region
      $region41: #{tpu_custom_call.1} parent=5 // pred_check
        %p298 = pneg %p297
      $region42: #{tpu_custom_call.1} parent=5 // pred_check_branch
        %300 = sbr.rel (%p298) target = $region44
      $region43: #{tpu_custom_call.1} parent=5 // pred_region
        // Predicated region
        $region45: #{tpu_custom_call.1} parent=43 // pred_check
          %p301 = pneg %p42
        $region46: #{tpu_custom_call.1} parent=43 // pred_check_branch
          %303 = sbr.rel (%p301) target = $region48
        $region47: #{tpu_custom_call.1} parent=43 // pred_region
          %s304 = sand.u32 %s32, 1
          %s305 = scalar_lea.sflag [#allocation6], %s304
          %s306 = sand.u32 %s32, 1
          %s307 = smul.addr %s306, 16
          %s308 = scalar_lea.vmem [#allocation5], %s307
          %s309 = smul.u32 4, %s22
          %s311 = ssub.s32 256, 256
          %312 = vsyncadd %s305, %s311
          %s313 = smul.addr %s309, 64
          %s314 = scalar_lea.hbm %s0, %s313
          %s315 = sshll.u32 %s308, 4
          %s316 = int_to_ptr.vmem [resolvable:$true] %s315
          %321 = dma.hbm_to_vmem [thread:$0]  %s314, 256, %s316, %s305, 64, 64, 4
        $region48: #{tpu_custom_call.1} parent=43 // pred_fallthru
          _
      $region44: #{tpu_custom_call.1} parent=5 // pred_fallthru
        _
      %p322 = scmp.le.s32.totalorder 1, %s22
      %p323 = scmp.lt.s32.totalorder %s22, 3
      %p324 = pnand %p322, %p323
      %p325 = pneg %p324
      // Predicated region
      $region49: #{tpu_custom_call.1} parent=5 // pred_check
        _
      $region50: #{tpu_custom_call.1} parent=5 // pred_check_branch
        %327 = sbr.rel (%p324) target = $region52
      $region51: #{tpu_custom_call.1} parent=5 // pred_region
        %s328 = ssub.s32 %s22, 1
        %s329 = sand.u32 %s35, 1
        %s330 = scalar_lea.sflag [#allocation6], %s329
        %s331 = sand.u32 %s35, 1
        %s332 = smul.addr %s331, 16
        %s333 = scalar_lea.vmem [#allocation5], %s332
        // Predicated region
        $region53: #{tpu_custom_call.1} parent=51 // pred_check
          %p334 = pneg %p48
        $region54: #{tpu_custom_call.1} parent=51 // pred_check_branch
          %336 = sbr.rel (%p334) target = $region56
        $region55: #{tpu_custom_call.1} parent=51 // pred_region
          %337 = dma.done %s330, 256
        $region56: #{tpu_custom_call.1} parent=51 // pred_fallthru
          _
        // Predicated region
        $region57: #{tpu_custom_call.1} parent=51 // pred_check
          %p338 = pneg %p69
        $region58: #{tpu_custom_call.1} parent=51 // pred_check_branch
          %340 = sbr.rel (%p338) target = $region60
        $region59: #{tpu_custom_call.1} parent=51 // pred_region
          %341 = dma.done [#allocation9], 3072
        $region60: #{tpu_custom_call.1} parent=51 // pred_fallthru
          _
        // Predicated region
        $region61: #{tpu_custom_call.1} parent=51 // pred_check
          %p342 = pneg %p90
        $region62: #{tpu_custom_call.1} parent=51 // pred_check_branch
          %344 = sbr.rel (%p342) target = $region64
        $region63: #{tpu_custom_call.1} parent=51 // pred_region
          %345 = dma.done [#allocation9], 3072
        $region64: #{tpu_custom_call.1} parent=51 // pred_fallthru
          _
        // Predicated region
        $region65: #{tpu_custom_call.1} parent=51 // pred_check
          %p346 = pneg %p111
        $region66: #{tpu_custom_call.1} parent=51 // pred_check_branch
          %348 = sbr.rel (%p346) target = $region68
        $region67: #{tpu_custom_call.1} parent=51 // pred_region
          %349 = dma.done [#allocation12], 6144
        $region68: #{tpu_custom_call.1} parent=51 // pred_fallthru
          _
        // Predicated region
        $region69: #{tpu_custom_call.1} parent=51 // pred_check
          %p350 = pneg %p174
        $region70: #{tpu_custom_call.1} parent=51 // pred_check_branch
          %352 = sbr.rel (%p350) target = $region72
        $region71: #{tpu_custom_call.1} parent=51 // pred_region
          %353 = dma.done [#allocation12], 1024
        $region72: #{tpu_custom_call.1} parent=51 // pred_fallthru
          _
        %s354 = sand.u32 %s35, 1
        %s355 = scalar_lea.sflag [#allocation6], %s354
        %s356 = sand.u32 %s35, 1
        %s357 = smul.addr %s356, 16
        %s358 = scalar_lea.vmem [#allocation5], %s357
        %p359 = pneg %p48
        %p360 = pneg %p45
        %p361 = pneg %p69
        %p362 = pneg %p66
        %p363 = pneg %p90
        %p364 = pneg %p87
        %p365 = pneg %p111
        %p366 = pneg %p108
        %p367 = pneg %p132
        %p368 = pneg %p129
        %p369 = pneg %p153
        %p370 = pneg %p150
        %p371 = pneg %p174
        %p372 = pneg %p171
        %p373 = pneg %p195
        %p374 = pneg %p192
        %p375 = pneg %p221
        %p376 = pneg %p218
        %s377 = sand.u32 %s208, 1
        %s378 = scalar_lea.sflag [#allocation7], %s377
        %s379 = sand.u32 %s208, 1
        %s380 = smul.addr %s379, 32
        %s381 = scalar_lea.vmem [#allocation14], %s380
        %s382 = smul.u32 4, %s27
        %s383 = smul.u32 4, %s27
        %p385 = scmp.eq.s32.totalorder %s27, 0
        // Predicated region
        $region73: #{tpu_custom_call.1} parent=51 // pred_check
          %p386 = pneg %p385
        $region74: #{tpu_custom_call.1} parent=51 // pred_check_branch
          %388 = sbr.rel (%p386) target = $region76
        $region75: #{tpu_custom_call.1} parent=51 // pred_region
          %389 = vst [vmem:[#allocation4] sm:$0xff] 0.0
          %390 = vst [vmem:[#allocation4 + $0x8] sm:$0xff] 0.0
        $region76: #{tpu_custom_call.1} parent=51 // pred_fallthru
          _
        %v391 = vld [vmem:[#allocation11] sm:$0xff]
        %v392 = vld [vmem:[#allocation11 + $0x8] sm:$0xf]
        %v393 = vld [vmem:[#allocation11 + $0xc] sm:$0xff]
        %v394 = vld [vmem:[#allocation11 + $0x14] sm:$0xf]
        %v395 = vld [vmem:[#allocation11 + $0x18] sm:$0xff]
        %v396 = vld [vmem:[#allocation11 + $0x20] sm:$0xf]
        %v397 = vld [vmem:[#allocation11 + $0x24] sm:$0xff]
        %v398 = vld [vmem:[#allocation11 + $0x2c] sm:$0xf]
        %v399 = vld [vmem:[#allocation11 + $0x30] sm:$0xff]
        %v400 = vld [vmem:[#allocation11 + $0x38] sm:$0xf]
        %v401 = vld [vmem:[#allocation11 + $0x3c] sm:$0xff]
        %v402 = vld [vmem:[#allocation11 + $0x44] sm:$0xf]
        %v403 = vld [vmem:[#allocation11 + $0x48] sm:$0xff]
        %v404 = vld [vmem:[#allocation11 + $0x50] sm:$0xf]
        %v405 = vld [vmem:[#allocation11 + $0x54] sm:$0xff]
        %v406 = vld [vmem:[#allocation11 + $0x5c] sm:$0xf]
        %v407 = vld [vmem:[#allocation11 + $0x60] sm:$0xff]
        %v408 = vld [vmem:[#allocation11 + $0x68] sm:$0xf]
        %v409 = vld [vmem:[#allocation11 + $0x6c] sm:$0xff]
        %v410 = vld [vmem:[#allocation11 + $0x74] sm:$0xf]
        %v411 = vld [vmem:[#allocation11 + $0x78] sm:$0xff]
        %v412 = vld [vmem:[#allocation11 + $0x80] sm:$0xf]
        %v413 = vld [vmem:[#allocation11 + $0x84] sm:$0xff]
        %v414 = vld [vmem:[#allocation11 + $0x8c] sm:$0xf]
        %v415 = vld [vmem:[#allocation11 + $0x90] sm:$0xff]
        %v416 = vld [vmem:[#allocation11 + $0x98] sm:$0xf]
        %v417 = vld [vmem:[#allocation11 + $0x9c] sm:$0xff]
        %v418 = vld [vmem:[#allocation11 + $0xa4] sm:$0xf]
        %v419 = vld [vmem:[#allocation11 + $0xa8] sm:$0xff]
        %v420 = vld [vmem:[#allocation11 + $0xb0] sm:$0xf]
        %v421 = vld [vmem:[#allocation11 + $0xb4] sm:$0xff]
        %v422 = vld [vmem:[#allocation11 + $0xbc] sm:$0xf]
        %v423 = vld [vmem:[%s5] sm:$0x1]
        %v424 = vld [vmem:[%s333] sm:$0xf]
        %v425 = vld [vmem:[%s333 + $0x4] sm:$0xf]
        %v426 = vld [vmem:[%s333 + $0x8] sm:$0xf]
        %v427 = vld [vmem:[%s333 + $0xc] sm:$0xf]
        %v428 = vld [vmem:[#allocation8] sm:$0xff]
        %v429 = vld [vmem:[#allocation8 + $0x8] sm:$0xf]
        %v430 = vld [vmem:[#allocation8 + $0xc] sm:$0xff]
        %v431 = vld [vmem:[#allocation8 + $0x14] sm:$0xf]
        %v432 = vld [vmem:[#allocation8 + $0x18] sm:$0xff]
        %v433 = vld [vmem:[#allocation8 + $0x20] sm:$0xf]
        %v434 = vld [vmem:[#allocation8 + $0x24] sm:$0xff]
        %v435 = vld [vmem:[#allocation8 + $0x2c] sm:$0xf]
        %v436 = vld [vmem:[#allocation8 + $0x30] sm:$0xff]
        %v437 = vld [vmem:[#allocation8 + $0x38] sm:$0xf]
        %v438 = vld [vmem:[#allocation8 + $0x3c] sm:$0xff]
        %v439 = vld [vmem:[#allocation8 + $0x44] sm:$0xf]
        %v440 = vld [vmem:[#allocation8 + $0x48] sm:$0xff]
        %v441 = vld [vmem:[#allocation8 + $0x50] sm:$0xf]
        %v442 = vld [vmem:[#allocation8 + $0x54] sm:$0xff]
        %v443 = vld [vmem:[#allocation8 + $0x5c] sm:$0xf]
        %v444 = vld [vmem:[#allocation8 + $0x60] sm:$0xff]
        %v445 = vld [vmem:[#allocation8 + $0x68] sm:$0xf]
        %v446 = vld [vmem:[#allocation8 + $0x6c] sm:$0xff]
        %v447 = vld [vmem:[#allocation8 + $0x74] sm:$0xf]
        %v448 = vld [vmem:[#allocation8 + $0x78] sm:$0xff]
        %v449 = vld [vmem:[#allocation8 + $0x80] sm:$0xf]
        %v450 = vld [vmem:[#allocation8 + $0x84] sm:$0xff]
        %v451 = vld [vmem:[#allocation8 + $0x8c] sm:$0xf]
        %v452 = vld [vmem:[#allocation8 + $0x90] sm:$0xff]
        %v453 = vld [vmem:[#allocation8 + $0x98] sm:$0xf]
        %v454 = vld [vmem:[#allocation8 + $0x9c] sm:$0xff]
        %v455 = vld [vmem:[#allocation8 + $0xa4] sm:$0xf]
        %v456 = vld [vmem:[#allocation8 + $0xa8] sm:$0xff]
        %v457 = vld [vmem:[#allocation8 + $0xb0] sm:$0xf]
        %v458 = vld [vmem:[#allocation8 + $0xb4] sm:$0xff]
        %v459 = vld [vmem:[#allocation8 + $0xbc] sm:$0xf]
        %v460 = vld [vmem:[%s4] sm:$0x7]
        %v462 = vlaneseq
        %v463 = vshrl.u32 %v462, 7
        %v464 = vsub.s32 0, %v463
        %v465 = vrot.slane %v460, %v464
        %v466 = vlaneseq
        %v467 = vshrl.u32 %v466, 7
        %v468 = vsub.s32 1, %v467
        %v469 = vrot.slane %v460, %v468
        %v470 = vlaneseq
        %v471 = vshrl.u32 %v470, 7
        %v472 = vsub.s32 2, %v471
        %v473 = vrot.slane %v460, %v472
        %v481 = vunpack.c.l.b16 %v424
        %v482 = vunpack.c.l.b16 %v425
        %v483 = vunpack.c.l.b16 %v426
        %v484 = vunpack.c.l.b16 %v427
        %v485 = vpack.c.b16 %v482, %v481
        %v486 = vpack.c.b16 %v484, %v483
        %v521 = vunpack.c.l.b16 %v428
        %v522 = vunpack.c.h.b16 %v428
        %v523 = vunpack.c.l.b16 %v429
        %v524 = vunpack.c.l.b16 %v430
        %v525 = vunpack.c.h.b16 %v430
        %v526 = vunpack.c.l.b16 %v431
        %v527 = vunpack.c.l.b16 %v432
        %v528 = vunpack.c.h.b16 %v432
        %v529 = vunpack.c.l.b16 %v433
        %v530 = vunpack.c.l.b16 %v434
        %v531 = vunpack.c.h.b16 %v434
        %v532 = vunpack.c.l.b16 %v435
        %v533 = vunpack.c.l.b16 %v436
        %v534 = vunpack.c.h.b16 %v436
        %v535 = vunpack.c.l.b16 %v437
        %v536 = vunpack.c.l.b16 %v438
        %v537 = vunpack.c.h.b16 %v438
        %v538 = vunpack.c.l.b16 %v439
        %v539 = vunpack.c.l.b16 %v440
        %v540 = vunpack.c.h.b16 %v440
        %v541 = vunpack.c.l.b16 %v441
        %v542 = vunpack.c.l.b16 %v442
        %v543 = vunpack.c.h.b16 %v442
        %v544 = vunpack.c.l.b16 %v443
        %v545 = vunpack.c.l.b16 %v444
        %v546 = vunpack.c.h.b16 %v444
        %v547 = vunpack.c.l.b16 %v445
        %v548 = vunpack.c.l.b16 %v446
        %v549 = vunpack.c.h.b16 %v446
        %v550 = vunpack.c.l.b16 %v447
        %v551 = vunpack.c.l.b16 %v448
        %v552 = vunpack.c.h.b16 %v448
        %v553 = vunpack.c.l.b16 %v449
        %v554 = vunpack.c.l.b16 %v450
        %v555 = vunpack.c.h.b16 %v450
        %v556 = vunpack.c.l.b16 %v451
        %v557 = vunpack.c.l.b16 %v452
        %v558 = vunpack.c.h.b16 %v452
        %v559 = vunpack.c.l.b16 %v453
        %v560 = vunpack.c.l.b16 %v454
        %v561 = vunpack.c.h.b16 %v454
        %v562 = vunpack.c.l.b16 %v455
        %v563 = vunpack.c.l.b16 %v456
        %v564 = vunpack.c.h.b16 %v456
        %v565 = vunpack.c.l.b16 %v457
        %v566 = vunpack.c.l.b16 %v458
        %v567 = vunpack.c.h.b16 %v458
        %v568 = vunpack.c.l.b16 %v459
        %v569 = vpack.c.b16 %v524, %v521
        %v570 = vpack.c.b16 %v525, %v522
        %v571 = vpack.c.b16 %v526, %v523
        %v572 = vpack.c.b16 %v530, %v527
        %v573 = vpack.c.b16 %v531, %v528
        %v574 = vpack.c.b16 %v532, %v529
        %v575 = vpack.c.b16 %v536, %v533
        %v576 = vpack.c.b16 %v537, %v534
        %v577 = vpack.c.b16 %v538, %v535
        %v578 = vpack.c.b16 %v542, %v539
        %v579 = vpack.c.b16 %v543, %v540
        %v580 = vpack.c.b16 %v544, %v541
        %v581 = vpack.c.b16 %v548, %v545
        %v582 = vpack.c.b16 %v549, %v546
        %v583 = vpack.c.b16 %v550, %v547
        %v584 = vpack.c.b16 %v554, %v551
        %v585 = vpack.c.b16 %v555, %v552
        %v586 = vpack.c.b16 %v556, %v553
        %v587 = vpack.c.b16 %v560, %v557
        %v588 = vpack.c.b16 %v561, %v558
        %v589 = vpack.c.b16 %v562, %v559
        %v590 = vpack.c.b16 %v566, %v563
        %v591 = vpack.c.b16 %v567, %v564
        %v592 = vpack.c.b16 %v568, %v565
        %617 = vmatprep.subr.bf16.mxu0 %v570
        %618 = vmatpush1.bf16.msra.mxu0 %v569
        %619 = vmatprep.subr.bf16.mxu0 %v573
        %620 = vmatpush1.bf16.msra.mxu0 %v572
        %621 = vmatprep.subr.bf16.mxu0 %v576
        %622 = vmatpush1.bf16.msra.mxu0 %v575
        %623 = vmatprep.subr.bf16.mxu0 %v579
        %624 = vmatpush1.bf16.msra.mxu0 %v578
        %625 = vmatprep.subr.bf16.mxu0 %v582
        %626 = vmatpush1.bf16.msra.mxu0 %v581
        %627 = vmatprep.subr.bf16.mxu0 %v585
        %628 = vmatpush1.bf16.msra.mxu0 %v584
        %629 = vmatprep.subr.bf16.mxu0 %v588
        %630 = vmatpush1.bf16.msra.mxu0 %v587
        %631 = vmatprep.subr.bf16.mxu0 %v591
        %632 = vmatpush1.bf16.msra.mxu0 %v590
        %633 = vmatprep.subr.bf16.mxu0 0
        %634 = vmatpush1.bf16.msra.mxu0 0
        %635 = vmatprep.subr.bf16.mxu0 0
        %636 = vmatpush1.bf16.msra.mxu0 0
        %637 = vmatprep.subr.bf16.mxu0 0
        %638 = vmatpush1.bf16.msra.mxu0 0
        %639 = vmatprep.subr.bf16.mxu0 0
        %640 = vmatpush1.bf16.msra.mxu0 0
        %641 = vmatprep.subr.bf16.mxu0 0
        %642 = vmatpush1.bf16.msra.mxu0 0
        %643 = vmatprep.subr.bf16.mxu0 0
        %644 = vmatpush1.bf16.msra.mxu0 0
        %645 = vmatprep.subr.bf16.mxu0 0
        %646 = vmatpush1.bf16.msra.mxu0 0
        %647 = vmatprep.subr.bf16.mxu0 0
        %648 = vmatpush1.bf16.msra.mxu0 0
        %649 = vmatprep.mubr.bf16.mxu0 0
        %650 = vmatmul.mubr.bf16.gmra.mrb[0].mxu0 %v485
        %v651 = vpop.f32.mrb[0].mxu0
        %v652 = vadd.f32 %v465, %v651
        %v653 = vpop.f32.mrb[0].mxu0
        %v654 = vadd.f32 %v469, %v653
        %v655 = vpop.f32.mrb[0].mxu0
        %v656 = vadd.f32 %v465, %v655
        %v657 = vpop.f32.mrb[0].mxu0
        %v658 = vadd.f32 %v469, %v657
        %659 = vmatprep.mubr.bf16.mxu0 0
        %660 = vmatmul.mubr.bf16.gmra.mrb[0].mxu0 %v486
        %v661 = vpop.f32.mrb[0].mxu0
        %v662 = vadd.f32 %v465, %v661
        %v663 = vpop.f32.mrb[0].mxu0
        %v664 = vadd.f32 %v469, %v663
        %v665 = vpop.f32.mrb[0].mxu0
        %v666 = vadd.f32 %v465, %v665
        %v667 = vpop.f32.mrb[0].mxu0
        %v668 = vadd.f32 %v469, %v667
        %669 = vdwg.mxu0
        %670 = vmatprep.subr.bf16.mxu0 0
        %671 = vmatpush1.bf16.msra.mxu0 %v571
        %672 = vmatprep.subr.bf16.mxu0 0
        %673 = vmatpush1.bf16.msra.mxu0 %v574
        %674 = vmatprep.subr.bf16.mxu0 0
        %675 = vmatpush1.bf16.msra.mxu0 %v577
        %676 = vmatprep.subr.bf16.mxu0 0
        %677 = vmatpush1.bf16.msra.mxu0 %v580
        %678 = vmatprep.subr.bf16.mxu0 0
        %679 = vmatpush1.bf16.msra.mxu0 %v583
        %680 = vmatprep.subr.bf16.mxu0 0
        %681 = vmatpush1.bf16.msra.mxu0 %v586
        %682 = vmatprep.subr.bf16.mxu0 0
        %683 = vmatpush1.bf16.msra.mxu0 %v589
        %684 = vmatprep.subr.bf16.mxu0 0
        %685 = vmatpush1.bf16.msra.mxu0 %v592
        %686 = vmatprep.subr.bf16.mxu0 0
        %687 = vmatpush1.bf16.msra.mxu0 0
        %688 = vmatprep.subr.bf16.mxu0 0
        %689 = vmatpush1.bf16.msra.mxu0 0
        %690 = vmatprep.subr.bf16.mxu0 0
        %691 = vmatpush1.bf16.msra.mxu0 0
        %692 = vmatprep.subr.bf16.mxu0 0
        %693 = vmatpush1.bf16.msra.mxu0 0
        %694 = vmatprep.subr.bf16.mxu0 0
        %695 = vmatpush1.bf16.msra.mxu0 0
        %696 = vmatprep.subr.bf16.mxu0 0
        %697 = vmatpush1.bf16.msra.mxu0 0
        %698 = vmatprep.subr.bf16.mxu0 0
        %699 = vmatpush1.bf16.msra.mxu0 0
        %700 = vmatprep.subr.bf16.mxu0 0
        %701 = vmatpush1.bf16.msra.mxu0 0
        %702 = vmatprep.mubr.bf16.mxu0 0
        %703 = vmatmul.mubr.bf16.gmra.mrb[0].mxu0 %v485
        %v704 = vpop.f32.mrb[0].mxu0
        %v705 = vadd.f32 %v473, %v704
        %v706 = vpop.f32.mrb[0].mxu0
        %v707 = vpop.f32.mrb[0].mxu0
        %v708 = vadd.f32 %v473, %v707
        %v709 = vpop.f32.mrb[0].mxu0
        %710 = vmatprep.mubr.bf16.mxu0 0
        %711 = vmatmul.mubr.bf16.gmra.mrb[0].mxu0 %v486
        %v712 = vpop.f32.mrb[0].mxu0
        %v713 = vadd.f32 %v473, %v712
        %v714 = vpop.f32.mrb[0].mxu0
        %v715 = vpop.f32.mrb[0].mxu0
        %v716 = vadd.f32 %v473, %v715
        %v717 = vpop.f32.mrb[0].mxu0
        %718 = vdwg.mxu0
        %719 = vst [vmem:[#allocation3] sm:$0xff] %v652
        %720 = vst [vmem:[#allocation3 + $0x8] sm:$0xff] %v654
        %721 = vst [vmem:[#allocation3 + $0x10] sm:$0xff] %v705
        %722 = vst [vmem:[#allocation3 + $0x18] sm:$0xff] %v656
        %723 = vst [vmem:[#allocation3 + $0x20] sm:$0xff] %v658
        %724 = vst [vmem:[#allocation3 + $0x28] sm:$0xff] %v708
        %725 = vst [vmem:[#allocation3 + $0x30] sm:$0xff] %v662
        %726 = vst [vmem:[#allocation3 + $0x38] sm:$0xff] %v664
        %727 = vst [vmem:[#allocation3 + $0x40] sm:$0xff] %v713
        %728 = vst [vmem:[#allocation3 + $0x48] sm:$0xff] %v666
        %729 = vst [vmem:[#allocation3 + $0x50] sm:$0xff] %v668
        %730 = vst [vmem:[#allocation3 + $0x58] sm:$0xff] %v716
        %v731 = vld [vmem:[#allocation4] sm:$0xff]
        %v732 = vld [vmem:[#allocation3] sm:$0xff]
        %v733 = vld [vmem:[#allocation3 + $0x8] sm:$0xff]
        %v734 = vld [vmem:[#allocation3 + $0x10] sm:$0xff]
        %v735 = vpack.c.bf16 %v731, %v731
        %v768 = vunpack.c.l.b16 %v391
        %v769 = vunpack.c.h.b16 %v391
        %v770 = vunpack.c.l.b16 %v392
        %v771 = vunpack.c.l.b16 %v393
        %v772 = vunpack.c.h.b16 %v393
        %v773 = vunpack.c.l.b16 %v394
        %v774 = vunpack.c.l.b16 %v395
        %v775 = vunpack.c.h.b16 %v395
        %v776 = vunpack.c.l.b16 %v396
        %v777 = vunpack.c.l.b16 %v397
        %v778 = vunpack.c.h.b16 %v397
        %v779 = vunpack.c.l.b16 %v398
        %v780 = vunpack.c.l.b16 %v399
        %v781 = vunpack.c.h.b16 %v399
        %v782 = vunpack.c.l.b16 %v400
        %v783 = vunpack.c.l.b16 %v401
        %v784 = vunpack.c.h.b16 %v401
        %v785 = vunpack.c.l.b16 %v402
        %v786 = vunpack.c.l.b16 %v403
        %v787 = vunpack.c.h.b16 %v403
        %v788 = vunpack.c.l.b16 %v404
        %v789 = vunpack.c.l.b16 %v405
        %v790 = vunpack.c.h.b16 %v405
        %v791 = vunpack.c.l.b16 %v406
        %v792 = vunpack.c.l.b16 %v407
        %v793 = vunpack.c.h.b16 %v407
        %v794 = vunpack.c.l.b16 %v408
        %v795 = vunpack.c.l.b16 %v409
        %v796 = vunpack.c.h.b16 %v409
        %v797 = vunpack.c.l.b16 %v410
        %v798 = vunpack.c.l.b16 %v411
        %v799 = vunpack.c.h.b16 %v411
        %v800 = vunpack.c.l.b16 %v412
        %v801 = vunpack.c.l.b16 %v413
        %v802 = vunpack.c.h.b16 %v413
        %v803 = vunpack.c.l.b16 %v414
        %v804 = vunpack.c.l.b16 %v415
        %v805 = vunpack.c.h.b16 %v415
        %v806 = vunpack.c.l.b16 %v416
        %v807 = vunpack.c.l.b16 %v417
        %v808 = vunpack.c.h.b16 %v417
        %v809 = vunpack.c.l.b16 %v418
        %v810 = vunpack.c.l.b16 %v419
        %v811 = vunpack.c.h.b16 %v419
        %v812 = vunpack.c.l.b16 %v420
        %v813 = vunpack.c.l.b16 %v421
        %v814 = vunpack.c.h.b16 %v421
        %v815 = vunpack.c.l.b16 %v422
        %v816 = vpack.c.b16 %v771, %v768
        %v817 = vpack.c.b16 %v772, %v769
        %v818 = vpack.c.b16 %v773, %v770
        %v819 = vpack.c.b16 %v777, %v774
        %v820 = vpack.c.b16 %v778, %v775
        %v821 = vpack.c.b16 %v779, %v776
        %v822 = vpack.c.b16 %v783, %v780
        %v823 = vpack.c.b16 %v784, %v781
        %v824 = vpack.c.b16 %v785, %v782
        %v825 = vpack.c.b16 %v789, %v786
        %v826 = vpack.c.b16 %v790, %v787
        %v827 = vpack.c.b16 %v791, %v788
        %v828 = vpack.c.b16 %v795, %v792
        %v829 = vpack.c.b16 %v796, %v793
        %v830 = vpack.c.b16 %v797, %v794
        %v831 = vpack.c.b16 %v801, %v798
        %v832 = vpack.c.b16 %v802, %v799
        %v833 = vpack.c.b16 %v803, %v800
        %v834 = vpack.c.b16 %v807, %v804
        %v835 = vpack.c.b16 %v808, %v805
        %v836 = vpack.c.b16 %v809, %v806
        %v837 = vpack.c.b16 %v813, %v810
        %v838 = vpack.c.b16 %v814, %v811
        %v839 = vpack.c.b16 %v815, %v812
        %864 = vmatprep.subr.bf16.mxu0 %v817
        %865 = vmatpush1.bf16.msra.mxu0 %v816
        %866 = vmatprep.subr.bf16.mxu0 %v820
        %867 = vmatpush1.bf16.msra.mxu0 %v819
        %868 = vmatprep.subr.bf16.mxu0 %v823
        %869 = vmatpush1.bf16.msra.mxu0 %v822
        %870 = vmatprep.subr.bf16.mxu0 %v826
        %871 = vmatpush1.bf16.msra.mxu0 %v825
        %872 = vmatprep.subr.bf16.mxu0 %v829
        %873 = vmatpush1.bf16.msra.mxu0 %v828
        %874 = vmatprep.subr.bf16.mxu0 %v832
        %875 = vmatpush1.bf16.msra.mxu0 %v831
        %876 = vmatprep.subr.bf16.mxu0 %v835
        %877 = vmatpush1.bf16.msra.mxu0 %v834
        %878 = vmatprep.subr.bf16.mxu0 %v838
        %879 = vmatpush1.bf16.msra.mxu0 %v837
        %880 = vmatprep.subr.bf16.mxu0 0
        %881 = vmatpush1.bf16.msra.mxu0 0
        %882 = vmatprep.subr.bf16.mxu0 0
        %883 = vmatpush1.bf16.msra.mxu0 0
        %884 = vmatprep.subr.bf16.mxu0 0
        %885 = vmatpush1.bf16.msra.mxu0 0
        %886 = vmatprep.subr.bf16.mxu0 0
        %887 = vmatpush1.bf16.msra.mxu0 0
        %888 = vmatprep.subr.bf16.mxu0 0
        %889 = vmatpush1.bf16.msra.mxu0 0
        %890 = vmatprep.subr.bf16.mxu0 0
        %891 = vmatpush1.bf16.msra.mxu0 0
        %892 = vmatprep.subr.bf16.mxu0 0
        %893 = vmatpush1.bf16.msra.mxu0 0
        %894 = vmatprep.subr.bf16.mxu0 0
        %895 = vmatpush1.bf16.msra.mxu0 0
        %896 = vmatprep.mubr.bf16.mxu0 0
        %897 = vmatmul.mubr.bf16.gmra.mrb[0].mxu0 %v735
        %v898 = vpop.f32.mrb[0].mxu0
        %v899 = vadd.f32 0.0, %v898
        %v900 = vpop.f32.mrb[0].mxu0
        %v901 = vadd.f32 0.0, %v900
        %v902 = vpop.f32.mrb[0].mxu0
        %v903 = vpop.f32.mrb[0].mxu0
        %904 = vdwg.mxu0
        %905 = vmatprep.subr.bf16.mxu0 0
        %906 = vmatpush1.bf16.msra.mxu0 %v818
        %907 = vmatprep.subr.bf16.mxu0 0
        %908 = vmatpush1.bf16.msra.mxu0 %v821
        %909 = vmatprep.subr.bf16.mxu0 0
        %910 = vmatpush1.bf16.msra.mxu0 %v824
        %911 = vmatprep.subr.bf16.mxu0 0
        %912 = vmatpush1.bf16.msra.mxu0 %v827
        %913 = vmatprep.subr.bf16.mxu0 0
        %914 = vmatpush1.bf16.msra.mxu0 %v830
        %915 = vmatprep.subr.bf16.mxu0 0
        %916 = vmatpush1.bf16.msra.mxu0 %v833
        %917 = vmatprep.subr.bf16.mxu0 0
        %918 = vmatpush1.bf16.msra.mxu0 %v836
        %919 = vmatprep.subr.bf16.mxu0 0
        %920 = vmatpush1.bf16.msra.mxu0 %v839
        %921 = vmatprep.subr.bf16.mxu0 0
        %922 = vmatpush1.bf16.msra.mxu0 0
        %923 = vmatprep.subr.bf16.mxu0 0
        %924 = vmatpush1.bf16.msra.mxu0 0
        %925 = vmatprep.subr.bf16.mxu0 0
        %926 = vmatpush1.bf16.msra.mxu0 0
        %927 = vmatprep.subr.bf16.mxu0 0
        %928 = vmatpush1.bf16.msra.mxu0 0
        %929 = vmatprep.subr.bf16.mxu0 0
        %930 = vmatpush1.bf16.msra.mxu0 0
        %931 = vmatprep.subr.bf16.mxu0 0
        %932 = vmatpush1.bf16.msra.mxu0 0
        %933 = vmatprep.subr.bf16.mxu0 0
        %934 = vmatpush1.bf16.msra.mxu0 0
        %935 = vmatprep.subr.bf16.mxu0 0
        %936 = vmatpush1.bf16.msra.mxu0 0
        %937 = vmatprep.mubr.bf16.mxu0 0
        %938 = vmatmul.mubr.bf16.gmra.mrb[0].mxu0 %v735
        %v939 = vpop.f32.mrb[0].mxu0
        %v940 = vadd.f32 0.0, %v939
        %v941 = vpop.f32.mrb[0].mxu0
        %v942 = vpop.f32.mrb[0].mxu0
        %v943 = vpop.f32.mrb[0].mxu0
        %944 = vdwg.mxu0
        %v945 = vadd.f32 %v732, %v899
        %v946 = vxor.u32 %v945, 2147483648
        %v947 = vmul.f32 %v946, 1.442695
        %v948 = vpow.pop %v947
        %v949 = vadd.f32 %v948, 1.0
        %v950 = vrcp.pop %v949
        %v951 = vmul.f32 1.0, %v950
        %v952 = vadd.f32 %v733, %v901
        %v953 = vxor.u32 %v952, 2147483648
        %v954 = vmul.f32 %v953, 1.442695
        %v955 = vpow.pop %v954
        %v956 = vadd.f32 %v955, 1.0
        %v957 = vrcp.pop %v956
        %v958 = vmul.f32 1.0, %v957
        %v960 = vlaneseq
        %v961 = vshrl.u32 %v960, 7
        %v962 = vsub.s32 0, %v961
        %v963 = vrot.slane %v423, %v962
        %v965 = vadd.f32 %v940, %v963
        %v966 = vmul.f32 %v951, %v965
        %v967 = vadd.f32 %v734, %v966
        %v968 = vtanh.pop %v967
        %v969 = vsub.f32 1.0, %v958
        %v970 = vmul.f32 %v969, %v968
        %v971 = vmul.f32 %v958, %v731
        %v972 = vadd.f32 %v970, %v971
        %973 = vst [vmem:[#allocation4] sm:$0xff] %v972
        %v974 = vpack.c.bf16 %v972, %v972
        %975 = vst [vmem:[#allocation2] sm:$0xf] %v974
        %v976 = vld [vmem:[#allocation4] sm:$0xff]
        %v977 = vld [vmem:[#allocation3 + $0x18] sm:$0xff]
        %v978 = vld [vmem:[#allocation3 + $0x20] sm:$0xff]
        %v979 = vld [vmem:[#allocation3 + $0x28] sm:$0xff]
        %v980 = vpack.c.bf16 %v976, %v976
        %981 = vmatprep.subr.bf16.mxu0 %v817
        %982 = vmatpush1.bf16.msra.mxu0 %v816
        %983 = vmatprep.subr.bf16.mxu0 %v820
        %984 = vmatpush1.bf16.msra.mxu0 %v819
        %985 = vmatprep.subr.bf16.mxu0 %v823
        %986 = vmatpush1.bf16.msra.mxu0 %v822
        %987 = vmatprep.subr.bf16.mxu0 %v826
        %988 = vmatpush1.bf16.msra.mxu0 %v825
        %989 = vmatprep.subr.bf16.mxu0 %v829
        %990 = vmatpush1.bf16.msra.mxu0 %v828
        %991 = vmatprep.subr.bf16.mxu0 %v832
        %992 = vmatpush1.bf16.msra.mxu0 %v831
        %993 = vmatprep.subr.bf16.mxu0 %v835
        %994 = vmatpush1.bf16.msra.mxu0 %v834
        %995 = vmatprep.subr.bf16.mxu0 %v838
        %996 = vmatpush1.bf16.msra.mxu0 %v837
        %997 = vmatprep.subr.bf16.mxu0 0
        %998 = vmatpush1.bf16.msra.mxu0 0
        %999 = vmatprep.subr.bf16.mxu0 0
        %1000 = vmatpush1.bf16.msra.mxu0 0
        %1001 = vmatprep.subr.bf16.mxu0 0
        %1002 = vmatpush1.bf16.msra.mxu0 0
        %1003 = vmatprep.subr.bf16.mxu0 0
        %1004 = vmatpush1.bf16.msra.mxu0 0
        %1005 = vmatprep.subr.bf16.mxu0 0
        %1006 = vmatpush1.bf16.msra.mxu0 0
        %1007 = vmatprep.subr.bf16.mxu0 0
        %1008 = vmatpush1.bf16.msra.mxu0 0
        %1009 = vmatprep.subr.bf16.mxu0 0
        %1010 = vmatpush1.bf16.msra.mxu0 0
        %1011 = vmatprep.subr.bf16.mxu0 0
        %1012 = vmatpush1.bf16.msra.mxu0 0
        %1013 = vmatprep.mubr.bf16.mxu0 0
        %1014 = vmatmul.mubr.bf16.gmra.mrb[0].mxu0 %v980
        %v1015 = vpop.f32.mrb[0].mxu0
        %v1016 = vadd.f32 0.0, %v1015
        %v1017 = vpop.f32.mrb[0].mxu0
        %v1018 = vadd.f32 0.0, %v1017
        %v1019 = vpop.f32.mrb[0].mxu0
        %v1020 = vpop.f32.mrb[0].mxu0
        %1021 = vdwg.mxu0
        %1022 = vmatprep.subr.bf16.mxu0 0
        %1023 = vmatpush1.bf16.msra.mxu0 %v818
        %1024 = vmatprep.subr.bf16.mxu0 0
        %1025 = vmatpush1.bf16.msra.mxu0 %v821
        %1026 = vmatprep.subr.bf16.mxu0 0
        %1027 = vmatpush1.bf16.msra.mxu0 %v824
        %1028 = vmatprep.subr.bf16.mxu0 0
        %1029 = vmatpush1.bf16.msra.mxu0 %v827
        %1030 = vmatprep.subr.bf16.mxu0 0
        %1031 = vmatpush1.bf16.msra.mxu0 %v830
        %1032 = vmatprep.subr.bf16.mxu0 0
        %1033 = vmatpush1.bf16.msra.mxu0 %v833
        %1034 = vmatprep.subr.bf16.mxu0 0
        %1035 = vmatpush1.bf16.msra.mxu0 %v836
        %1036 = vmatprep.subr.bf16.mxu0 0
        %1037 = vmatpush1.bf16.msra.mxu0 %v839
        %1038 = vmatprep.subr.bf16.mxu0 0
        %1039 = vmatpush1.bf16.msra.mxu0 0
        %1040 = vmatprep.subr.bf16.mxu0 0
        %1041 = vmatpush1.bf16.msra.mxu0 0
        %1042 = vmatprep.subr.bf16.mxu0 0
        %1043 = vmatpush1.bf16.msra.mxu0 0
        %1044 = vmatprep.subr.bf16.mxu0 0
        %1045 = vmatpush1.bf16.msra.mxu0 0
        %1046 = vmatprep.subr.bf16.mxu0 0
        %1047 = vmatpush1.bf16.msra.mxu0 0
        %1048 = vmatprep.subr.bf16.mxu0 0
        %1049 = vmatpush1.bf16.msra.mxu0 0
        %1050 = vmatprep.subr.bf16.mxu0 0
        %1051 = vmatpush1.bf16.msra.mxu0 0
        %1052 = vmatprep.subr.bf16.mxu0 0
        %1053 = vmatpush1.bf16.msra.mxu0 0
        %1054 = vmatprep.mubr.bf16.mxu0 0
        %1055 = vmatmul.mubr.bf16.gmra.mrb[0].mxu0 %v980
        %v1056 = vpop.f32.mrb[0].mxu0
        %v1057 = vadd.f32 0.0, %v1056
        %v1058 = vpop.f32.mrb[0].mxu0
        %v1059 = vpop.f32.mrb[0].mxu0
        %v1060 = vpop.f32.mrb[0].mxu0
        %1061 = vdwg.mxu0
        %v1062 = vadd.f32 %v977, %v1016
        %v1063 = vxor.u32 %v1062, 2147483648
        %v1064 = vmul.f32 %v1063, 1.442695
        %v1065 = vpow.pop %v1064
        %v1066 = vadd.f32 %v1065, 1.0
        %v1067 = vrcp.pop %v1066
        %v1068 = vmul.f32 1.0, %v1067
        %v1069 = vadd.f32 %v978, %v1018
        %v1070 = vxor.u32 %v1069, 2147483648
        %v1071 = vmul.f32 %v1070, 1.442695
        %v1072 = vpow.pop %v1071
        %v1073 = vadd.f32 %v1072, 1.0
        %v1074 = vrcp.pop %v1073
        %v1075 = vmul.f32 1.0, %v1074
        %v1076 = vadd.f32 %v1057, %v963
        %v1077 = vmul.f32 %v1068, %v1076
        %v1078 = vadd.f32 %v979, %v1077
        %v1079 = vtanh.pop %v1078
        %v1080 = vsub.f32 1.0, %v1075
        %v1081 = vmul.f32 %v1080, %v1079
        %v1082 = vmul.f32 %v1075, %v976
        %v1083 = vadd.f32 %v1081, %v1082
        %1084 = vst [vmem:[#allocation4] sm:$0xff] %v1083
        %v1085 = vpack.c.bf16 %v1083, %v1083
        %v1087 = vrot.slane %v1085, 4
        %1089 = vst [vmem:[#allocation2] sm:$0xf0] %v1087
        %v1090 = vld [vmem:[#allocation4] sm:$0xff]
        %v1091 = vld [vmem:[#allocation3 + $0x30] sm:$0xff]
        %v1092 = vld [vmem:[#allocation3 + $0x38] sm:$0xff]
        %v1093 = vld [vmem:[#allocation3 + $0x40] sm:$0xff]
        %v1094 = vpack.c.bf16 %v1090, %v1090
        %1095 = vmatprep.subr.bf16.mxu0 %v817
        %1096 = vmatpush1.bf16.msra.mxu0 %v816
        %1097 = vmatprep.subr.bf16.mxu0 %v820
        %1098 = vmatpush1.bf16.msra.mxu0 %v819
        %1099 = vmatprep.subr.bf16.mxu0 %v823
        %1100 = vmatpush1.bf16.msra.mxu0 %v822
        %1101 = vmatprep.subr.bf16.mxu0 %v826
        %1102 = vmatpush1.bf16.msra.mxu0 %v825
        %1103 = vmatprep.subr.bf16.mxu0 %v829
        %1104 = vmatpush1.bf16.msra.mxu0 %v828
        %1105 = vmatprep.subr.bf16.mxu0 %v832
        %1106 = vmatpush1.bf16.msra.mxu0 %v831
        %1107 = vmatprep.subr.bf16.mxu0 %v835
        %1108 = vmatpush1.bf16.msra.mxu0 %v834
        %1109 = vmatprep.subr.bf16.mxu0 %v838
        %1110 = vmatpush1.bf16.msra.mxu0 %v837
        %1111 = vmatprep.subr.bf16.mxu0 0
        %1112 = vmatpush1.bf16.msra.mxu0 0
        %1113 = vmatprep.subr.bf16.mxu0 0
        %1114 = vmatpush1.bf16.msra.mxu0 0
        %1115 = vmatprep.subr.bf16.mxu0 0
        %1116 = vmatpush1.bf16.msra.mxu0 0
        %1117 = vmatprep.subr.bf16.mxu0 0
        %1118 = vmatpush1.bf16.msra.mxu0 0
        %1119 = vmatprep.subr.bf16.mxu0 0
        %1120 = vmatpush1.bf16.msra.mxu0 0
        %1121 = vmatprep.subr.bf16.mxu0 0
        %1122 = vmatpush1.bf16.msra.mxu0 0
        %1123 = vmatprep.subr.bf16.mxu0 0
        %1124 = vmatpush1.bf16.msra.mxu0 0
        %1125 = vmatprep.subr.bf16.mxu0 0
        %1126 = vmatpush1.bf16.msra.mxu0 0
        %1127 = vmatprep.mubr.bf16.mxu0 0
        %1128 = vmatmul.mubr.bf16.gmra.mrb[0].mxu0 %v1094
        %v1129 = vpop.f32.mrb[0].mxu0
        %v1130 = vadd.f32 0.0, %v1129
        %v1131 = vpop.f32.mrb[0].mxu0
        %v1132 = vadd.f32 0.0, %v1131
        %v1133 = vpop.f32.mrb[0].mxu0
        %v1134 = vpop.f32.mrb[0].mxu0
        %1135 = vdwg.mxu0
        %1136 = vmatprep.subr.bf16.mxu0 0
        %1137 = vmatpush1.bf16.msra.mxu0 %v818
        %1138 = vmatprep.subr.bf16.mxu0 0
        %1139 = vmatpush1.bf16.msra.mxu0 %v821
        %1140 = vmatprep.subr.bf16.mxu0 0
        %1141 = vmatpush1.bf16.msra.mxu0 %v824
        %1142 = vmatprep.subr.bf16.mxu0 0
        %1143 = vmatpush1.bf16.msra.mxu0 %v827
        %1144 = vmatprep.subr.bf16.mxu0 0
        %1145 = vmatpush1.bf16.msra.mxu0 %v830
        %1146 = vmatprep.subr.bf16.mxu0 0
        %1147 = vmatpush1.bf16.msra.mxu0 %v833
        %1148 = vmatprep.subr.bf16.mxu0 0
        %1149 = vmatpush1.bf16.msra.mxu0 %v836
        %1150 = vmatprep.subr.bf16.mxu0 0
        %1151 = vmatpush1.bf16.msra.mxu0 %v839
        %1152 = vmatprep.subr.bf16.mxu0 0
        %1153 = vmatpush1.bf16.msra.mxu0 0
        %1154 = vmatprep.subr.bf16.mxu0 0
        %1155 = vmatpush1.bf16.msra.mxu0 0
        %1156 = vmatprep.subr.bf16.mxu0 0
        %1157 = vmatpush1.bf16.msra.mxu0 0
        %1158 = vmatprep.subr.bf16.mxu0 0
        %1159 = vmatpush1.bf16.msra.mxu0 0
        %1160 = vmatprep.subr.bf16.mxu0 0
        %1161 = vmatpush1.bf16.msra.mxu0 0
        %1162 = vmatprep.subr.bf16.mxu0 0
        %1163 = vmatpush1.bf16.msra.mxu0 0
        %1164 = vmatprep.subr.bf16.mxu0 0
        %1165 = vmatpush1.bf16.msra.mxu0 0
        %1166 = vmatprep.subr.bf16.mxu0 0
        %1167 = vmatpush1.bf16.msra.mxu0 0
        %1168 = vmatprep.mubr.bf16.mxu0 0
        %1169 = vmatmul.mubr.bf16.gmra.mrb[0].mxu0 %v1094
        %v1170 = vpop.f32.mrb[0].mxu0
        %v1171 = vadd.f32 0.0, %v1170
        %v1172 = vpop.f32.mrb[0].mxu0
        %v1173 = vpop.f32.mrb[0].mxu0
        %v1174 = vpop.f32.mrb[0].mxu0
        %1175 = vdwg.mxu0
        %v1176 = vadd.f32 %v1091, %v1130
        %v1177 = vxor.u32 %v1176, 2147483648
        %v1178 = vmul.f32 %v1177, 1.442695
        %v1179 = vpow.pop %v1178
        %v1180 = vadd.f32 %v1179, 1.0
        %v1181 = vrcp.pop %v1180
        %v1182 = vmul.f32 1.0, %v1181
        %v1183 = vadd.f32 %v1092, %v1132
        %v1184 = vxor.u32 %v1183, 2147483648
        %v1185 = vmul.f32 %v1184, 1.442695
        %v1186 = vpow.pop %v1185
        %v1187 = vadd.f32 %v1186, 1.0
        %v1188 = vrcp.pop %v1187
        %v1189 = vmul.f32 1.0, %v1188
        %v1190 = vadd.f32 %v1171, %v963
        %v1191 = vmul.f32 %v1182, %v1190
        %v1192 = vadd.f32 %v1093, %v1191
        %v1193 = vtanh.pop %v1192
        %v1194 = vsub.f32 1.0, %v1189
        %v1195 = vmul.f32 %v1194, %v1193
        %v1196 = vmul.f32 %v1189, %v1090
        %v1197 = vadd.f32 %v1195, %v1196
        %1198 = vst [vmem:[#allocation4] sm:$0xff] %v1197
        %v1199 = vpack.c.bf16 %v1197, %v1197
        %1200 = vst [vmem:[#allocation2 + $0x8] sm:$0xf] %v1199
        %v1201 = vld [vmem:[#allocation4] sm:$0xff]
        %v1202 = vld [vmem:[#allocation3 + $0x48] sm:$0xff]
        %v1203 = vld [vmem:[#allocation3 + $0x50] sm:$0xff]
        %v1204 = vld [vmem:[#allocation3 + $0x58] sm:$0xff]
        %v1205 = vpack.c.bf16 %v1201, %v1201
        %1206 = vmatprep.subr.bf16.mxu0 %v817
        %1207 = vmatpush1.bf16.msra.mxu0 %v816
        %1208 = vmatprep.subr.bf16.mxu0 %v820
        %1209 = vmatpush1.bf16.msra.mxu0 %v819
        %1210 = vmatprep.subr.bf16.mxu0 %v823
        %1211 = vmatpush1.bf16.msra.mxu0 %v822
        %1212 = vmatprep.subr.bf16.mxu0 %v826
        %1213 = vmatpush1.bf16.msra.mxu0 %v825
        %1214 = vmatprep.subr.bf16.mxu0 %v829
        %1215 = vmatpush1.bf16.msra.mxu0 %v828
        %1216 = vmatprep.subr.bf16.mxu0 %v832
        %1217 = vmatpush1.bf16.msra.mxu0 %v831
        %1218 = vmatprep.subr.bf16.mxu0 %v835
        %1219 = vmatpush1.bf16.msra.mxu0 %v834
        %1220 = vmatprep.subr.bf16.mxu0 %v838
        %1221 = vmatpush1.bf16.msra.mxu0 %v837
        %1222 = vmatprep.subr.bf16.mxu0 0
        %1223 = vmatpush1.bf16.msra.mxu0 0
        %1224 = vmatprep.subr.bf16.mxu0 0
        %1225 = vmatpush1.bf16.msra.mxu0 0
        %1226 = vmatprep.subr.bf16.mxu0 0
        %1227 = vmatpush1.bf16.msra.mxu0 0
        %1228 = vmatprep.subr.bf16.mxu0 0
        %1229 = vmatpush1.bf16.msra.mxu0 0
        %1230 = vmatprep.subr.bf16.mxu0 0
        %1231 = vmatpush1.bf16.msra.mxu0 0
        %1232 = vmatprep.subr.bf16.mxu0 0
        %1233 = vmatpush1.bf16.msra.mxu0 0
        %1234 = vmatprep.subr.bf16.mxu0 0
        %1235 = vmatpush1.bf16.msra.mxu0 0
        %1236 = vmatprep.subr.bf16.mxu0 0
        %1237 = vmatpush1.bf16.msra.mxu0 0
        %1238 = vmatprep.mubr.bf16.mxu0 0
        %1239 = vmatmul.mubr.bf16.gmra.mrb[0].mxu0 %v1205
        %v1240 = vpop.f32.mrb[0].mxu0
        %v1241 = vadd.f32 0.0, %v1240
        %v1242 = vpop.f32.mrb[0].mxu0
        %v1243 = vadd.f32 0.0, %v1242
        %v1244 = vpop.f32.mrb[0].mxu0
        %v1245 = vpop.f32.mrb[0].mxu0
        %1246 = vdwg.mxu0
        %1247 = vmatprep.subr.bf16.mxu0 0
        %1248 = vmatpush1.bf16.msra.mxu0 %v818
        %1249 = vmatprep.subr.bf16.mxu0 0
        %1250 = vmatpush1.bf16.msra.mxu0 %v821
        %1251 = vmatprep.subr.bf16.mxu0 0
        %1252 = vmatpush1.bf16.msra.mxu0 %v824
        %1253 = vmatprep.subr.bf16.mxu0 0
        %1254 = vmatpush1.bf16.msra.mxu0 %v827
        %1255 = vmatprep.subr.bf16.mxu0 0
        %1256 = vmatpush1.bf16.msra.mxu0 %v830
        %1257 = vmatprep.subr.bf16.mxu0 0
        %1258 = vmatpush1.bf16.msra.mxu0 %v833
        %1259 = vmatprep.subr.bf16.mxu0 0
        %1260 = vmatpush1.bf16.msra.mxu0 %v836
        %1261 = vmatprep.subr.bf16.mxu0 0
        %1262 = vmatpush1.bf16.msra.mxu0 %v839
        %1263 = vmatprep.subr.bf16.mxu0 0
        %1264 = vmatpush1.bf16.msra.mxu0 0
        %1265 = vmatprep.subr.bf16.mxu0 0
        %1266 = vmatpush1.bf16.msra.mxu0 0
        %1267 = vmatprep.subr.bf16.mxu0 0
        %1268 = vmatpush1.bf16.msra.mxu0 0
        %1269 = vmatprep.subr.bf16.mxu0 0
        %1270 = vmatpush1.bf16.msra.mxu0 0
        %1271 = vmatprep.subr.bf16.mxu0 0
        %1272 = vmatpush1.bf16.msra.mxu0 0
        %1273 = vmatprep.subr.bf16.mxu0 0
        %1274 = vmatpush1.bf16.msra.mxu0 0
        %1275 = vmatprep.subr.bf16.mxu0 0
        %1276 = vmatpush1.bf16.msra.mxu0 0
        %1277 = vmatprep.subr.bf16.mxu0 0
        %1278 = vmatpush1.bf16.msra.mxu0 0
        %1279 = vmatprep.mubr.bf16.mxu0 0
        %1280 = vmatmul.mubr.bf16.gmra.mrb[0].mxu0 %v1205
        %v1281 = vpop.f32.mrb[0].mxu0
        %v1282 = vadd.f32 0.0, %v1281
        %v1283 = vpop.f32.mrb[0].mxu0
        %v1284 = vpop.f32.mrb[0].mxu0
        %v1285 = vpop.f32.mrb[0].mxu0
        %1286 = vdwg.mxu0
        %v1287 = vadd.f32 %v1202, %v1241
        %v1288 = vxor.u32 %v1287, 2147483648
        %v1289 = vmul.f32 %v1288, 1.442695
        %v1290 = vpow.pop %v1289
        %v1291 = vadd.f32 %v1290, 1.0
        %v1292 = vrcp.pop %v1291
        %v1293 = vmul.f32 1.0, %v1292
        %v1294 = vadd.f32 %v1203, %v1243
        %v1295 = vxor.u32 %v1294, 2147483648
        %v1296 = vmul.f32 %v1295, 1.442695
        %v1297 = vpow.pop %v1296
        %v1298 = vadd.f32 %v1297, 1.0
        %v1299 = vrcp.pop %v1298
        %v1300 = vmul.f32 1.0, %v1299
        %v1301 = vadd.f32 %v1282, %v963
        %v1302 = vmul.f32 %v1293, %v1301
        %v1303 = vadd.f32 %v1204, %v1302
        %v1304 = vtanh.pop %v1303
        %v1305 = vsub.f32 1.0, %v1300
        %v1306 = vmul.f32 %v1305, %v1304
        %v1307 = vmul.f32 %v1300, %v1201
        %v1308 = vadd.f32 %v1306, %v1307
        %1309 = vst [vmem:[#allocation4] sm:$0xff] %v1308
        %v1310 = vpack.c.bf16 %v1308, %v1308
        %v1312 = vrot.slane %v1310, 4
        %1314 = vst [vmem:[#allocation2 + $0x8] sm:$0xf0] %v1312
        %s1315 = scalar_lea.vmem [#allocation11], 192
        %v1316 = vld [vmem:[%s1315] sm:$0xff]
        %v1317 = vld [vmem:[%s1315 + $0x8] sm:$0xf]
        %v1318 = vld [vmem:[%s1315 + $0xc] sm:$0xff]
        %v1319 = vld [vmem:[%s1315 + $0x14] sm:$0xf]
        %v1320 = vld [vmem:[%s1315 + $0x18] sm:$0xff]
        %v1321 = vld [vmem:[%s1315 + $0x20] sm:$0xf]
        %v1322 = vld [vmem:[%s1315 + $0x24] sm:$0xff]
        %v1323 = vld [vmem:[%s1315 + $0x2c] sm:$0xf]
        %v1324 = vld [vmem:[%s1315 + $0x30] sm:$0xff]
        %v1325 = vld [vmem:[%s1315 + $0x38] sm:$0xf]
        %v1326 = vld [vmem:[%s1315 + $0x3c] sm:$0xff]
        %v1327 = vld [vmem:[%s1315 + $0x44] sm:$0xf]
        %v1328 = vld [vmem:[%s1315 + $0x48] sm:$0xff]
        %v1329 = vld [vmem:[%s1315 + $0x50] sm:$0xf]
        %v1330 = vld [vmem:[%s1315 + $0x54] sm:$0xff]
        %v1331 = vld [vmem:[%s1315 + $0x5c] sm:$0xf]
        %v1332 = vld [vmem:[%s1315 + $0x60] sm:$0xff]
        %v1333 = vld [vmem:[%s1315 + $0x68] sm:$0xf]
        %v1334 = vld [vmem:[%s1315 + $0x6c] sm:$0xff]
        %v1335 = vld [vmem:[%s1315 + $0x74] sm:$0xf]
        %v1336 = vld [vmem:[%s1315 + $0x78] sm:$0xff]
        %v1337 = vld [vmem:[%s1315 + $0x80] sm:$0xf]
        %v1338 = vld [vmem:[%s1315 + $0x84] sm:$0xff]
        %v1339 = vld [vmem:[%s1315 + $0x8c] sm:$0xf]
        %v1340 = vld [vmem:[%s1315 + $0x90] sm:$0xff]
        %v1341 = vld [vmem:[%s1315 + $0x98] sm:$0xf]
        %v1342 = vld [vmem:[%s1315 + $0x9c] sm:$0xff]
        %v1343 = vld [vmem:[%s1315 + $0xa4] sm:$0xf]
        %v1344 = vld [vmem:[%s1315 + $0xa8] sm:$0xff]
        %v1345 = vld [vmem:[%s1315 + $0xb0] sm:$0xf]
        %v1346 = vld [vmem:[%s1315 + $0xb4] sm:$0xff]
        %v1347 = vld [vmem:[%s1315 + $0xbc] sm:$0xf]
        %s1348 = scalar_lea.vmem %s5, 1
        %v1349 = vld [vmem:[%s1348] sm:$0x1]
        %v1350 = vld [vmem:[#allocation2] sm:$0xff]
        %v1351 = vld [vmem:[#allocation2 + $0x8] sm:$0xff]
        %v1352 = vld [vmem:[#allocation10] sm:$0xff]
        %v1353 = vld [vmem:[#allocation10 + $0x8] sm:$0xf]
        %v1354 = vld [vmem:[#allocation10 + $0xc] sm:$0xff]
        %v1355 = vld [vmem:[#allocation10 + $0x14] sm:$0xf]
        %v1356 = vld [vmem:[#allocation10 + $0x18] sm:$0xff]
        %v1357 = vld [vmem:[#allocation10 + $0x20] sm:$0xf]
        %v1358 = vld [vmem:[#allocation10 + $0x24] sm:$0xff]
        %v1359 = vld [vmem:[#allocation10 + $0x2c] sm:$0xf]
        %v1360 = vld [vmem:[#allocation10 + $0x30] sm:$0xff]
        %v1361 = vld [vmem:[#allocation10 + $0x38] sm:$0xf]
        %v1362 = vld [vmem:[#allocation10 + $0x3c] sm:$0xff]
        %v1363 = vld [vmem:[#allocation10 + $0x44] sm:$0xf]
        %v1364 = vld [vmem:[#allocation10 + $0x48] sm:$0xff]
        %v1365 = vld [vmem:[#allocation10 + $0x50] sm:$0xf]
        %v1366 = vld [vmem:[#allocation10 + $0x54] sm:$0xff]
        %v1367 = vld [vmem:[#allocation10 + $0x5c] sm:$0xf]
        %v1368 = vld [vmem:[#allocation10 + $0x60] sm:$0xff]
        %v1369 = vld [vmem:[#allocation10 + $0x68] sm:$0xf]
        %v1370 = vld [vmem:[#allocation10 + $0x6c] sm:$0xff]
        %v1371 = vld [vmem:[#allocation10 + $0x74] sm:$0xf]
        %v1372 = vld [vmem:[#allocation10 + $0x78] sm:$0xff]
        %v1373 = vld [vmem:[#allocation10 + $0x80] sm:$0xf]
        %v1374 = vld [vmem:[#allocation10 + $0x84] sm:$0xff]
        %v1375 = vld [vmem:[#allocation10 + $0x8c] sm:$0xf]
        %v1376 = vld [vmem:[#allocation10 + $0x90] sm:$0xff]
        %v1377 = vld [vmem:[#allocation10 + $0x98] sm:$0xf]
        %v1378 = vld [vmem:[#allocation10 + $0x9c] sm:$0xff]
        %v1379 = vld [vmem:[#allocation10 + $0xa4] sm:$0xf]
        %v1380 = vld [vmem:[#allocation10 + $0xa8] sm:$0xff]
        %v1381 = vld [vmem:[#allocation10 + $0xb0] sm:$0xf]
        %v1382 = vld [vmem:[#allocation10 + $0xb4] sm:$0xff]
        %v1383 = vld [vmem:[#allocation10 + $0xbc] sm:$0xf]
        %s1384 = scalar_lea.vmem %s4, 3
        %v1385 = vld [vmem:[%s1384] sm:$0x7]
        %v1387 = vlaneseq
        %v1388 = vshrl.u32 %v1387, 7
        %v1389 = vsub.s32 0, %v1388
        %v1390 = vrot.slane %v1385, %v1389
        %v1391 = vlaneseq
        %v1392 = vshrl.u32 %v1391, 7
        %v1393 = vsub.s32 1, %v1392
        %v1394 = vrot.slane %v1385, %v1393
        %v1395 = vlaneseq
        %v1396 = vshrl.u32 %v1395, 7
        %v1397 = vsub.s32 2, %v1396
        %v1398 = vrot.slane %v1385, %v1397
        %v1434 = vunpack.c.l.b16 %v1352
        %v1435 = vunpack.c.h.b16 %v1352
        %v1436 = vunpack.c.l.b16 %v1353
        %v1437 = vunpack.c.l.b16 %v1354
        %v1438 = vunpack.c.h.b16 %v1354
        %v1439 = vunpack.c.l.b16 %v1355
        %v1440 = vunpack.c.l.b16 %v1356
        %v1441 = vunpack.c.h.b16 %v1356
        %v1442 = vunpack.c.l.b16 %v1357
        %v1443 = vunpack.c.l.b16 %v1358
        %v1444 = vunpack.c.h.b16 %v1358
        %v1445 = vunpack.c.l.b16 %v1359
        %v1446 = vunpack.c.l.b16 %v1360
        %v1447 = vunpack.c.h.b16 %v1360
        %v1448 = vunpack.c.l.b16 %v1361
        %v1449 = vunpack.c.l.b16 %v1362
        %v1450 = vunpack.c.h.b16 %v1362
        %v1451 = vunpack.c.l.b16 %v1363
        %v1452 = vunpack.c.l.b16 %v1364
        %v1453 = vunpack.c.h.b16 %v1364
        %v1454 = vunpack.c.l.b16 %v1365
        %v1455 = vunpack.c.l.b16 %v1366
        %v1456 = vunpack.c.h.b16 %v1366
        %v1457 = vunpack.c.l.b16 %v1367
        %v1458 = vunpack.c.l.b16 %v1368
        %v1459 = vunpack.c.h.b16 %v1368
        %v1460 = vunpack.c.l.b16 %v1369
        %v1461 = vunpack.c.l.b16 %v1370
        %v1462 = vunpack.c.h.b16 %v1370
        %v1463 = vunpack.c.l.b16 %v1371
        %v1464 = vunpack.c.l.b16 %v1372
        %v1465 = vunpack.c.h.b16 %v1372
        %v1466 = vunpack.c.l.b16 %v1373
        %v1467 = vunpack.c.l.b16 %v1374
        %v1468 = vunpack.c.h.b16 %v1374
        %v1469 = vunpack.c.l.b16 %v1375
        %v1470 = vunpack.c.l.b16 %v1376
        %v1471 = vunpack.c.h.b16 %v1376
        %v1472 = vunpack.c.l.b16 %v1377
        %v1473 = vunpack.c.l.b16 %v1378
        %v1474 = vunpack.c.h.b16 %v1378
        %v1475 = vunpack.c.l.b16 %v1379
        %v1476 = vunpack.c.l.b16 %v1380
        %v1477 = vunpack.c.h.b16 %v1380
        %v1478 = vunpack.c.l.b16 %v1381
        %v1479 = vunpack.c.l.b16 %v1382
        %v1480 = vunpack.c.h.b16 %v1382
        %v1481 = vunpack.c.l.b16 %v1383
        %v1482 = vpack.c.b16 %v1437, %v1434
        %v1483 = vpack.c.b16 %v1438, %v1435
        %v1484 = vpack.c.b16 %v1439, %v1436
        %v1485 = vpack.c.b16 %v1443, %v1440
        %v1486 = vpack.c.b16 %v1444, %v1441
        %v1487 = vpack.c.b16 %v1445, %v1442
        %v1488 = vpack.c.b16 %v1449, %v1446
        %v1489 = vpack.c.b16 %v1450, %v1447
        %v1490 = vpack.c.b16 %v1451, %v1448
        %v1491 = vpack.c.b16 %v1455, %v1452
        %v1492 = vpack.c.b16 %v1456, %v1453
        %v1493 = vpack.c.b16 %v1457, %v1454
        %v1494 = vpack.c.b16 %v1461, %v1458
        %v1495 = vpack.c.b16 %v1462, %v1459
        %v1496 = vpack.c.b16 %v1463, %v1460
        %v1497 = vpack.c.b16 %v1467, %v1464
        %v1498 = vpack.c.b16 %v1468, %v1465
        %v1499 = vpack.c.b16 %v1469, %v1466
        %v1500 = vpack.c.b16 %v1473, %v1470
        %v1501 = vpack.c.b16 %v1474, %v1471
        %v1502 = vpack.c.b16 %v1475, %v1472
        %v1503 = vpack.c.b16 %v1479, %v1476
        %v1504 = vpack.c.b16 %v1480, %v1477
        %v1505 = vpack.c.b16 %v1481, %v1478
        %1530 = vmatprep.subr.bf16.mxu0 %v1483
        %1531 = vmatpush1.bf16.msra.mxu0 %v1482
        %1532 = vmatprep.subr.bf16.mxu0 %v1486
        %1533 = vmatpush1.bf16.msra.mxu0 %v1485
        %1534 = vmatprep.subr.bf16.mxu0 %v1489
        %1535 = vmatpush1.bf16.msra.mxu0 %v1488
        %1536 = vmatprep.subr.bf16.mxu0 %v1492
        %1537 = vmatpush1.bf16.msra.mxu0 %v1491
        %1538 = vmatprep.subr.bf16.mxu0 %v1495
        %1539 = vmatpush1.bf16.msra.mxu0 %v1494
        %1540 = vmatprep.subr.bf16.mxu0 %v1498
        %1541 = vmatpush1.bf16.msra.mxu0 %v1497
        %1542 = vmatprep.subr.bf16.mxu0 %v1501
        %1543 = vmatpush1.bf16.msra.mxu0 %v1500
        %1544 = vmatprep.subr.bf16.mxu0 %v1504
        %1545 = vmatpush1.bf16.msra.mxu0 %v1503
        %1546 = vmatprep.subr.bf16.mxu0 0
        %1547 = vmatpush1.bf16.msra.mxu0 0
        %1548 = vmatprep.subr.bf16.mxu0 0
        %1549 = vmatpush1.bf16.msra.mxu0 0
        %1550 = vmatprep.subr.bf16.mxu0 0
        %1551 = vmatpush1.bf16.msra.mxu0 0
        %1552 = vmatprep.subr.bf16.mxu0 0
        %1553 = vmatpush1.bf16.msra.mxu0 0
        %1554 = vmatprep.subr.bf16.mxu0 0
        %1555 = vmatpush1.bf16.msra.mxu0 0
        %1556 = vmatprep.subr.bf16.mxu0 0
        %1557 = vmatpush1.bf16.msra.mxu0 0
        %1558 = vmatprep.subr.bf16.mxu0 0
        %1559 = vmatpush1.bf16.msra.mxu0 0
        %1560 = vmatprep.subr.bf16.mxu0 0
        %1561 = vmatpush1.bf16.msra.mxu0 0
        %1562 = vmatprep.mubr.bf16.mxu0 0
        %1563 = vmatmul.mubr.bf16.gmra.mrb[0].mxu0 %v1350
        %v1564 = vpop.f32.mrb[0].mxu0
        %v1565 = vadd.f32 %v1390, %v1564
        %v1566 = vpop.f32.mrb[0].mxu0
        %v1567 = vadd.f32 %v1394, %v1566
        %v1568 = vpop.f32.mrb[0].mxu0
        %v1569 = vadd.f32 %v1390, %v1568
        %v1570 = vpop.f32.mrb[0].mxu0
        %v1571 = vadd.f32 %v1394, %v1570
        %1572 = vmatprep.mubr.bf16.mxu0 0
        %1573 = vmatmul.mubr.bf16.gmra.mrb[0].mxu0 %v1351
        %v1574 = vpop.f32.mrb[0].mxu0
        %v1575 = vadd.f32 %v1390, %v1574
        %v1576 = vpop.f32.mrb[0].mxu0
        %v1577 = vadd.f32 %v1394, %v1576
        %v1578 = vpop.f32.mrb[0].mxu0
        %v1579 = vadd.f32 %v1390, %v1578
        %v1580 = vpop.f32.mrb[0].mxu0
        %v1581 = vadd.f32 %v1394, %v1580
        %1582 = vdwg.mxu0
        %1583 = vmatprep.subr.bf16.mxu0 0
        %1584 = vmatpush1.bf16.msra.mxu0 %v1484
        %1585 = vmatprep.subr.bf16.mxu0 0
        %1586 = vmatpush1.bf16.msra.mxu0 %v1487
        %1587 = vmatprep.subr.bf16.mxu0 0
        %1588 = vmatpush1.bf16.msra.mxu0 %v1490
        %1589 = vmatprep.subr.bf16.mxu0 0
        %1590 = vmatpush1.bf16.msra.mxu0 %v1493
        %1591 = vmatprep.subr.bf16.mxu0 0
        %1592 = vmatpush1.bf16.msra.mxu0 %v1496
        %1593 = vmatprep.subr.bf16.mxu0 0
        %1594 = vmatpush1.bf16.msra.mxu0 %v1499
        %1595 = vmatprep.subr.bf16.mxu0 0
        %1596 = vmatpush1.bf16.msra.mxu0 %v1502
        %1597 = vmatprep.subr.bf16.mxu0 0
        %1598 = vmatpush1.bf16.msra.mxu0 %v1505
        %1599 = vmatprep.subr.bf16.mxu0 0
        %1600 = vmatpush1.bf16.msra.mxu0 0
        %1601 = vmatprep.subr.bf16.mxu0 0
        %1602 = vmatpush1.bf16.msra.mxu0 0
        %1603 = vmatprep.subr.bf16.mxu0 0
        %1604 = vmatpush1.bf16.msra.mxu0 0
        %1605 = vmatprep.subr.bf16.mxu0 0
        %1606 = vmatpush1.bf16.msra.mxu0 0
        %1607 = vmatprep.subr.bf16.mxu0 0
        %1608 = vmatpush1.bf16.msra.mxu0 0
        %1609 = vmatprep.subr.bf16.mxu0 0
        %1610 = vmatpush1.bf16.msra.mxu0 0
        %1611 = vmatprep.subr.bf16.mxu0 0
        %1612 = vmatpush1.bf16.msra.mxu0 0
        %1613 = vmatprep.subr.bf16.mxu0 0
        %1614 = vmatpush1.bf16.msra.mxu0 0
        %1615 = vmatprep.mubr.bf16.mxu0 0
        %1616 = vmatmul.mubr.bf16.gmra.mrb[0].mxu0 %v1350
        %v1617 = vpop.f32.mrb[0].mxu0
        %v1618 = vadd.f32 %v1398, %v1617
        %v1619 = vpop.f32.mrb[0].mxu0
        %v1620 = vpop.f32.mrb[0].mxu0
        %v1621 = vadd.f32 %v1398, %v1620
        %v1622 = vpop.f32.mrb[0].mxu0
        %1623 = vmatprep.mubr.bf16.mxu0 0
        %1624 = vmatmul.mubr.bf16.gmra.mrb[0].mxu0 %v1351
        %v1625 = vpop.f32.mrb[0].mxu0
        %v1626 = vadd.f32 %v1398, %v1625
        %v1627 = vpop.f32.mrb[0].mxu0
        %v1628 = vpop.f32.mrb[0].mxu0
        %v1629 = vadd.f32 %v1398, %v1628
        %v1630 = vpop.f32.mrb[0].mxu0
        %1631 = vdwg.mxu0
        %1632 = vst [vmem:[#allocation3] sm:$0xff] %v1565
        %1633 = vst [vmem:[#allocation3 + $0x8] sm:$0xff] %v1567
        %1634 = vst [vmem:[#allocation3 + $0x10] sm:$0xff] %v1618
        %1635 = vst [vmem:[#allocation3 + $0x18] sm:$0xff] %v1569
        %1636 = vst [vmem:[#allocation3 + $0x20] sm:$0xff] %v1571
        %1637 = vst [vmem:[#allocation3 + $0x28] sm:$0xff] %v1621
        %1638 = vst [vmem:[#allocation3 + $0x30] sm:$0xff] %v1575
        %1639 = vst [vmem:[#allocation3 + $0x38] sm:$0xff] %v1577
        %1640 = vst [vmem:[#allocation3 + $0x40] sm:$0xff] %v1626
        %1641 = vst [vmem:[#allocation3 + $0x48] sm:$0xff] %v1579
        %1642 = vst [vmem:[#allocation3 + $0x50] sm:$0xff] %v1581
        %1643 = vst [vmem:[#allocation3 + $0x58] sm:$0xff] %v1629
        %s1644 = scalar_lea.vmem [#allocation4], 8
        %v1645 = vld [vmem:[%s1644] sm:$0xff]
        %v1646 = vld [vmem:[#allocation3] sm:$0xff]
        %v1647 = vld [vmem:[#allocation3 + $0x8] sm:$0xff]
        %v1648 = vld [vmem:[#allocation3 + $0x10] sm:$0xff]
        %v1649 = vpack.c.bf16 %v1645, %v1645
        %v1682 = vunpack.c.l.b16 %v1316
        %v1683 = vunpack.c.h.b16 %v1316
        %v1684 = vunpack.c.l.b16 %v1317
        %v1685 = vunpack.c.l.b16 %v1318
        %v1686 = vunpack.c.h.b16 %v1318
        %v1687 = vunpack.c.l.b16 %v1319
        %v1688 = vunpack.c.l.b16 %v1320
        %v1689 = vunpack.c.h.b16 %v1320
        %v1690 = vunpack.c.l.b16 %v1321
        %v1691 = vunpack.c.l.b16 %v1322
        %v1692 = vunpack.c.h.b16 %v1322
        %v1693 = vunpack.c.l.b16 %v1323
        %v1694 = vunpack.c.l.b16 %v1324
        %v1695 = vunpack.c.h.b16 %v1324
        %v1696 = vunpack.c.l.b16 %v1325
        %v1697 = vunpack.c.l.b16 %v1326
        %v1698 = vunpack.c.h.b16 %v1326
        %v1699 = vunpack.c.l.b16 %v1327
        %v1700 = vunpack.c.l.b16 %v1328
        %v1701 = vunpack.c.h.b16 %v1328
        %v1702 = vunpack.c.l.b16 %v1329
        %v1703 = vunpack.c.l.b16 %v1330
        %v1704 = vunpack.c.h.b16 %v1330
        %v1705 = vunpack.c.l.b16 %v1331
        %v1706 = vunpack.c.l.b16 %v1332
        %v1707 = vunpack.c.h.b16 %v1332
        %v1708 = vunpack.c.l.b16 %v1333
        %v1709 = vunpack.c.l.b16 %v1334
        %v1710 = vunpack.c.h.b16 %v1334
        %v1711 = vunpack.c.l.b16 %v1335
        %v1712 = vunpack.c.l.b16 %v1336
        %v1713 = vunpack.c.h.b16 %v1336
        %v1714 = vunpack.c.l.b16 %v1337
        %v1715 = vunpack.c.l.b16 %v1338
        %v1716 = vunpack.c.h.b16 %v1338
        %v1717 = vunpack.c.l.b16 %v1339
        %v1718 = vunpack.c.l.b16 %v1340
        %v1719 = vunpack.c.h.b16 %v1340
        %v1720 = vunpack.c.l.b16 %v1341
        %v1721 = vunpack.c.l.b16 %v1342
        %v1722 = vunpack.c.h.b16 %v1342
        %v1723 = vunpack.c.l.b16 %v1343
        %v1724 = vunpack.c.l.b16 %v1344
        %v1725 = vunpack.c.h.b16 %v1344
        %v1726 = vunpack.c.l.b16 %v1345
        %v1727 = vunpack.c.l.b16 %v1346
        %v1728 = vunpack.c.h.b16 %v1346
        %v1729 = vunpack.c.l.b16 %v1347
        %v1730 = vpack.c.b16 %v1685, %v1682
        %v1731 = vpack.c.b16 %v1686, %v1683
        %v1732 = vpack.c.b16 %v1687, %v1684
        %v1733 = vpack.c.b16 %v1691, %v1688
        %v1734 = vpack.c.b16 %v1692, %v1689
        %v1735 = vpack.c.b16 %v1693, %v1690
        %v1736 = vpack.c.b16 %v1697, %v1694
        %v1737 = vpack.c.b16 %v1698, %v1695
        %v1738 = vpack.c.b16 %v1699, %v1696
        %v1739 = vpack.c.b16 %v1703, %v1700
        %v1740 = vpack.c.b16 %v1704, %v1701
        %v1741 = vpack.c.b16 %v1705, %v1702
        %v1742 = vpack.c.b16 %v1709, %v1706
        %v1743 = vpack.c.b16 %v1710, %v1707
        %v1744 = vpack.c.b16 %v1711, %v1708
        %v1745 = vpack.c.b16 %v1715, %v1712
        %v1746 = vpack.c.b16 %v1716, %v1713
        %v1747 = vpack.c.b16 %v1717, %v1714
        %v1748 = vpack.c.b16 %v1721, %v1718
        %v1749 = vpack.c.b16 %v1722, %v1719
        %v1750 = vpack.c.b16 %v1723, %v1720
        %v1751 = vpack.c.b16 %v1727, %v1724
        %v1752 = vpack.c.b16 %v1728, %v1725
        %v1753 = vpack.c.b16 %v1729, %v1726
        %1778 = vmatprep.subr.bf16.mxu0 %v1731
        %1779 = vmatpush1.bf16.msra.mxu0 %v1730
        %1780 = vmatprep.subr.bf16.mxu0 %v1734
        %1781 = vmatpush1.bf16.msra.mxu0 %v1733
        %1782 = vmatprep.subr.bf16.mxu0 %v1737
        %1783 = vmatpush1.bf16.msra.mxu0 %v1736
        %1784 = vmatprep.subr.bf16.mxu0 %v1740
        %1785 = vmatpush1.bf16.msra.mxu0 %v1739
        %1786 = vmatprep.subr.bf16.mxu0 %v1743
        %1787 = vmatpush1.bf16.msra.mxu0 %v1742
        %1788 = vmatprep.subr.bf16.mxu0 %v1746
        %1789 = vmatpush1.bf16.msra.mxu0 %v1745
        %1790 = vmatprep.subr.bf16.mxu0 %v1749
        %1791 = vmatpush1.bf16.msra.mxu0 %v1748
        %1792 = vmatprep.subr.bf16.mxu0 %v1752
        %1793 = vmatpush1.bf16.msra.mxu0 %v1751
        %1794 = vmatprep.subr.bf16.mxu0 0
        %1795 = vmatpush1.bf16.msra.mxu0 0
        %1796 = vmatprep.subr.bf16.mxu0 0
        %1797 = vmatpush1.bf16.msra.mxu0 0
        %1798 = vmatprep.subr.bf16.mxu0 0
        %1799 = vmatpush1.bf16.msra.mxu0 0
        %1800 = vmatprep.subr.bf16.mxu0 0
        %1801 = vmatpush1.bf16.msra.mxu0 0
        %1802 = vmatprep.subr.bf16.mxu0 0
        %1803 = vmatpush1.bf16.msra.mxu0 0
        %1804 = vmatprep.subr.bf16.mxu0 0
        %1805 = vmatpush1.bf16.msra.mxu0 0
        %1806 = vmatprep.subr.bf16.mxu0 0
        %1807 = vmatpush1.bf16.msra.mxu0 0
        %1808 = vmatprep.subr.bf16.mxu0 0
        %1809 = vmatpush1.bf16.msra.mxu0 0
        %1810 = vmatprep.mubr.bf16.mxu0 0
        %1811 = vmatmul.mubr.bf16.gmra.mrb[0].mxu0 %v1649
        %v1812 = vpop.f32.mrb[0].mxu0
        %v1813 = vadd.f32 0.0, %v1812
        %v1814 = vpop.f32.mrb[0].mxu0
        %v1815 = vadd.f32 0.0, %v1814
        %v1816 = vpop.f32.mrb[0].mxu0
        %v1817 = vpop.f32.mrb[0].mxu0
        %1818 = vdwg.mxu0
        %1819 = vmatprep.subr.bf16.mxu0 0
        %1820 = vmatpush1.bf16.msra.mxu0 %v1732
        %1821 = vmatprep.subr.bf16.mxu0 0
        %1822 = vmatpush1.bf16.msra.mxu0 %v1735
        %1823 = vmatprep.subr.bf16.mxu0 0
        %1824 = vmatpush1.bf16.msra.mxu0 %v1738
        %1825 = vmatprep.subr.bf16.mxu0 0
        %1826 = vmatpush1.bf16.msra.mxu0 %v1741
        %1827 = vmatprep.subr.bf16.mxu0 0
        %1828 = vmatpush1.bf16.msra.mxu0 %v1744
        %1829 = vmatprep.subr.bf16.mxu0 0
        %1830 = vmatpush1.bf16.msra.mxu0 %v1747
        %1831 = vmatprep.subr.bf16.mxu0 0
        %1832 = vmatpush1.bf16.msra.mxu0 %v1750
        %1833 = vmatprep.subr.bf16.mxu0 0
        %1834 = vmatpush1.bf16.msra.mxu0 %v1753
        %1835 = vmatprep.subr.bf16.mxu0 0
        %1836 = vmatpush1.bf16.msra.mxu0 0
        %1837 = vmatprep.subr.bf16.mxu0 0
        %1838 = vmatpush1.bf16.msra.mxu0 0
        %1839 = vmatprep.subr.bf16.mxu0 0
        %1840 = vmatpush1.bf16.msra.mxu0 0
        %1841 = vmatprep.subr.bf16.mxu0 0
        %1842 = vmatpush1.bf16.msra.mxu0 0
        %1843 = vmatprep.subr.bf16.mxu0 0
        %1844 = vmatpush1.bf16.msra.mxu0 0
        %1845 = vmatprep.subr.bf16.mxu0 0
        %1846 = vmatpush1.bf16.msra.mxu0 0
        %1847 = vmatprep.subr.bf16.mxu0 0
        %1848 = vmatpush1.bf16.msra.mxu0 0
        %1849 = vmatprep.subr.bf16.mxu0 0
        %1850 = vmatpush1.bf16.msra.mxu0 0
        %1851 = vmatprep.mubr.bf16.mxu0 0
        %1852 = vmatmul.mubr.bf16.gmra.mrb[0].mxu0 %v1649
        %v1853 = vpop.f32.mrb[0].mxu0
        %v1854 = vadd.f32 0.0, %v1853
        %v1855 = vpop.f32.mrb[0].mxu0
        %v1856 = vpop.f32.mrb[0].mxu0
        %v1857 = vpop.f32.mrb[0].mxu0
        %1858 = vdwg.mxu0
        %v1859 = vadd.f32 %v1646, %v1813
        %v1860 = vxor.u32 %v1859, 2147483648
        %v1861 = vmul.f32 %v1860, 1.442695
        %v1862 = vpow.pop %v1861
        %v1863 = vadd.f32 %v1862, 1.0
        %v1864 = vrcp.pop %v1863
        %v1865 = vmul.f32 1.0, %v1864
        %v1866 = vadd.f32 %v1647, %v1815
        %v1867 = vxor.u32 %v1866, 2147483648
        %v1868 = vmul.f32 %v1867, 1.442695
        %v1869 = vpow.pop %v1868
        %v1870 = vadd.f32 %v1869, 1.0
        %v1871 = vrcp.pop %v1870
        %v1872 = vmul.f32 1.0, %v1871
        %v1874 = vlaneseq
        %v1875 = vshrl.u32 %v1874, 7
        %v1876 = vsub.s32 0, %v1875
        %v1877 = vrot.slane %v1349, %v1876
        %v1879 = vadd.f32 %v1854, %v1877
        %v1880 = vmul.f32 %v1865, %v1879
        %v1881 = vadd.f32 %v1648, %v1880
        %v1882 = vtanh.pop %v1881
        %v1883 = vsub.f32 1.0, %v1872
        %v1884 = vmul.f32 %v1883, %v1882
        %v1885 = vmul.f32 %v1872, %v1645
        %v1886 = vadd.f32 %v1884, %v1885
        %1887 = vst [vmem:[%s1644] sm:$0xff] %v1886
        %v1888 = vld [vmem:[#allocation2] sm:$0xf]
        %v1889 = vunpack.c.l.bf16 %v1888
        %v1890 = vadd.f32 %v1886, %v1889
        %v1891 = vpack.c.bf16 %v1890, %v1890
        %1892 = vst [vmem:[#allocation2] sm:$0xf] %v1891
        %v1893 = vld [vmem:[%s1644] sm:$0xff]
        %v1894 = vld [vmem:[#allocation3 + $0x18] sm:$0xff]
        %v1895 = vld [vmem:[#allocation3 + $0x20] sm:$0xff]
        %v1896 = vld [vmem:[#allocation3 + $0x28] sm:$0xff]
        %v1897 = vpack.c.bf16 %v1893, %v1893
        %1898 = vmatprep.subr.bf16.mxu0 %v1731
        %1899 = vmatpush1.bf16.msra.mxu0 %v1730
        %1900 = vmatprep.subr.bf16.mxu0 %v1734
        %1901 = vmatpush1.bf16.msra.mxu0 %v1733
        %1902 = vmatprep.subr.bf16.mxu0 %v1737
        %1903 = vmatpush1.bf16.msra.mxu0 %v1736
        %1904 = vmatprep.subr.bf16.mxu0 %v1740
        %1905 = vmatpush1.bf16.msra.mxu0 %v1739
        %1906 = vmatprep.subr.bf16.mxu0 %v1743
        %1907 = vmatpush1.bf16.msra.mxu0 %v1742
        %1908 = vmatprep.subr.bf16.mxu0 %v1746
        %1909 = vmatpush1.bf16.msra.mxu0 %v1745
        %1910 = vmatprep.subr.bf16.mxu0 %v1749
        %1911 = vmatpush1.bf16.msra.mxu0 %v1748
        %1912 = vmatprep.subr.bf16.mxu0 %v1752
        %1913 = vmatpush1.bf16.msra.mxu0 %v1751
        %1914 = vmatprep.subr.bf16.mxu0 0
        %1915 = vmatpush1.bf16.msra.mxu0 0
        %1916 = vmatprep.subr.bf16.mxu0 0
        %1917 = vmatpush1.bf16.msra.mxu0 0
        %1918 = vmatprep.subr.bf16.mxu0 0
        %1919 = vmatpush1.bf16.msra.mxu0 0
        %1920 = vmatprep.subr.bf16.mxu0 0
        %1921 = vmatpush1.bf16.msra.mxu0 0
        %1922 = vmatprep.subr.bf16.mxu0 0
        %1923 = vmatpush1.bf16.msra.mxu0 0
        %1924 = vmatprep.subr.bf16.mxu0 0
        %1925 = vmatpush1.bf16.msra.mxu0 0
        %1926 = vmatprep.subr.bf16.mxu0 0
        %1927 = vmatpush1.bf16.msra.mxu0 0
        %1928 = vmatprep.subr.bf16.mxu0 0
        %1929 = vmatpush1.bf16.msra.mxu0 0
        %1930 = vmatprep.mubr.bf16.mxu0 0
        %1931 = vmatmul.mubr.bf16.gmra.mrb[0].mxu0 %v1897
        %v1932 = vpop.f32.mrb[0].mxu0
        %v1933 = vadd.f32 0.0, %v1932
        %v1934 = vpop.f32.mrb[0].mxu0
        %v1935 = vadd.f32 0.0, %v1934
        %v1936 = vpop.f32.mrb[0].mxu0
        %v1937 = vpop.f32.mrb[0].mxu0
        %1938 = vdwg.mxu0
        %1939 = vmatprep.subr.bf16.mxu0 0
        %1940 = vmatpush1.bf16.msra.mxu0 %v1732
        %1941 = vmatprep.subr.bf16.mxu0 0
        %1942 = vmatpush1.bf16.msra.mxu0 %v1735
        %1943 = vmatprep.subr.bf16.mxu0 0
        %1944 = vmatpush1.bf16.msra.mxu0 %v1738
        %1945 = vmatprep.subr.bf16.mxu0 0
        %1946 = vmatpush1.bf16.msra.mxu0 %v1741
        %1947 = vmatprep.subr.bf16.mxu0 0
        %1948 = vmatpush1.bf16.msra.mxu0 %v1744
        %1949 = vmatprep.subr.bf16.mxu0 0
        %1950 = vmatpush1.bf16.msra.mxu0 %v1747
        %1951 = vmatprep.subr.bf16.mxu0 0
        %1952 = vmatpush1.bf16.msra.mxu0 %v1750
        %1953 = vmatprep.subr.bf16.mxu0 0
        %1954 = vmatpush1.bf16.msra.mxu0 %v1753
        %1955 = vmatprep.subr.bf16.mxu0 0
        %1956 = vmatpush1.bf16.msra.mxu0 0
        %1957 = vmatprep.subr.bf16.mxu0 0
        %1958 = vmatpush1.bf16.msra.mxu0 0
        %1959 = vmatprep.subr.bf16.mxu0 0
        %1960 = vmatpush1.bf16.msra.mxu0 0
        %1961 = vmatprep.subr.bf16.mxu0 0
        %1962 = vmatpush1.bf16.msra.mxu0 0
        %1963 = vmatprep.subr.bf16.mxu0 0
        %1964 = vmatpush1.bf16.msra.mxu0 0
        %1965 = vmatprep.subr.bf16.mxu0 0
        %1966 = vmatpush1.bf16.msra.mxu0 0
        %1967 = vmatprep.subr.bf16.mxu0 0
        %1968 = vmatpush1.bf16.msra.mxu0 0
        %1969 = vmatprep.subr.bf16.mxu0 0
        %1970 = vmatpush1.bf16.msra.mxu0 0
        %1971 = vmatprep.mubr.bf16.mxu0 0
        %1972 = vmatmul.mubr.bf16.gmra.mrb[0].mxu0 %v1897
        %v1973 = vpop.f32.mrb[0].mxu0
        %v1974 = vadd.f32 0.0, %v1973
        %v1975 = vpop.f32.mrb[0].mxu0
        %v1976 = vpop.f32.mrb[0].mxu0
        %v1977 = vpop.f32.mrb[0].mxu0
        %1978 = vdwg.mxu0
        %v1979 = vadd.f32 %v1894, %v1933
        %v1980 = vxor.u32 %v1979, 2147483648
        %v1981 = vmul.f32 %v1980, 1.442695
        %v1982 = vpow.pop %v1981
        %v1983 = vadd.f32 %v1982, 1.0
        %v1984 = vrcp.pop %v1983
        %v1985 = vmul.f32 1.0, %v1984
        %v1986 = vadd.f32 %v1895, %v1935
        %v1987 = vxor.u32 %v1986, 2147483648
        %v1988 = vmul.f32 %v1987, 1.442695
        %v1989 = vpow.pop %v1988
        %v1990 = vadd.f32 %v1989, 1.0
        %v1991 = vrcp.pop %v1990
        %v1992 = vmul.f32 1.0, %v1991
        %v1993 = vadd.f32 %v1974, %v1877
        %v1994 = vmul.f32 %v1985, %v1993
        %v1995 = vadd.f32 %v1896, %v1994
        %v1996 = vtanh.pop %v1995
        %v1997 = vsub.f32 1.0, %v1992
        %v1998 = vmul.f32 %v1997, %v1996
        %v1999 = vmul.f32 %v1992, %v1893
        %v2000 = vadd.f32 %v1998, %v1999
        %2001 = vst [vmem:[%s1644] sm:$0xff] %v2000
        %v2002 = vld [vmem:[#allocation2] sm:$0xf0]
        %v2004 = vrot.slane %v2002, 4
        %v2006 = vunpack.c.l.bf16 %v2004
        %v2007 = vadd.f32 %v2000, %v2006
        %v2008 = vpack.c.bf16 %v2007, %v2007
        %v2010 = vrot.slane %v2008, 4
        %2012 = vst [vmem:[#allocation2] sm:$0xf0] %v2010
        %v2013 = vld [vmem:[%s1644] sm:$0xff]
        %v2014 = vld [vmem:[#allocation3 + $0x30] sm:$0xff]
        %v2015 = vld [vmem:[#allocation3 + $0x38] sm:$0xff]
        %v2016 = vld [vmem:[#allocation3 + $0x40] sm:$0xff]
        %v2017 = vpack.c.bf16 %v2013, %v2013
        %2018 = vmatprep.subr.bf16.mxu0 %v1731
        %2019 = vmatpush1.bf16.msra.mxu0 %v1730
        %2020 = vmatprep.subr.bf16.mxu0 %v1734
        %2021 = vmatpush1.bf16.msra.mxu0 %v1733
        %2022 = vmatprep.subr.bf16.mxu0 %v1737
        %2023 = vmatpush1.bf16.msra.mxu0 %v1736
        %2024 = vmatprep.subr.bf16.mxu0 %v1740
        %2025 = vmatpush1.bf16.msra.mxu0 %v1739
        %2026 = vmatprep.subr.bf16.mxu0 %v1743
        %2027 = vmatpush1.bf16.msra.mxu0 %v1742
        %2028 = vmatprep.subr.bf16.mxu0 %v1746
        %2029 = vmatpush1.bf16.msra.mxu0 %v1745
        %2030 = vmatprep.subr.bf16.mxu0 %v1749
        %2031 = vmatpush1.bf16.msra.mxu0 %v1748
        %2032 = vmatprep.subr.bf16.mxu0 %v1752
        %2033 = vmatpush1.bf16.msra.mxu0 %v1751
        %2034 = vmatprep.subr.bf16.mxu0 0
        %2035 = vmatpush1.bf16.msra.mxu0 0
        %2036 = vmatprep.subr.bf16.mxu0 0
        %2037 = vmatpush1.bf16.msra.mxu0 0
        %2038 = vmatprep.subr.bf16.mxu0 0
        %2039 = vmatpush1.bf16.msra.mxu0 0
        %2040 = vmatprep.subr.bf16.mxu0 0
        %2041 = vmatpush1.bf16.msra.mxu0 0
        %2042 = vmatprep.subr.bf16.mxu0 0
        %2043 = vmatpush1.bf16.msra.mxu0 0
        %2044 = vmatprep.subr.bf16.mxu0 0
        %2045 = vmatpush1.bf16.msra.mxu0 0
        %2046 = vmatprep.subr.bf16.mxu0 0
        %2047 = vmatpush1.bf16.msra.mxu0 0
        %2048 = vmatprep.subr.bf16.mxu0 0
        %2049 = vmatpush1.bf16.msra.mxu0 0
        %2050 = vmatprep.mubr.bf16.mxu0 0
        %2051 = vmatmul.mubr.bf16.gmra.mrb[0].mxu0 %v2017
        %v2052 = vpop.f32.mrb[0].mxu0
        %v2053 = vadd.f32 0.0, %v2052
        %v2054 = vpop.f32.mrb[0].mxu0
        %v2055 = vadd.f32 0.0, %v2054
        %v2056 = vpop.f32.mrb[0].mxu0
        %v2057 = vpop.f32.mrb[0].mxu0
        %2058 = vdwg.mxu0
        %2059 = vmatprep.subr.bf16.mxu0 0
        %2060 = vmatpush1.bf16.msra.mxu0 %v1732
        %2061 = vmatprep.subr.bf16.mxu0 0
        %2062 = vmatpush1.bf16.msra.mxu0 %v1735
        %2063 = vmatprep.subr.bf16.mxu0 0
        %2064 = vmatpush1.bf16.msra.mxu0 %v1738
        %2065 = vmatprep.subr.bf16.mxu0 0
        %2066 = vmatpush1.bf16.msra.mxu0 %v1741
        %2067 = vmatprep.subr.bf16.mxu0 0
        %2068 = vmatpush1.bf16.msra.mxu0 %v1744
        %2069 = vmatprep.subr.bf16.mxu0 0
        %2070 = vmatpush1.bf16.msra.mxu0 %v1747
        %2071 = vmatprep.subr.bf16.mxu0 0
        %2072 = vmatpush1.bf16.msra.mxu0 %v1750
        %2073 = vmatprep.subr.bf16.mxu0 0
        %2074 = vmatpush1.bf16.msra.mxu0 %v1753
        %2075 = vmatprep.subr.bf16.mxu0 0
        %2076 = vmatpush1.bf16.msra.mxu0 0
        %2077 = vmatprep.subr.bf16.mxu0 0
        %2078 = vmatpush1.bf16.msra.mxu0 0
        %2079 = vmatprep.subr.bf16.mxu0 0
        %2080 = vmatpush1.bf16.msra.mxu0 0
        %2081 = vmatprep.subr.bf16.mxu0 0
        %2082 = vmatpush1.bf16.msra.mxu0 0
        %2083 = vmatprep.subr.bf16.mxu0 0
        %2084 = vmatpush1.bf16.msra.mxu0 0
        %2085 = vmatprep.subr.bf16.mxu0 0
        %2086 = vmatpush1.bf16.msra.mxu0 0
        %2087 = vmatprep.subr.bf16.mxu0 0
        %2088 = vmatpush1.bf16.msra.mxu0 0
        %2089 = vmatprep.subr.bf16.mxu0 0
        %2090 = vmatpush1.bf16.msra.mxu0 0
        %2091 = vmatprep.mubr.bf16.mxu0 0
        %2092 = vmatmul.mubr.bf16.gmra.mrb[0].mxu0 %v2017
        %v2093 = vpop.f32.mrb[0].mxu0
        %v2094 = vadd.f32 0.0, %v2093
        %v2095 = vpop.f32.mrb[0].mxu0
        %v2096 = vpop.f32.mrb[0].mxu0
        %v2097 = vpop.f32.mrb[0].mxu0
        %2098 = vdwg.mxu0
        %v2099 = vadd.f32 %v2014, %v2053
        %v2100 = vxor.u32 %v2099, 2147483648
        %v2101 = vmul.f32 %v2100, 1.442695
        %v2102 = vpow.pop %v2101
        %v2103 = vadd.f32 %v2102, 1.0
        %v2104 = vrcp.pop %v2103
        %v2105 = vmul.f32 1.0, %v2104
        %v2106 = vadd.f32 %v2015, %v2055
        %v2107 = vxor.u32 %v2106, 2147483648
        %v2108 = vmul.f32 %v2107, 1.442695
        %v2109 = vpow.pop %v2108
        %v2110 = vadd.f32 %v2109, 1.0
        %v2111 = vrcp.pop %v2110
        %v2112 = vmul.f32 1.0, %v2111
        %v2113 = vadd.f32 %v2094, %v1877
        %v2114 = vmul.f32 %v2105, %v2113
        %v2115 = vadd.f32 %v2016, %v2114
        %v2116 = vtanh.pop %v2115
        %v2117 = vsub.f32 1.0, %v2112
        %v2118 = vmul.f32 %v2117, %v2116
        %v2119 = vmul.f32 %v2112, %v2013
        %v2120 = vadd.f32 %v2118, %v2119
        %2121 = vst [vmem:[%s1644] sm:$0xff] %v2120
        %v2122 = vld [vmem:[#allocation2 + $0x8] sm:$0xf]
        %v2123 = vunpack.c.l.bf16 %v2122
        %v2124 = vadd.f32 %v2120, %v2123
        %v2125 = vpack.c.bf16 %v2124, %v2124
        %2126 = vst [vmem:[#allocation2 + $0x8] sm:$0xf] %v2125
        %v2127 = vld [vmem:[%s1644] sm:$0xff]
        %v2128 = vld [vmem:[#allocation3 + $0x48] sm:$0xff]
        %v2129 = vld [vmem:[#allocation3 + $0x50] sm:$0xff]
        %v2130 = vld [vmem:[#allocation3 + $0x58] sm:$0xff]
        %v2131 = vpack.c.bf16 %v2127, %v2127
        %2132 = vmatprep.subr.bf16.mxu0 %v1731
        %2133 = vmatpush1.bf16.msra.mxu0 %v1730
        %2134 = vmatprep.subr.bf16.mxu0 %v1734
        %2135 = vmatpush1.bf16.msra.mxu0 %v1733
        %2136 = vmatprep.subr.bf16.mxu0 %v1737
        %2137 = vmatpush1.bf16.msra.mxu0 %v1736
        %2138 = vmatprep.subr.bf16.mxu0 %v1740
        %2139 = vmatpush1.bf16.msra.mxu0 %v1739
        %2140 = vmatprep.subr.bf16.mxu0 %v1743
        %2141 = vmatpush1.bf16.msra.mxu0 %v1742
        %2142 = vmatprep.subr.bf16.mxu0 %v1746
        %2143 = vmatpush1.bf16.msra.mxu0 %v1745
        %2144 = vmatprep.subr.bf16.mxu0 %v1749
        %2145 = vmatpush1.bf16.msra.mxu0 %v1748
        %2146 = vmatprep.subr.bf16.mxu0 %v1752
        %2147 = vmatpush1.bf16.msra.mxu0 %v1751
        %2148 = vmatprep.subr.bf16.mxu0 0
        %2149 = vmatpush1.bf16.msra.mxu0 0
        %2150 = vmatprep.subr.bf16.mxu0 0
        %2151 = vmatpush1.bf16.msra.mxu0 0
        %2152 = vmatprep.subr.bf16.mxu0 0
        %2153 = vmatpush1.bf16.msra.mxu0 0
        %2154 = vmatprep.subr.bf16.mxu0 0
        %2155 = vmatpush1.bf16.msra.mxu0 0
        %2156 = vmatprep.subr.bf16.mxu0 0
        %2157 = vmatpush1.bf16.msra.mxu0 0
        %2158 = vmatprep.subr.bf16.mxu0 0
        %2159 = vmatpush1.bf16.msra.mxu0 0
        %2160 = vmatprep.subr.bf16.mxu0 0
        %2161 = vmatpush1.bf16.msra.mxu0 0
        %2162 = vmatprep.subr.bf16.mxu0 0
        %2163 = vmatpush1.bf16.msra.mxu0 0
        %2164 = vmatprep.mubr.bf16.mxu0 0
        %2165 = vmatmul.mubr.bf16.gmra.mrb[0].mxu0 %v2131
        %v2166 = vpop.f32.mrb[0].mxu0
        %v2167 = vadd.f32 0.0, %v2166
        %v2168 = vpop.f32.mrb[0].mxu0
        %v2169 = vadd.f32 0.0, %v2168
        %v2170 = vpop.f32.mrb[0].mxu0
        %v2171 = vpop.f32.mrb[0].mxu0
        %2172 = vdwg.mxu0
        %2173 = vmatprep.subr.bf16.mxu0 0
        %2174 = vmatpush1.bf16.msra.mxu0 %v1732
        %2175 = vmatprep.subr.bf16.mxu0 0
        %2176 = vmatpush1.bf16.msra.mxu0 %v1735
        %2177 = vmatprep.subr.bf16.mxu0 0
        %2178 = vmatpush1.bf16.msra.mxu0 %v1738
        %2179 = vmatprep.subr.bf16.mxu0 0
        %2180 = vmatpush1.bf16.msra.mxu0 %v1741
        %2181 = vmatprep.subr.bf16.mxu0 0
        %2182 = vmatpush1.bf16.msra.mxu0 %v1744
        %2183 = vmatprep.subr.bf16.mxu0 0
        %2184 = vmatpush1.bf16.msra.mxu0 %v1747
        %2185 = vmatprep.subr.bf16.mxu0 0
        %2186 = vmatpush1.bf16.msra.mxu0 %v1750
        %2187 = vmatprep.subr.bf16.mxu0 0
        %2188 = vmatpush1.bf16.msra.mxu0 %v1753
        %2189 = vmatprep.subr.bf16.mxu0 0
        %2190 = vmatpush1.bf16.msra.mxu0 0
        %2191 = vmatprep.subr.bf16.mxu0 0
        %2192 = vmatpush1.bf16.msra.mxu0 0
        %2193 = vmatprep.subr.bf16.mxu0 0
        %2194 = vmatpush1.bf16.msra.mxu0 0
        %2195 = vmatprep.subr.bf16.mxu0 0
        %2196 = vmatpush1.bf16.msra.mxu0 0
        %2197 = vmatprep.subr.bf16.mxu0 0
        %2198 = vmatpush1.bf16.msra.mxu0 0
        %2199 = vmatprep.subr.bf16.mxu0 0
        %2200 = vmatpush1.bf16.msra.mxu0 0
        %2201 = vmatprep.subr.bf16.mxu0 0
        %2202 = vmatpush1.bf16.msra.mxu0 0
        %2203 = vmatprep.subr.bf16.mxu0 0
        %2204 = vmatpush1.bf16.msra.mxu0 0
        %2205 = vmatprep.mubr.bf16.mxu0 0
        %2206 = vmatmul.mubr.bf16.gmra.mrb[0].mxu0 %v2131
        %v2207 = vpop.f32.mrb[0].mxu0
        %v2208 = vadd.f32 0.0, %v2207
        %v2209 = vpop.f32.mrb[0].mxu0
        %v2210 = vpop.f32.mrb[0].mxu0
        %v2211 = vpop.f32.mrb[0].mxu0
        %2212 = vdwg.mxu0
        %v2213 = vadd.f32 %v2128, %v2167
        %v2214 = vxor.u32 %v2213, 2147483648
        %v2215 = vmul.f32 %v2214, 1.442695
        %v2216 = vpow.pop %v2215
        %v2217 = vadd.f32 %v2216, 1.0
        %v2218 = vrcp.pop %v2217
        %v2219 = vmul.f32 1.0, %v2218
        %v2220 = vadd.f32 %v2129, %v2169
        %v2221 = vxor.u32 %v2220, 2147483648
        %v2222 = vmul.f32 %v2221, 1.442695
        %v2223 = vpow.pop %v2222
        %v2224 = vadd.f32 %v2223, 1.0
        %v2225 = vrcp.pop %v2224
        %v2226 = vmul.f32 1.0, %v2225
        %v2227 = vadd.f32 %v2208, %v1877
        %v2228 = vmul.f32 %v2219, %v2227
        %v2229 = vadd.f32 %v2130, %v2228
        %v2230 = vtanh.pop %v2229
        %v2231 = vsub.f32 1.0, %v2226
        %v2232 = vmul.f32 %v2231, %v2230
        %v2233 = vmul.f32 %v2226, %v2127
        %v2234 = vadd.f32 %v2232, %v2233
        %2235 = vst [vmem:[%s1644] sm:$0xff] %v2234
        %v2236 = vld [vmem:[#allocation2 + $0x8] sm:$0xf0]
        %v2238 = vrot.slane %v2236, 4
        %v2240 = vunpack.c.l.bf16 %v2238
        %v2241 = vadd.f32 %v2234, %v2240
        %v2242 = vpack.c.bf16 %v2241, %v2241
        %v2244 = vrot.slane %v2242, 4
        %2246 = vst [vmem:[#allocation2 + $0x8] sm:$0xf0] %v2244
        %v2247 = vld [vmem:[#allocation2] sm:$0xff]
        %v2248 = vld [vmem:[#allocation2 + $0x8] sm:$0xff]
        %v2249 = vld [vmem:[#allocation13] sm:$0xf]
        %v2250 = vld [vmem:[#allocation13 + $0x4] sm:$0xf]
        %v2251 = vld [vmem:[#allocation13 + $0x8] sm:$0xf]
        %v2252 = vld [vmem:[#allocation13 + $0xc] sm:$0xf]
        %v2253 = vld [vmem:[#allocation13 + $0x10] sm:$0xf]
        %v2254 = vld [vmem:[#allocation13 + $0x14] sm:$0xf]
        %v2255 = vld [vmem:[#allocation13 + $0x18] sm:$0xf]
        %v2256 = vld [vmem:[#allocation13 + $0x1c] sm:$0xf]
        %v2257 = vld [vmem:[#allocation13 + $0x20] sm:$0xf]
        %v2258 = vld [vmem:[#allocation13 + $0x24] sm:$0xf]
        %v2259 = vld [vmem:[#allocation13 + $0x28] sm:$0xf]
        %v2260 = vld [vmem:[#allocation13 + $0x2c] sm:$0xf]
        %v2261 = vld [vmem:[#allocation13 + $0x30] sm:$0xf]
        %v2262 = vld [vmem:[#allocation13 + $0x34] sm:$0xf]
        %v2263 = vld [vmem:[#allocation13 + $0x38] sm:$0xf]
        %v2264 = vld [vmem:[#allocation13 + $0x3c] sm:$0xf]
        %v2265 = vld [vmem:[%s7] sm:$0x1]
        %v2267 = vlaneseq
        %v2268 = vshrl.u32 %v2267, 7
        %v2269 = vsub.s32 0, %v2268
        %v2270 = vrot.slane %v2265, %v2269
        %v2288 = vunpack.c.l.b16 %v2249
        %v2289 = vunpack.c.l.b16 %v2250
        %v2290 = vunpack.c.l.b16 %v2251
        %v2291 = vunpack.c.l.b16 %v2252
        %v2292 = vunpack.c.l.b16 %v2253
        %v2293 = vunpack.c.l.b16 %v2254
        %v2294 = vunpack.c.l.b16 %v2255
        %v2295 = vunpack.c.l.b16 %v2256
        %v2296 = vunpack.c.l.b16 %v2257
        %v2297 = vunpack.c.l.b16 %v2258
        %v2298 = vunpack.c.l.b16 %v2259
        %v2299 = vunpack.c.l.b16 %v2260
        %v2300 = vunpack.c.l.b16 %v2261
        %v2301 = vunpack.c.l.b16 %v2262
        %v2302 = vunpack.c.l.b16 %v2263
        %v2303 = vunpack.c.l.b16 %v2264
        %v2304 = vpack.c.b16 %v2289, %v2288
        %v2305 = vpack.c.b16 %v2291, %v2290
        %v2306 = vpack.c.b16 %v2293, %v2292
        %v2307 = vpack.c.b16 %v2295, %v2294
        %v2308 = vpack.c.b16 %v2297, %v2296
        %v2309 = vpack.c.b16 %v2299, %v2298
        %v2310 = vpack.c.b16 %v2301, %v2300
        %v2311 = vpack.c.b16 %v2303, %v2302
        %2320 = vmatprep.subr.bf16.mxu0 0
        %2321 = vmatpush1.bf16.msra.mxu0 %v2304
        %2322 = vmatprep.subr.bf16.mxu0 0
        %2323 = vmatpush1.bf16.msra.mxu0 %v2305
        %2324 = vmatprep.subr.bf16.mxu0 0
        %2325 = vmatpush1.bf16.msra.mxu0 %v2306
        %2326 = vmatprep.subr.bf16.mxu0 0
        %2327 = vmatpush1.bf16.msra.mxu0 %v2307
        %2328 = vmatprep.subr.bf16.mxu0 0
        %2329 = vmatpush1.bf16.msra.mxu0 %v2308
        %2330 = vmatprep.subr.bf16.mxu0 0
        %2331 = vmatpush1.bf16.msra.mxu0 %v2309
        %2332 = vmatprep.subr.bf16.mxu0 0
        %2333 = vmatpush1.bf16.msra.mxu0 %v2310
        %2334 = vmatprep.subr.bf16.mxu0 0
        %2335 = vmatpush1.bf16.msra.mxu0 %v2311
        %2336 = vmatprep.subr.bf16.mxu0 0
        %2337 = vmatpush1.bf16.msra.mxu0 0
        %2338 = vmatprep.subr.bf16.mxu0 0
        %2339 = vmatpush1.bf16.msra.mxu0 0
        %2340 = vmatprep.subr.bf16.mxu0 0
        %2341 = vmatpush1.bf16.msra.mxu0 0
        %2342 = vmatprep.subr.bf16.mxu0 0
        %2343 = vmatpush1.bf16.msra.mxu0 0
        %2344 = vmatprep.subr.bf16.mxu0 0
        %2345 = vmatpush1.bf16.msra.mxu0 0
        %2346 = vmatprep.subr.bf16.mxu0 0
        %2347 = vmatpush1.bf16.msra.mxu0 0
        %2348 = vmatprep.subr.bf16.mxu0 0
        %2349 = vmatpush1.bf16.msra.mxu0 0
        %2350 = vmatprep.subr.bf16.mxu0 0
        %2351 = vmatpush1.bf16.msra.mxu0 0
        %2352 = vmatprep.mubr.bf16.mxu0 0
        %2353 = vmatmul.mubr.bf16.gmra.mrb[0].mxu0 %v2247
        %v2354 = vpop.f32.mrb[0].mxu0
        %v2355 = vadd.f32 %v2270, %v2354
        %v2356 = vpop.f32.mrb[0].mxu0
        %v2357 = vpop.f32.mrb[0].mxu0
        %v2358 = vadd.f32 %v2270, %v2357
        %v2359 = vpop.f32.mrb[0].mxu0
        %2360 = vmatprep.mubr.bf16.mxu0 0
        %2361 = vmatmul.mubr.bf16.gmra.mrb[0].mxu0 %v2248
        %v2362 = vpop.f32.mrb[0].mxu0
        %v2363 = vadd.f32 %v2270, %v2362
        %v2364 = vpop.f32.mrb[0].mxu0
        %v2365 = vpop.f32.mrb[0].mxu0
        %v2366 = vadd.f32 %v2270, %v2365
        %v2367 = vpop.f32.mrb[0].mxu0
        %2368 = vdwg.mxu0
        %2369 = vst [vmem:[%s381] sm:$0xff] %v2355
        %2370 = vst [vmem:[%s381 + $0x8] sm:$0xff] %v2358
        %2371 = vst [vmem:[%s381 + $0x10] sm:$0xff] %v2363
        %2372 = vst [vmem:[%s381 + $0x18] sm:$0xff] %v2366
        %s2373 = sand.u32 %s208, 1
        %s2374 = scalar_lea.sflag [#allocation7], %s2373
        %s2375 = sand.u32 %s208, 1
        %s2376 = smul.addr %s2375, 32
        %s2377 = scalar_lea.vmem [#allocation14], %s2376
        // Predicated region
        $region77: #{tpu_custom_call.1} parent=51 // pred_check
          %p2378 = pneg %p218
        $region78: #{tpu_custom_call.1} parent=51 // pred_check_branch
          %2380 = sbr.rel (%p2378) target = $region80
        $region79: #{tpu_custom_call.1} parent=51 // pred_region
          %s2381 = smul.u32 4, %s27
          %s2383 = ssub.s32 512, 512
          %2384 = vsyncadd %s2374, %s2383
          %s2385 = smul.addr %s2381, 128
          %s2386 = scalar_lea.hbm %s8, %s2385
          %s2387 = sshll.u32 %s2377, 4
          %s2388 = int_to_ptr.vmem [resolvable:$true] %s2387
          %2393 = dma.vmem_to_hbm [thread:$0]  %s2388, 512, %s2386, %s2374, 128, 128, 8
        $region80: #{tpu_custom_call.1} parent=51 // pred_fallthru
          _
      $region52: #{tpu_custom_call.1} parent=5 // pred_fallthru
        _
      %p2394 = scmp.le.s32.totalorder 2, %s22
      // Predicated region
      $region81: #{tpu_custom_call.1} parent=5 // pred_check
        %p2395 = pneg %p2394
      $region82: #{tpu_custom_call.1} parent=5 // pred_check_branch
        %2397 = sbr.rel (%p2395) target = $region84
      $region83: #{tpu_custom_call.1} parent=5 // pred_region
        %s2398 = ssub.s32 %s22, 2
        // Predicated region
        $region85: #{tpu_custom_call.1} parent=83 // pred_check
          %p2399 = pneg %p224
        $region86: #{tpu_custom_call.1} parent=83 // pred_check_branch
          %2401 = sbr.rel (%p2399) target = $region88
        $region87: #{tpu_custom_call.1} parent=83 // pred_region
          %s2402 = sand.u32 %s209, 1
          %s2403 = scalar_lea.sflag [#allocation7], %s2402
          %s2404 = sand.u32 %s209, 1
          %s2405 = smul.addr %s2404, 32
          %s2406 = scalar_lea.vmem [#allocation14], %s2405
          %2407 = dma.done %s2403, 512
        $region88: #{tpu_custom_call.1} parent=83 // pred_fallthru
          _
      $region84: #{tpu_custom_call.1} parent=5 // pred_fallthru
        _
    $region6: #{tpu_custom_call.1} parent=1 // loop_footer
      %s26 = sadd.s32 1, %s22
    $region7: #{tpu_custom_call.1} parent=1 // loop_footer_branch
      %21 = sbr.rel target = $region3
    $region8: #{tpu_custom_call.1} parent=1 // loop_exit
      _
    %2408 = vsyncpa [#allocation6], 1
    %s2409 = scalar_lea.sflag [#allocation6], 1
    %2410 = vsyncpa %s2409, 1
    %2411 = vsyncpa [#allocation9], 1
    %2412 = vsyncpa [#allocation12], 1
    %2413 = vsyncpa [#allocation7], 1
    %s2414 = scalar_lea.sflag [#allocation7], 1
    %2415 = vsyncpa %s2414, 1

// kernel: tpu_custom_call.1
$region0: #{tpu_custom_call.1}
  #allocation0 [shape = 'u32[]', space=smem, size = 0x4, offset = 0x4, fixed_abs, tag = 'smem constant byte address 0x4 - core index']
  #allocation1 [shape = 'u32[144,128]{1,0:T(1,128)}', space=vmem, size = 0x12000, scoped, tag = 'internal scratch']
  #allocation2 [shape = 'bf16[32,128]{1,0:T(16,128)(2,1)}', space=vmem, size = 0x2000, scoped, tag = 'scratch operand']
  #allocation3 [shape = 'f32[32,384]{1,0:T(8,128)}', space=vmem, size = 0xc000, scoped, tag = 'scratch operand']
  #allocation4 [shape = 'f32[2,8,128]{2,1,0:T(8,128)}', space=vmem, size = 0x2000, scoped, tag = 'scratch operand']
  %s0 = inlined_call_operand.hbm [shape: bf16[64,128], index: 0, kind: input, shape index: {}]
  %s1 = inlined_call_operand.hbm [shape: bf16[128,384], index: 1, kind: input, shape index: {}]
  %s2 = inlined_call_operand.hbm [shape: bf16[1,128,384], index: 2, kind: input, shape index: {}]
  %s3 = inlined_call_operand.hbm [shape: bf16[2,128,384], index: 3, kind: input, shape index: {}]
  %s4 = inlined_call_operand.vmem [shape: f32[2,1,384], index: 4, kind: input, shape index: {}]
  %s5 = inlined_call_operand.vmem [shape: f32[2,1,128], index: 5, kind: input, shape index: {}]
  %s6 = inlined_call_operand.hbm [shape: bf16[128,128], index: 6, kind: input, shape index: {}]
  %s7 = inlined_call_operand.vmem [shape: f32[1,128], index: 7, kind: input, shape index: {}]
  %s8 = inlined_call_operand.hbm [shape: f32[64,128], index: 8, kind: output, shape index: {}]
  %s9 = sld [smem:[#allocation0]]
  $region89: #{tpu_custom_call.1} parent=0
    _
  %s11 = ssub.s32 1, %s9
  %s12 = scalar_select 0, %s11, %s9
  $region1: #{tpu_custom_call.1} parent=0
    #allocation5 [shape = 'u8[16384]{0}', space=vmem, size = 0x4000, scoped, tag = 'input window, operand 0']
    #allocation6 [shape = 's32[2]{0}', space=sflag, size = 0x8, scoped, tag = 'scoped memory for tpu_custom_call.1']
    #allocation7 [shape = 's32[2]{0}', space=sflag, size = 0x8, scoped, tag = 'scoped memory for tpu_custom_call.1']
    #allocation8 [shape = 'u8[98304]{0}', space=vmem, size = 0x18000, scoped, tag = 'input window, operand 1, single buffered']
    #allocation9 [shape = 's32[1]{0}', space=sflag, size = 0x4, scoped, tag = 'scoped memory for tpu_custom_call.1']
    #allocation10 [shape = 'u8[98304]{0}', space=vmem, size = 0x18000, scoped, tag = 'input window, operand 2, single buffered']
    #allocation11 [shape = 'u8[196608]{0}', space=vmem, size = 0x30000, scoped, tag = 'input window, operand 3, single buffered']
    #allocation12 [shape = 's32[1]{0}', space=sflag, size = 0x4, scoped, tag = 'scoped memory for tpu_custom_call.1']
    #allocation13 [shape = 'u8[32768]{0}', space=vmem, size = 0x8000, scoped, tag = 'input window, operand 6, single buffered']
    #allocation14 [shape = 'u8[32768]{0}', space=vmem, size = 0x8000, scoped, tag = 'output window, operand 0']
    %13 = vsyncpa [#allocation6], 0
    %s14 = scalar_lea.sflag [#allocation6], 1
    %15 = vsyncpa %s14, 0
    %16 = vsyncpa [#allocation9], 0
    %17 = vsyncpa [#allocation12], 0
    %18 = vsyncpa [#allocation7], 0
    %s19 = scalar_lea.sflag [#allocation7], 1
    %20 = vsyncpa %s19, 0
    loop: start=0, step=1, limit=4
    $region2: #{tpu_custom_call.1} parent=1 // loop_pre_header
      _
    $region3: #{tpu_custom_call.1} parent=1 // loop_header
      %s22 = sphi 0, %s26
      %p23 = scmp.ge.s32.totalorder %s22, 4
      %s32 = sphi 0, %s34
      %s35 = sphi 0, %s32
      %s36 = sphi 0, %s35
      %s52 = sphi 0, %s36
      %s56 = sphi 0, %s56
      %s58 = sphi 0, %s56
      %s59 = sphi 0, %s58
      %s73 = sphi 0, %s59
      %s77 = sphi 0, %s77
      %s79 = sphi 0, %s77
      %s80 = sphi 0, %s79
      %s94 = sphi 0, %s80
      %s98 = sphi 0, %s98
      %s100 = sphi 0, %s98
      %s101 = sphi 0, %s100
      %s115 = sphi 0, %s101
      %s119 = sphi 0, %s119
      %s121 = sphi 0, %s119
      %s122 = sphi 0, %s121
      %s136 = sphi 0, %s122
      %s140 = sphi 0, %s140
      %s142 = sphi 0, %s140
      %s143 = sphi 0, %s142
      %s157 = sphi 0, %s143
      %s161 = sphi 0, %s161
      %s163 = sphi 0, %s161
      %s164 = sphi 0, %s163
      %s178 = sphi 0, %s164
      %s182 = sphi 0, %s182
      %s184 = sphi 0, %s182
      %s185 = sphi 0, %s184
      %s199 = sphi 0, %s185
      %s205 = sphi 0, %s207
      %s208 = sphi 0, %s205
      %s209 = sphi 0, %s208
      %s225 = sphi 0, %s209
    $region4: #{tpu_custom_call.1} parent=1 // loop_header_branch
      %25 = sbr.rel (%p23) target = $region8
    $region5: #{tpu_custom_call.1} parent=1 // loop_body
      %s27 = ssub.s32 %s22, 1
      %s28 = ssub.s32 %s22, 2
      %s29 = sadd.s32 %s22, 1
      %s30 = ssub.s32 %s22, %s29
      %p31 = scmp.eq.s32.totalorder %s30, 0
      %s33 = sadd.s32 %s32, 1
      %s34 = scalar_select %p31, %s32, %s33
      %p37 = pneg %p31
      %p38 = scmp.eq.s32.totalorder %s22, 1
      %p39 = por %p37, %p38
      %p40 = scmp.ne.s32.totalorder %s32, %s35
      %p41 = scmp.eq.s32.totalorder %s22, 0
      %p42 = por %p40, %p41
      %p43 = scmp.ne.s32.totalorder %s32, %s35
      %p44 = scmp.eq.s32.totalorder %s27, 1
      %p45 = por %p43, %p44
      %p46 = scmp.ne.s32.totalorder %s35, %s36
      %p47 = scmp.eq.s32.totalorder %s27, 0
      %p48 = por %p46, %p47
      %p49 = scmp.ne.s32.totalorder %s35, %s36
      %p50 = scmp.eq.s32.totalorder %s28, 1
      %p51 = por %p49, %p50
      %p53 = scmp.ne.s32.totalorder %s36, %s52
      %p54 = scmp.eq.s32.totalorder %s28, 0
      %p55 = por %p53, %p54
      %s57 = sadd.s32 %s56, 1
      %p60 = scmp.eq.s32.totalorder %s22, 1
      %p61 = scmp.ne.s32.totalorder %s56, %s58
      %p62 = scmp.eq.s32.totalorder %s22, 0
      %p63 = por %p61, %p62
      %p64 = scmp.ne.s32.totalorder %s56, %s58
      %p65 = scmp.eq.s32.totalorder %s27, 1
      %p66 = por %p64, %p65
      %p67 = scmp.ne.s32.totalorder %s58, %s59
      %p68 = scmp.eq.s32.totalorder %s27, 0
      %p69 = por %p67, %p68
      %p70 = scmp.ne.s32.totalorder %s58, %s59
      %p71 = scmp.eq.s32.totalorder %s28, 1
      %p72 = por %p70, %p71
      %p74 = scmp.ne.s32.totalorder %s59, %s73
      %p75 = scmp.eq.s32.totalorder %s28, 0
      %p76 = por %p74, %p75
      %s78 = sadd.s32 %s77, 1
      %p81 = scmp.eq.s32.totalorder %s22, 1
      %p82 = scmp.ne.s32.totalorder %s77, %s79
      %p83 = scmp.eq.s32.totalorder %s22, 0
      %p84 = por %p82, %p83
      %p85 = scmp.ne.s32.totalorder %s77, %s79
      %p86 = scmp.eq.s32.totalorder %s27, 1
      %p87 = por %p85, %p86
      %p88 = scmp.ne.s32.totalorder %s79, %s80
      %p89 = scmp.eq.s32.totalorder %s27, 0
      %p90 = por %p88, %p89
      %p91 = scmp.ne.s32.totalorder %s79, %s80
      %p92 = scmp.eq.s32.totalorder %s28, 1
      %p93 = por %p91, %p92
      %p95 = scmp.ne.s32.totalorder %s80, %s94
      %p96 = scmp.eq.s32.totalorder %s28, 0
      %p97 = por %p95, %p96
      %s99 = sadd.s32 %s98, 1
      %p102 = scmp.eq.s32.totalorder %s22, 1
      %p103 = scmp.ne.s32.totalorder %s98, %s100
      %p104 = scmp.eq.s32.totalorder %s22, 0
      %p105 = por %p103, %p104
      %p106 = scmp.ne.s32.totalorder %s98, %s100
      %p107 = scmp.eq.s32.totalorder %s27, 1
      %p108 = por %p106, %p107
      %p109 = scmp.ne.s32.totalorder %s100, %s101
      %p110 = scmp.eq.s32.totalorder %s27, 0
      %p111 = por %p109, %p110
      %p112 = scmp.ne.s32.totalorder %s100, %s101
      %p113 = scmp.eq.s32.totalorder %s28, 1
      %p114 = por %p112, %p113
      %p116 = scmp.ne.s32.totalorder %s101, %s115
      %p117 = scmp.eq.s32.totalorder %s28, 0
      %p118 = por %p116, %p117
      %s120 = sadd.s32 %s119, 1
      %p123 = scmp.eq.s32.totalorder %s22, 1
      %p124 = scmp.ne.s32.totalorder %s119, %s121
      %p125 = scmp.eq.s32.totalorder %s22, 0
      %p126 = por %p124, %p125
      %p127 = scmp.ne.s32.totalorder %s119, %s121
      %p128 = scmp.eq.s32.totalorder %s27, 1
      %p129 = por %p127, %p128
      %p130 = scmp.ne.s32.totalorder %s121, %s122
      %p131 = scmp.eq.s32.totalorder %s27, 0
      %p132 = por %p130, %p131
      %p133 = scmp.ne.s32.totalorder %s121, %s122
      %p134 = scmp.eq.s32.totalorder %s28, 1
      %p135 = por %p133, %p134
      %p137 = scmp.ne.s32.totalorder %s122, %s136
      %p138 = scmp.eq.s32.totalorder %s28, 0
      %p139 = por %p137, %p138
      %s141 = sadd.s32 %s140, 1
      %p144 = scmp.eq.s32.totalorder %s22, 1
      %p145 = scmp.ne.s32.totalorder %s140, %s142
      %p146 = scmp.eq.s32.totalorder %s22, 0
      %p147 = por %p145, %p146
      %p148 = scmp.ne.s32.totalorder %s140, %s142
      %p149 = scmp.eq.s32.totalorder %s27, 1
      %p150 = por %p148, %p149
      %p151 = scmp.ne.s32.totalorder %s142, %s143
      %p152 = scmp.eq.s32.totalorder %s27, 0
      %p153 = por %p151, %p152
      %p154 = scmp.ne.s32.totalorder %s142, %s143
      %p155 = scmp.eq.s32.totalorder %s28, 1
      %p156 = por %p154, %p155
      %p158 = scmp.ne.s32.totalorder %s143, %s157
      %p159 = scmp.eq.s32.totalorder %s28, 0
      %p160 = por %p158, %p159
      %s162 = sadd.s32 %s161, 1
      %p165 = scmp.eq.s32.totalorder %s22, 1
      %p166 = scmp.ne.s32.totalorder %s161, %s163
      %p167 = scmp.eq.s32.totalorder %s22, 0
      %p168 = por %p166, %p167
      %p169 = scmp.ne.s32.totalorder %s161, %s163
      %p170 = scmp.eq.s32.totalorder %s27, 1
      %p171 = por %p169, %p170
      %p172 = scmp.ne.s32.totalorder %s163, %s164
      %p173 = scmp.eq.s32.totalorder %s27, 0
      %p174 = por %p172, %p173
      %p175 = scmp.ne.s32.totalorder %s163, %s164
      %p176 = scmp.eq.s32.totalorder %s28, 1
      %p177 = por %p175, %p176
      %p179 = scmp.ne.s32.totalorder %s164, %s178
      %p180 = scmp.eq.s32.totalorder %s28, 0
      %p181 = por %p179, %p180
      %s183 = sadd.s32 %s182, 1
      %p186 = scmp.eq.s32.totalorder %s22, 1
      %p187 = scmp.ne.s32.totalorder %s182, %s184
      %p188 = scmp.eq.s32.totalorder %s22, 0
      %p189 = por %p187, %p188
      %p190 = scmp.ne.s32.totalorder %s182, %s184
      %p191 = scmp.eq.s32.totalorder %s27, 1
      %p192 = por %p190, %p191
      %p193 = scmp.ne.s32.totalorder %s184, %s185
      %p194 = scmp.eq.s32.totalorder %s27, 0
      %p195 = por %p193, %p194
      %p196 = scmp.ne.s32.totalorder %s184, %s185
      %p197 = scmp.eq.s32.totalorder %s28, 1
      %p198 = por %p196, %p197
      %p200 = scmp.ne.s32.totalorder %s185, %s199
      %p201 = scmp.eq.s32.totalorder %s28, 0
      %p202 = por %p200, %p201
      %s203 = ssub.s32 %s22, %s29
      %p204 = scmp.eq.s32.totalorder %s203, 0
      %s206 = sadd.s32 %s205, 1
      %s207 = scalar_select %p204, %s205, %s206
      %p210 = pneg %p204
      %p211 = scmp.eq.s32.totalorder %s22, 1
      %p212 = por %p210, %p211
      %p213 = scmp.ne.s32.totalorder %s205, %s208
      %p214 = scmp.eq.s32.totalorder %s22, 0
      %p215 = por %p213, %p214
      %p216 = scmp.ne.s32.totalorder %s205, %s208
      %p217 = scmp.eq.s32.totalorder %s27, 1
      %p218 = por %p216, %p217
      %p219 = scmp.ne.s32.totalorder %s208, %s209
      %p220 = scmp.eq.s32.totalorder %s27, 0
      %p221 = por %p219, %p220
      %p222 = scmp.ne.s32.totalorder %s208, %s209
      %p223 = scmp.eq.s32.totalorder %s28, 1
      %p224 = por %p222, %p223
      %p226 = scmp.ne.s32.totalorder %s209, %s225
      %p227 = scmp.eq.s32.totalorder %s28, 0
      %p228 = por %p226, %p227
      %p229 = scmp.le.s32.totalorder 1, %s22
      %p230 = scmp.lt.s32.totalorder %s22, 3
      %p231 = pnand %p229, %p230
      %p232 = pneg %p231
      // Predicated region
      $region9: #{tpu_custom_call.1} parent=5 // pred_check
        _
      $region10: #{tpu_custom_call.1} parent=5 // pred_check_branch
        %234 = sbr.rel (%p231) target = $region12
      $region11: #{tpu_custom_call.1} parent=5 // pred_region
        %s235 = ssub.s32 %s22, 1
        // Predicated region
        $region13: #{tpu_custom_call.1} parent=11 // pred_check
          %p236 = pneg %p69
        $region14: #{tpu_custom_call.1} parent=11 // pred_check_branch
          %238 = sbr.rel (%p236) target = $region16
        $region15: #{tpu_custom_call.1} parent=11 // pred_region
          %s240 = ssub.s32 3072, 3072
          %241 = vsyncadd [#allocation9], %s240
          %s242 = sshll.u32 [#allocation8], 4
          %s243 = int_to_ptr.vmem [resolvable:$true] %s242
          %248 = dma.hbm_to_vmem [thread:$0]  %s1, 3072, %s243, [#allocation9], 192, 192, 12
        $region16: #{tpu_custom_call.1} parent=11 // pred_fallthru
          _
        // Predicated region
        $region17: #{tpu_custom_call.1} parent=11 // pred_check
          %p249 = pneg %p90
        $region18: #{tpu_custom_call.1} parent=11 // pred_check_branch
          %251 = sbr.rel (%p249) target = $region20
        $region19: #{tpu_custom_call.1} parent=11 // pred_region
          %s253 = ssub.s32 3072, 3072
          %254 = vsyncadd [#allocation9], %s253
          %s255 = sshll.u32 [#allocation10], 4
          %s256 = int_to_ptr.vmem [resolvable:$true] %s255
          %261 = dma.hbm_to_vmem [thread:$0]  %s2, 3072, %s256, [#allocation9], 192, 192, 12
        $region20: #{tpu_custom_call.1} parent=11 // pred_fallthru
          _
        // Predicated region
        $region21: #{tpu_custom_call.1} parent=11 // pred_check
          %p262 = pneg %p111
        $region22: #{tpu_custom_call.1} parent=11 // pred_check_branch
          %264 = sbr.rel (%p262) target = $region24
        $region23: #{tpu_custom_call.1} parent=11 // pred_region
          %s266 = ssub.s32 6144, 6144
          %267 = vsyncadd [#allocation12], %s266
          %s268 = sshll.u32 [#allocation11], 4
          %s269 = int_to_ptr.vmem [resolvable:$true] %s268
          %274 = dma.hbm_to_vmem [thread:$0]  %s3, 6144, %s269, [#allocation12], 192, 192, 12
        $region24: #{tpu_custom_call.1} parent=11 // pred_fallthru
          _
        // Predicated region
        $region25: #{tpu_custom_call.1} parent=11 // pred_check
          %p275 = pneg %p132
        $region26: #{tpu_custom_call.1} parent=11 // pred_check_branch
          %277 = sbr.rel (%p275) target = $region28
        $region27: #{tpu_custom_call.1} parent=11 // pred_region
          _
        $region28: #{tpu_custom_call.1} parent=11 // pred_fallthru
          _
        // Predicated region
        $region29: #{tpu_custom_call.1} parent=11 // pred_check
          %p278 = pneg %p153
        $region30: #{tpu_custom_call.1} parent=11 // pred_check_branch
          %280 = sbr.rel (%p278) target = $region32
        $region31: #{tpu_custom_call.1} parent=11 // pred_region
          _
        $region32: #{tpu_custom_call.1} parent=11 // pred_fallthru
          _
        // Predicated region
        $region33: #{tpu_custom_call.1} parent=11 // pred_check
          %p281 = pneg %p174
        $region34: #{tpu_custom_call.1} parent=11 // pred_check_branch
          %283 = sbr.rel (%p281) target = $region36
        $region35: #{tpu_custom_call.1} parent=11 // pred_region
          %s285 = ssub.s32 1024, 1024
          %286 = vsyncadd [#allocation12], %s285
          %s287 = sshll.u32 [#allocation13], 4
          %s288 = int_to_ptr.vmem [resolvable:$true] %s287
          %293 = dma.hbm_to_vmem [thread:$0]  %s6, 1024, %s288, [#allocation12], 64, 64, 4
        $region36: #{tpu_custom_call.1} parent=11 // pred_fallthru
          _
        // Predicated region
        $region37: #{tpu_custom_call.1} parent=11 // pred_check
          %p294 = pneg %p195
        $region38: #{tpu_custom_call.1} parent=11 // pred_check_branch
          %296 = sbr.rel (%p294) target = $region40
        $region39: #{tpu_custom_call.1} parent=11 // pred_region
          _
        $region40: #{tpu_custom_call.1} parent=11 // pred_fallthru
          _
      $region12: #{tpu_custom_call.1} parent=5 // pred_fallthru
        _
      %p297 = scmp.lt.s32.totalorder %s22, 2
      // Predicated region
      $region41: #{tpu_custom_call.1} parent=5 // pred_check
        %p298 = pneg %p297
      $region42: #{tpu_custom_call.1} parent=5 // pred_check_branch
        %300 = sbr.rel (%p298) target = $region44
      $region43: #{tpu_custom_call.1} parent=5 // pred_region
        // Predicated region
        $region45: #{tpu_custom_call.1} parent=43 // pred_check
          %p301 = pneg %p42
        $region46: #{tpu_custom_call.1} parent=43 // pred_check_branch
          %303 = sbr.rel (%p301) target = $region48
        $region47: #{tpu_custom_call.1} parent=43 // pred_region
          %s304 = sand.u32 %s32, 1
          %s305 = scalar_lea.sflag [#allocation6], %s304
          %s306 = sand.u32 %s32, 1
          %s307 = smul.addr %s306, 16
          %s308 = scalar_lea.vmem [#allocation5], %s307
          %s309 = smul.u32 4, %s22
          %s311 = ssub.s32 256, 256
          %312 = vsyncadd %s305, %s311
          %s313 = smul.addr %s309, 64
          %s314 = scalar_lea.hbm %s0, %s313
          %s315 = sshll.u32 %s308, 4
          %s316 = int_to_ptr.vmem [resolvable:$true] %s315
          %321 = dma.hbm_to_vmem [thread:$0]  %s314, 256, %s316, %s305, 64, 64, 4
        $region48: #{tpu_custom_call.1} parent=43 // pred_fallthru
          _
      $region44: #{tpu_custom_call.1} parent=5 // pred_fallthru
        _
      %p322 = scmp.le.s32.totalorder 1, %s22
      %p323 = scmp.lt.s32.totalorder %s22, 3
      %p324 = pnand %p322, %p323
      %p325 = pneg %p324
      // Predicated region
      $region49: #{tpu_custom_call.1} parent=5 // pred_check
        _
      $region50: #{tpu_custom_call.1} parent=5 // pred_check_branch
        %327 = sbr.rel (%p324) target = $region52
      $region51: #{tpu_custom_call.1} parent=5 // pred_region
        %s328 = ssub.s32 %s22, 1
        %s329 = sand.u32 %s35, 1
        %s330 = scalar_lea.sflag [#allocation6], %s329
        %s331 = sand.u32 %s35, 1
        %s332 = smul.addr %s331, 16
        %s333 = scalar_lea.vmem [#allocation5], %s332
        // Predicated region
        $region53: #{tpu_custom_call.1} parent=51 // pred_check
          %p334 = pneg %p48
        $region54: #{tpu_custom_call.1} parent=51 // pred_check_branch
          %336 = sbr.rel (%p334) target = $region56
        $region55: #{tpu_custom_call.1} parent=51 // pred_region
          %337 = dma.done %s330, 256
        $region56: #{tpu_custom_call.1} parent=51 // pred_fallthru
          _
        // Predicated region
        $region57: #{tpu_custom_call.1} parent=51 // pred_check
          %p338 = pneg %p69
        $region58: #{tpu_custom_call.1} parent=51 // pred_check_branch
          %340 = sbr.rel (%p338) target = $region60
        $region59: #{tpu_custom_call.1} parent=51 // pred_region
          %341 = dma.done [#allocation9], 3072
        $region60: #{tpu_custom_call.1} parent=51 // pred_fallthru
          _
        // Predicated region
        $region61: #{tpu_custom_call.1} parent=51 // pred_check
          %p342 = pneg %p90
        $region62: #{tpu_custom_call.1} parent=51 // pred_check_branch
          %344 = sbr.rel (%p342) target = $region64
        $region63: #{tpu_custom_call.1} parent=51 // pred_region
          %345 = dma.done [#allocation9], 3072
        $region64: #{tpu_custom_call.1} parent=51 // pred_fallthru
          _
        // Predicated region
        $region65: #{tpu_custom_call.1} parent=51 // pred_check
          %p346 = pneg %p111
        $region66: #{tpu_custom_call.1} parent=51 // pred_check_branch
          %348 = sbr.rel (%p346) target = $region68
        $region67: #{tpu_custom_call.1} parent=51 // pred_region
          %349 = dma.done [#allocation12], 6144
        $region68: #{tpu_custom_call.1} parent=51 // pred_fallthru
          _
        // Predicated region
        $region69: #{tpu_custom_call.1} parent=51 // pred_check
          %p350 = pneg %p174
        $region70: #{tpu_custom_call.1} parent=51 // pred_check_branch
          %352 = sbr.rel (%p350) target = $region72
        $region71: #{tpu_custom_call.1} parent=51 // pred_region
          %353 = dma.done [#allocation12], 1024
        $region72: #{tpu_custom_call.1} parent=51 // pred_fallthru
          _
        %s354 = sand.u32 %s35, 1
        %s355 = scalar_lea.sflag [#allocation6], %s354
        %s356 = sand.u32 %s35, 1
        %s357 = smul.addr %s356, 16
        %s358 = scalar_lea.vmem [#allocation5], %s357
        %p359 = pneg %p48
        %p360 = pneg %p45
        %p361 = pneg %p69
        %p362 = pneg %p66
        %p363 = pneg %p90
        %p364 = pneg %p87
        %p365 = pneg %p111
        %p366 = pneg %p108
        %p367 = pneg %p132
        %p368 = pneg %p129
        %p369 = pneg %p153
        %p370 = pneg %p150
        %p371 = pneg %p174
        %p372 = pneg %p171
        %p373 = pneg %p195
        %p374 = pneg %p192
        %p375 = pneg %p221
        %p376 = pneg %p218
        %s377 = sand.u32 %s208, 1
        %s378 = scalar_lea.sflag [#allocation7], %s377
        %s379 = sand.u32 %s208, 1
        %s380 = smul.addr %s379, 32
        %s381 = scalar_lea.vmem [#allocation14], %s380
        %s382 = smul.u32 4, %s27
        %s383 = smul.u32 4, %s27
        %p385 = scmp.eq.s32.totalorder %s27, 0
        // Predicated region
        $region73: #{tpu_custom_call.1} parent=51 // pred_check
          %p386 = pneg %p385
        $region74: #{tpu_custom_call.1} parent=51 // pred_check_branch
          %388 = sbr.rel (%p386) target = $region76
        $region75: #{tpu_custom_call.1} parent=51 // pred_region
          %389 = vst [vmem:[#allocation4] sm:$0xff] 0.0
          %390 = vst [vmem:[#allocation4 + $0x8] sm:$0xff] 0.0
        $region76: #{tpu_custom_call.1} parent=51 // pred_fallthru
          _
        %v391 = vld [vmem:[#allocation11] sm:$0xff]
        %v392 = vld [vmem:[#allocation11 + $0x8] sm:$0xf]
        %v393 = vld [vmem:[#allocation11 + $0xc] sm:$0xff]
        %v394 = vld [vmem:[#allocation11 + $0x14] sm:$0xf]
        %v395 = vld [vmem:[#allocation11 + $0x18] sm:$0xff]
        %v396 = vld [vmem:[#allocation11 + $0x20] sm:$0xf]
        %v397 = vld [vmem:[#allocation11 + $0x24] sm:$0xff]
        %v398 = vld [vmem:[#allocation11 + $0x2c] sm:$0xf]
        %v399 = vld [vmem:[#allocation11 + $0x30] sm:$0xff]
        %v400 = vld [vmem:[#allocation11 + $0x38] sm:$0xf]
        %v401 = vld [vmem:[#allocation11 + $0x3c] sm:$0xff]
        %v402 = vld [vmem:[#allocation11 + $0x44] sm:$0xf]
        %v403 = vld [vmem:[#allocation11 + $0x48] sm:$0xff]
        %v404 = vld [vmem:[#allocation11 + $0x50] sm:$0xf]
        %v405 = vld [vmem:[#allocation11 + $0x54] sm:$0xff]
        %v406 = vld [vmem:[#allocation11 + $0x5c] sm:$0xf]
        %v407 = vld [vmem:[#allocation11 + $0x60] sm:$0xff]
        %v408 = vld [vmem:[#allocation11 + $0x68] sm:$0xf]
        %v409 = vld [vmem:[#allocation11 + $0x6c] sm:$0xff]
        %v410 = vld [vmem:[#allocation11 + $0x74] sm:$0xf]
        %v411 = vld [vmem:[#allocation11 + $0x78] sm:$0xff]
        %v412 = vld [vmem:[#allocation11 + $0x80] sm:$0xf]
        %v413 = vld [vmem:[#allocation11 + $0x84] sm:$0xff]
        %v414 = vld [vmem:[#allocation11 + $0x8c] sm:$0xf]
        %v415 = vld [vmem:[#allocation11 + $0x90] sm:$0xff]
        %v416 = vld [vmem:[#allocation11 + $0x98] sm:$0xf]
        %v417 = vld [vmem:[#allocation11 + $0x9c] sm:$0xff]
        %v418 = vld [vmem:[#allocation11 + $0xa4] sm:$0xf]
        %v419 = vld [vmem:[#allocation11 + $0xa8] sm:$0xff]
        %v420 = vld [vmem:[#allocation11 + $0xb0] sm:$0xf]
        %v421 = vld [vmem:[#allocation11 + $0xb4] sm:$0xff]
        %v422 = vld [vmem:[#allocation11 + $0xbc] sm:$0xf]
        %v423 = vld [vmem:[%s5] sm:$0x1]
        %v424 = vld [vmem:[%s333] sm:$0xf]
        %v425 = vld [vmem:[%s333 + $0x4] sm:$0xf]
        %v426 = vld [vmem:[%s333 + $0x8] sm:$0xf]
        %v427 = vld [vmem:[%s333 + $0xc] sm:$0xf]
        %v428 = vld [vmem:[#allocation8] sm:$0xff]
        %v429 = vld [vmem:[#allocation8 + $0x8] sm:$0xf]
        %v430 = vld [vmem:[#allocation8 + $0xc] sm:$0xff]
        %v431 = vld [vmem:[#allocation8 + $0x14] sm:$0xf]
        %v432 = vld [vmem:[#allocation8 + $0x18] sm:$0xff]
        %v433 = vld [vmem:[#allocation8 + $0x20] sm:$0xf]
        %v434 = vld [vmem:[#allocation8 + $0x24] sm:$0xff]
        %v435 = vld [vmem:[#allocation8 + $0x2c] sm:$0xf]
        %v436 = vld [vmem:[#allocation8 + $0x30] sm:$0xff]
        %v437 = vld [vmem:[#allocation8 + $0x38] sm:$0xf]
        %v438 = vld [vmem:[#allocation8 + $0x3c] sm:$0xff]
        %v439 = vld [vmem:[#allocation8 + $0x44] sm:$0xf]
        %v440 = vld [vmem:[#allocation8 + $0x48] sm:$0xff]
        %v441 = vld [vmem:[#allocation8 + $0x50] sm:$0xf]
        %v442 = vld [vmem:[#allocation8 + $0x54] sm:$0xff]
        %v443 = vld [vmem:[#allocation8 + $0x5c] sm:$0xf]
        %v444 = vld [vmem:[#allocation8 + $0x60] sm:$0xff]
        %v445 = vld [vmem:[#allocation8 + $0x68] sm:$0xf]
        %v446 = vld [vmem:[#allocation8 + $0x6c] sm:$0xff]
        %v447 = vld [vmem:[#allocation8 + $0x74] sm:$0xf]
        %v448 = vld [vmem:[#allocation8 + $0x78] sm:$0xff]
        %v449 = vld [vmem:[#allocation8 + $0x80] sm:$0xf]
        %v450 = vld [vmem:[#allocation8 + $0x84] sm:$0xff]
        %v451 = vld [vmem:[#allocation8 + $0x8c] sm:$0xf]
        %v452 = vld [vmem:[#allocation8 + $0x90] sm:$0xff]
        %v453 = vld [vmem:[#allocation8 + $0x98] sm:$0xf]
        %v454 = vld [vmem:[#allocation8 + $0x9c] sm:$0xff]
        %v455 = vld [vmem:[#allocation8 + $0xa4] sm:$0xf]
        %v456 = vld [vmem:[#allocation8 + $0xa8] sm:$0xff]
        %v457 = vld [vmem:[#allocation8 + $0xb0] sm:$0xf]
        %v458 = vld [vmem:[#allocation8 + $0xb4] sm:$0xff]
        %v459 = vld [vmem:[#allocation8 + $0xbc] sm:$0xf]
        %v460 = vld [vmem:[%s4] sm:$0x7]
        %v462 = vlaneseq
        %v463 = vshrl.u32 %v462, 7
        %v464 = vsub.s32 0, %v463
        %v465 = vrot.slane %v460, %v464
        %v466 = vlaneseq
        %v467 = vshrl.u32 %v466, 7
        %v468 = vsub.s32 1, %v467
        %v469 = vrot.slane %v460, %v468
        %v470 = vlaneseq
        %v471 = vshrl.u32 %v470, 7
        %v472 = vsub.s32 2, %v471
        %v473 = vrot.slane %v460, %v472
        %v481 = vunpack.c.l.b16 %v424
        %v482 = vunpack.c.l.b16 %v425
        %v483 = vunpack.c.l.b16 %v426
        %v484 = vunpack.c.l.b16 %v427
        %v485 = vpack.c.b16 %v482, %v481
        %v486 = vpack.c.b16 %v484, %v483
        %v521 = vunpack.c.l.b16 %v428
        %v522 = vunpack.c.h.b16 %v428
        %v523 = vunpack.c.l.b16 %v429
        %v524 = vunpack.c.l.b16 %v430
        %v525 = vunpack.c.h.b16 %v430
        %v526 = vunpack.c.l.b16 %v431
        %v527 = vunpack.c.l.b16 %v432
        %v528 = vunpack.c.h.b16 %v432
        %v529 = vunpack.c.l.b16 %v433
        %v530 = vunpack.c.l.b16 %v434
        %v531 = vunpack.c.h.b16 %v434
        %v532 = vunpack.c.l.b16 %v435
        %v533 = vunpack.c.l.b16 %v436
        %v534 = vunpack.c.h.b16 %v436
        %v535 = vunpack.c.l.b16 %v437
        %v536 = vunpack.c.l.b16 %v438
        %v537 = vunpack.c.h.b16 %v438
        %v538 = vunpack.c.l.b16 %v439
        %v539 = vunpack.c.l.b16 %v440
        %v540 = vunpack.c.h.b16 %v440
        %v541 = vunpack.c.l.b16 %v441
        %v542 = vunpack.c.l.b16 %v442
        %v543 = vunpack.c.h.b16 %v442
        %v544 = vunpack.c.l.b16 %v443
        %v545 = vunpack.c.l.b16 %v444
        %v546 = vunpack.c.h.b16 %v444
        %v547 = vunpack.c.l.b16 %v445
        %v548 = vunpack.c.l.b16 %v446
        %v549 = vunpack.c.h.b16 %v446
        %v550 = vunpack.c.l.b16 %v447
        %v551 = vunpack.c.l.b16 %v448
        %v552 = vunpack.c.h.b16 %v448
        %v553 = vunpack.c.l.b16 %v449
        %v554 = vunpack.c.l.b16 %v450
        %v555 = vunpack.c.h.b16 %v450
        %v556 = vunpack.c.l.b16 %v451
        %v557 = vunpack.c.l.b16 %v452
        %v558 = vunpack.c.h.b16 %v452
        %v559 = vunpack.c.l.b16 %v453
        %v560 = vunpack.c.l.b16 %v454
        %v561 = vunpack.c.h.b16 %v454
        %v562 = vunpack.c.l.b16 %v455
        %v563 = vunpack.c.l.b16 %v456
        %v564 = vunpack.c.h.b16 %v456
        %v565 = vunpack.c.l.b16 %v457
        %v566 = vunpack.c.l.b16 %v458
        %v567 = vunpack.c.h.b16 %v458
        %v568 = vunpack.c.l.b16 %v459
        %v569 = vpack.c.b16 %v524, %v521
        %v570 = vpack.c.b16 %v525, %v522
        %v571 = vpack.c.b16 %v526, %v523
        %v572 = vpack.c.b16 %v530, %v527
        %v573 = vpack.c.b16 %v531, %v528
        %v574 = vpack.c.b16 %v532, %v529
        %v575 = vpack.c.b16 %v536, %v533
        %v576 = vpack.c.b16 %v537, %v534
        %v577 = vpack.c.b16 %v538, %v535
        %v578 = vpack.c.b16 %v542, %v539
        %v579 = vpack.c.b16 %v543, %v540
        %v580 = vpack.c.b16 %v544, %v541
        %v581 = vpack.c.b16 %v548, %v545
        %v582 = vpack.c.b16 %v549, %v546
        %v583 = vpack.c.b16 %v550, %v547
        %v584 = vpack.c.b16 %v554, %v551
        %v585 = vpack.c.b16 %v555, %v552
        %v586 = vpack.c.b16 %v556, %v553
        %v587 = vpack.c.b16 %v560, %v557
        %v588 = vpack.c.b16 %v561, %v558
        %v589 = vpack.c.b16 %v562, %v559
        %v590 = vpack.c.b16 %v566, %v563
        %v591 = vpack.c.b16 %v567, %v564
        %v592 = vpack.c.b16 %v568, %v565
        %617 = vmatprep.subr.bf16.mxu0 %v570
        %618 = vmatpush1.bf16.msra.mxu0 %v569
        %619 = vmatprep.subr.bf16.mxu0 %v573
        %620 = vmatpush1.bf16.msra.mxu0 %v572
        %621 = vmatprep.subr.bf16.mxu0 %v576
        %622 = vmatpush1.bf16.msra.mxu0 %v575
        %623 = vmatprep.subr.bf16.mxu0 %v579
        %624 = vmatpush1.bf16.msra.mxu0 %v578
        %625 = vmatprep.subr.bf16.mxu0 %v582
        %626 = vmatpush1.bf16.msra.mxu0 %v581
        %627 = vmatprep.subr.bf16.mxu0 %v585
        %628 = vmatpush1.bf16.msra.mxu0 %v584
        %629 = vmatprep.subr.bf16.mxu0 %v588
        %630 = vmatpush1.bf16.msra.mxu0 %v587
        %631 = vmatprep.subr.bf16.mxu0 %v591
        %632 = vmatpush1.bf16.msra.mxu0 %v590
        %633 = vmatprep.subr.bf16.mxu0 0
        %634 = vmatpush1.bf16.msra.mxu0 0
        %635 = vmatprep.subr.bf16.mxu0 0
        %636 = vmatpush1.bf16.msra.mxu0 0
        %637 = vmatprep.subr.bf16.mxu0 0
        %638 = vmatpush1.bf16.msra.mxu0 0
        %639 = vmatprep.subr.bf16.mxu0 0
        %640 = vmatpush1.bf16.msra.mxu0 0
        %641 = vmatprep.subr.bf16.mxu0 0
        %642 = vmatpush1.bf16.msra.mxu0 0
        %643 = vmatprep.subr.bf16.mxu0 0
        %644 = vmatpush1.bf16.msra.mxu0 0
        %645 = vmatprep.subr.bf16.mxu0 0
        %646 = vmatpush1.bf16.msra.mxu0 0
        %647 = vmatprep.subr.bf16.mxu0 0
        %648 = vmatpush1.bf16.msra.mxu0 0
        %649 = vmatprep.mubr.bf16.mxu0 0
        %650 = vmatmul.mubr.bf16.gmra.mrb[0].mxu0 %v485
        %v651 = vpop.f32.mrb[0].mxu0
        %v652 = vadd.f32 %v465, %v651
        %v653 = vpop.f32.mrb[0].mxu0
        %v654 = vadd.f32 %v469, %v653
        %v655 = vpop.f32.mrb[0].mxu0
        %v656 = vadd.f32 %v465, %v655
        %v657 = vpop.f32.mrb[0].mxu0
        %v658 = vadd.f32 %v469, %v657
        %659 = vmatprep.mubr.bf16.mxu0 0
        %660 = vmatmul.mubr.bf16.gmra.mrb[0].mxu0 %v486
        %v661 = vpop.f32.mrb[0].mxu0
        %v662 = vadd.f32 %v465, %v661
        %v663 = vpop.f32.mrb[0].mxu0
        %v664 = vadd.f32 %v469, %v663
        %v665 = vpop.f32.mrb[0].mxu0
        %v666 = vadd.f32 %v465, %v665
        %v667 = vpop.f32.mrb[0].mxu0
        %v668 = vadd.f32 %v469, %v667
        %669 = vdwg.mxu0
        %670 = vmatprep.subr.bf16.mxu0 0
        %671 = vmatpush1.bf16.msra.mxu0 %v571
        %672 = vmatprep.subr.bf16.mxu0 0
        %673 = vmatpush1.bf16.msra.mxu0 %v574
        %674 = vmatprep.subr.bf16.mxu0 0
        %675 = vmatpush1.bf16.msra.mxu0 %v577
        %676 = vmatprep.subr.bf16.mxu0 0
        %677 = vmatpush1.bf16.msra.mxu0 %v580
        %678 = vmatprep.subr.bf16.mxu0 0
        %679 = vmatpush1.bf16.msra.mxu0 %v583
        %680 = vmatprep.subr.bf16.mxu0 0
        %681 = vmatpush1.bf16.msra.mxu0 %v586
        %682 = vmatprep.subr.bf16.mxu0 0
        %683 = vmatpush1.bf16.msra.mxu0 %v589
        %684 = vmatprep.subr.bf16.mxu0 0
        %685 = vmatpush1.bf16.msra.mxu0 %v592
        %686 = vmatprep.subr.bf16.mxu0 0
        %687 = vmatpush1.bf16.msra.mxu0 0
        %688 = vmatprep.subr.bf16.mxu0 0
        %689 = vmatpush1.bf16.msra.mxu0 0
        %690 = vmatprep.subr.bf16.mxu0 0
        %691 = vmatpush1.bf16.msra.mxu0 0
        %692 = vmatprep.subr.bf16.mxu0 0
        %693 = vmatpush1.bf16.msra.mxu0 0
        %694 = vmatprep.subr.bf16.mxu0 0
        %695 = vmatpush1.bf16.msra.mxu0 0
        %696 = vmatprep.subr.bf16.mxu0 0
        %697 = vmatpush1.bf16.msra.mxu0 0
        %698 = vmatprep.subr.bf16.mxu0 0
        %699 = vmatpush1.bf16.msra.mxu0 0
        %700 = vmatprep.subr.bf16.mxu0 0
        %701 = vmatpush1.bf16.msra.mxu0 0
        %702 = vmatprep.mubr.bf16.mxu0 0
        %703 = vmatmul.mubr.bf16.gmra.mrb[0].mxu0 %v485
        %v704 = vpop.f32.mrb[0].mxu0
        %v705 = vadd.f32 %v473, %v704
        %v706 = vpop.f32.mrb[0].mxu0
        %v707 = vpop.f32.mrb[0].mxu0
        %v708 = vadd.f32 %v473, %v707
        %v709 = vpop.f32.mrb[0].mxu0
        %710 = vmatprep.mubr.bf16.mxu0 0
        %711 = vmatmul.mubr.bf16.gmra.mrb[0].mxu0 %v486
        %v712 = vpop.f32.mrb[0].mxu0
        %v713 = vadd.f32 %v473, %v712
        %v714 = vpop.f32.mrb[0].mxu0
        %v715 = vpop.f32.mrb[0].mxu0
        %v716 = vadd.f32 %v473, %v715
        %v717 = vpop.f32.mrb[0].mxu0
        %718 = vdwg.mxu0
        %719 = vst [vmem:[#allocation3] sm:$0xff] %v652
        %720 = vst [vmem:[#allocation3 + $0x8] sm:$0xff] %v654
        %721 = vst [vmem:[#allocation3 + $0x10] sm:$0xff] %v705
        %722 = vst [vmem:[#allocation3 + $0x18] sm:$0xff] %v656
        %723 = vst [vmem:[#allocation3 + $0x20] sm:$0xff] %v658
        %724 = vst [vmem:[#allocation3 + $0x28] sm:$0xff] %v708
        %725 = vst [vmem:[#allocation3 + $0x30] sm:$0xff] %v662
        %726 = vst [vmem:[#allocation3 + $0x38] sm:$0xff] %v664
        %727 = vst [vmem:[#allocation3 + $0x40] sm:$0xff] %v713
        %728 = vst [vmem:[#allocation3 + $0x48] sm:$0xff] %v666
        %729 = vst [vmem:[#allocation3 + $0x50] sm:$0xff] %v668
        %730 = vst [vmem:[#allocation3 + $0x58] sm:$0xff] %v716
        %v731 = vld [vmem:[#allocation4] sm:$0xff]
        %v732 = vld [vmem:[#allocation3] sm:$0xff]
        %v733 = vld [vmem:[#allocation3 + $0x8] sm:$0xff]
        %v734 = vld [vmem:[#allocation3 + $0x10] sm:$0xff]
        %v735 = vpack.c.bf16 %v731, %v731
        %v768 = vunpack.c.l.b16 %v391
        %v769 = vunpack.c.h.b16 %v391
        %v770 = vunpack.c.l.b16 %v392
        %v771 = vunpack.c.l.b16 %v393
        %v772 = vunpack.c.h.b16 %v393
        %v773 = vunpack.c.l.b16 %v394
        %v774 = vunpack.c.l.b16 %v395
        %v775 = vunpack.c.h.b16 %v395
        %v776 = vunpack.c.l.b16 %v396
        %v777 = vunpack.c.l.b16 %v397
        %v778 = vunpack.c.h.b16 %v397
        %v779 = vunpack.c.l.b16 %v398
        %v780 = vunpack.c.l.b16 %v399
        %v781 = vunpack.c.h.b16 %v399
        %v782 = vunpack.c.l.b16 %v400
        %v783 = vunpack.c.l.b16 %v401
        %v784 = vunpack.c.h.b16 %v401
        %v785 = vunpack.c.l.b16 %v402
        %v786 = vunpack.c.l.b16 %v403
        %v787 = vunpack.c.h.b16 %v403
        %v788 = vunpack.c.l.b16 %v404
        %v789 = vunpack.c.l.b16 %v405
        %v790 = vunpack.c.h.b16 %v405
        %v791 = vunpack.c.l.b16 %v406
        %v792 = vunpack.c.l.b16 %v407
        %v793 = vunpack.c.h.b16 %v407
        %v794 = vunpack.c.l.b16 %v408
        %v795 = vunpack.c.l.b16 %v409
        %v796 = vunpack.c.h.b16 %v409
        %v797 = vunpack.c.l.b16 %v410
        %v798 = vunpack.c.l.b16 %v411
        %v799 = vunpack.c.h.b16 %v411
        %v800 = vunpack.c.l.b16 %v412
        %v801 = vunpack.c.l.b16 %v413
        %v802 = vunpack.c.h.b16 %v413
        %v803 = vunpack.c.l.b16 %v414
        %v804 = vunpack.c.l.b16 %v415
        %v805 = vunpack.c.h.b16 %v415
        %v806 = vunpack.c.l.b16 %v416
        %v807 = vunpack.c.l.b16 %v417
        %v808 = vunpack.c.h.b16 %v417
        %v809 = vunpack.c.l.b16 %v418
        %v810 = vunpack.c.l.b16 %v419
        %v811 = vunpack.c.h.b16 %v419
        %v812 = vunpack.c.l.b16 %v420
        %v813 = vunpack.c.l.b16 %v421
        %v814 = vunpack.c.h.b16 %v421
        %v815 = vunpack.c.l.b16 %v422
        %v816 = vpack.c.b16 %v771, %v768
        %v817 = vpack.c.b16 %v772, %v769
        %v818 = vpack.c.b16 %v773, %v770
        %v819 = vpack.c.b16 %v777, %v774
        %v820 = vpack.c.b16 %v778, %v775
        %v821 = vpack.c.b16 %v779, %v776
        %v822 = vpack.c.b16 %v783, %v780
        %v823 = vpack.c.b16 %v784, %v781
        %v824 = vpack.c.b16 %v785, %v782
        %v825 = vpack.c.b16 %v789, %v786
        %v826 = vpack.c.b16 %v790, %v787
        %v827 = vpack.c.b16 %v791, %v788
        %v828 = vpack.c.b16 %v795, %v792
        %v829 = vpack.c.b16 %v796, %v793
        %v830 = vpack.c.b16 %v797, %v794
        %v831 = vpack.c.b16 %v801, %v798
        %v832 = vpack.c.b16 %v802, %v799
        %v833 = vpack.c.b16 %v803, %v800
        %v834 = vpack.c.b16 %v807, %v804
        %v835 = vpack.c.b16 %v808, %v805
        %v836 = vpack.c.b16 %v809, %v806
        %v837 = vpack.c.b16 %v813, %v810
        %v838 = vpack.c.b16 %v814, %v811
        %v839 = vpack.c.b16 %v815, %v812
        %864 = vmatprep.subr.bf16.mxu0 %v817
        %865 = vmatpush1.bf16.msra.mxu0 %v816
        %866 = vmatprep.subr.bf16.mxu0 %v820
        %867 = vmatpush1.bf16.msra.mxu0 %v819
        %868 = vmatprep.subr.bf16.mxu0 %v823
        %869 = vmatpush1.bf16.msra.mxu0 %v822
        %870 = vmatprep.subr.bf16.mxu0 %v826
        %871 = vmatpush1.bf16.msra.mxu0 %v825
        %872 = vmatprep.subr.bf16.mxu0 %v829
        %873 = vmatpush1.bf16.msra.mxu0 %v828
        %874 = vmatprep.subr.bf16.mxu0 %v832
        %875 = vmatpush1.bf16.msra.mxu0 %v831
        %876 = vmatprep.subr.bf16.mxu0 %v835
        %877 = vmatpush1.bf16.msra.mxu0 %v834
        %878 = vmatprep.subr.bf16.mxu0 %v838
        %879 = vmatpush1.bf16.msra.mxu0 %v837
        %880 = vmatprep.subr.bf16.mxu0 0
        %881 = vmatpush1.bf16.msra.mxu0 0
        %882 = vmatprep.subr.bf16.mxu0 0
        %883 = vmatpush1.bf16.msra.mxu0 0
        %884 = vmatprep.subr.bf16.mxu0 0
        %885 = vmatpush1.bf16.msra.mxu0 0
        %886 = vmatprep.subr.bf16.mxu0 0
        %887 = vmatpush1.bf16.msra.mxu0 0
        %888 = vmatprep.subr.bf16.mxu0 0
        %889 = vmatpush1.bf16.msra.mxu0 0
        %890 = vmatprep.subr.bf16.mxu0 0
        %891 = vmatpush1.bf16.msra.mxu0 0
        %892 = vmatprep.subr.bf16.mxu0 0
        %893 = vmatpush1.bf16.msra.mxu0 0
        %894 = vmatprep.subr.bf16.mxu0 0
        %895 = vmatpush1.bf16.msra.mxu0 0
        %896 = vmatprep.mubr.bf16.mxu0 0
        %897 = vmatmul.mubr.bf16.gmra.mrb[0].mxu0 %v735
        %v898 = vpop.f32.mrb[0].mxu0
        %v899 = vadd.f32 0.0, %v898
        %v900 = vpop.f32.mrb[0].mxu0
        %v901 = vadd.f32 0.0, %v900
        %v902 = vpop.f32.mrb[0].mxu0
        %v903 = vpop.f32.mrb[0].mxu0
        %904 = vdwg.mxu0
        %905 = vmatprep.subr.bf16.mxu0 0
        %906 = vmatpush1.bf16.msra.mxu0 %v818
        %907 = vmatprep.subr.bf16.mxu0 0
        %908 = vmatpush1.bf16.msra.mxu0 %v821
        %909 = vmatprep.subr.bf16.mxu0 0
        %910 = vmatpush1.bf16.msra.mxu0 %v824
        %911 = vmatprep.subr.bf16.mxu0 0
        %912 = vmatpush1.bf16.msra.mxu0 %v827
        %913 = vmatprep.subr.bf16.mxu0 0
        %914 = vmatpush1.bf16.msra.mxu0 %v830
        %915 = vmatprep.subr.bf16.mxu0 0
        %916 = vmatpush1.bf16.msra.mxu0 %v833
        %917 = vmatprep.subr.bf16.mxu0 0
        %918 = vmatpush1.bf16.msra.mxu0 %v836
        %919 = vmatprep.subr.bf16.mxu0 0
        %920 = vmatpush1.bf16.msra.mxu0 %v839
        %921 = vmatprep.subr.bf16.mxu0 0
        %922 = vmatpush1.bf16.msra.mxu0 0
        %923 = vmatprep.subr.bf16.mxu0 0
        %924 = vmatpush1.bf16.msra.mxu0 0
        %925 = vmatprep.subr.bf16.mxu0 0
        %926 = vmatpush1.bf16.msra.mxu0 0
        %927 = vmatprep.subr.bf16.mxu0 0
        %928 = vmatpush1.bf16.msra.mxu0 0
        %929 = vmatprep.subr.bf16.mxu0 0
        %930 = vmatpush1.bf16.msra.mxu0 0
        %931 = vmatprep.subr.bf16.mxu0 0
        %932 = vmatpush1.bf16.msra.mxu0 0
        %933 = vmatprep.subr.bf16.mxu0 0
        %934 = vmatpush1.bf16.msra.mxu0 0
        %935 = vmatprep.subr.bf16.mxu0 0
        %936 = vmatpush1.bf16.msra.mxu0 0
        %937 = vmatprep.mubr.bf16.mxu0 0
        %938 = vmatmul.mubr.bf16.gmra.mrb[0].mxu0 %v735
        %v939 = vpop.f32.mrb[0].mxu0
        %v940 = vadd.f32 0.0, %v939
        %v941 = vpop.f32.mrb[0].mxu0
        %v942 = vpop.f32.mrb[0].mxu0
        %v943 = vpop.f32.mrb[0].mxu0
        %944 = vdwg.mxu0
        %v945 = vadd.f32 %v732, %v899
        %v946 = vxor.u32 %v945, 2147483648
        %v947 = vmul.f32 %v946, 1.442695
        %v948 = vpow.pop %v947
        %v949 = vadd.f32 %v948, 1.0
        %v950 = vrcp.pop %v949
        %v951 = vmul.f32 1.0, %v950
        %v952 = vadd.f32 %v733, %v901
        %v953 = vxor.u32 %v952, 2147483648
        %v954 = vmul.f32 %v953, 1.442695
        %v955 = vpow.pop %v954
        %v956 = vadd.f32 %v955, 1.0
        %v957 = vrcp.pop %v956
        %v958 = vmul.f32 1.0, %v957
        %v960 = vlaneseq
        %v961 = vshrl.u32 %v960, 7
        %v962 = vsub.s32 0, %v961
        %v963 = vrot.slane %v423, %v962
        %v965 = vadd.f32 %v940, %v963
        %v966 = vmul.f32 %v951, %v965
        %v967 = vadd.f32 %v734, %v966
        %v968 = vtanh.pop %v967
        %v969 = vsub.f32 1.0, %v958
        %v970 = vmul.f32 %v969, %v968
        %v971 = vmul.f32 %v958, %v731
        %v972 = vadd.f32 %v970, %v971
        %973 = vst [vmem:[#allocation4] sm:$0xff] %v972
        %v974 = vpack.c.bf16 %v972, %v972
        %975 = vst [vmem:[#allocation2] sm:$0xf] %v974
        %v976 = vld [vmem:[#allocation4] sm:$0xff]
        %v977 = vld [vmem:[#allocation3 + $0x18] sm:$0xff]
        %v978 = vld [vmem:[#allocation3 + $0x20] sm:$0xff]
        %v979 = vld [vmem:[#allocation3 + $0x28] sm:$0xff]
        %v980 = vpack.c.bf16 %v976, %v976
        %981 = vmatprep.subr.bf16.mxu0 %v817
        %982 = vmatpush1.bf16.msra.mxu0 %v816
        %983 = vmatprep.subr.bf16.mxu0 %v820
        %984 = vmatpush1.bf16.msra.mxu0 %v819
        %985 = vmatprep.subr.bf16.mxu0 %v823
        %986 = vmatpush1.bf16.msra.mxu0 %v822
        %987 = vmatprep.subr.bf16.mxu0 %v826
        %988 = vmatpush1.bf16.msra.mxu0 %v825
        %989 = vmatprep.subr.bf16.mxu0 %v829
        %990 = vmatpush1.bf16.msra.mxu0 %v828
        %991 = vmatprep.subr.bf16.mxu0 %v832
        %992 = vmatpush1.bf16.msra.mxu0 %v831
        %993 = vmatprep.subr.bf16.mxu0 %v835
        %994 = vmatpush1.bf16.msra.mxu0 %v834
        %995 = vmatprep.subr.bf16.mxu0 %v838
        %996 = vmatpush1.bf16.msra.mxu0 %v837
        %997 = vmatprep.subr.bf16.mxu0 0
        %998 = vmatpush1.bf16.msra.mxu0 0
        %999 = vmatprep.subr.bf16.mxu0 0
        %1000 = vmatpush1.bf16.msra.mxu0 0
        %1001 = vmatprep.subr.bf16.mxu0 0
        %1002 = vmatpush1.bf16.msra.mxu0 0
        %1003 = vmatprep.subr.bf16.mxu0 0
        %1004 = vmatpush1.bf16.msra.mxu0 0
        %1005 = vmatprep.subr.bf16.mxu0 0
        %1006 = vmatpush1.bf16.msra.mxu0 0
        %1007 = vmatprep.subr.bf16.mxu0 0
        %1008 = vmatpush1.bf16.msra.mxu0 0
        %1009 = vmatprep.subr.bf16.mxu0 0
        %1010 = vmatpush1.bf16.msra.mxu0 0
        %1011 = vmatprep.subr.bf16.mxu0 0
        %1012 = vmatpush1.bf16.msra.mxu0 0
        %1013 = vmatprep.mubr.bf16.mxu0 0
        %1014 = vmatmul.mubr.bf16.gmra.mrb[0].mxu0 %v980
        %v1015 = vpop.f32.mrb[0].mxu0
        %v1016 = vadd.f32 0.0, %v1015
        %v1017 = vpop.f32.mrb[0].mxu0
        %v1018 = vadd.f32 0.0, %v1017
        %v1019 = vpop.f32.mrb[0].mxu0
        %v1020 = vpop.f32.mrb[0].mxu0
        %1021 = vdwg.mxu0
        %1022 = vmatprep.subr.bf16.mxu0 0
        %1023 = vmatpush1.bf16.msra.mxu0 %v818
        %1024 = vmatprep.subr.bf16.mxu0 0
        %1025 = vmatpush1.bf16.msra.mxu0 %v821
        %1026 = vmatprep.subr.bf16.mxu0 0
        %1027 = vmatpush1.bf16.msra.mxu0 %v824
        %1028 = vmatprep.subr.bf16.mxu0 0
        %1029 = vmatpush1.bf16.msra.mxu0 %v827
        %1030 = vmatprep.subr.bf16.mxu0 0
        %1031 = vmatpush1.bf16.msra.mxu0 %v830
        %1032 = vmatprep.subr.bf16.mxu0 0
        %1033 = vmatpush1.bf16.msra.mxu0 %v833
        %1034 = vmatprep.subr.bf16.mxu0 0
        %1035 = vmatpush1.bf16.msra.mxu0 %v836
        %1036 = vmatprep.subr.bf16.mxu0 0
        %1037 = vmatpush1.bf16.msra.mxu0 %v839
        %1038 = vmatprep.subr.bf16.mxu0 0
        %1039 = vmatpush1.bf16.msra.mxu0 0
        %1040 = vmatprep.subr.bf16.mxu0 0
        %1041 = vmatpush1.bf16.msra.mxu0 0
        %1042 = vmatprep.subr.bf16.mxu0 0
        %1043 = vmatpush1.bf16.msra.mxu0 0
        %1044 = vmatprep.subr.bf16.mxu0 0
        %1045 = vmatpush1.bf16.msra.mxu0 0
        %1046 = vmatprep.subr.bf16.mxu0 0
        %1047 = vmatpush1.bf16.msra.mxu0 0
        %1048 = vmatprep.subr.bf16.mxu0 0
        %1049 = vmatpush1.bf16.msra.mxu0 0
        %1050 = vmatprep.subr.bf16.mxu0 0
        %1051 = vmatpush1.bf16.msra.mxu0 0
        %1052 = vmatprep.subr.bf16.mxu0 0
        %1053 = vmatpush1.bf16.msra.mxu0 0
        %1054 = vmatprep.mubr.bf16.mxu0 0
        %1055 = vmatmul.mubr.bf16.gmra.mrb[0].mxu0 %v980
        %v1056 = vpop.f32.mrb[0].mxu0
        %v1057 = vadd.f32 0.0, %v1056
        %v1058 = vpop.f32.mrb[0].mxu0
        %v1059 = vpop.f32.mrb[0].mxu0
        %v1060 = vpop.f32.mrb[0].mxu0
        %1061 = vdwg.mxu0
        %v1062 = vadd.f32 %v977, %v1016
        %v1063 = vxor.u32 %v1062, 2147483648
        %v1064 = vmul.f32 %v1063, 1.442695
        %v1065 = vpow.pop %v1064
        %v1066 = vadd.f32 %v1065, 1.0
        %v1067 = vrcp.pop %v1066
        %v1068 = vmul.f32 1.0, %v1067
        %v1069 = vadd.f32 %v978, %v1018
        %v1070 = vxor.u32 %v1069, 2147483648
        %v1071 = vmul.f32 %v1070, 1.442695
        %v1072 = vpow.pop %v1071
        %v1073 = vadd.f32 %v1072, 1.0
        %v1074 = vrcp.pop %v1073
        %v1075 = vmul.f32 1.0, %v1074
        %v1076 = vadd.f32 %v1057, %v963
        %v1077 = vmul.f32 %v1068, %v1076
        %v1078 = vadd.f32 %v979, %v1077
        %v1079 = vtanh.pop %v1078
        %v1080 = vsub.f32 1.0, %v1075
        %v1081 = vmul.f32 %v1080, %v1079
        %v1082 = vmul.f32 %v1075, %v976
        %v1083 = vadd.f32 %v1081, %v1082
        %1084 = vst [vmem:[#allocation4] sm:$0xff] %v1083
        %v1085 = vpack.c.bf16 %v1083, %v1083
        %v1087 = vrot.slane %v1085, 4
        %1089 = vst [vmem:[#allocation2] sm:$0xf0] %v1087
        %v1090 = vld [vmem:[#allocation4] sm:$0xff]
        %v1091 = vld [vmem:[#allocation3 + $0x30] sm:$0xff]
        %v1092 = vld [vmem:[#allocation3 + $0x38] sm:$0xff]
        %v1093 = vld [vmem:[#allocation3 + $0x40] sm:$0xff]
        %v1094 = vpack.c.bf16 %v1090, %v1090
        %1095 = vmatprep.subr.bf16.mxu0 %v817
        %1096 = vmatpush1.bf16.msra.mxu0 %v816
        %1097 = vmatprep.subr.bf16.mxu0 %v820
        %1098 = vmatpush1.bf16.msra.mxu0 %v819
        %1099 = vmatprep.subr.bf16.mxu0 %v823
        %1100 = vmatpush1.bf16.msra.mxu0 %v822
        %1101 = vmatprep.subr.bf16.mxu0 %v826
        %1102 = vmatpush1.bf16.msra.mxu0 %v825
        %1103 = vmatprep.subr.bf16.mxu0 %v829
        %1104 = vmatpush1.bf16.msra.mxu0 %v828
        %1105 = vmatprep.subr.bf16.mxu0 %v832
        %1106 = vmatpush1.bf16.msra.mxu0 %v831
        %1107 = vmatprep.subr.bf16.mxu0 %v835
        %1108 = vmatpush1.bf16.msra.mxu0 %v834
        %1109 = vmatprep.subr.bf16.mxu0 %v838
        %1110 = vmatpush1.bf16.msra.mxu0 %v837
        %1111 = vmatprep.subr.bf16.mxu0 0
        %1112 = vmatpush1.bf16.msra.mxu0 0
        %1113 = vmatprep.subr.bf16.mxu0 0
        %1114 = vmatpush1.bf16.msra.mxu0 0
        %1115 = vmatprep.subr.bf16.mxu0 0
        %1116 = vmatpush1.bf16.msra.mxu0 0
        %1117 = vmatprep.subr.bf16.mxu0 0
        %1118 = vmatpush1.bf16.msra.mxu0 0
        %1119 = vmatprep.subr.bf16.mxu0 0
        %1120 = vmatpush1.bf16.msra.mxu0 0
        %1121 = vmatprep.subr.bf16.mxu0 0
        %1122 = vmatpush1.bf16.msra.mxu0 0
        %1123 = vmatprep.subr.bf16.mxu0 0
        %1124 = vmatpush1.bf16.msra.mxu0 0
        %1125 = vmatprep.subr.bf16.mxu0 0
        %1126 = vmatpush1.bf16.msra.mxu0 0
        %1127 = vmatprep.mubr.bf16.mxu0 0
        %1128 = vmatmul.mubr.bf16.gmra.mrb[0].mxu0 %v1094
        %v1129 = vpop.f32.mrb[0].mxu0
        %v1130 = vadd.f32 0.0, %v1129
        %v1131 = vpop.f32.mrb[0].mxu0
        %v1132 = vadd.f32 0.0, %v1131
        %v1133 = vpop.f32.mrb[0].mxu0
        %v1134 = vpop.f32.mrb[0].mxu0
        %1135 = vdwg.mxu0
        %1136 = vmatprep.subr.bf16.mxu0 0
        %1137 = vmatpush1.bf16.msra.mxu0 %v818
        %1138 = vmatprep.subr.bf16.mxu0 0
        %1139 = vmatpush1.bf16.msra.mxu0 %v821
        %1140 = vmatprep.subr.bf16.mxu0 0
        %1141 = vmatpush1.bf16.msra.mxu0 %v824
        %1142 = vmatprep.subr.bf16.mxu0 0
        %1143 = vmatpush1.bf16.msra.mxu0 %v827
        %1144 = vmatprep.subr.bf16.mxu0 0
        %1145 = vmatpush1.bf16.msra.mxu0 %v830
        %1146 = vmatprep.subr.bf16.mxu0 0
        %1147 = vmatpush1.bf16.msra.mxu0 %v833
        %1148 = vmatprep.subr.bf16.mxu0 0
        %1149 = vmatpush1.bf16.msra.mxu0 %v836
        %1150 = vmatprep.subr.bf16.mxu0 0
        %1151 = vmatpush1.bf16.msra.mxu0 %v839
        %1152 = vmatprep.subr.bf16.mxu0 0
        %1153 = vmatpush1.bf16.msra.mxu0 0
        %1154 = vmatprep.subr.bf16.mxu0 0
        %1155 = vmatpush1.bf16.msra.mxu0 0
        %1156 = vmatprep.subr.bf16.mxu0 0
        %1157 = vmatpush1.bf16.msra.mxu0 0
        %1158 = vmatprep.subr.bf16.mxu0 0
        %1159 = vmatpush1.bf16.msra.mxu0 0
        %1160 = vmatprep.subr.bf16.mxu0 0
        %1161 = vmatpush1.bf16.msra.mxu0 0
        %1162 = vmatprep.subr.bf16.mxu0 0
        %1163 = vmatpush1.bf16.msra.mxu0 0
        %1164 = vmatprep.subr.bf16.mxu0 0
        %1165 = vmatpush1.bf16.msra.mxu0 0
        %1166 = vmatprep.subr.bf16.mxu0 0
        %1167 = vmatpush1.bf16.msra.mxu0 0
        %1168 = vmatprep.mubr.bf16.mxu0 0
        %1169 = vmatmul.mubr.bf16.gmra.mrb[0].mxu0 %v1094
        %v1170 = vpop.f32.mrb[0].mxu0
        %v1171 = vadd.f32 0.0, %v1170
        %v1172 = vpop.f32.mrb[0].mxu0
        %v1173 = vpop.f32.mrb[0].mxu0
        %v1174 = vpop.f32.mrb[0].mxu0
        %1175 = vdwg.mxu0
        %v1176 = vadd.f32 %v1091, %v1130
        %v1177 = vxor.u32 %v1176, 2147483648
        %v1178 = vmul.f32 %v1177, 1.442695
        %v1179 = vpow.pop %v1178
        %v1180 = vadd.f32 %v1179, 1.0
        %v1181 = vrcp.pop %v1180
        %v1182 = vmul.f32 1.0, %v1181
        %v1183 = vadd.f32 %v1092, %v1132
        %v1184 = vxor.u32 %v1183, 2147483648
        %v1185 = vmul.f32 %v1184, 1.442695
        %v1186 = vpow.pop %v1185
        %v1187 = vadd.f32 %v1186, 1.0
        %v1188 = vrcp.pop %v1187
        %v1189 = vmul.f32 1.0, %v1188
        %v1190 = vadd.f32 %v1171, %v963
        %v1191 = vmul.f32 %v1182, %v1190
        %v1192 = vadd.f32 %v1093, %v1191
        %v1193 = vtanh.pop %v1192
        %v1194 = vsub.f32 1.0, %v1189
        %v1195 = vmul.f32 %v1194, %v1193
        %v1196 = vmul.f32 %v1189, %v1090
        %v1197 = vadd.f32 %v1195, %v1196
        %1198 = vst [vmem:[#allocation4] sm:$0xff] %v1197
        %v1199 = vpack.c.bf16 %v1197, %v1197
        %1200 = vst [vmem:[#allocation2 + $0x8] sm:$0xf] %v1199
        %v1201 = vld [vmem:[#allocation4] sm:$0xff]
        %v1202 = vld [vmem:[#allocation3 + $0x48] sm:$0xff]
        %v1203 = vld [vmem:[#allocation3 + $0x50] sm:$0xff]
        %v1204 = vld [vmem:[#allocation3 + $0x58] sm:$0xff]
        %v1205 = vpack.c.bf16 %v1201, %v1201
        %1206 = vmatprep.subr.bf16.mxu0 %v817
        %1207 = vmatpush1.bf16.msra.mxu0 %v816
        %1208 = vmatprep.subr.bf16.mxu0 %v820
        %1209 = vmatpush1.bf16.msra.mxu0 %v819
        %1210 = vmatprep.subr.bf16.mxu0 %v823
        %1211 = vmatpush1.bf16.msra.mxu0 %v822
        %1212 = vmatprep.subr.bf16.mxu0 %v826
        %1213 = vmatpush1.bf16.msra.mxu0 %v825
        %1214 = vmatprep.subr.bf16.mxu0 %v829
        %1215 = vmatpush1.bf16.msra.mxu0 %v828
        %1216 = vmatprep.subr.bf16.mxu0 %v832
        %1217 = vmatpush1.bf16.msra.mxu0 %v831
        %1218 = vmatprep.subr.bf16.mxu0 %v835
        %1219 = vmatpush1.bf16.msra.mxu0 %v834
        %1220 = vmatprep.subr.bf16.mxu0 %v838
        %1221 = vmatpush1.bf16.msra.mxu0 %v837
        %1222 = vmatprep.subr.bf16.mxu0 0
        %1223 = vmatpush1.bf16.msra.mxu0 0
        %1224 = vmatprep.subr.bf16.mxu0 0
        %1225 = vmatpush1.bf16.msra.mxu0 0
        %1226 = vmatprep.subr.bf16.mxu0 0
        %1227 = vmatpush1.bf16.msra.mxu0 0
        %1228 = vmatprep.subr.bf16.mxu0 0
        %1229 = vmatpush1.bf16.msra.mxu0 0
        %1230 = vmatprep.subr.bf16.mxu0 0
        %1231 = vmatpush1.bf16.msra.mxu0 0
        %1232 = vmatprep.subr.bf16.mxu0 0
        %1233 = vmatpush1.bf16.msra.mxu0 0
        %1234 = vmatprep.subr.bf16.mxu0 0
        %1235 = vmatpush1.bf16.msra.mxu0 0
        %1236 = vmatprep.subr.bf16.mxu0 0
        %1237 = vmatpush1.bf16.msra.mxu0 0
        %1238 = vmatprep.mubr.bf16.mxu0 0
        %1239 = vmatmul.mubr.bf16.gmra.mrb[0].mxu0 %v1205
        %v1240 = vpop.f32.mrb[0].mxu0
        %v1241 = vadd.f32 0.0, %v1240
        %v1242 = vpop.f32.mrb[0].mxu0
        %v1243 = vadd.f32 0.0, %v1242
        %v1244 = vpop.f32.mrb[0].mxu0
        %v1245 = vpop.f32.mrb[0].mxu0
        %1246 = vdwg.mxu0
        %1247 = vmatprep.subr.bf16.mxu0 0
        %1248 = vmatpush1.bf16.msra.mxu0 %v818
        %1249 = vmatprep.subr.bf16.mxu0 0
        %1250 = vmatpush1.bf16.msra.mxu0 %v821
        %1251 = vmatprep.subr.bf16.mxu0 0
        %1252 = vmatpush1.bf16.msra.mxu0 %v824
        %1253 = vmatprep.subr.bf16.mxu0 0
        %1254 = vmatpush1.bf16.msra.mxu0 %v827
        %1255 = vmatprep.subr.bf16.mxu0 0
        %1256 = vmatpush1.bf16.msra.mxu0 %v830
        %1257 = vmatprep.subr.bf16.mxu0 0
        %1258 = vmatpush1.bf16.msra.mxu0 %v833
        %1259 = vmatprep.subr.bf16.mxu0 0
        %1260 = vmatpush1.bf16.msra.mxu0 %v836
        %1261 = vmatprep.subr.bf16.mxu0 0
        %1262 = vmatpush1.bf16.msra.mxu0 %v839
        %1263 = vmatprep.subr.bf16.mxu0 0
        %1264 = vmatpush1.bf16.msra.mxu0 0
        %1265 = vmatprep.subr.bf16.mxu0 0
        %1266 = vmatpush1.bf16.msra.mxu0 0
        %1267 = vmatprep.subr.bf16.mxu0 0
        %1268 = vmatpush1.bf16.msra.mxu0 0
        %1269 = vmatprep.subr.bf16.mxu0 0
        %1270 = vmatpush1.bf16.msra.mxu0 0
        %1271 = vmatprep.subr.bf16.mxu0 0
        %1272 = vmatpush1.bf16.msra.mxu0 0
        %1273 = vmatprep.subr.bf16.mxu0 0
        %1274 = vmatpush1.bf16.msra.mxu0 0
        %1275 = vmatprep.subr.bf16.mxu0 0
        %1276 = vmatpush1.bf16.msra.mxu0 0
        %1277 = vmatprep.subr.bf16.mxu0 0
        %1278 = vmatpush1.bf16.msra.mxu0 0
        %1279 = vmatprep.mubr.bf16.mxu0 0
        %1280 = vmatmul.mubr.bf16.gmra.mrb[0].mxu0 %v1205
        %v1281 = vpop.f32.mrb[0].mxu0
        %v1282 = vadd.f32 0.0, %v1281
        %v1283 = vpop.f32.mrb[0].mxu0
        %v1284 = vpop.f32.mrb[0].mxu0
        %v1285 = vpop.f32.mrb[0].mxu0
        %1286 = vdwg.mxu0
        %v1287 = vadd.f32 %v1202, %v1241
        %v1288 = vxor.u32 %v1287, 2147483648
        %v1289 = vmul.f32 %v1288, 1.442695
        %v1290 = vpow.pop %v1289
        %v1291 = vadd.f32 %v1290, 1.0
        %v1292 = vrcp.pop %v1291
        %v1293 = vmul.f32 1.0, %v1292
        %v1294 = vadd.f32 %v1203, %v1243
        %v1295 = vxor.u32 %v1294, 2147483648
        %v1296 = vmul.f32 %v1295, 1.442695
        %v1297 = vpow.pop %v1296
        %v1298 = vadd.f32 %v1297, 1.0
        %v1299 = vrcp.pop %v1298
        %v1300 = vmul.f32 1.0, %v1299
        %v1301 = vadd.f32 %v1282, %v963
        %v1302 = vmul.f32 %v1293, %v1301
        %v1303 = vadd.f32 %v1204, %v1302
        %v1304 = vtanh.pop %v1303
        %v1305 = vsub.f32 1.0, %v1300
        %v1306 = vmul.f32 %v1305, %v1304
        %v1307 = vmul.f32 %v1300, %v1201
        %v1308 = vadd.f32 %v1306, %v1307
        %1309 = vst [vmem:[#allocation4] sm:$0xff] %v1308
        %v1310 = vpack.c.bf16 %v1308, %v1308
        %v1312 = vrot.slane %v1310, 4
        %1314 = vst [vmem:[#allocation2 + $0x8] sm:$0xf0] %v1312
        %s1315 = scalar_lea.vmem [#allocation11], 192
        %v1316 = vld [vmem:[%s1315] sm:$0xff]
        %v1317 = vld [vmem:[%s1315 + $0x8] sm:$0xf]
        %v1318 = vld [vmem:[%s1315 + $0xc] sm:$0xff]
        %v1319 = vld [vmem:[%s1315 + $0x14] sm:$0xf]
        %v1320 = vld [vmem:[%s1315 + $0x18] sm:$0xff]
        %v1321 = vld [vmem:[%s1315 + $0x20] sm:$0xf]
        %v1322 = vld [vmem:[%s1315 + $0x24] sm:$0xff]
        %v1323 = vld [vmem:[%s1315 + $0x2c] sm:$0xf]
        %v1324 = vld [vmem:[%s1315 + $0x30] sm:$0xff]
        %v1325 = vld [vmem:[%s1315 + $0x38] sm:$0xf]
        %v1326 = vld [vmem:[%s1315 + $0x3c] sm:$0xff]
        %v1327 = vld [vmem:[%s1315 + $0x44] sm:$0xf]
        %v1328 = vld [vmem:[%s1315 + $0x48] sm:$0xff]
        %v1329 = vld [vmem:[%s1315 + $0x50] sm:$0xf]
        %v1330 = vld [vmem:[%s1315 + $0x54] sm:$0xff]
        %v1331 = vld [vmem:[%s1315 + $0x5c] sm:$0xf]
        %v1332 = vld [vmem:[%s1315 + $0x60] sm:$0xff]
        %v1333 = vld [vmem:[%s1315 + $0x68] sm:$0xf]
        %v1334 = vld [vmem:[%s1315 + $0x6c] sm:$0xff]
        %v1335 = vld [vmem:[%s1315 + $0x74] sm:$0xf]
        %v1336 = vld [vmem:[%s1315 + $0x78] sm:$0xff]
        %v1337 = vld [vmem:[%s1315 + $0x80] sm:$0xf]
        %v1338 = vld [vmem:[%s1315 + $0x84] sm:$0xff]
        %v1339 = vld [vmem:[%s1315 + $0x8c] sm:$0xf]
        %v1340 = vld [vmem:[%s1315 + $0x90] sm:$0xff]
        %v1341 = vld [vmem:[%s1315 + $0x98] sm:$0xf]
        %v1342 = vld [vmem:[%s1315 + $0x9c] sm:$0xff]
        %v1343 = vld [vmem:[%s1315 + $0xa4] sm:$0xf]
        %v1344 = vld [vmem:[%s1315 + $0xa8] sm:$0xff]
        %v1345 = vld [vmem:[%s1315 + $0xb0] sm:$0xf]
        %v1346 = vld [vmem:[%s1315 + $0xb4] sm:$0xff]
        %v1347 = vld [vmem:[%s1315 + $0xbc] sm:$0xf]
        %s1348 = scalar_lea.vmem %s5, 1
        %v1349 = vld [vmem:[%s1348] sm:$0x1]
        %v1350 = vld [vmem:[#allocation2] sm:$0xff]
        %v1351 = vld [vmem:[#allocation2 + $0x8] sm:$0xff]
        %v1352 = vld [vmem:[#allocation10] sm:$0xff]
        %v1353 = vld [vmem:[#allocation10 + $0x8] sm:$0xf]
        %v1354 = vld [vmem:[#allocation10 + $0xc] sm:$0xff]
        %v1355 = vld [vmem:[#allocation10 + $0x14] sm:$0xf]
        %v1356 = vld [vmem:[#allocation10 + $0x18] sm:$0xff]
        %v1357 = vld [vmem:[#allocation10 + $0x20] sm:$0xf]
        %v1358 = vld [vmem:[#allocation10 + $0x24] sm:$0xff]
        %v1359 = vld [vmem:[#allocation10 + $0x2c] sm:$0xf]
        %v1360 = vld [vmem:[#allocation10 + $0x30] sm:$0xff]
        %v1361 = vld [vmem:[#allocation10 + $0x38] sm:$0xf]
        %v1362 = vld [vmem:[#allocation10 + $0x3c] sm:$0xff]
        %v1363 = vld [vmem:[#allocation10 + $0x44] sm:$0xf]
        %v1364 = vld [vmem:[#allocation10 + $0x48] sm:$0xff]
        %v1365 = vld [vmem:[#allocation10 + $0x50] sm:$0xf]
        %v1366 = vld [vmem:[#allocation10 + $0x54] sm:$0xff]
        %v1367 = vld [vmem:[#allocation10 + $0x5c] sm:$0xf]
        %v1368 = vld [vmem:[#allocation10 + $0x60] sm:$0xff]
        %v1369 = vld [vmem:[#allocation10 + $0x68] sm:$0xf]
        %v1370 = vld [vmem:[#allocation10 + $0x6c] sm:$0xff]
        %v1371 = vld [vmem:[#allocation10 + $0x74] sm:$0xf]
        %v1372 = vld [vmem:[#allocation10 + $0x78] sm:$0xff]
        %v1373 = vld [vmem:[#allocation10 + $0x80] sm:$0xf]
        %v1374 = vld [vmem:[#allocation10 + $0x84] sm:$0xff]
        %v1375 = vld [vmem:[#allocation10 + $0x8c] sm:$0xf]
        %v1376 = vld [vmem:[#allocation10 + $0x90] sm:$0xff]
        %v1377 = vld [vmem:[#allocation10 + $0x98] sm:$0xf]
        %v1378 = vld [vmem:[#allocation10 + $0x9c] sm:$0xff]
        %v1379 = vld [vmem:[#allocation10 + $0xa4] sm:$0xf]
        %v1380 = vld [vmem:[#allocation10 + $0xa8] sm:$0xff]
        %v1381 = vld [vmem:[#allocation10 + $0xb0] sm:$0xf]
        %v1382 = vld [vmem:[#allocation10 + $0xb4] sm:$0xff]
        %v1383 = vld [vmem:[#allocation10 + $0xbc] sm:$0xf]
        %s1384 = scalar_lea.vmem %s4, 3
        %v1385 = vld [vmem:[%s1384] sm:$0x7]
        %v1387 = vlaneseq
        %v1388 = vshrl.u32 %v1387, 7
        %v1389 = vsub.s32 0, %v1388
        %v1390 = vrot.slane %v1385, %v1389
        %v1391 = vlaneseq
        %v1392 = vshrl.u32 %v1391, 7
        %v1393 = vsub.s32 1, %v1392
        %v1394 = vrot.slane %v1385, %v1393
        %v1395 = vlaneseq
        %v1396 = vshrl.u32 %v1395, 7
        %v1397 = vsub.s32 2, %v1396
        %v1398 = vrot.slane %v1385, %v1397
        %v1434 = vunpack.c.l.b16 %v1352
        %v1435 = vunpack.c.h.b16 %v1352
        %v1436 = vunpack.c.l.b16 %v1353
        %v1437 = vunpack.c.l.b16 %v1354
        %v1438 = vunpack.c.h.b16 %v1354
        %v1439 = vunpack.c.l.b16 %v1355
        %v1440 = vunpack.c.l.b16 %v1356
        %v1441 = vunpack.c.h.b16 %v1356
        %v1442 = vunpack.c.l.b16 %v1357
        %v1443 = vunpack.c.l.b16 %v1358
        %v1444 = vunpack.c.h.b16 %v1358
        %v1445 = vunpack.c.l.b16 %v1359
        %v1446 = vunpack.c.l.b16 %v1360
        %v1447 = vunpack.c.h.b16 %v1360
        %v1448 = vunpack.c.l.b16 %v1361
        %v1449 = vunpack.c.l.b16 %v1362
        %v1450 = vunpack.c.h.b16 %v1362
        %v1451 = vunpack.c.l.b16 %v1363
        %v1452 = vunpack.c.l.b16 %v1364
        %v1453 = vunpack.c.h.b16 %v1364
        %v1454 = vunpack.c.l.b16 %v1365
        %v1455 = vunpack.c.l.b16 %v1366
        %v1456 = vunpack.c.h.b16 %v1366
        %v1457 = vunpack.c.l.b16 %v1367
        %v1458 = vunpack.c.l.b16 %v1368
        %v1459 = vunpack.c.h.b16 %v1368
        %v1460 = vunpack.c.l.b16 %v1369
        %v1461 = vunpack.c.l.b16 %v1370
        %v1462 = vunpack.c.h.b16 %v1370
        %v1463 = vunpack.c.l.b16 %v1371
        %v1464 = vunpack.c.l.b16 %v1372
        %v1465 = vunpack.c.h.b16 %v1372
        %v1466 = vunpack.c.l.b16 %v1373
        %v1467 = vunpack.c.l.b16 %v1374
        %v1468 = vunpack.c.h.b16 %v1374
        %v1469 = vunpack.c.l.b16 %v1375
        %v1470 = vunpack.c.l.b16 %v1376
        %v1471 = vunpack.c.h.b16 %v1376
        %v1472 = vunpack.c.l.b16 %v1377
        %v1473 = vunpack.c.l.b16 %v1378
        %v1474 = vunpack.c.h.b16 %v1378
        %v1475 = vunpack.c.l.b16 %v1379
        %v1476 = vunpack.c.l.b16 %v1380
        %v1477 = vunpack.c.h.b16 %v1380
        %v1478 = vunpack.c.l.b16 %v1381
        %v1479 = vunpack.c.l.b16 %v1382
        %v1480 = vunpack.c.h.b16 %v1382
        %v1481 = vunpack.c.l.b16 %v1383
        %v1482 = vpack.c.b16 %v1437, %v1434
        %v1483 = vpack.c.b16 %v1438, %v1435
        %v1484 = vpack.c.b16 %v1439, %v1436
        %v1485 = vpack.c.b16 %v1443, %v1440
        %v1486 = vpack.c.b16 %v1444, %v1441
        %v1487 = vpack.c.b16 %v1445, %v1442
        %v1488 = vpack.c.b16 %v1449, %v1446
        %v1489 = vpack.c.b16 %v1450, %v1447
        %v1490 = vpack.c.b16 %v1451, %v1448
        %v1491 = vpack.c.b16 %v1455, %v1452
        %v1492 = vpack.c.b16 %v1456, %v1453
        %v1493 = vpack.c.b16 %v1457, %v1454
        %v1494 = vpack.c.b16 %v1461, %v1458
        %v1495 = vpack.c.b16 %v1462, %v1459
        %v1496 = vpack.c.b16 %v1463, %v1460
        %v1497 = vpack.c.b16 %v1467, %v1464
        %v1498 = vpack.c.b16 %v1468, %v1465
        %v1499 = vpack.c.b16 %v1469, %v1466
        %v1500 = vpack.c.b16 %v1473, %v1470
        %v1501 = vpack.c.b16 %v1474, %v1471
        %v1502 = vpack.c.b16 %v1475, %v1472
        %v1503 = vpack.c.b16 %v1479, %v1476
        %v1504 = vpack.c.b16 %v1480, %v1477
        %v1505 = vpack.c.b16 %v1481, %v1478
        %1530 = vmatprep.subr.bf16.mxu0 %v1483
        %1531 = vmatpush1.bf16.msra.mxu0 %v1482
        %1532 = vmatprep.subr.bf16.mxu0 %v1486
        %1533 = vmatpush1.bf16.msra.mxu0 %v1485
        %1534 = vmatprep.subr.bf16.mxu0 %v1489
        %1535 = vmatpush1.bf16.msra.mxu0 %v1488
        %1536 = vmatprep.subr.bf16.mxu0 %v1492
        %1537 = vmatpush1.bf16.msra.mxu0 %v1491
        %1538 = vmatprep.subr.bf16.mxu0 %v1495
        %1539 = vmatpush1.bf16.msra.mxu0 %v1494
        %1540 = vmatprep.subr.bf16.mxu0 %v1498
        %1541 = vmatpush1.bf16.msra.mxu0 %v1497
        %1542 = vmatprep.subr.bf16.mxu0 %v1501
        %1543 = vmatpush1.bf16.msra.mxu0 %v1500
        %1544 = vmatprep.subr.bf16.mxu0 %v1504
        %1545 = vmatpush1.bf16.msra.mxu0 %v1503
        %1546 = vmatprep.subr.bf16.mxu0 0
        %1547 = vmatpush1.bf16.msra.mxu0 0
        %1548 = vmatprep.subr.bf16.mxu0 0
        %1549 = vmatpush1.bf16.msra.mxu0 0
        %1550 = vmatprep.subr.bf16.mxu0 0
        %1551 = vmatpush1.bf16.msra.mxu0 0
        %1552 = vmatprep.subr.bf16.mxu0 0
        %1553 = vmatpush1.bf16.msra.mxu0 0
        %1554 = vmatprep.subr.bf16.mxu0 0
        %1555 = vmatpush1.bf16.msra.mxu0 0
        %1556 = vmatprep.subr.bf16.mxu0 0
        %1557 = vmatpush1.bf16.msra.mxu0 0
        %1558 = vmatprep.subr.bf16.mxu0 0
        %1559 = vmatpush1.bf16.msra.mxu0 0
        %1560 = vmatprep.subr.bf16.mxu0 0
        %1561 = vmatpush1.bf16.msra.mxu0 0
        %1562 = vmatprep.mubr.bf16.mxu0 0
        %1563 = vmatmul.mubr.bf16.gmra.mrb[0].mxu0 %v1350
        %v1564 = vpop.f32.mrb[0].mxu0
        %v1565 = vadd.f32 %v1390, %v1564
        %v1566 = vpop.f32.mrb[0].mxu0
        %v1567 = vadd.f32 %v1394, %v1566
        %v1568 = vpop.f32.mrb[0].mxu0
        %v1569 = vadd.f32 %v1390, %v1568
        %v1570 = vpop.f32.mrb[0].mxu0
        %v1571 = vadd.f32 %v1394, %v1570
        %1572 = vmatprep.mubr.bf16.mxu0 0
        %1573 = vmatmul.mubr.bf16.gmra.mrb[0].mxu0 %v1351
        %v1574 = vpop.f32.mrb[0].mxu0
        %v1575 = vadd.f32 %v1390, %v1574
        %v1576 = vpop.f32.mrb[0].mxu0
        %v1577 = vadd.f32 %v1394, %v1576
        %v1578 = vpop.f32.mrb[0].mxu0
        %v1579 = vadd.f32 %v1390, %v1578
        %v1580 = vpop.f32.mrb[0].mxu0
        %v1581 = vadd.f32 %v1394, %v1580
        %1582 = vdwg.mxu0
        %1583 = vmatprep.subr.bf16.mxu0 0
        %1584 = vmatpush1.bf16.msra.mxu0 %v1484
        %1585 = vmatprep.subr.bf16.mxu0 0
        %1586 = vmatpush1.bf16.msra.mxu0 %v1487
        %1587 = vmatprep.subr.bf16.mxu0 0
        %1588 = vmatpush1.bf16.msra.mxu0 %v1490
        %1589 = vmatprep.subr.bf16.mxu0 0
        %1590 = vmatpush1.bf16.msra.mxu0 %v1493
        %1591 = vmatprep.subr.bf16.mxu0 0
        %1592 = vmatpush1.bf16.msra.mxu0 %v1496
        %1593 = vmatprep.subr.bf16.mxu0 0
        %1594 = vmatpush1.bf16.msra.mxu0 %v1499
        %1595 = vmatprep.subr.bf16.mxu0 0
        %1596 = vmatpush1.bf16.msra.mxu0 %v1502
        %1597 = vmatprep.subr.bf16.mxu0 0
        %1598 = vmatpush1.bf16.msra.mxu0 %v1505
        %1599 = vmatprep.subr.bf16.mxu0 0
        %1600 = vmatpush1.bf16.msra.mxu0 0
        %1601 = vmatprep.subr.bf16.mxu0 0
        %1602 = vmatpush1.bf16.msra.mxu0 0
        %1603 = vmatprep.subr.bf16.mxu0 0
        %1604 = vmatpush1.bf16.msra.mxu0 0
        %1605 = vmatprep.subr.bf16.mxu0 0
        %1606 = vmatpush1.bf16.msra.mxu0 0
        %1607 = vmatprep.subr.bf16.mxu0 0
        %1608 = vmatpush1.bf16.msra.mxu0 0
        %1609 = vmatprep.subr.bf16.mxu0 0
        %1610 = vmatpush1.bf16.msra.mxu0 0
        %1611 = vmatprep.subr.bf16.mxu0 0
        %1612 = vmatpush1.bf16.msra.mxu0 0
        %1613 = vmatprep.subr.bf16.mxu0 0
        %1614 = vmatpush1.bf16.msra.mxu0 0
        %1615 = vmatprep.mubr.bf16.mxu0 0
        %1616 = vmatmul.mubr.bf16.gmra.mrb[0].mxu0 %v1350
        %v1617 = vpop.f32.mrb[0].mxu0
        %v1618 = vadd.f32 %v1398, %v1617
        %v1619 = vpop.f32.mrb[0].mxu0
        %v1620 = vpop.f32.mrb[0].mxu0
        %v1621 = vadd.f32 %v1398, %v1620
        %v1622 = vpop.f32.mrb[0].mxu0
        %1623 = vmatprep.mubr.bf16.mxu0 0
        %1624 = vmatmul.mubr.bf16.gmra.mrb[0].mxu0 %v1351
        %v1625 = vpop.f32.mrb[0].mxu0
        %v1626 = vadd.f32 %v1398, %v1625
        %v1627 = vpop.f32.mrb[0].mxu0
        %v1628 = vpop.f32.mrb[0].mxu0
        %v1629 = vadd.f32 %v1398, %v1628
        %v1630 = vpop.f32.mrb[0].mxu0
        %1631 = vdwg.mxu0
        %1632 = vst [vmem:[#allocation3] sm:$0xff] %v1565
        %1633 = vst [vmem:[#allocation3 + $0x8] sm:$0xff] %v1567
        %1634 = vst [vmem:[#allocation3 + $0x10] sm:$0xff] %v1618
        %1635 = vst [vmem:[#allocation3 + $0x18] sm:$0xff] %v1569
        %1636 = vst [vmem:[#allocation3 + $0x20] sm:$0xff] %v1571
        %1637 = vst [vmem:[#allocation3 + $0x28] sm:$0xff] %v1621
        %1638 = vst [vmem:[#allocation3 + $0x30] sm:$0xff] %v1575
        %1639 = vst [vmem:[#allocation3 + $0x38] sm:$0xff] %v1577
        %1640 = vst [vmem:[#allocation3 + $0x40] sm:$0xff] %v1626
        %1641 = vst [vmem:[#allocation3 + $0x48] sm:$0xff] %v1579
        %1642 = vst [vmem:[#allocation3 + $0x50] sm:$0xff] %v1581
        %1643 = vst [vmem:[#allocation3 + $0x58] sm:$0xff] %v1629
        %s1644 = scalar_lea.vmem [#allocation4], 8
        %v1645 = vld [vmem:[%s1644] sm:$0xff]
        %v1646 = vld [vmem:[#allocation3] sm:$0xff]
        %v1647 = vld [vmem:[#allocation3 + $0x8] sm:$0xff]
        %v1648 = vld [vmem:[#allocation3 + $0x10] sm:$0xff]
        %v1649 = vpack.c.bf16 %v1645, %v1645
        %v1682 = vunpack.c.l.b16 %v1316
        %v1683 = vunpack.c.h.b16 %v1316
        %v1684 = vunpack.c.l.b16 %v1317
        %v1685 = vunpack.c.l.b16 %v1318
        %v1686 = vunpack.c.h.b16 %v1318
        %v1687 = vunpack.c.l.b16 %v1319
        %v1688 = vunpack.c.l.b16 %v1320
        %v1689 = vunpack.c.h.b16 %v1320
        %v1690 = vunpack.c.l.b16 %v1321
        %v1691 = vunpack.c.l.b16 %v1322
        %v1692 = vunpack.c.h.b16 %v1322
        %v1693 = vunpack.c.l.b16 %v1323
        %v1694 = vunpack.c.l.b16 %v1324
        %v1695 = vunpack.c.h.b16 %v1324
        %v1696 = vunpack.c.l.b16 %v1325
        %v1697 = vunpack.c.l.b16 %v1326
        %v1698 = vunpack.c.h.b16 %v1326
        %v1699 = vunpack.c.l.b16 %v1327
        %v1700 = vunpack.c.l.b16 %v1328
        %v1701 = vunpack.c.h.b16 %v1328
        %v1702 = vunpack.c.l.b16 %v1329
        %v1703 = vunpack.c.l.b16 %v1330
        %v1704 = vunpack.c.h.b16 %v1330
        %v1705 = vunpack.c.l.b16 %v1331
        %v1706 = vunpack.c.l.b16 %v1332
        %v1707 = vunpack.c.h.b16 %v1332
        %v1708 = vunpack.c.l.b16 %v1333
        %v1709 = vunpack.c.l.b16 %v1334
        %v1710 = vunpack.c.h.b16 %v1334
        %v1711 = vunpack.c.l.b16 %v1335
        %v1712 = vunpack.c.l.b16 %v1336
        %v1713 = vunpack.c.h.b16 %v1336
        %v1714 = vunpack.c.l.b16 %v1337
        %v1715 = vunpack.c.l.b16 %v1338
        %v1716 = vunpack.c.h.b16 %v1338
        %v1717 = vunpack.c.l.b16 %v1339
        %v1718 = vunpack.c.l.b16 %v1340
        %v1719 = vunpack.c.h.b16 %v1340
        %v1720 = vunpack.c.l.b16 %v1341
        %v1721 = vunpack.c.l.b16 %v1342
        %v1722 = vunpack.c.h.b16 %v1342
        %v1723 = vunpack.c.l.b16 %v1343
        %v1724 = vunpack.c.l.b16 %v1344
        %v1725 = vunpack.c.h.b16 %v1344
        %v1726 = vunpack.c.l.b16 %v1345
        %v1727 = vunpack.c.l.b16 %v1346
        %v1728 = vunpack.c.h.b16 %v1346
        %v1729 = vunpack.c.l.b16 %v1347
        %v1730 = vpack.c.b16 %v1685, %v1682
        %v1731 = vpack.c.b16 %v1686, %v1683
        %v1732 = vpack.c.b16 %v1687, %v1684
        %v1733 = vpack.c.b16 %v1691, %v1688
        %v1734 = vpack.c.b16 %v1692, %v1689
        %v1735 = vpack.c.b16 %v1693, %v1690
        %v1736 = vpack.c.b16 %v1697, %v1694
        %v1737 = vpack.c.b16 %v1698, %v1695
        %v1738 = vpack.c.b16 %v1699, %v1696
        %v1739 = vpack.c.b16 %v1703, %v1700
        %v1740 = vpack.c.b16 %v1704, %v1701
        %v1741 = vpack.c.b16 %v1705, %v1702
        %v1742 = vpack.c.b16 %v1709, %v1706
        %v1743 = vpack.c.b16 %v1710, %v1707
        %v1744 = vpack.c.b16 %v1711, %v1708
        %v1745 = vpack.c.b16 %v1715, %v1712
        %v1746 = vpack.c.b16 %v1716, %v1713
        %v1747 = vpack.c.b16 %v1717, %v1714
        %v1748 = vpack.c.b16 %v1721, %v1718
        %v1749 = vpack.c.b16 %v1722, %v1719
        %v1750 = vpack.c.b16 %v1723, %v1720
        %v1751 = vpack.c.b16 %v1727, %v1724
        %v1752 = vpack.c.b16 %v1728, %v1725
        %v1753 = vpack.c.b16 %v1729, %v1726
        %1778 = vmatprep.subr.bf16.mxu0 %v1731
        %1779 = vmatpush1.bf16.msra.mxu0 %v1730
        %1780 = vmatprep.subr.bf16.mxu0 %v1734
        %1781 = vmatpush1.bf16.msra.mxu0 %v1733
        %1782 = vmatprep.subr.bf16.mxu0 %v1737
        %1783 = vmatpush1.bf16.msra.mxu0 %v1736
        %1784 = vmatprep.subr.bf16.mxu0 %v1740
        %1785 = vmatpush1.bf16.msra.mxu0 %v1739
        %1786 = vmatprep.subr.bf16.mxu0 %v1743
        %1787 = vmatpush1.bf16.msra.mxu0 %v1742
        %1788 = vmatprep.subr.bf16.mxu0 %v1746
        %1789 = vmatpush1.bf16.msra.mxu0 %v1745
        %1790 = vmatprep.subr.bf16.mxu0 %v1749
        %1791 = vmatpush1.bf16.msra.mxu0 %v1748
        %1792 = vmatprep.subr.bf16.mxu0 %v1752
        %1793 = vmatpush1.bf16.msra.mxu0 %v1751
        %1794 = vmatprep.subr.bf16.mxu0 0
        %1795 = vmatpush1.bf16.msra.mxu0 0
        %1796 = vmatprep.subr.bf16.mxu0 0
        %1797 = vmatpush1.bf16.msra.mxu0 0
        %1798 = vmatprep.subr.bf16.mxu0 0
        %1799 = vmatpush1.bf16.msra.mxu0 0
        %1800 = vmatprep.subr.bf16.mxu0 0
        %1801 = vmatpush1.bf16.msra.mxu0 0
        %1802 = vmatprep.subr.bf16.mxu0 0
        %1803 = vmatpush1.bf16.msra.mxu0 0
        %1804 = vmatprep.subr.bf16.mxu0 0
        %1805 = vmatpush1.bf16.msra.mxu0 0
        %1806 = vmatprep.subr.bf16.mxu0 0
        %1807 = vmatpush1.bf16.msra.mxu0 0
        %1808 = vmatprep.subr.bf16.mxu0 0
        %1809 = vmatpush1.bf16.msra.mxu0 0
        %1810 = vmatprep.mubr.bf16.mxu0 0
        %1811 = vmatmul.mubr.bf16.gmra.mrb[0].mxu0 %v1649
        %v1812 = vpop.f32.mrb[0].mxu0
        %v1813 = vadd.f32 0.0, %v1812
        %v1814 = vpop.f32.mrb[0].mxu0
        %v1815 = vadd.f32 0.0, %v1814
        %v1816 = vpop.f32.mrb[0].mxu0
        %v1817 = vpop.f32.mrb[0].mxu0
        %1818 = vdwg.mxu0
        %1819 = vmatprep.subr.bf16.mxu0 0
        %1820 = vmatpush1.bf16.msra.mxu0 %v1732
        %1821 = vmatprep.subr.bf16.mxu0 0
        %1822 = vmatpush1.bf16.msra.mxu0 %v1735
        %1823 = vmatprep.subr.bf16.mxu0 0
        %1824 = vmatpush1.bf16.msra.mxu0 %v1738
        %1825 = vmatprep.subr.bf16.mxu0 0
        %1826 = vmatpush1.bf16.msra.mxu0 %v1741
        %1827 = vmatprep.subr.bf16.mxu0 0
        %1828 = vmatpush1.bf16.msra.mxu0 %v1744
        %1829 = vmatprep.subr.bf16.mxu0 0
        %1830 = vmatpush1.bf16.msra.mxu0 %v1747
        %1831 = vmatprep.subr.bf16.mxu0 0
        %1832 = vmatpush1.bf16.msra.mxu0 %v1750
        %1833 = vmatprep.subr.bf16.mxu0 0
        %1834 = vmatpush1.bf16.msra.mxu0 %v1753
        %1835 = vmatprep.subr.bf16.mxu0 0
        %1836 = vmatpush1.bf16.msra.mxu0 0
        %1837 = vmatprep.subr.bf16.mxu0 0
        %1838 = vmatpush1.bf16.msra.mxu0 0
        %1839 = vmatprep.subr.bf16.mxu0 0
        %1840 = vmatpush1.bf16.msra.mxu0 0
        %1841 = vmatprep.subr.bf16.mxu0 0
        %1842 = vmatpush1.bf16.msra.mxu0 0
        %1843 = vmatprep.subr.bf16.mxu0 0
        %1844 = vmatpush1.bf16.msra.mxu0 0
        %1845 = vmatprep.subr.bf16.mxu0 0
        %1846 = vmatpush1.bf16.msra.mxu0 0
        %1847 = vmatprep.subr.bf16.mxu0 0
        %1848 = vmatpush1.bf16.msra.mxu0 0
        %1849 = vmatprep.subr.bf16.mxu0 0
        %1850 = vmatpush1.bf16.msra.mxu0 0
        %1851 = vmatprep.mubr.bf16.mxu0 0
        %1852 = vmatmul.mubr.bf16.gmra.mrb[0].mxu0 %v1649
        %v1853 = vpop.f32.mrb[0].mxu0
        %v1854 = vadd.f32 0.0, %v1853
        %v1855 = vpop.f32.mrb[0].mxu0
        %v1856 = vpop.f32.mrb[0].mxu0
        %v1857 = vpop.f32.mrb[0].mxu0
        %1858 = vdwg.mxu0
        %v1859 = vadd.f32 %v1646, %v1813
        %v1860 = vxor.u32 %v1859, 2147483648
        %v1861 = vmul.f32 %v1860, 1.442695
        %v1862 = vpow.pop %v1861
        %v1863 = vadd.f32 %v1862, 1.0
        %v1864 = vrcp.pop %v1863
        %v1865 = vmul.f32 1.0, %v1864
        %v1866 = vadd.f32 %v1647, %v1815
        %v1867 = vxor.u32 %v1866, 2147483648
        %v1868 = vmul.f32 %v1867, 1.442695
        %v1869 = vpow.pop %v1868
        %v1870 = vadd.f32 %v1869, 1.0
        %v1871 = vrcp.pop %v1870
        %v1872 = vmul.f32 1.0, %v1871
        %v1874 = vlaneseq
        %v1875 = vshrl.u32 %v1874, 7
        %v1876 = vsub.s32 0, %v1875
        %v1877 = vrot.slane %v1349, %v1876
        %v1879 = vadd.f32 %v1854, %v1877
        %v1880 = vmul.f32 %v1865, %v1879
        %v1881 = vadd.f32 %v1648, %v1880
        %v1882 = vtanh.pop %v1881
        %v1883 = vsub.f32 1.0, %v1872
        %v1884 = vmul.f32 %v1883, %v1882
        %v1885 = vmul.f32 %v1872, %v1645
        %v1886 = vadd.f32 %v1884, %v1885
        %1887 = vst [vmem:[%s1644] sm:$0xff] %v1886
        %v1888 = vld [vmem:[#allocation2] sm:$0xf]
        %v1889 = vunpack.c.l.bf16 %v1888
        %v1890 = vadd.f32 %v1886, %v1889
        %v1891 = vpack.c.bf16 %v1890, %v1890
        %1892 = vst [vmem:[#allocation2] sm:$0xf] %v1891
        %v1893 = vld [vmem:[%s1644] sm:$0xff]
        %v1894 = vld [vmem:[#allocation3 + $0x18] sm:$0xff]
        %v1895 = vld [vmem:[#allocation3 + $0x20] sm:$0xff]
        %v1896 = vld [vmem:[#allocation3 + $0x28] sm:$0xff]
        %v1897 = vpack.c.bf16 %v1893, %v1893
        %1898 = vmatprep.subr.bf16.mxu0 %v1731
        %1899 = vmatpush1.bf16.msra.mxu0 %v1730
        %1900 = vmatprep.subr.bf16.mxu0 %v1734
        %1901 = vmatpush1.bf16.msra.mxu0 %v1733
        %1902 = vmatprep.subr.bf16.mxu0 %v1737
        %1903 = vmatpush1.bf16.msra.mxu0 %v1736
        %1904 = vmatprep.subr.bf16.mxu0 %v1740
        %1905 = vmatpush1.bf16.msra.mxu0 %v1739
        %1906 = vmatprep.subr.bf16.mxu0 %v1743
        %1907 = vmatpush1.bf16.msra.mxu0 %v1742
        %1908 = vmatprep.subr.bf16.mxu0 %v1746
        %1909 = vmatpush1.bf16.msra.mxu0 %v1745
        %1910 = vmatprep.subr.bf16.mxu0 %v1749
        %1911 = vmatpush1.bf16.msra.mxu0 %v1748
        %1912 = vmatprep.subr.bf16.mxu0 %v1752
        %1913 = vmatpush1.bf16.msra.mxu0 %v1751
        %1914 = vmatprep.subr.bf16.mxu0 0
        %1915 = vmatpush1.bf16.msra.mxu0 0
        %1916 = vmatprep.subr.bf16.mxu0 0
        %1917 = vmatpush1.bf16.msra.mxu0 0
        %1918 = vmatprep.subr.bf16.mxu0 0
        %1919 = vmatpush1.bf16.msra.mxu0 0
        %1920 = vmatprep.subr.bf16.mxu0 0
        %1921 = vmatpush1.bf16.msra.mxu0 0
        %1922 = vmatprep.subr.bf16.mxu0 0
        %1923 = vmatpush1.bf16.msra.mxu0 0
        %1924 = vmatprep.subr.bf16.mxu0 0
        %1925 = vmatpush1.bf16.msra.mxu0 0
        %1926 = vmatprep.subr.bf16.mxu0 0
        %1927 = vmatpush1.bf16.msra.mxu0 0
        %1928 = vmatprep.subr.bf16.mxu0 0
        %1929 = vmatpush1.bf16.msra.mxu0 0
        %1930 = vmatprep.mubr.bf16.mxu0 0
        %1931 = vmatmul.mubr.bf16.gmra.mrb[0].mxu0 %v1897
        %v1932 = vpop.f32.mrb[0].mxu0
        %v1933 = vadd.f32 0.0, %v1932
        %v1934 = vpop.f32.mrb[0].mxu0
        %v1935 = vadd.f32 0.0, %v1934
        %v1936 = vpop.f32.mrb[0].mxu0
        %v1937 = vpop.f32.mrb[0].mxu0
        %1938 = vdwg.mxu0
        %1939 = vmatprep.subr.bf16.mxu0 0
        %1940 = vmatpush1.bf16.msra.mxu0 %v1732
        %1941 = vmatprep.subr.bf16.mxu0 0
        %1942 = vmatpush1.bf16.msra.mxu0 %v1735
        %1943 = vmatprep.subr.bf16.mxu0 0
        %1944 = vmatpush1.bf16.msra.mxu0 %v1738
        %1945 = vmatprep.subr.bf16.mxu0 0
        %1946 = vmatpush1.bf16.msra.mxu0 %v1741
        %1947 = vmatprep.subr.bf16.mxu0 0
        %1948 = vmatpush1.bf16.msra.mxu0 %v1744
        %1949 = vmatprep.subr.bf16.mxu0 0
        %1950 = vmatpush1.bf16.msra.mxu0 %v1747
        %1951 = vmatprep.subr.bf16.mxu0 0
        %1952 = vmatpush1.bf16.msra.mxu0 %v1750
        %1953 = vmatprep.subr.bf16.mxu0 0
        %1954 = vmatpush1.bf16.msra.mxu0 %v1753
        %1955 = vmatprep.subr.bf16.mxu0 0
        %1956 = vmatpush1.bf16.msra.mxu0 0
        %1957 = vmatprep.subr.bf16.mxu0 0
        %1958 = vmatpush1.bf16.msra.mxu0 0
        %1959 = vmatprep.subr.bf16.mxu0 0
        %1960 = vmatpush1.bf16.msra.mxu0 0
        %1961 = vmatprep.subr.bf16.mxu0 0
        %1962 = vmatpush1.bf16.msra.mxu0 0
        %1963 = vmatprep.subr.bf16.mxu0 0
        %1964 = vmatpush1.bf16.msra.mxu0 0
        %1965 = vmatprep.subr.bf16.mxu0 0
        %1966 = vmatpush1.bf16.msra.mxu0 0
        %1967 = vmatprep.subr.bf16.mxu0 0
        %1968 = vmatpush1.bf16.msra.mxu0 0
        %1969 = vmatprep.subr.bf16.mxu0 0
        %1970 = vmatpush1.bf16.msra.mxu0 0
        %1971 = vmatprep.mubr.bf16.mxu0 0
        %1972 = vmatmul.mubr.bf16.gmra.mrb[0].mxu0 %v1897
        %v1973 = vpop.f32.mrb[0].mxu0
        %v1974 = vadd.f32 0.0, %v1973
        %v1975 = vpop.f32.mrb[0].mxu0
        %v1976 = vpop.f32.mrb[0].mxu0
        %v1977 = vpop.f32.mrb[0].mxu0
        %1978 = vdwg.mxu0
        %v1979 = vadd.f32 %v1894, %v1933
        %v1980 = vxor.u32 %v1979, 2147483648
        %v1981 = vmul.f32 %v1980, 1.442695
        %v1982 = vpow.pop %v1981
        %v1983 = vadd.f32 %v1982, 1.0
        %v1984 = vrcp.pop %v1983
        %v1985 = vmul.f32 1.0, %v1984
        %v1986 = vadd.f32 %v1895, %v1935
        %v1987 = vxor.u32 %v1986, 2147483648
        %v1988 = vmul.f32 %v1987, 1.442695
        %v1989 = vpow.pop %v1988
        %v1990 = vadd.f32 %v1989, 1.0
        %v1991 = vrcp.pop %v1990
        %v1992 = vmul.f32 1.0, %v1991
        %v1993 = vadd.f32 %v1974, %v1877
        %v1994 = vmul.f32 %v1985, %v1993
        %v1995 = vadd.f32 %v1896, %v1994
        %v1996 = vtanh.pop %v1995
        %v1997 = vsub.f32 1.0, %v1992
        %v1998 = vmul.f32 %v1997, %v1996
        %v1999 = vmul.f32 %v1992, %v1893
        %v2000 = vadd.f32 %v1998, %v1999
        %2001 = vst [vmem:[%s1644] sm:$0xff] %v2000
        %v2002 = vld [vmem:[#allocation2] sm:$0xf0]
        %v2004 = vrot.slane %v2002, 4
        %v2006 = vunpack.c.l.bf16 %v2004
        %v2007 = vadd.f32 %v2000, %v2006
        %v2008 = vpack.c.bf16 %v2007, %v2007
        %v2010 = vrot.slane %v2008, 4
        %2012 = vst [vmem:[#allocation2] sm:$0xf0] %v2010
        %v2013 = vld [vmem:[%s1644] sm:$0xff]
        %v2014 = vld [vmem:[#allocation3 + $0x30] sm:$0xff]
        %v2015 = vld [vmem:[#allocation3 + $0x38] sm:$0xff]
        %v2016 = vld [vmem:[#allocation3 + $0x40] sm:$0xff]
        %v2017 = vpack.c.bf16 %v2013, %v2013
        %2018 = vmatprep.subr.bf16.mxu0 %v1731
        %2019 = vmatpush1.bf16.msra.mxu0 %v1730
        %2020 = vmatprep.subr.bf16.mxu0 %v1734
        %2021 = vmatpush1.bf16.msra.mxu0 %v1733
        %2022 = vmatprep.subr.bf16.mxu0 %v1737
        %2023 = vmatpush1.bf16.msra.mxu0 %v1736
        %2024 = vmatprep.subr.bf16.mxu0 %v1740
        %2025 = vmatpush1.bf16.msra.mxu0 %v1739
        %2026 = vmatprep.subr.bf16.mxu0 %v1743
        %2027 = vmatpush1.bf16.msra.mxu0 %v1742
        %2028 = vmatprep.subr.bf16.mxu0 %v1746
        %2029 = vmatpush1.bf16.msra.mxu0 %v1745
        %2030 = vmatprep.subr.bf16.mxu0 %v1749
        %2031 = vmatpush1.bf16.msra.mxu0 %v1748
        %2032 = vmatprep.subr.bf16.mxu0 %v1752
        %2033 = vmatpush1.bf16.msra.mxu0 %v1751
        %2034 = vmatprep.subr.bf16.mxu0 0
        %2035 = vmatpush1.bf16.msra.mxu0 0
        %2036 = vmatprep.subr.bf16.mxu0 0
        %2037 = vmatpush1.bf16.msra.mxu0 0
        %2038 = vmatprep.subr.bf16.mxu0 0
        %2039 = vmatpush1.bf16.msra.mxu0 0
        %2040 = vmatprep.subr.bf16.mxu0 0
        %2041 = vmatpush1.bf16.msra.mxu0 0
        %2042 = vmatprep.subr.bf16.mxu0 0
        %2043 = vmatpush1.bf16.msra.mxu0 0
        %2044 = vmatprep.subr.bf16.mxu0 0
        %2045 = vmatpush1.bf16.msra.mxu0 0
        %2046 = vmatprep.subr.bf16.mxu0 0
        %2047 = vmatpush1.bf16.msra.mxu0 0
        %2048 = vmatprep.subr.bf16.mxu0 0
        %2049 = vmatpush1.bf16.msra.mxu0 0
        %2050 = vmatprep.mubr.bf16.mxu0 0
        %2051 = vmatmul.mubr.bf16.gmra.mrb[0].mxu0 %v2017
        %v2052 = vpop.f32.mrb[0].mxu0
        %v2053 = vadd.f32 0.0, %v2052
        %v2054 = vpop.f32.mrb[0].mxu0
        %v2055 = vadd.f32 0.0, %v2054
        %v2056 = vpop.f32.mrb[0].mxu0
        %v2057 = vpop.f32.mrb[0].mxu0
        %2058 = vdwg.mxu0
        %2059 = vmatprep.subr.bf16.mxu0 0
        %2060 = vmatpush1.bf16.msra.mxu0 %v1732
        %2061 = vmatprep.subr.bf16.mxu0 0
        %2062 = vmatpush1.bf16.msra.mxu0 %v1735
        %2063 = vmatprep.subr.bf16.mxu0 0
        %2064 = vmatpush1.bf16.msra.mxu0 %v1738
        %2065 = vmatprep.subr.bf16.mxu0 0
        %2066 = vmatpush1.bf16.msra.mxu0 %v1741
        %2067 = vmatprep.subr.bf16.mxu0 0
        %2068 = vmatpush1.bf16.msra.mxu0 %v1744
        %2069 = vmatprep.subr.bf16.mxu0 0
        %2070 = vmatpush1.bf16.msra.mxu0 %v1747
        %2071 = vmatprep.subr.bf16.mxu0 0
        %2072 = vmatpush1.bf16.msra.mxu0 %v1750
        %2073 = vmatprep.subr.bf16.mxu0 0
        %2074 = vmatpush1.bf16.msra.mxu0 %v1753
        %2075 = vmatprep.subr.bf16.mxu0 0
        %2076 = vmatpush1.bf16.msra.mxu0 0
        %2077 = vmatprep.subr.bf16.mxu0 0
        %2078 = vmatpush1.bf16.msra.mxu0 0
        %2079 = vmatprep.subr.bf16.mxu0 0
        %2080 = vmatpush1.bf16.msra.mxu0 0
        %2081 = vmatprep.subr.bf16.mxu0 0
        %2082 = vmatpush1.bf16.msra.mxu0 0
        %2083 = vmatprep.subr.bf16.mxu0 0
        %2084 = vmatpush1.bf16.msra.mxu0 0
        %2085 = vmatprep.subr.bf16.mxu0 0
        %2086 = vmatpush1.bf16.msra.mxu0 0
        %2087 = vmatprep.subr.bf16.mxu0 0
        %2088 = vmatpush1.bf16.msra.mxu0 0
        %2089 = vmatprep.subr.bf16.mxu0 0
        %2090 = vmatpush1.bf16.msra.mxu0 0
        %2091 = vmatprep.mubr.bf16.mxu0 0
        %2092 = vmatmul.mubr.bf16.gmra.mrb[0].mxu0 %v2017
        %v2093 = vpop.f32.mrb[0].mxu0
        %v2094 = vadd.f32 0.0, %v2093
        %v2095 = vpop.f32.mrb[0].mxu0
        %v2096 = vpop.f32.mrb[0].mxu0
        %v2097 = vpop.f32.mrb[0].mxu0
        %2098 = vdwg.mxu0
        %v2099 = vadd.f32 %v2014, %v2053
        %v2100 = vxor.u32 %v2099, 2147483648
        %v2101 = vmul.f32 %v2100, 1.442695
        %v2102 = vpow.pop %v2101
        %v2103 = vadd.f32 %v2102, 1.0
        %v2104 = vrcp.pop %v2103
        %v2105 = vmul.f32 1.0, %v2104
        %v2106 = vadd.f32 %v2015, %v2055
        %v2107 = vxor.u32 %v2106, 2147483648
        %v2108 = vmul.f32 %v2107, 1.442695
        %v2109 = vpow.pop %v2108
        %v2110 = vadd.f32 %v2109, 1.0
        %v2111 = vrcp.pop %v2110
        %v2112 = vmul.f32 1.0, %v2111
        %v2113 = vadd.f32 %v2094, %v1877
        %v2114 = vmul.f32 %v2105, %v2113
        %v2115 = vadd.f32 %v2016, %v2114
        %v2116 = vtanh.pop %v2115
        %v2117 = vsub.f32 1.0, %v2112
        %v2118 = vmul.f32 %v2117, %v2116
        %v2119 = vmul.f32 %v2112, %v2013
        %v2120 = vadd.f32 %v2118, %v2119
        %2121 = vst [vmem:[%s1644] sm:$0xff] %v2120
        %v2122 = vld [vmem:[#allocation2 + $0x8] sm:$0xf]
        %v2123 = vunpack.c.l.bf16 %v2122
        %v2124 = vadd.f32 %v2120, %v2123
        %v2125 = vpack.c.bf16 %v2124, %v2124
        %2126 = vst [vmem:[#allocation2 + $0x8] sm:$0xf] %v2125
        %v2127 = vld [vmem:[%s1644] sm:$0xff]
        %v2128 = vld [vmem:[#allocation3 + $0x48] sm:$0xff]
        %v2129 = vld [vmem:[#allocation3 + $0x50] sm:$0xff]
        %v2130 = vld [vmem:[#allocation3 + $0x58] sm:$0xff]
        %v2131 = vpack.c.bf16 %v2127, %v2127
        %2132 = vmatprep.subr.bf16.mxu0 %v1731
        %2133 = vmatpush1.bf16.msra.mxu0 %v1730
        %2134 = vmatprep.subr.bf16.mxu0 %v1734
        %2135 = vmatpush1.bf16.msra.mxu0 %v1733
        %2136 = vmatprep.subr.bf16.mxu0 %v1737
        %2137 = vmatpush1.bf16.msra.mxu0 %v1736
        %2138 = vmatprep.subr.bf16.mxu0 %v1740
        %2139 = vmatpush1.bf16.msra.mxu0 %v1739
        %2140 = vmatprep.subr.bf16.mxu0 %v1743
        %2141 = vmatpush1.bf16.msra.mxu0 %v1742
        %2142 = vmatprep.subr.bf16.mxu0 %v1746
        %2143 = vmatpush1.bf16.msra.mxu0 %v1745
        %2144 = vmatprep.subr.bf16.mxu0 %v1749
        %2145 = vmatpush1.bf16.msra.mxu0 %v1748
        %2146 = vmatprep.subr.bf16.mxu0 %v1752
        %2147 = vmatpush1.bf16.msra.mxu0 %v1751
        %2148 = vmatprep.subr.bf16.mxu0 0
        %2149 = vmatpush1.bf16.msra.mxu0 0
        %2150 = vmatprep.subr.bf16.mxu0 0
        %2151 = vmatpush1.bf16.msra.mxu0 0
        %2152 = vmatprep.subr.bf16.mxu0 0
        %2153 = vmatpush1.bf16.msra.mxu0 0
        %2154 = vmatprep.subr.bf16.mxu0 0
        %2155 = vmatpush1.bf16.msra.mxu0 0
        %2156 = vmatprep.subr.bf16.mxu0 0
        %2157 = vmatpush1.bf16.msra.mxu0 0
        %2158 = vmatprep.subr.bf16.mxu0 0
        %2159 = vmatpush1.bf16.msra.mxu0 0
        %2160 = vmatprep.subr.bf16.mxu0 0
        %2161 = vmatpush1.bf16.msra.mxu0 0
        %2162 = vmatprep.subr.bf16.mxu0 0
        %2163 = vmatpush1.bf16.msra.mxu0 0
        %2164 = vmatprep.mubr.bf16.mxu0 0
        %2165 = vmatmul.mubr.bf16.gmra.mrb[0].mxu0 %v2131
        %v2166 = vpop.f32.mrb[0].mxu0
        %v2167 = vadd.f32 0.0, %v2166
        %v2168 = vpop.f32.mrb[0].mxu0
        %v2169 = vadd.f32 0.0, %v2168
        %v2170 = vpop.f32.mrb[0].mxu0
        %v2171 = vpop.f32.mrb[0].mxu0
        %2172 = vdwg.mxu0
        %2173 = vmatprep.subr.bf16.mxu0 0
        %2174 = vmatpush1.bf16.msra.mxu0 %v1732
        %2175 = vmatprep.subr.bf16.mxu0 0
        %2176 = vmatpush1.bf16.msra.mxu0 %v1735
        %2177 = vmatprep.subr.bf16.mxu0 0
        %2178 = vmatpush1.bf16.msra.mxu0 %v1738
        %2179 = vmatprep.subr.bf16.mxu0 0
        %2180 = vmatpush1.bf16.msra.mxu0 %v1741
        %2181 = vmatprep.subr.bf16.mxu0 0
        %2182 = vmatpush1.bf16.msra.mxu0 %v1744
        %2183 = vmatprep.subr.bf16.mxu0 0
        %2184 = vmatpush1.bf16.msra.mxu0 %v1747
        %2185 = vmatprep.subr.bf16.mxu0 0
        %2186 = vmatpush1.bf16.msra.mxu0 %v1750
        %2187 = vmatprep.subr.bf16.mxu0 0
        %2188 = vmatpush1.bf16.msra.mxu0 %v1753
        %2189 = vmatprep.subr.bf16.mxu0 0
        %2190 = vmatpush1.bf16.msra.mxu0 0
        %2191 = vmatprep.subr.bf16.mxu0 0
        %2192 = vmatpush1.bf16.msra.mxu0 0
        %2193 = vmatprep.subr.bf16.mxu0 0
        %2194 = vmatpush1.bf16.msra.mxu0 0
        %2195 = vmatprep.subr.bf16.mxu0 0
        %2196 = vmatpush1.bf16.msra.mxu0 0
        %2197 = vmatprep.subr.bf16.mxu0 0
        %2198 = vmatpush1.bf16.msra.mxu0 0
        %2199 = vmatprep.subr.bf16.mxu0 0
        %2200 = vmatpush1.bf16.msra.mxu0 0
        %2201 = vmatprep.subr.bf16.mxu0 0
        %2202 = vmatpush1.bf16.msra.mxu0 0
        %2203 = vmatprep.subr.bf16.mxu0 0
        %2204 = vmatpush1.bf16.msra.mxu0 0
        %2205 = vmatprep.mubr.bf16.mxu0 0
        %2206 = vmatmul.mubr.bf16.gmra.mrb[0].mxu0 %v2131
        %v2207 = vpop.f32.mrb[0].mxu0
        %v2208 = vadd.f32 0.0, %v2207
        %v2209 = vpop.f32.mrb[0].mxu0
        %v2210 = vpop.f32.mrb[0].mxu0
        %v2211 = vpop.f32.mrb[0].mxu0
        %2212 = vdwg.mxu0
        %v2213 = vadd.f32 %v2128, %v2167
        %v2214 = vxor.u32 %v2213, 2147483648
        %v2215 = vmul.f32 %v2214, 1.442695
        %v2216 = vpow.pop %v2215
        %v2217 = vadd.f32 %v2216, 1.0
        %v2218 = vrcp.pop %v2217
        %v2219 = vmul.f32 1.0, %v2218
        %v2220 = vadd.f32 %v2129, %v2169
        %v2221 = vxor.u32 %v2220, 2147483648
        %v2222 = vmul.f32 %v2221, 1.442695
        %v2223 = vpow.pop %v2222
        %v2224 = vadd.f32 %v2223, 1.0
        %v2225 = vrcp.pop %v2224
        %v2226 = vmul.f32 1.0, %v2225
        %v2227 = vadd.f32 %v2208, %v1877
        %v2228 = vmul.f32 %v2219, %v2227
        %v2229 = vadd.f32 %v2130, %v2228
        %v2230 = vtanh.pop %v2229
        %v2231 = vsub.f32 1.0, %v2226
        %v2232 = vmul.f32 %v2231, %v2230
        %v2233 = vmul.f32 %v2226, %v2127
        %v2234 = vadd.f32 %v2232, %v2233
        %2235 = vst [vmem:[%s1644] sm:$0xff] %v2234
        %v2236 = vld [vmem:[#allocation2 + $0x8] sm:$0xf0]
        %v2238 = vrot.slane %v2236, 4
        %v2240 = vunpack.c.l.bf16 %v2238
        %v2241 = vadd.f32 %v2234, %v2240
        %v2242 = vpack.c.bf16 %v2241, %v2241
        %v2244 = vrot.slane %v2242, 4
        %2246 = vst [vmem:[#allocation2 + $0x8] sm:$0xf0] %v2244
        %v2247 = vld [vmem:[#allocation2] sm:$0xff]
        %v2248 = vld [vmem:[#allocation2 + $0x8] sm:$0xff]
        %v2249 = vld [vmem:[#allocation13] sm:$0xf]
        %v2250 = vld [vmem:[#allocation13 + $0x4] sm:$0xf]
        %v2251 = vld [vmem:[#allocation13 + $0x8] sm:$0xf]
        %v2252 = vld [vmem:[#allocation13 + $0xc] sm:$0xf]
        %v2253 = vld [vmem:[#allocation13 + $0x10] sm:$0xf]
        %v2254 = vld [vmem:[#allocation13 + $0x14] sm:$0xf]
        %v2255 = vld [vmem:[#allocation13 + $0x18] sm:$0xf]
        %v2256 = vld [vmem:[#allocation13 + $0x1c] sm:$0xf]
        %v2257 = vld [vmem:[#allocation13 + $0x20] sm:$0xf]
        %v2258 = vld [vmem:[#allocation13 + $0x24] sm:$0xf]
        %v2259 = vld [vmem:[#allocation13 + $0x28] sm:$0xf]
        %v2260 = vld [vmem:[#allocation13 + $0x2c] sm:$0xf]
        %v2261 = vld [vmem:[#allocation13 + $0x30] sm:$0xf]
        %v2262 = vld [vmem:[#allocation13 + $0x34] sm:$0xf]
        %v2263 = vld [vmem:[#allocation13 + $0x38] sm:$0xf]
        %v2264 = vld [vmem:[#allocation13 + $0x3c] sm:$0xf]
        %v2265 = vld [vmem:[%s7] sm:$0x1]
        %v2267 = vlaneseq
        %v2268 = vshrl.u32 %v2267, 7
        %v2269 = vsub.s32 0, %v2268
        %v2270 = vrot.slane %v2265, %v2269
        %v2288 = vunpack.c.l.b16 %v2249
        %v2289 = vunpack.c.l.b16 %v2250
        %v2290 = vunpack.c.l.b16 %v2251
        %v2291 = vunpack.c.l.b16 %v2252
        %v2292 = vunpack.c.l.b16 %v2253
        %v2293 = vunpack.c.l.b16 %v2254
        %v2294 = vunpack.c.l.b16 %v2255
        %v2295 = vunpack.c.l.b16 %v2256
        %v2296 = vunpack.c.l.b16 %v2257
        %v2297 = vunpack.c.l.b16 %v2258
        %v2298 = vunpack.c.l.b16 %v2259
        %v2299 = vunpack.c.l.b16 %v2260
        %v2300 = vunpack.c.l.b16 %v2261
        %v2301 = vunpack.c.l.b16 %v2262
        %v2302 = vunpack.c.l.b16 %v2263
        %v2303 = vunpack.c.l.b16 %v2264
        %v2304 = vpack.c.b16 %v2289, %v2288
        %v2305 = vpack.c.b16 %v2291, %v2290
        %v2306 = vpack.c.b16 %v2293, %v2292
        %v2307 = vpack.c.b16 %v2295, %v2294
        %v2308 = vpack.c.b16 %v2297, %v2296
        %v2309 = vpack.c.b16 %v2299, %v2298
        %v2310 = vpack.c.b16 %v2301, %v2300
        %v2311 = vpack.c.b16 %v2303, %v2302
        %2320 = vmatprep.subr.bf16.mxu0 0
        %2321 = vmatpush1.bf16.msra.mxu0 %v2304
        %2322 = vmatprep.subr.bf16.mxu0 0
        %2323 = vmatpush1.bf16.msra.mxu0 %v2305
        %2324 = vmatprep.subr.bf16.mxu0 0
        %2325 = vmatpush1.bf16.msra.mxu0 %v2306
        %2326 = vmatprep.subr.bf16.mxu0 0
        %2327 = vmatpush1.bf16.msra.mxu0 %v2307
        %2328 = vmatprep.subr.bf16.mxu0 0
        %2329 = vmatpush1.bf16.msra.mxu0 %v2308
        %2330 = vmatprep.subr.bf16.mxu0 0
        %2331 = vmatpush1.bf16.msra.mxu0 %v2309
        %2332 = vmatprep.subr.bf16.mxu0 0
        %2333 = vmatpush1.bf16.msra.mxu0 %v2310
        %2334 = vmatprep.subr.bf16.mxu0 0
        %2335 = vmatpush1.bf16.msra.mxu0 %v2311
        %2336 = vmatprep.subr.bf16.mxu0 0
        %2337 = vmatpush1.bf16.msra.mxu0 0
        %2338 = vmatprep.subr.bf16.mxu0 0
        %2339 = vmatpush1.bf16.msra.mxu0 0
        %2340 = vmatprep.subr.bf16.mxu0 0
        %2341 = vmatpush1.bf16.msra.mxu0 0
        %2342 = vmatprep.subr.bf16.mxu0 0
        %2343 = vmatpush1.bf16.msra.mxu0 0
        %2344 = vmatprep.subr.bf16.mxu0 0
        %2345 = vmatpush1.bf16.msra.mxu0 0
        %2346 = vmatprep.subr.bf16.mxu0 0
        %2347 = vmatpush1.bf16.msra.mxu0 0
        %2348 = vmatprep.subr.bf16.mxu0 0
        %2349 = vmatpush1.bf16.msra.mxu0 0
        %2350 = vmatprep.subr.bf16.mxu0 0
        %2351 = vmatpush1.bf16.msra.mxu0 0
        %2352 = vmatprep.mubr.bf16.mxu0 0
        %2353 = vmatmul.mubr.bf16.gmra.mrb[0].mxu0 %v2247
        %v2354 = vpop.f32.mrb[0].mxu0
        %v2355 = vadd.f32 %v2270, %v2354
        %v2356 = vpop.f32.mrb[0].mxu0
        %v2357 = vpop.f32.mrb[0].mxu0
        %v2358 = vadd.f32 %v2270, %v2357
        %v2359 = vpop.f32.mrb[0].mxu0
        %2360 = vmatprep.mubr.bf16.mxu0 0
        %2361 = vmatmul.mubr.bf16.gmra.mrb[0].mxu0 %v2248
        %v2362 = vpop.f32.mrb[0].mxu0
        %v2363 = vadd.f32 %v2270, %v2362
        %v2364 = vpop.f32.mrb[0].mxu0
        %v2365 = vpop.f32.mrb[0].mxu0
        %v2366 = vadd.f32 %v2270, %v2365
        %v2367 = vpop.f32.mrb[0].mxu0
        %2368 = vdwg.mxu0
        %2369 = vst [vmem:[%s381] sm:$0xff] %v2355
        %2370 = vst [vmem:[%s381 + $0x8] sm:$0xff] %v2358
        %2371 = vst [vmem:[%s381 + $0x10] sm:$0xff] %v2363
        %2372 = vst [vmem:[%s381 + $0x18] sm:$0xff] %v2366
        %s2373 = sand.u32 %s208, 1
        %s2374 = scalar_lea.sflag [#allocation7], %s2373
        %s2375 = sand.u32 %s208, 1
        %s2376 = smul.addr %s2375, 32
        %s2377 = scalar_lea.vmem [#allocation14], %s2376
        // Predicated region
        $region77: #{tpu_custom_call.1} parent=51 // pred_check
          %p2378 = pneg %p218
        $region78: #{tpu_custom_call.1} parent=51 // pred_check_branch
          %2380 = sbr.rel (%p2378) target = $region80
        $region79: #{tpu_custom_call.1} parent=51 // pred_region
          %s2381 = smul.u32 4, %s27
          %s2383 = ssub.s32 512, 512
          %2384 = vsyncadd %s2374, %s2383
          %s2385 = smul.addr %s2381, 128
          %s2386 = scalar_lea.hbm %s8, %s2385
          %s2387 = sshll.u32 %s2377, 4
          %s2388 = int_to_ptr.vmem [resolvable:$true] %s2387
          %2393 = dma.vmem_to_hbm [thread:$0]  %s2388, 512, %s2386, %s2374, 128, 128, 8
        $region80: #{tpu_custom_call.1} parent=51 // pred_fallthru
          _
      $region52: #{tpu_custom_call.1} parent=5 // pred_fallthru
        _
      %p2394 = scmp.le.s32.totalorder 2, %s22
      // Predicated region
      $region81: #{tpu_custom_call.1} parent=5 // pred_check
        %p2395 = pneg %p2394
      $region82: #{tpu_custom_call.1} parent=5 // pred_check_branch
        %2397 = sbr.rel (%p2395) target = $region84
      $region83: #{tpu_custom_call.1} parent=5 // pred_region
        %s2398 = ssub.s32 %s22, 2
        // Predicated region
        $region85: #{tpu_custom_call.1} parent=83 // pred_check
          %p2399 = pneg %p224
        $region86: #{tpu_custom_call.1} parent=83 // pred_check_branch
          %2401 = sbr.rel (%p2399) target = $region88
        $region87: #{tpu_custom_call.1} parent=83 // pred_region
          %s2402 = sand.u32 %s209, 1
          %s2403 = scalar_lea.sflag [#allocation7], %s2402
          %s2404 = sand.u32 %s209, 1
          %s2405 = smul.addr %s2404, 32
          %s2406 = scalar_lea.vmem [#allocation14], %s2405
          %2407 = dma.done %s2403, 512
        $region88: #{tpu_custom_call.1} parent=83 // pred_fallthru
          _
      $region84: #{tpu_custom_call.1} parent=5 // pred_fallthru
        _
    $region6: #{tpu_custom_call.1} parent=1 // loop_footer
      %s26 = sadd.s32 1, %s22
    $region7: #{tpu_custom_call.1} parent=1 // loop_footer_branch
      %21 = sbr.rel target = $region3
    $region8: #{tpu_custom_call.1} parent=1 // loop_exit
      _
    %2408 = vsyncpa [#allocation6], 1
    %s2409 = scalar_lea.sflag [#allocation6], 1
    %2410 = vsyncpa %s2409, 1
    %2411 = vsyncpa [#allocation9], 1
    %2412 = vsyncpa [#allocation12], 1
    %2413 = vsyncpa [#allocation7], 1
    %s2414 = scalar_lea.sflag [#allocation7], 1
    %2415 = vsyncpa %s2414, 1

</llo_original>
